<compile_context>
chip_gen: v7x
topology: tpu7x:2x2x1
jax: 0.10.0
libtpu: 0.0.40
codegen_flags: <defaults>
</compile_context>

<pallas_src>
import math
import functools

import jax
import jax.numpy as jnp
from jax.experimental import pallas as pl
from jax.experimental.pallas import tpu as pltpu

LN_EPS = 1e-5  # nn.LayerNorm default


# ----------------------------------------------------------------------------------
# In-kernel building blocks (pure functions on loaded values)
# ----------------------------------------------------------------------------------
def _layernorm(x, w, b):
    mu = jnp.mean(x, axis=-1, keepdims=True)
    var = jnp.mean((x - mu) ** 2, axis=-1, keepdims=True)
    return (x - mu) * jax.lax.rsqrt(var + LN_EPS) * w + b


def _attention_block(x_res, xq_ln, xkv_ln, klen, wq, bq, wkv, bkv, wo, bo,
                     *, n_heads, d_q, d_v, causal):
    """Pre-LN multi-head attention with residual add.

    x_res:  (Lq, D) float32 residual input
    xq_ln:  (Lq, D) float32 normalized query input
    xkv_ln: (Lk, D) float32 (normalized) key/value input
    klen:   scalar int32 valid key length for this batch element
    wq/wkv/wo: bf16 weight matrices (D,Hq) / (D,Hkv) / (Hv,D); biases f32.
    """
    Lq, _ = x_res.shape
    Lk = xkv_ln.shape[0]
    Hq = n_heads * d_q

    q = jnp.dot(xq_ln.astype(jnp.bfloat16), wq,
                preferred_element_type=jnp.float32) + bq
    kvp = jnp.dot(xkv_ln.astype(jnp.bfloat16), wkv,
                  preferred_element_type=jnp.float32) + bkv
    k = kvp[:, :Hq]
    v = kvp[:, Hq:]
    q = q * (1.0 / math.sqrt(d_q))           # fold scale into Q once (not per head)

    key_ids = jax.lax.broadcasted_iota(jnp.int32, (Lq, Lk), 1)
    mask = key_ids < klen
    if causal:
        q_ids = jax.lax.broadcasted_iota(jnp.int32, (Lq, Lk), 0)
        mask = jnp.logical_and(mask, key_ids <= q_ids)

    # Per-head attention (static unroll; heads are 32-wide, 32-deep contractions).
    ctxs = []
    for h in range(n_heads):
        qh = q[:, h * d_q:(h + 1) * d_q].astype(jnp.bfloat16)
        kh = k[:, h * d_q:(h + 1) * d_q].astype(jnp.bfloat16)
        vh = v[:, h * d_v:(h + 1) * d_v].astype(jnp.bfloat16)
        # qh @ kh^T without an explicit transpose (contract the feature dim of both).
        s = jax.lax.dot_general(qh, kh, (((1,), (1,)), ((), ())),
                                preferred_element_type=jnp.float32)
        s = jnp.where(mask, s, -1e30)
        s = s - jnp.max(s, axis=-1, keepdims=True)
        e = jnp.exp(s)
        p = e * pl.reciprocal(jnp.sum(e, axis=-1, keepdims=True), approx=True)
        ctxs.append(jnp.dot(p.astype(jnp.bfloat16), vh,
                            preferred_element_type=jnp.float32))
    ctx = jnp.concatenate(ctxs, axis=-1)      # (Lq, Hv)

    # Single fused output projection (one 128-deep contraction instead of n_heads).
    out = jnp.dot(ctx.astype(jnp.bfloat16), wo,
                  preferred_element_type=jnp.float32) + bo
    # TODO(synk): dropout on attention weights / output is identity in eval mode.
    return out + x_res


def _ffn_block(x_res, lnw, lnb, w1, b1, w2, b2):
    h = _layernorm(x_res, lnw, lnb)
    h = jnp.dot(h.astype(jnp.bfloat16), w1, preferred_element_type=jnp.float32) + b1
    h = jnp.maximum(h, 0.0)
    h = jnp.dot(h.astype(jnp.bfloat16), w2, preferred_element_type=jnp.float32) + b2
    return h + x_res


# ----------------------------------------------------------------------------------
# Fused encoder-stack kernel: grid = (batch, layer); out_ref is the resident carrier.
# ----------------------------------------------------------------------------------
def _encoder_kernel(lens_ref, x_ref,
                    m_lnw, m_lnb, wq, bq, wkv, bkv, wo, bo,
                    g_lnw, g_lnb, w1, b1, w2, b2,
                    fin_lnw, fin_lnb,
                    out_ref, *, n_heads, d_q, d_v):
    b = pl.program_id(0)
    l = pl.program_id(1)
    n_l = pl.num_programs(1)

    @pl.when(l == 0)
    def _():
        out_ref[...] = x_ref[...]            # load embedded input into the carrier

    x = out_ref[0]                           # (Le, D) resident activation
    klen = lens_ref[b]

    x_ln = _layernorm(x, m_lnw[0], m_lnb[0])
    x = _attention_block(x, x_ln, x_ln, klen, wq[0], bq[0], wkv[0], bkv[0],
                         wo[0], bo[0], n_heads=n_heads, d_q=d_q, d_v=d_v,
                         causal=False)
    x = _ffn_block(x, g_lnw[0], g_lnb[0], w1[0], b1[0], w2[0], b2[0])

    out_ref[0] = x

    @pl.when(l == n_l - 1)
    def _():
        out_ref[0] = _layernorm(x, fin_lnw[...], fin_lnb[...])   # encoder final LN


# ----------------------------------------------------------------------------------
# Fused decoder-stack kernel: grid = (batch, layer); VMEM scratch carries activations,
# final LN + tied FC projection done at the last layer iteration.
# ----------------------------------------------------------------------------------
def _decoder_kernel(dlens_ref, elens_ref, y_ref, enc_ref,
                    s_lnw, s_lnb, s_wq, s_bq, s_wkv, s_bkv, s_wo, s_bo,
                    c_lnw, c_lnb, c_wq, c_bq, c_wkv, c_bkv, c_wo, c_bo,
                    g_lnw, g_lnb, g_w1, g_b1, g_w2, g_b2,
                    fin_lnw, fin_lnb, fc_w, fc_b,
                    out_ref, act_ref, *, n_heads, d_q, d_v):
    b = pl.program_id(0)
    l = pl.program_id(1)
    n_l = pl.num_programs(1)

    @pl.when(l == 0)
    def _():
        act_ref[...] = y_ref[...]

    y = act_ref[0]                           # (Ld, D) resident activation
    enc = enc_ref[0]                         # (Le, D) encoder memory (already final-LN'd)
    dklen = dlens_ref[b]
    eklen = elens_ref[b]

    # Self-attention (causal + key-padding mask); LN computed once for Q and KV.
    y_ln = _layernorm(y, s_lnw[0], s_lnb[0])
    y = _attention_block(y, y_ln, y_ln, dklen, s_wq[0], s_bq[0], s_wkv[0], s_bkv[0],
                         s_wo[0], s_bo[0], n_heads=n_heads, d_q=d_q, d_v=d_v,
                         causal=True)
    # Cross-attention: LN only on queries, raw encoder output as memory.
    yq_ln = _layernorm(y, c_lnw[0], c_lnb[0])
    y = _attention_block(y, yq_ln, enc, eklen, c_wq[0], c_bq[0], c_wkv[0], c_bkv[0],
                         c_wo[0], c_bo[0], n_heads=n_heads, d_q=d_q, d_v=d_v,
                         causal=False)
    y = _ffn_block(y, g_lnw[0], g_lnb[0], g_w1[0], g_b1[0], g_w2[0], g_b2[0])

    act_ref[0] = y

    @pl.when(l == n_l - 1)
    def _():
        h = _layernorm(y, fin_lnw[...], fin_lnb[...])
        out_ref[0] = jnp.dot(h.astype(jnp.bfloat16), fc_w[...],
                             preferred_element_type=jnp.float32) + fc_b[...]


# ----------------------------------------------------------------------------------
# Pallas wrappers
# ----------------------------------------------------------------------------------
_L3 = lambda b, l, *_: (l, 0, 0)     # per-layer stacked weight
_S2 = lambda b, l, *_: (0, 0)        # shared 2-D weight
_AB = lambda b, l, *_: (b, 0, 0)     # per-batch activation block


def _mha_specs(D, Hq, Hkv, Hv):
    return [
        pl.BlockSpec((1, 1, D), _L3), pl.BlockSpec((1, 1, D), _L3),     # ln_w, ln_b
        pl.BlockSpec((1, D, Hq), _L3), pl.BlockSpec((1, 1, Hq), _L3),   # wq, bq
        pl.BlockSpec((1, D, Hkv), _L3), pl.BlockSpec((1, 1, Hkv), _L3),  # wkv, bkv
        pl.BlockSpec((1, Hv, D), _L3), pl.BlockSpec((1, 1, D), _L3),    # wo, bo
    ]


def _ffn_specs(D, Di):
    return [
        pl.BlockSpec((1, 1, D), _L3), pl.BlockSpec((1, 1, D), _L3),     # ln_w, ln_b
        pl.BlockSpec((1, D, Di), _L3), pl.BlockSpec((1, 1, Di), _L3),   # w1, b1
        pl.BlockSpec((1, Di, D), _L3), pl.BlockSpec((1, 1, D), _L3),    # w2, b2
    ]


def _mha_args(p):
    return [p["ln_w"], p["ln_b"], p["wq"], p["bq"], p["wkv"], p["bkv"], p["wo"], p["bo"]]


def _ffn_args(p):
    return [p["ln_w"], p["ln_b"], p["w1"], p["b1"], p["w2"], p["b2"]]


def encoder_forward(x, enc_lens, params, *, n_heads, d_q, d_v):
    B, Le, D = x.shape
    mha, ffn = params["enc_mha"], params["enc_ffn"]
    n_layers = mha["wq"].shape[0]
    Hq, Hkv, Hv = n_heads * d_q, n_heads * (d_q + d_v), n_heads * d_v
    Di = ffn["w1"].shape[-1]

    in_specs = ([pl.BlockSpec((1, Le, D), _AB)]
                + _mha_specs(D, Hq, Hkv, Hv)
                + _ffn_specs(D, Di)
                + [pl.BlockSpec((1, D), _S2), pl.BlockSpec((1, D), _S2)])

    kernel = functools.partial(_encoder_kernel, n_heads=n_heads, d_q=d_q, d_v=d_v)
    return pl.pallas_call(
        kernel,
        out_shape=jax.ShapeDtypeStruct((B, Le, D), jnp.float32),
        grid_spec=pltpu.PrefetchScalarGridSpec(
            num_scalar_prefetch=1,
            grid=(B, n_layers),
            in_specs=in_specs,
            out_specs=pl.BlockSpec((1, Le, D), _AB),
        ),
        compiler_params=pltpu.CompilerParams(
            dimension_semantics=("parallel", "arbitrary")),
    )(enc_lens, x,
      *_mha_args(mha), *_ffn_args(ffn),
      params["enc_ln_w"], params["enc_ln_b"])


def decoder_forward(y, enc_out, dec_lens, enc_lens, params, *, n_heads, d_q, d_v):
    B, Ld, D = y.shape
    Le = enc_out.shape[1]
    sm, cm, ffn = params["dec_self_mha"], params["dec_cross_mha"], params["dec_ffn"]
    n_layers = sm["wq"].shape[0]
    Hq, Hkv, Hv = n_heads * d_q, n_heads * (d_q + d_v), n_heads * d_v
    Di = ffn["w1"].shape[-1]
    V = params["fc_w"].shape[-1]

    in_specs = ([pl.BlockSpec((1, Ld, D), _AB), pl.BlockSpec((1, Le, D), _AB)]
                + _mha_specs(D, Hq, Hkv, Hv)       # self-attention
                + _mha_specs(D, Hq, Hkv, Hv)       # cross-attention
                + _ffn_specs(D, Di)
                + [pl.BlockSpec((1, D), _S2), pl.BlockSpec((1, D), _S2),   # final LN
                   pl.BlockSpec((D, V), _S2), pl.BlockSpec((1, V), _S2)])  # tied FC

    kernel = functools.partial(_decoder_kernel, n_heads=n_heads, d_q=d_q, d_v=d_v)
    return pl.pallas_call(
        kernel,
        out_shape=jax.ShapeDtypeStruct((B, Ld, V), jnp.float32),
        grid_spec=pltpu.PrefetchScalarGridSpec(
            num_scalar_prefetch=2,
            grid=(B, n_layers),
            in_specs=in_specs,
            out_specs=pl.BlockSpec((1, Ld, V), _AB),
            scratch_shapes=[pltpu.VMEM((1, Ld, D), jnp.float32)],
        ),
        compiler_params=pltpu.CompilerParams(
            dimension_semantics=("parallel", "arbitrary")),
    )(dec_lens, enc_lens, y, enc_out,
      *_mha_args(sm), *_mha_args(cm), *_ffn_args(ffn),
      params["dec_ln_w"], params["dec_ln_b"], params["fc_w"], params["fc_b"])


# ----------------------------------------------------------------------------------
# Parameter construction (deterministic, synthetic; weights stacked per layer)
# ----------------------------------------------------------------------------------
def _xavier(key, out_f, in_f):
    bound = math.sqrt(6.0 / (in_f + out_f))
    return jax.random.uniform(key, (out_f, in_f), jnp.float32, -bound, bound)


def make_mha_stack(key, n_layers, d_model, n_heads, d_q, d_v):
    Hq, Hkv, Hv = n_heads * d_q, n_heads * (d_q + d_v), n_heads * d_v
    keys = jax.random.split(key, 3 * n_layers)
    wq = jnp.stack([_xavier(keys[3 * i + 0], Hq, d_model).T for i in range(n_layers)])
    wkv = jnp.stack([_xavier(keys[3 * i + 1], Hkv, d_model).T for i in range(n_layers)])
    wo = jnp.stack([_xavier(keys[3 * i + 2], d_model, Hv).T for i in range(n_layers)])
    return dict(
        ln_w=jnp.ones((n_layers, 1, d_model), jnp.float32),
        ln_b=jnp.zeros((n_layers, 1, d_model), jnp.float32),
        wq=wq.astype(jnp.bfloat16), bq=jnp.zeros((n_layers, 1, Hq), jnp.float32),
        wkv=wkv.astype(jnp.bfloat16), bkv=jnp.zeros((n_layers, 1, Hkv), jnp.float32),
        wo=wo.astype(jnp.bfloat16), bo=jnp.zeros((n_layers, 1, d_model), jnp.float32),
    )


def make_ffn_stack(key, n_layers, d_model, d_inner):
    keys = jax.random.split(key, 2 * n_layers)
    w1 = jnp.stack([_xavier(keys[2 * i + 0], d_inner, d_model).T for i in range(n_layers)])
    w2 = jnp.stack([_xavier(keys[2 * i + 1], d_model, d_inner).T for i in range(n_layers)])
    return dict(
        ln_w=jnp.ones((n_layers, 1, d_model), jnp.float32),
        ln_b=jnp.zeros((n_layers, 1, d_model), jnp.float32),
        w1=w1.astype(jnp.bfloat16), b1=jnp.zeros((n_layers, 1, d_inner), jnp.float32),
        w2=w2.astype(jnp.bfloat16), b2=jnp.zeros((n_layers, 1, d_model), jnp.float32),
    )


def make_positional_encoding(max_len, d_model):
    pos = jnp.arange(max_len, dtype=jnp.float32)[:, None]
    div = jnp.exp(jnp.arange(0, d_model, 2, dtype=jnp.float32)
                  * (-math.log(10000.0) / d_model))
    pe = jnp.zeros((max_len, d_model), jnp.float32)
    pe = pe.at[:, 0::2].set(jnp.sin(pos * div))
    pe = pe.at[:, 1::2].set(jnp.cos(pos * div))
    return pe[None]                                # (1, max_len, D)


def make_transformer_params(key, vocab_size, d_model, n_heads, d_q, d_v,
                            d_inner, n_layers, max_len):
    keys = jax.random.split(key, 6)
    emb = jax.random.normal(keys[0], (vocab_size, d_model), jnp.float32) \
        * (d_model ** -0.5)                        # shared embedding (enc = dec = fc)
    return dict(
        embedding=emb,
        pos_enc=make_positional_encoding(max_len, d_model),
        enc_mha=make_mha_stack(keys[1], n_layers, d_model, n_heads, d_q, d_v),
        enc_ffn=make_ffn_stack(keys[2], n_layers, d_model, d_inner),
        enc_ln_w=jnp.ones((1, d_model), jnp.float32),
        enc_ln_b=jnp.zeros((1, d_model), jnp.float32),
        dec_self_mha=make_mha_stack(keys[3], n_layers, d_model, n_heads, d_q, d_v),
        dec_cross_mha=make_mha_stack(keys[4], n_layers, d_model, n_heads, d_q, d_v),
        dec_ffn=make_ffn_stack(keys[5], n_layers, d_model, d_inner),
        dec_ln_w=jnp.ones((1, d_model), jnp.float32),
        dec_ln_b=jnp.zeros((1, d_model), jnp.float32),
        fc_w=emb.T.astype(jnp.bfloat16),            # tied: fc.weight = embedding
        fc_b=jnp.zeros((1, vocab_size), jnp.float32),
    )


# ----------------------------------------------------------------------------------
# Forward pass (embedding/pos-enc glue in JAX, whole stacks in Pallas)
# ----------------------------------------------------------------------------------
def transformer_forward(params, enc_tokens, dec_tokens, enc_lens, dec_lens,
                        *, d_model, n_heads, d_q, d_v):
    # TODO(synk): embedding gather + positional-encoding add stay in plain JAX (a
    # tiny gather with no benefit from a Pallas kernel at these sizes).
    Le = enc_tokens.shape[1]
    x = jnp.take(params["embedding"], enc_tokens, axis=0) * math.sqrt(d_model) \
        + params["pos_enc"][:, :Le, :]
    enc_out = encoder_forward(x, enc_lens, params,
                              n_heads=n_heads, d_q=d_q, d_v=d_v)

    Ld = dec_tokens.shape[1]
    y = jnp.take(params["embedding"], dec_tokens, axis=0) * math.sqrt(d_model) \
        + params["pos_enc"][:, :Ld, :]
    logits = decoder_forward(y, enc_out, dec_lens, enc_lens, params,
                             n_heads=n_heads, d_q=d_q, d_v=d_v)
    return logits


# ----------------------------------------------------------------------------------
if __name__ == "__main__":
    # Small but lane-dense shapes (d_model / head-dims / vocab are multiples of 128).
    vocab_size = 128
    d_model, n_heads, d_q, d_v = 128, 4, 32, 32
    d_inner, n_layers = 256, 2
    B, Le, Ld, max_len = 2, 8, 8, 16

    key = jax.random.PRNGKey(0)
    kp, ke, kd = jax.random.split(key, 3)
    params = make_transformer_params(kp, vocab_size, d_model, n_heads, d_q, d_v,
                                     d_inner, n_layers, max_len)

    enc_tokens = jax.random.randint(ke, (B, Le), 0, vocab_size, dtype=jnp.int32)
    dec_tokens = jax.random.randint(kd, (B, Ld), 0, vocab_size, dtype=jnp.int32)
    enc_lens = jnp.array([8, 5], dtype=jnp.int32)
    dec_lens = jnp.array([8, 6], dtype=jnp.int32)

    fwd = jax.jit(functools.partial(transformer_forward, d_model=d_model,
                                    n_heads=n_heads, d_q=d_q, d_v=d_v))
    logits = fwd(params, enc_tokens, dec_tokens, enc_lens, dec_lens)
    jax.block_until_ready(logits)
    assert logits.shape == (B, Ld, vocab_size)
    assert bool(jnp.all(jnp.isfinite(logits)))
    print("KERNEL_OK")
</pallas_src>

<mosaic_0001>
module attributes {stable_mosaic.version = 11 : i64} {
  func.func @_encoder_kernel(%arg0: i32, %arg1: i32, %arg2: memref<2xi32, #tpu.memory_space<smem>>, %arg3: memref<1x8x128xf32, #tpu.memory_space<vmem>>, %arg4: memref<1x1x128xf32, #tpu.memory_space<vmem>>, %arg5: memref<1x1x128xf32, #tpu.memory_space<vmem>>, %arg6: memref<1x128x128xbf16, #tpu.memory_space<vmem>>, %arg7: memref<1x1x128xf32, #tpu.memory_space<vmem>>, %arg8: memref<1x128x256xbf16, #tpu.memory_space<vmem>>, %arg9: memref<1x1x256xf32, #tpu.memory_space<vmem>>, %arg10: memref<1x128x128xbf16, #tpu.memory_space<vmem>>, %arg11: memref<1x1x128xf32, #tpu.memory_space<vmem>>, %arg12: memref<1x1x128xf32, #tpu.memory_space<vmem>>, %arg13: memref<1x1x128xf32, #tpu.memory_space<vmem>>, %arg14: memref<1x128x256xbf16, #tpu.memory_space<vmem>>, %arg15: memref<1x1x256xf32, #tpu.memory_space<vmem>>, %arg16: memref<1x256x128xbf16, #tpu.memory_space<vmem>>, %arg17: memref<1x1x128xf32, #tpu.memory_space<vmem>>, %arg18: memref<1x128xf32, #tpu.memory_space<vmem>>, %arg19: memref<1x128xf32, #tpu.memory_space<vmem>>, %arg20: memref<1x8x128xf32, #tpu.memory_space<vmem>>) attributes {dimension_semantics = [#tpu.dimension_semantics<parallel>, #tpu.dimension_semantics<arbitrary>], iteration_bounds = array<i64: 2, 2>, scalar_prefetch = 1 : i64, scratch_operands = 0 : i64, tpu.core_type = #tpu.core_type<tc>, window_params = [{transform_indices = @transform_0, window_bounds = array<i64: 1, 8, 128>}, {transform_indices = @transform_1, window_bounds = array<i64: 1, 1, 128>}, {transform_indices = @transform_2, window_bounds = array<i64: 1, 1, 128>}, {transform_indices = @transform_3, window_bounds = array<i64: 1, 128, 128>}, {transform_indices = @transform_4, window_bounds = array<i64: 1, 1, 128>}, {transform_indices = @transform_5, window_bounds = array<i64: 1, 128, 256>}, {transform_indices = @transform_6, window_bounds = array<i64: 1, 1, 256>}, {transform_indices = @transform_7, window_bounds = array<i64: 1, 128, 128>}, {transform_indices = @transform_8, window_bounds = array<i64: 1, 1, 128>}, {transform_indices = @transform_9, window_bounds = array<i64: 1, 1, 128>}, {transform_indices = @transform_10, window_bounds = array<i64: 1, 1, 128>}, {transform_indices = @transform_11, window_bounds = array<i64: 1, 128, 256>}, {transform_indices = @transform_12, window_bounds = array<i64: 1, 1, 256>}, {transform_indices = @transform_13, window_bounds = array<i64: 1, 256, 128>}, {transform_indices = @transform_14, window_bounds = array<i64: 1, 1, 128>}, {pipeline_mode = #tpu.pipeline_mode<synchronous>, transform_indices = @transform_15, window_bounds = array<i64: 1, 128>}, {pipeline_mode = #tpu.pipeline_mode<synchronous>, transform_indices = @transform_16, window_bounds = array<i64: 1, 128>}, {transform_indices = @transform_17, window_bounds = array<i64: 1, 8, 128>}]} {
    %c0_i32 = arith.constant 0 : i32
    %0 = arith.cmpi eq, %arg1, %c0_i32 : i32
    %1 = arith.extui %0 : i1 to i32
    %c0_i32_0 = arith.constant 0 : i32
    %2 = arith.cmpi ne, %1, %c0_i32_0 : i32
    scf.if %2 {
      %c0_85 = arith.constant 0 : index
      %c0_86 = arith.constant 0 : index
      %c0_87 = arith.constant 0 : index
      %201 = vector.load %arg3[%c0_85, %c0_86, %c0_87] : memref<1x8x128xf32, #tpu.memory_space<vmem>>, vector<1x8x128xf32>
      %c0_88 = arith.constant 0 : index
      %c0_89 = arith.constant 0 : index
      %c0_90 = arith.constant 0 : index
      %202 = vector.load %arg20[%c0_88, %c0_89, %c0_90] : memref<1x8x128xf32, #tpu.memory_space<vmem>>, vector<1x8x128xf32>
      tpu.vector_store %arg20[%c0_88, %c0_89, %c0_90], %201 {strides = array<i32>} : memref<1x8x128xf32, #tpu.memory_space<vmem>>, vector<1x8x128xf32>,
    } else {
    }
    %c0 = arith.constant 0 : index
    %c0_1 = arith.constant 0 : index
    %c0_2 = arith.constant 0 : index
    %3 = vector.load %arg20[%c0, %c0_1, %c0_2] : memref<1x8x128xf32, #tpu.memory_space<vmem>>, vector<1x8x128xf32>
    %4 = vector.shape_cast %3 : vector<1x8x128xf32> to vector<8x128xf32>
    %5 = arith.index_cast %arg0 : i32 to index
    %6 = memref.load %arg2[%5] : memref<2xi32, #tpu.memory_space<smem>>
    %c0_3 = arith.constant 0 : index
    %c0_4 = arith.constant 0 : index
    %c0_5 = arith.constant 0 : index
    %7 = vector.load %arg4[%c0_3, %c0_4, %c0_5] : memref<1x1x128xf32, #tpu.memory_space<vmem>>, vector<1x1x128xf32>
    %8 = vector.shape_cast %7 : vector<1x1x128xf32> to vector<1x128xf32>
    %c0_6 = arith.constant 0 : index
    %c0_7 = arith.constant 0 : index
    %c0_8 = arith.constant 0 : index
    %9 = vector.load %arg5[%c0_6, %c0_7, %c0_8] : memref<1x1x128xf32, #tpu.memory_space<vmem>>, vector<1x1x128xf32>
    %10 = vector.shape_cast %9 : vector<1x1x128xf32> to vector<1x128xf32>
    %cst = arith.constant dense<0.000000e+00> : vector<8xf32>
    %11 = vector.multi_reduction <add>, %4, %cst [1] : vector<8x128xf32> to vector<8xf32>
    %12 = vector.shape_cast %11 : vector<8xf32> to vector<8x1xf32>
    %cst_9 = arith.constant 1.280000e+02 : f32
    %13 = vector.broadcast %cst_9 : f32 to vector<8x1xf32>
    %14 = arith.divf %12, %13 : vector<8x1xf32>
    %15 = vector.broadcast %14 : vector<8x1xf32> to vector<8x128xf32>
    %16 = arith.subf %4, %15 : vector<8x128xf32>
    %17 = arith.mulf %16, %16 : vector<8x128xf32>
    %cst_10 = arith.constant dense<0.000000e+00> : vector<8xf32>
    %18 = vector.multi_reduction <add>, %17, %cst_10 [1] : vector<8x128xf32> to vector<8xf32>
    %19 = vector.shape_cast %18 : vector<8xf32> to vector<8x1xf32>
    %cst_11 = arith.constant 1.280000e+02 : f32
    %20 = vector.broadcast %cst_11 : f32 to vector<8x1xf32>
    %21 = arith.divf %19, %20 : vector<8x1xf32>
    %22 = vector.broadcast %14 : vector<8x1xf32> to vector<8x128xf32>
    %23 = arith.subf %4, %22 : vector<8x128xf32>
    %cst_12 = arith.constant 9.99999974E-6 : f32
    %24 = vector.broadcast %cst_12 : f32 to vector<8x1xf32>
    %25 = arith.addf %21, %24 : vector<8x1xf32>
    %26 = math.rsqrt %25 : vector<8x1xf32>
    %27 = vector.broadcast %26 : vector<8x1xf32> to vector<8x128xf32>
    %28 = arith.mulf %23, %27 : vector<8x128xf32>
    %29 = vector.broadcast %8 : vector<1x128xf32> to vector<8x128xf32>
    %30 = arith.mulf %28, %29 : vector<8x128xf32>
    %31 = vector.broadcast %10 : vector<1x128xf32> to vector<8x128xf32>
    %32 = arith.addf %30, %31 : vector<8x128xf32>
    %c0_13 = arith.constant 0 : index
    %c0_14 = arith.constant 0 : index
    %c0_15 = arith.constant 0 : index
    %33 = vector.load %arg6[%c0_13, %c0_14, %c0_15] : memref<1x128x128xbf16, #tpu.memory_space<vmem>>, vector<1x128x128xbf16>
    %34 = vector.shape_cast %33 : vector<1x128x128xbf16> to vector<128x128xbf16>
    %c0_16 = arith.constant 0 : index
    %c0_17 = arith.constant 0 : index
    %c0_18 = arith.constant 0 : index
    %35 = vector.load %arg7[%c0_16, %c0_17, %c0_18] : memref<1x1x128xf32, #tpu.memory_space<vmem>>, vector<1x1x128xf32>
    %36 = vector.shape_cast %35 : vector<1x1x128xf32> to vector<1x128xf32>
    %c0_19 = arith.constant 0 : index
    %c0_20 = arith.constant 0 : index
    %c0_21 = arith.constant 0 : index
    %37 = vector.load %arg8[%c0_19, %c0_20, %c0_21] : memref<1x128x256xbf16, #tpu.memory_space<vmem>>, vector<1x128x256xbf16>
    %38 = vector.shape_cast %37 : vector<1x128x256xbf16> to vector<128x256xbf16>
    %c0_22 = arith.constant 0 : index
    %c0_23 = arith.constant 0 : index
    %c0_24 = arith.constant 0 : index
    %39 = vector.load %arg9[%c0_22, %c0_23, %c0_24] : memref<1x1x256xf32, #tpu.memory_space<vmem>>, vector<1x1x256xf32>
    %40 = vector.shape_cast %39 : vector<1x1x256xf32> to vector<1x256xf32>
    %c0_25 = arith.constant 0 : index
    %c0_26 = arith.constant 0 : index
    %c0_27 = arith.constant 0 : index
    %41 = vector.load %arg10[%c0_25, %c0_26, %c0_27] : memref<1x128x128xbf16, #tpu.memory_space<vmem>>, vector<1x128x128xbf16>
    %42 = vector.shape_cast %41 : vector<1x128x128xbf16> to vector<128x128xbf16>
    %c0_28 = arith.constant 0 : index
    %c0_29 = arith.constant 0 : index
    %c0_30 = arith.constant 0 : index
    %43 = vector.load %arg11[%c0_28, %c0_29, %c0_30] : memref<1x1x128xf32, #tpu.memory_space<vmem>>, vector<1x1x128xf32>
    %44 = vector.shape_cast %43 : vector<1x1x128xf32> to vector<1x128xf32>
    %45 = arith.truncf %32 : vector<8x128xf32> to vector<8x128xbf16>
    %cst_31 = arith.constant dense<0.000000e+00> : vector<8x128xf32>
    %46 = tpu.matmul %45, %34, %cst_31 {dimension_numbers = #tpu.dot_dimension_numbers<[1], [0], [0], [1], [0, 0, 1, 1], [], []>} : vector<8x128xbf16>, vector<128x128xbf16>, vector<8x128xf32> -> vector<8x128xf32>
    %47 = vector.broadcast %36 : vector<1x128xf32> to vector<8x128xf32>
    %48 = arith.addf %46, %47 : vector<8x128xf32>
    %49 = arith.truncf %32 : vector<8x128xf32> to vector<8x128xbf16>
    %cst_32 = arith.constant dense<0.000000e+00> : vector<8x256xf32>
    %50 = tpu.matmul %49, %38, %cst_32 {dimension_numbers = #tpu.dot_dimension_numbers<[1], [0], [0], [1], [0, 0, 1, 1], [], []>} : vector<8x128xbf16>, vector<128x256xbf16>, vector<8x256xf32> -> vector<8x256xf32>
    %51 = vector.broadcast %40 : vector<1x256xf32> to vector<8x256xf32>
    %52 = arith.addf %50, %51 : vector<8x256xf32>
    %53 = vector.extract_strided_slice %52 {offsets = [0, 0], sizes = [8, 128], strides = [1, 1]} : vector<8x256xf32> to vector<8x128xf32>
    %54 = vector.extract_strided_slice %52 {offsets = [0, 128], sizes = [8, 128], strides = [1, 1]} : vector<8x256xf32> to vector<8x128xf32>
    %cst_33 = arith.constant 0.176776692 : f32
    %55 = vector.broadcast %cst_33 : f32 to vector<8x128xf32>
    %56 = arith.mulf %48, %55 : vector<8x128xf32>
    %57 = tpu.iota {dimensions = array<i32: 1>} : vector<8x8xi32>
    %58 = vector.broadcast %6 : i32 to vector<8x8xi32>
    %59 = arith.cmpi slt, %57, %58 : vector<8x8xi32>
    %60 = vector.extract_strided_slice %56 {offsets = [0, 0], sizes = [8, 32], strides = [1, 1]} : vector<8x128xf32> to vector<8x32xf32>
    %61 = arith.truncf %60 : vector<8x32xf32> to vector<8x32xbf16>
    %62 = vector.extract_strided_slice %53 {offsets = [0, 0], sizes = [8, 32], strides = [1, 1]} : vector<8x128xf32> to vector<8x32xf32>
    %63 = arith.truncf %62 : vector<8x32xf32> to vector<8x32xbf16>
    %64 = vector.extract_strided_slice %54 {offsets = [0, 0], sizes = [8, 32], strides = [1, 1]} : vector<8x128xf32> to vector<8x32xf32>
    %65 = arith.truncf %64 : vector<8x32xf32> to vector<8x32xbf16>
    %cst_34 = arith.constant dense<0.000000e+00> : vector<8x8xf32>
    %66 = tpu.matmul %61, %63, %cst_34 {dimension_numbers = #tpu.dot_dimension_numbers<[1], [1], [0], [0], [0, 0, 1, 0], [], []>} : vector<8x32xbf16>, vector<8x32xbf16>, vector<8x8xf32> -> vector<8x8xf32>
    %cst_35 = arith.constant -1.000000e+30 : f32
    %67 = vector.broadcast %cst_35 : f32 to vector<8x8xf32>
    %68 = arith.select %59, %66, %67 : vector<8x8xi1>, vector<8x8xf32>
    %cst_36 = arith.constant dense<0xFF800000> : vector<8xf32>
    %69 = vector.multi_reduction <maximumf>, %68, %cst_36 [1] : vector<8x8xf32> to vector<8xf32>
    %70 = vector.shape_cast %69 : vector<8xf32> to vector<8x1xf32>
    %71 = vector.broadcast %70 : vector<8x1xf32> to vector<8x8xf32>
    %72 = arith.subf %68, %71 : vector<8x8xf32>
    %73 = math.exp %72 : vector<8x8xf32>
    %cst_37 = arith.constant dense<0.000000e+00> : vector<8xf32>
    %74 = vector.multi_reduction <add>, %73, %cst_37 [1] : vector<8x8xf32> to vector<8xf32>
    %75 = vector.shape_cast %74 : vector<8xf32> to vector<8x1xf32>
    %76 = tpu.reciprocal %75 {approx = true} : vector<8x1xf32> -> vector<8x1xf32>
    %77 = vector.broadcast %76 : vector<8x1xf32> to vector<8x8xf32>
    %78 = arith.mulf %73, %77 : vector<8x8xf32>
    %79 = arith.truncf %78 : vector<8x8xf32> to vector<8x8xbf16>
    %cst_38 = arith.constant dense<0.000000e+00> : vector<8x32xf32>
    %80 = tpu.matmul %79, %65, %cst_38 {dimension_numbers = #tpu.dot_dimension_numbers<[1], [0], [0], [1], [0, 0, 1, 1], [], []>} : vector<8x8xbf16>, vector<8x32xbf16>, vector<8x32xf32> -> vector<8x32xf32>
    %81 = vector.extract_strided_slice %56 {offsets = [0, 32], sizes = [8, 32], strides = [1, 1]} : vector<8x128xf32> to vector<8x32xf32>
    %82 = arith.truncf %81 : vector<8x32xf32> to vector<8x32xbf16>
    %83 = vector.extract_strided_slice %53 {offsets = [0, 32], sizes = [8, 32], strides = [1, 1]} : vector<8x128xf32> to vector<8x32xf32>
    %84 = arith.truncf %83 : vector<8x32xf32> to vector<8x32xbf16>
    %85 = vector.extract_strided_slice %54 {offsets = [0, 32], sizes = [8, 32], strides = [1, 1]} : vector<8x128xf32> to vector<8x32xf32>
    %86 = arith.truncf %85 : vector<8x32xf32> to vector<8x32xbf16>
    %cst_39 = arith.constant dense<0.000000e+00> : vector<8x8xf32>
    %87 = tpu.matmul %82, %84, %cst_39 {dimension_numbers = #tpu.dot_dimension_numbers<[1], [1], [0], [0], [0, 0, 1, 0], [], []>} : vector<8x32xbf16>, vector<8x32xbf16>, vector<8x8xf32> -> vector<8x8xf32>
    %cst_40 = arith.constant -1.000000e+30 : f32
    %88 = vector.broadcast %cst_40 : f32 to vector<8x8xf32>
    %89 = arith.select %59, %87, %88 : vector<8x8xi1>, vector<8x8xf32>
    %cst_41 = arith.constant dense<0xFF800000> : vector<8xf32>
    %90 = vector.multi_reduction <maximumf>, %89, %cst_41 [1] : vector<8x8xf32> to vector<8xf32>
    %91 = vector.shape_cast %90 : vector<8xf32> to vector<8x1xf32>
    %92 = vector.broadcast %91 : vector<8x1xf32> to vector<8x8xf32>
    %93 = arith.subf %89, %92 : vector<8x8xf32>
    %94 = math.exp %93 : vector<8x8xf32>
    %cst_42 = arith.constant dense<0.000000e+00> : vector<8xf32>
    %95 = vector.multi_reduction <add>, %94, %cst_42 [1] : vector<8x8xf32> to vector<8xf32>
    %96 = vector.shape_cast %95 : vector<8xf32> to vector<8x1xf32>
    %97 = tpu.reciprocal %96 {approx = true} : vector<8x1xf32> -> vector<8x1xf32>
    %98 = vector.broadcast %97 : vector<8x1xf32> to vector<8x8xf32>
    %99 = arith.mulf %94, %98 : vector<8x8xf32>
    %100 = arith.truncf %99 : vector<8x8xf32> to vector<8x8xbf16>
    %cst_43 = arith.constant dense<0.000000e+00> : vector<8x32xf32>
    %101 = tpu.matmul %100, %86, %cst_43 {dimension_numbers = #tpu.dot_dimension_numbers<[1], [0], [0], [1], [0, 0, 1, 1], [], []>} : vector<8x8xbf16>, vector<8x32xbf16>, vector<8x32xf32> -> vector<8x32xf32>
    %102 = vector.extract_strided_slice %56 {offsets = [0, 64], sizes = [8, 32], strides = [1, 1]} : vector<8x128xf32> to vector<8x32xf32>
    %103 = arith.truncf %102 : vector<8x32xf32> to vector<8x32xbf16>
    %104 = vector.extract_strided_slice %53 {offsets = [0, 64], sizes = [8, 32], strides = [1, 1]} : vector<8x128xf32> to vector<8x32xf32>
    %105 = arith.truncf %104 : vector<8x32xf32> to vector<8x32xbf16>
    %106 = vector.extract_strided_slice %54 {offsets = [0, 64], sizes = [8, 32], strides = [1, 1]} : vector<8x128xf32> to vector<8x32xf32>
    %107 = arith.truncf %106 : vector<8x32xf32> to vector<8x32xbf16>
    %cst_44 = arith.constant dense<0.000000e+00> : vector<8x8xf32>
    %108 = tpu.matmul %103, %105, %cst_44 {dimension_numbers = #tpu.dot_dimension_numbers<[1], [1], [0], [0], [0, 0, 1, 0], [], []>} : vector<8x32xbf16>, vector<8x32xbf16>, vector<8x8xf32> -> vector<8x8xf32>
    %cst_45 = arith.constant -1.000000e+30 : f32
    %109 = vector.broadcast %cst_45 : f32 to vector<8x8xf32>
    %110 = arith.select %59, %108, %109 : vector<8x8xi1>, vector<8x8xf32>
    %cst_46 = arith.constant dense<0xFF800000> : vector<8xf32>
    %111 = vector.multi_reduction <maximumf>, %110, %cst_46 [1] : vector<8x8xf32> to vector<8xf32>
    %112 = vector.shape_cast %111 : vector<8xf32> to vector<8x1xf32>
    %113 = vector.broadcast %112 : vector<8x1xf32> to vector<8x8xf32>
    %114 = arith.subf %110, %113 : vector<8x8xf32>
    %115 = math.exp %114 : vector<8x8xf32>
    %cst_47 = arith.constant dense<0.000000e+00> : vector<8xf32>
    %116 = vector.multi_reduction <add>, %115, %cst_47 [1] : vector<8x8xf32> to vector<8xf32>
    %117 = vector.shape_cast %116 : vector<8xf32> to vector<8x1xf32>
    %118 = tpu.reciprocal %117 {approx = true} : vector<8x1xf32> -> vector<8x1xf32>
    %119 = vector.broadcast %118 : vector<8x1xf32> to vector<8x8xf32>
    %120 = arith.mulf %115, %119 : vector<8x8xf32>
    %121 = arith.truncf %120 : vector<8x8xf32> to vector<8x8xbf16>
    %cst_48 = arith.constant dense<0.000000e+00> : vector<8x32xf32>
    %122 = tpu.matmul %121, %107, %cst_48 {dimension_numbers = #tpu.dot_dimension_numbers<[1], [0], [0], [1], [0, 0, 1, 1], [], []>} : vector<8x8xbf16>, vector<8x32xbf16>, vector<8x32xf32> -> vector<8x32xf32>
    %123 = vector.extract_strided_slice %56 {offsets = [0, 96], sizes = [8, 32], strides = [1, 1]} : vector<8x128xf32> to vector<8x32xf32>
    %124 = arith.truncf %123 : vector<8x32xf32> to vector<8x32xbf16>
    %125 = vector.extract_strided_slice %53 {offsets = [0, 96], sizes = [8, 32], strides = [1, 1]} : vector<8x128xf32> to vector<8x32xf32>
    %126 = arith.truncf %125 : vector<8x32xf32> to vector<8x32xbf16>
    %127 = vector.extract_strided_slice %54 {offsets = [0, 96], sizes = [8, 32], strides = [1, 1]} : vector<8x128xf32> to vector<8x32xf32>
    %128 = arith.truncf %127 : vector<8x32xf32> to vector<8x32xbf16>
    %cst_49 = arith.constant dense<0.000000e+00> : vector<8x8xf32>
    %129 = tpu.matmul %124, %126, %cst_49 {dimension_numbers = #tpu.dot_dimension_numbers<[1], [1], [0], [0], [0, 0, 1, 0], [], []>} : vector<8x32xbf16>, vector<8x32xbf16>, vector<8x8xf32> -> vector<8x8xf32>
    %cst_50 = arith.constant -1.000000e+30 : f32
    %130 = vector.broadcast %cst_50 : f32 to vector<8x8xf32>
    %131 = arith.select %59, %129, %130 : vector<8x8xi1>, vector<8x8xf32>
    %cst_51 = arith.constant dense<0xFF800000> : vector<8xf32>
    %132 = vector.multi_reduction <maximumf>, %131, %cst_51 [1] : vector<8x8xf32> to vector<8xf32>
    %133 = vector.shape_cast %132 : vector<8xf32> to vector<8x1xf32>
    %134 = vector.broadcast %133 : vector<8x1xf32> to vector<8x8xf32>
    %135 = arith.subf %131, %134 : vector<8x8xf32>
    %136 = math.exp %135 : vector<8x8xf32>
    %cst_52 = arith.constant dense<0.000000e+00> : vector<8xf32>
    %137 = vector.multi_reduction <add>, %136, %cst_52 [1] : vector<8x8xf32> to vector<8xf32>
    %138 = vector.shape_cast %137 : vector<8xf32> to vector<8x1xf32>
    %139 = tpu.reciprocal %138 {approx = true} : vector<8x1xf32> -> vector<8x1xf32>
    %140 = vector.broadcast %139 : vector<8x1xf32> to vector<8x8xf32>
    %141 = arith.mulf %136, %140 : vector<8x8xf32>
    %142 = arith.truncf %141 : vector<8x8xf32> to vector<8x8xbf16>
    %cst_53 = arith.constant dense<0.000000e+00> : vector<8x32xf32>
    %143 = tpu.matmul %142, %128, %cst_53 {dimension_numbers = #tpu.dot_dimension_numbers<[1], [0], [0], [1], [0, 0, 1, 1], [], []>} : vector<8x8xbf16>, vector<8x32xbf16>, vector<8x32xf32> -> vector<8x32xf32>
    %144 = tpu.concatenate %80, %101, %122, %143 in 1 : vector<8x32xf32>, vector<8x32xf32>, vector<8x32xf32>, vector<8x32xf32> -> vector<8x128xf32>
    %145 = arith.truncf %144 : vector<8x128xf32> to vector<8x128xbf16>
    %cst_54 = arith.constant dense<0.000000e+00> : vector<8x128xf32>
    %146 = tpu.matmul %145, %42, %cst_54 {dimension_numbers = #tpu.dot_dimension_numbers<[1], [0], [0], [1], [0, 0, 1, 1], [], []>} : vector<8x128xbf16>, vector<128x128xbf16>, vector<8x128xf32> -> vector<8x128xf32>
    %147 = vector.broadcast %44 : vector<1x128xf32> to vector<8x128xf32>
    %148 = arith.addf %146, %147 : vector<8x128xf32>
    %149 = arith.addf %148, %4 : vector<8x128xf32>
    %c0_55 = arith.constant 0 : index
    %c0_56 = arith.constant 0 : index
    %c0_57 = arith.constant 0 : index
    %150 = vector.load %arg12[%c0_55, %c0_56, %c0_57] : memref<1x1x128xf32, #tpu.memory_space<vmem>>, vector<1x1x128xf32>
    %151 = vector.shape_cast %150 : vector<1x1x128xf32> to vector<1x128xf32>
    %c0_58 = arith.constant 0 : index
    %c0_59 = arith.constant 0 : index
    %c0_60 = arith.constant 0 : index
    %152 = vector.load %arg13[%c0_58, %c0_59, %c0_60] : memref<1x1x128xf32, #tpu.memory_space<vmem>>, vector<1x1x128xf32>
    %153 = vector.shape_cast %152 : vector<1x1x128xf32> to vector<1x128xf32>
    %c0_61 = arith.constant 0 : index
    %c0_62 = arith.constant 0 : index
    %c0_63 = arith.constant 0 : index
    %154 = vector.load %arg14[%c0_61, %c0_62, %c0_63] : memref<1x128x256xbf16, #tpu.memory_space<vmem>>, vector<1x128x256xbf16>
    %155 = vector.shape_cast %154 : vector<1x128x256xbf16> to vector<128x256xbf16>
    %c0_64 = arith.constant 0 : index
    %c0_65 = arith.constant 0 : index
    %c0_66 = arith.constant 0 : index
    %156 = vector.load %arg15[%c0_64, %c0_65, %c0_66] : memref<1x1x256xf32, #tpu.memory_space<vmem>>, vector<1x1x256xf32>
    %157 = vector.shape_cast %156 : vector<1x1x256xf32> to vector<1x256xf32>
    %c0_67 = arith.constant 0 : index
    %c0_68 = arith.constant 0 : index
    %c0_69 = arith.constant 0 : index
    %158 = vector.load %arg16[%c0_67, %c0_68, %c0_69] : memref<1x256x128xbf16, #tpu.memory_space<vmem>>, vector<1x256x128xbf16>
    %159 = vector.shape_cast %158 : vector<1x256x128xbf16> to vector<256x128xbf16>
    %c0_70 = arith.constant 0 : index
    %c0_71 = arith.constant 0 : index
    %c0_72 = arith.constant 0 : index
    %160 = vector.load %arg17[%c0_70, %c0_71, %c0_72] : memref<1x1x128xf32, #tpu.memory_space<vmem>>, vector<1x1x128xf32>
    %161 = vector.shape_cast %160 : vector<1x1x128xf32> to vector<1x128xf32>
    %cst_73 = arith.constant dense<0.000000e+00> : vector<8xf32>
    %162 = vector.multi_reduction <add>, %149, %cst_73 [1] : vector<8x128xf32> to vector<8xf32>
    %163 = vector.shape_cast %162 : vector<8xf32> to vector<8x1xf32>
    %cst_74 = arith.constant 1.280000e+02 : f32
    %164 = vector.broadcast %cst_74 : f32 to vector<8x1xf32>
    %165 = arith.divf %163, %164 : vector<8x1xf32>
    %166 = vector.broadcast %165 : vector<8x1xf32> to vector<8x128xf32>
    %167 = arith.subf %149, %166 : vector<8x128xf32>
    %168 = arith.mulf %167, %167 : vector<8x128xf32>
    %cst_75 = arith.constant dense<0.000000e+00> : vector<8xf32>
    %169 = vector.multi_reduction <add>, %168, %cst_75 [1] : vector<8x128xf32> to vector<8xf32>
    %170 = vector.shape_cast %169 : vector<8xf32> to vector<8x1xf32>
    %cst_76 = arith.constant 1.280000e+02 : f32
    %171 = vector.broadcast %cst_76 : f32 to vector<8x1xf32>
    %172 = arith.divf %170, %171 : vector<8x1xf32>
    %173 = vector.broadcast %165 : vector<8x1xf32> to vector<8x128xf32>
    %174 = arith.subf %149, %173 : vector<8x128xf32>
    %cst_77 = arith.constant 9.99999974E-6 : f32
    %175 = vector.broadcast %cst_77 : f32 to vector<8x1xf32>
    %176 = arith.addf %172, %175 : vector<8x1xf32>
    %177 = math.rsqrt %176 : vector<8x1xf32>
    %178 = vector.broadcast %177 : vector<8x1xf32> to vector<8x128xf32>
    %179 = arith.mulf %174, %178 : vector<8x128xf32>
    %180 = vector.broadcast %151 : vector<1x128xf32> to vector<8x128xf32>
    %181 = arith.mulf %179, %180 : vector<8x128xf32>
    %182 = vector.broadcast %153 : vector<1x128xf32> to vector<8x128xf32>
    %183 = arith.addf %181, %182 : vector<8x128xf32>
    %184 = arith.truncf %183 : vector<8x128xf32> to vector<8x128xbf16>
    %cst_78 = arith.constant dense<0.000000e+00> : vector<8x256xf32>
    %185 = tpu.matmul %184, %155, %cst_78 {dimension_numbers = #tpu.dot_dimension_numbers<[1], [0], [0], [1], [0, 0, 1, 1], [], []>} : vector<8x128xbf16>, vector<128x256xbf16>, vector<8x256xf32> -> vector<8x256xf32>
    %186 = vector.broadcast %157 : vector<1x256xf32> to vector<8x256xf32>
    %187 = arith.addf %185, %186 : vector<8x256xf32>
    %cst_79 = arith.constant 0.000000e+00 : f32
    %188 = vector.broadcast %cst_79 : f32 to vector<8x256xf32>
    %189 = arith.maximumf %187, %188 : vector<8x256xf32>
    %190 = arith.truncf %189 : vector<8x256xf32> to vector<8x256xbf16>
    %cst_80 = arith.constant dense<0.000000e+00> : vector<8x128xf32>
    %191 = tpu.matmul %190, %159, %cst_80 {dimension_numbers = #tpu.dot_dimension_numbers<[1], [0], [0], [1], [0, 0, 1, 1], [], []>} : vector<8x256xbf16>, vector<256x128xbf16>, vector<8x128xf32> -> vector<8x128xf32>
    %192 = vector.broadcast %161 : vector<1x128xf32> to vector<8x128xf32>
    %193 = arith.addf %191, %192 : vector<8x128xf32>
    %194 = arith.addf %193, %149 : vector<8x128xf32>
    %c0_81 = arith.constant 0 : index
    %c0_82 = arith.constant 0 : index
    %c0_83 = arith.constant 0 : index
    %195 = vector.load %arg20[%c0_81, %c0_82, %c0_83] : memref<1x8x128xf32, #tpu.memory_space<vmem>>, vector<1x8x128xf32>
    %196 = vector.shape_cast %195 : vector<1x8x128xf32> to vector<8x128xf32>
    %197 = vector.shape_cast %194 : vector<8x128xf32> to vector<1x8x128xf32>
    tpu.vector_store %arg20[%c0_81, %c0_82, %c0_83], %197 {strides = array<i32>} : memref<1x8x128xf32, #tpu.memory_space<vmem>>, vector<1x8x128xf32>,
    %c1_i32 = arith.constant 1 : i32
    %198 = arith.cmpi eq, %arg1, %c1_i32 : i32
    %199 = arith.extui %198 : i1 to i32
    %c0_i32_84 = arith.constant 0 : i32
    %200 = arith.cmpi ne, %199, %c0_i32_84 : i32
    scf.if %200 {
      %c0_85 = arith.constant 0 : index
      %c0_86 = arith.constant 0 : index
      %201 = vector.load %arg18[%c0_85, %c0_86] : memref<1x128xf32, #tpu.memory_space<vmem>>, vector<1x128xf32>
      %c0_87 = arith.constant 0 : index
      %c0_88 = arith.constant 0 : index
      %202 = vector.load %arg19[%c0_87, %c0_88] : memref<1x128xf32, #tpu.memory_space<vmem>>, vector<1x128xf32>
      %cst_89 = arith.constant dense<0.000000e+00> : vector<8xf32>
      %203 = vector.multi_reduction <add>, %194, %cst_89 [1] : vector<8x128xf32> to vector<8xf32>
      %204 = vector.shape_cast %203 : vector<8xf32> to vector<8x1xf32>
      %cst_90 = arith.constant 1.280000e+02 : f32
      %205 = vector.broadcast %cst_90 : f32 to vector<8x1xf32>
      %206 = arith.divf %204, %205 : vector<8x1xf32>
      %207 = vector.broadcast %206 : vector<8x1xf32> to vector<8x128xf32>
      %208 = arith.subf %194, %207 : vector<8x128xf32>
      %209 = arith.mulf %208, %208 : vector<8x128xf32>
      %cst_91 = arith.constant dense<0.000000e+00> : vector<8xf32>
      %210 = vector.multi_reduction <add>, %209, %cst_91 [1] : vector<8x128xf32> to vector<8xf32>
      %211 = vector.shape_cast %210 : vector<8xf32> to vector<8x1xf32>
      %cst_92 = arith.constant 1.280000e+02 : f32
      %212 = vector.broadcast %cst_92 : f32 to vector<8x1xf32>
      %213 = arith.divf %211, %212 : vector<8x1xf32>
      %214 = vector.broadcast %206 : vector<8x1xf32> to vector<8x128xf32>
      %215 = arith.subf %194, %214 : vector<8x128xf32>
      %cst_93 = arith.constant 9.99999974E-6 : f32
      %216 = vector.broadcast %cst_93 : f32 to vector<8x1xf32>
      %217 = arith.addf %213, %216 : vector<8x1xf32>
      %218 = math.rsqrt %217 : vector<8x1xf32>
      %219 = vector.broadcast %218 : vector<8x1xf32> to vector<8x128xf32>
      %220 = arith.mulf %215, %219 : vector<8x128xf32>
      %221 = vector.broadcast %201 : vector<1x128xf32> to vector<8x128xf32>
      %222 = arith.mulf %220, %221 : vector<8x128xf32>
      %223 = vector.broadcast %202 : vector<1x128xf32> to vector<8x128xf32>
      %224 = arith.addf %222, %223 : vector<8x128xf32>
      %c0_94 = arith.constant 0 : index
      %c0_95 = arith.constant 0 : index
      %c0_96 = arith.constant 0 : index
      %225 = vector.load %arg20[%c0_94, %c0_95, %c0_96] : memref<1x8x128xf32, #tpu.memory_space<vmem>>, vector<1x8x128xf32>
      %226 = vector.shape_cast %225 : vector<1x8x128xf32> to vector<8x128xf32>
      %227 = vector.shape_cast %224 : vector<8x128xf32> to vector<1x8x128xf32>
      tpu.vector_store %arg20[%c0_94, %c0_95, %c0_96], %227 {strides = array<i32>} : memref<1x8x128xf32, #tpu.memory_space<vmem>>, vector<1x8x128xf32>,
    } else {
    }
    return
  }
  func.func @transform_0(%arg0: i32, %arg1: i32, %arg2: memref<2xi32, #tpu.memory_space<smem>>) -> (i32, i32, i32) {
    %c0_i32 = arith.constant 0 : i32
    %c0_i32_0 = arith.constant 0 : i32
    %c0_i32_1 = arith.constant 0 : i32
    return %arg0, %c0_i32, %c0_i32_0 : i32, i32, i32
  }
  func.func @transform_1(%arg0: i32, %arg1: i32, %arg2: memref<2xi32, #tpu.memory_space<smem>>) -> (i32, i32, i32) {
    %c0_i32 = arith.constant 0 : i32
    %c0_i32_0 = arith.constant 0 : i32
    %c0_i32_1 = arith.constant 0 : i32
    return %arg1, %c0_i32, %c0_i32_0 : i32, i32, i32
  }
  func.func @transform_2(%arg0: i32, %arg1: i32, %arg2: memref<2xi32, #tpu.memory_space<smem>>) -> (i32, i32, i32) {
    %c0_i32 = arith.constant 0 : i32
    %c0_i32_0 = arith.constant 0 : i32
    %c0_i32_1 = arith.constant 0 : i32
    return %arg1, %c0_i32, %c0_i32_0 : i32, i32, i32
  }
  func.func @transform_3(%arg0: i32, %arg1: i32, %arg2: memref<2xi32, #tpu.memory_space<smem>>) -> (i32, i32, i32) {
    %c0_i32 = arith.constant 0 : i32
    %c0_i32_0 = arith.constant 0 : i32
    %c0_i32_1 = arith.constant 0 : i32
    return %arg1, %c0_i32, %c0_i32_0 : i32, i32, i32
  }
  func.func @transform_4(%arg0: i32, %arg1: i32, %arg2: memref<2xi32, #tpu.memory_space<smem>>) -> (i32, i32, i32) {
    %c0_i32 = arith.constant 0 : i32
    %c0_i32_0 = arith.constant 0 : i32
    %c0_i32_1 = arith.constant 0 : i32
    return %arg1, %c0_i32, %c0_i32_0 : i32, i32, i32
  }
  func.func @transform_5(%arg0: i32, %arg1: i32, %arg2: memref<2xi32, #tpu.memory_space<smem>>) -> (i32, i32, i32) {
    %c0_i32 = arith.constant 0 : i32
    %c0_i32_0 = arith.constant 0 : i32
    %c0_i32_1 = arith.constant 0 : i32
    return %arg1, %c0_i32, %c0_i32_0 : i32, i32, i32
  }
  func.func @transform_6(%arg0: i32, %arg1: i32, %arg2: memref<2xi32, #tpu.memory_space<smem>>) -> (i32, i32, i32) {
    %c0_i32 = arith.constant 0 : i32
    %c0_i32_0 = arith.constant 0 : i32
    %c0_i32_1 = arith.constant 0 : i32
    return %arg1, %c0_i32, %c0_i32_0 : i32, i32, i32
  }
  func.func @transform_7(%arg0: i32, %arg1: i32, %arg2: memref<2xi32, #tpu.memory_space<smem>>) -> (i32, i32, i32) {
    %c0_i32 = arith.constant 0 : i32
    %c0_i32_0 = arith.constant 0 : i32
    %c0_i32_1 = arith.constant 0 : i32
    return %arg1, %c0_i32, %c0_i32_0 : i32, i32, i32
  }
  func.func @transform_8(%arg0: i32, %arg1: i32, %arg2: memref<2xi32, #tpu.memory_space<smem>>) -> (i32, i32, i32) {
    %c0_i32 = arith.constant 0 : i32
    %c0_i32_0 = arith.constant 0 : i32
    %c0_i32_1 = arith.constant 0 : i32
    return %arg1, %c0_i32, %c0_i32_0 : i32, i32, i32
  }
  func.func @transform_9(%arg0: i32, %arg1: i32, %arg2: memref<2xi32, #tpu.memory_space<smem>>) -> (i32, i32, i32) {
    %c0_i32 = arith.constant 0 : i32
    %c0_i32_0 = arith.constant 0 : i32
    %c0_i32_1 = arith.constant 0 : i32
    return %arg1, %c0_i32, %c0_i32_0 : i32, i32, i32
  }
  func.func @transform_10(%arg0: i32, %arg1: i32, %arg2: memref<2xi32, #tpu.memory_space<smem>>) -> (i32, i32, i32) {
    %c0_i32 = arith.constant 0 : i32
    %c0_i32_0 = arith.constant 0 : i32
    %c0_i32_1 = arith.constant 0 : i32
    return %arg1, %c0_i32, %c0_i32_0 : i32, i32, i32
  }
  func.func @transform_11(%arg0: i32, %arg1: i32, %arg2: memref<2xi32, #tpu.memory_space<smem>>) -> (i32, i32, i32) {
    %c0_i32 = arith.constant 0 : i32
    %c0_i32_0 = arith.constant 0 : i32
    %c0_i32_1 = arith.constant 0 : i32
    return %arg1, %c0_i32, %c0_i32_0 : i32, i32, i32
  }
  func.func @transform_12(%arg0: i32, %arg1: i32, %arg2: memref<2xi32, #tpu.memory_space<smem>>) -> (i32, i32, i32) {
    %c0_i32 = arith.constant 0 : i32
    %c0_i32_0 = arith.constant 0 : i32
    %c0_i32_1 = arith.constant 0 : i32
    return %arg1, %c0_i32, %c0_i32_0 : i32, i32, i32
  }
  func.func @transform_13(%arg0: i32, %arg1: i32, %arg2: memref<2xi32, #tpu.memory_space<smem>>) -> (i32, i32, i32) {
    %c0_i32 = arith.constant 0 : i32
    %c0_i32_0 = arith.constant 0 : i32
    %c0_i32_1 = arith.constant 0 : i32
    return %arg1, %c0_i32, %c0_i32_0 : i32, i32, i32
  }
  func.func @transform_14(%arg0: i32, %arg1: i32, %arg2: memref<2xi32, #tpu.memory_space<smem>>) -> (i32, i32, i32) {
    %c0_i32 = arith.constant 0 : i32
    %c0_i32_0 = arith.constant 0 : i32
    %c0_i32_1 = arith.constant 0 : i32
    return %arg1, %c0_i32, %c0_i32_0 : i32, i32, i32
  }
  func.func @transform_15(%arg0: i32, %arg1: i32, %arg2: memref<2xi32, #tpu.memory_space<smem>>) -> (i32, i32) {
    %c0_i32 = arith.constant 0 : i32
    %c0_i32_0 = arith.constant 0 : i32
    %c0_i32_1 = arith.constant 0 : i32
    return %c0_i32, %c0_i32_0 : i32, i32
  }
  func.func @transform_16(%arg0: i32, %arg1: i32, %arg2: memref<2xi32, #tpu.memory_space<smem>>) -> (i32, i32) {
    %c0_i32 = arith.constant 0 : i32
    %c0_i32_0 = arith.constant 0 : i32
    %c0_i32_1 = arith.constant 0 : i32
    return %c0_i32, %c0_i32_0 : i32, i32
  }
  func.func @transform_17(%arg0: i32, %arg1: i32, %arg2: memref<2xi32, #tpu.memory_space<smem>>) -> (i32, i32, i32) {
    %c0_i32 = arith.constant 0 : i32
    %c0_i32_0 = arith.constant 0 : i32
    %c0_i32_1 = arith.constant 0 : i32
    return %arg0, %c0_i32, %c0_i32_0 : i32, i32, i32
  }
}

module attributes {stable_mosaic.version = 11 : i64} {
  func.func @_decoder_kernel(%arg0: i32, %arg1: i32, %arg2: memref<2xi32, #tpu.memory_space<smem>>, %arg3: memref<2xi32, #tpu.memory_space<smem>>, %arg4: memref<1x8x128xf32, #tpu.memory_space<vmem>>, %arg5: memref<1x8x128xf32, #tpu.memory_space<vmem>>, %arg6: memref<1x1x128xf32, #tpu.memory_space<vmem>>, %arg7: memref<1x1x128xf32, #tpu.memory_space<vmem>>, %arg8: memref<1x128x128xbf16, #tpu.memory_space<vmem>>, %arg9: memref<1x1x128xf32, #tpu.memory_space<vmem>>, %arg10: memref<1x128x256xbf16, #tpu.memory_space<vmem>>, %arg11: memref<1x1x256xf32, #tpu.memory_space<vmem>>, %arg12: memref<1x128x128xbf16, #tpu.memory_space<vmem>>, %arg13: memref<1x1x128xf32, #tpu.memory_space<vmem>>, %arg14: memref<1x1x128xf32, #tpu.memory_space<vmem>>, %arg15: memref<1x1x128xf32, #tpu.memory_space<vmem>>, %arg16: memref<1x128x128xbf16, #tpu.memory_space<vmem>>, %arg17: memref<1x1x128xf32, #tpu.memory_space<vmem>>, %arg18: memref<1x128x256xbf16, #tpu.memory_space<vmem>>, %arg19: memref<1x1x256xf32, #tpu.memory_space<vmem>>, %arg20: memref<1x128x128xbf16, #tpu.memory_space<vmem>>, %arg21: memref<1x1x128xf32, #tpu.memory_space<vmem>>, %arg22: memref<1x1x128xf32, #tpu.memory_space<vmem>>, %arg23: memref<1x1x128xf32, #tpu.memory_space<vmem>>, %arg24: memref<1x128x256xbf16, #tpu.memory_space<vmem>>, %arg25: memref<1x1x256xf32, #tpu.memory_space<vmem>>, %arg26: memref<1x256x128xbf16, #tpu.memory_space<vmem>>, %arg27: memref<1x1x128xf32, #tpu.memory_space<vmem>>, %arg28: memref<1x128xf32, #tpu.memory_space<vmem>>, %arg29: memref<1x128xf32, #tpu.memory_space<vmem>>, %arg30: memref<128x128xbf16, #tpu.memory_space<vmem>>, %arg31: memref<1x128xf32, #tpu.memory_space<vmem>>, %arg32: memref<1x8x128xf32, #tpu.memory_space<vmem>>, %arg33: memref<1x8x128xf32, #tpu.memory_space<vmem>>) attributes {dimension_semantics = [#tpu.dimension_semantics<parallel>, #tpu.dimension_semantics<arbitrary>], iteration_bounds = array<i64: 2, 2>, scalar_prefetch = 2 : i64, scratch_operands = 1 : i64, tpu.core_type = #tpu.core_type<tc>, window_params = [{transform_indices = @transform_0, window_bounds = array<i64: 1, 8, 128>}, {transform_indices = @transform_1, window_bounds = array<i64: 1, 8, 128>}, {transform_indices = @transform_2, window_bounds = array<i64: 1, 1, 128>}, {transform_indices = @transform_3, window_bounds = array<i64: 1, 1, 128>}, {transform_indices = @transform_4, window_bounds = array<i64: 1, 128, 128>}, {transform_indices = @transform_5, window_bounds = array<i64: 1, 1, 128>}, {transform_indices = @transform_6, window_bounds = array<i64: 1, 128, 256>}, {transform_indices = @transform_7, window_bounds = array<i64: 1, 1, 256>}, {transform_indices = @transform_8, window_bounds = array<i64: 1, 128, 128>}, {transform_indices = @transform_9, window_bounds = array<i64: 1, 1, 128>}, {transform_indices = @transform_10, window_bounds = array<i64: 1, 1, 128>}, {transform_indices = @transform_11, window_bounds = array<i64: 1, 1, 128>}, {transform_indices = @transform_12, window_bounds = array<i64: 1, 128, 128>}, {transform_indices = @transform_13, window_bounds = array<i64: 1, 1, 128>}, {transform_indices = @transform_14, window_bounds = array<i64: 1, 128, 256>}, {transform_indices = @transform_15, window_bounds = array<i64: 1, 1, 256>}, {transform_indices = @transform_16, window_bounds = array<i64: 1, 128, 128>}, {transform_indices = @transform_17, window_bounds = array<i64: 1, 1, 128>}, {transform_indices = @transform_18, window_bounds = array<i64: 1, 1, 128>}, {transform_indices = @transform_19, window_bounds = array<i64: 1, 1, 128>}, {transform_indices = @transform_20, window_bounds = array<i64: 1, 128, 256>}, {transform_indices = @transform_21, window_bounds = array<i64: 1, 1, 256>}, {transform_indices = @transform_22, window_bounds = array<i64: 1, 256, 128>}, {transform_indices = @transform_23, window_bounds = array<i64: 1, 1, 128>}, {pipeline_mode = #tpu.pipeline_mode<synchronous>, transform_indices = @transform_24, window_bounds = array<i64: 1, 128>}, {pipeline_mode = #tpu.pipeline_mode<synchronous>, transform_indices = @transform_25, window_bounds = array<i64: 1, 128>}, {pipeline_mode = #tpu.pipeline_mode<synchronous>, transform_indices = @transform_26, window_bounds = array<i64: 128, 128>}, {pipeline_mode = #tpu.pipeline_mode<synchronous>, transform_indices = @transform_27, window_bounds = array<i64: 1, 128>}, {transform_indices = @transform_28, window_bounds = array<i64: 1, 8, 128>}]} {
    %c0_i32 = arith.constant 0 : i32
    %0 = arith.cmpi eq, %arg1, %c0_i32 : i32
    %1 = arith.extui %0 : i1 to i32
    %c0_i32_0 = arith.constant 0 : i32
    %2 = arith.cmpi ne, %1, %c0_i32_0 : i32
    scf.if %2 {
      %c0_141 = arith.constant 0 : index
      %c0_142 = arith.constant 0 : index
      %c0_143 = arith.constant 0 : index
      %351 = vector.load %arg4[%c0_141, %c0_142, %c0_143] : memref<1x8x128xf32, #tpu.memory_space<vmem>>, vector<1x8x128xf32>
      %c0_144 = arith.constant 0 : index
      %c0_145 = arith.constant 0 : index
      %c0_146 = arith.constant 0 : index
      %352 = vector.load %arg33[%c0_144, %c0_145, %c0_146] : memref<1x8x128xf32, #tpu.memory_space<vmem>>, vector<1x8x128xf32>
      tpu.vector_store %arg33[%c0_144, %c0_145, %c0_146], %351 {strides = array<i32>} : memref<1x8x128xf32, #tpu.memory_space<vmem>>, vector<1x8x128xf32>,
    } else {
    }
    %c0 = arith.constant 0 : index
    %c0_1 = arith.constant 0 : index
    %c0_2 = arith.constant 0 : index
    %3 = vector.load %arg33[%c0, %c0_1, %c0_2] : memref<1x8x128xf32, #tpu.memory_space<vmem>>, vector<1x8x128xf32>
    %4 = vector.shape_cast %3 : vector<1x8x128xf32> to vector<8x128xf32>
    %c0_3 = arith.constant 0 : index
    %c0_4 = arith.constant 0 : index
    %c0_5 = arith.constant 0 : index
    %5 = vector.load %arg5[%c0_3, %c0_4, %c0_5] : memref<1x8x128xf32, #tpu.memory_space<vmem>>, vector<1x8x128xf32>
    %6 = vector.shape_cast %5 : vector<1x8x128xf32> to vector<8x128xf32>
    %7 = arith.index_cast %arg0 : i32 to index
    %8 = memref.load %arg2[%7] : memref<2xi32, #tpu.memory_space<smem>>
    %9 = arith.index_cast %arg0 : i32 to index
    %10 = memref.load %arg3[%9] : memref<2xi32, #tpu.memory_space<smem>>
    %c0_6 = arith.constant 0 : index
    %c0_7 = arith.constant 0 : index
    %c0_8 = arith.constant 0 : index
    %11 = vector.load %arg6[%c0_6, %c0_7, %c0_8] : memref<1x1x128xf32, #tpu.memory_space<vmem>>, vector<1x1x128xf32>
    %12 = vector.shape_cast %11 : vector<1x1x128xf32> to vector<1x128xf32>
    %c0_9 = arith.constant 0 : index
    %c0_10 = arith.constant 0 : index
    %c0_11 = arith.constant 0 : index
    %13 = vector.load %arg7[%c0_9, %c0_10, %c0_11] : memref<1x1x128xf32, #tpu.memory_space<vmem>>, vector<1x1x128xf32>
    %14 = vector.shape_cast %13 : vector<1x1x128xf32> to vector<1x128xf32>
    %cst = arith.constant dense<0.000000e+00> : vector<8xf32>
    %15 = vector.multi_reduction <add>, %4, %cst [1] : vector<8x128xf32> to vector<8xf32>
    %16 = vector.shape_cast %15 : vector<8xf32> to vector<8x1xf32>
    %cst_12 = arith.constant 1.280000e+02 : f32
    %17 = vector.broadcast %cst_12 : f32 to vector<8x1xf32>
    %18 = arith.divf %16, %17 : vector<8x1xf32>
    %19 = vector.broadcast %18 : vector<8x1xf32> to vector<8x128xf32>
    %20 = arith.subf %4, %19 : vector<8x128xf32>
    %21 = arith.mulf %20, %20 : vector<8x128xf32>
    %cst_13 = arith.constant dense<0.000000e+00> : vector<8xf32>
    %22 = vector.multi_reduction <add>, %21, %cst_13 [1] : vector<8x128xf32> to vector<8xf32>
    %23 = vector.shape_cast %22 : vector<8xf32> to vector<8x1xf32>
    %cst_14 = arith.constant 1.280000e+02 : f32
    %24 = vector.broadcast %cst_14 : f32 to vector<8x1xf32>
    %25 = arith.divf %23, %24 : vector<8x1xf32>
    %26 = vector.broadcast %18 : vector<8x1xf32> to vector<8x128xf32>
    %27 = arith.subf %4, %26 : vector<8x128xf32>
    %cst_15 = arith.constant 9.99999974E-6 : f32
    %28 = vector.broadcast %cst_15 : f32 to vector<8x1xf32>
    %29 = arith.addf %25, %28 : vector<8x1xf32>
    %30 = math.rsqrt %29 : vector<8x1xf32>
    %31 = vector.broadcast %30 : vector<8x1xf32> to vector<8x128xf32>
    %32 = arith.mulf %27, %31 : vector<8x128xf32>
    %33 = vector.broadcast %12 : vector<1x128xf32> to vector<8x128xf32>
    %34 = arith.mulf %32, %33 : vector<8x128xf32>
    %35 = vector.broadcast %14 : vector<1x128xf32> to vector<8x128xf32>
    %36 = arith.addf %34, %35 : vector<8x128xf32>
    %c0_16 = arith.constant 0 : index
    %c0_17 = arith.constant 0 : index
    %c0_18 = arith.constant 0 : index
    %37 = vector.load %arg8[%c0_16, %c0_17, %c0_18] : memref<1x128x128xbf16, #tpu.memory_space<vmem>>, vector<1x128x128xbf16>
    %38 = vector.shape_cast %37 : vector<1x128x128xbf16> to vector<128x128xbf16>
    %c0_19 = arith.constant 0 : index
    %c0_20 = arith.constant 0 : index
    %c0_21 = arith.constant 0 : index
    %39 = vector.load %arg9[%c0_19, %c0_20, %c0_21] : memref<1x1x128xf32, #tpu.memory_space<vmem>>, vector<1x1x128xf32>
    %40 = vector.shape_cast %39 : vector<1x1x128xf32> to vector<1x128xf32>
    %c0_22 = arith.constant 0 : index
    %c0_23 = arith.constant 0 : index
    %c0_24 = arith.constant 0 : index
    %41 = vector.load %arg10[%c0_22, %c0_23, %c0_24] : memref<1x128x256xbf16, #tpu.memory_space<vmem>>, vector<1x128x256xbf16>
    %42 = vector.shape_cast %41 : vector<1x128x256xbf16> to vector<128x256xbf16>
    %c0_25 = arith.constant 0 : index
    %c0_26 = arith.constant 0 : index
    %c0_27 = arith.constant 0 : index
    %43 = vector.load %arg11[%c0_25, %c0_26, %c0_27] : memref<1x1x256xf32, #tpu.memory_space<vmem>>, vector<1x1x256xf32>
    %44 = vector.shape_cast %43 : vector<1x1x256xf32> to vector<1x256xf32>
    %c0_28 = arith.constant 0 : index
    %c0_29 = arith.constant 0 : index
    %c0_30 = arith.constant 0 : index
    %45 = vector.load %arg12[%c0_28, %c0_29, %c0_30] : memref<1x128x128xbf16, #tpu.memory_space<vmem>>, vector<1x128x128xbf16>
    %46 = vector.shape_cast %45 : vector<1x128x128xbf16> to vector<128x128xbf16>
    %c0_31 = arith.constant 0 : index
    %c0_32 = arith.constant 0 : index
    %c0_33 = arith.constant 0 : index
    %47 = vector.load %arg13[%c0_31, %c0_32, %c0_33] : memref<1x1x128xf32, #tpu.memory_space<vmem>>, vector<1x1x128xf32>
    %48 = vector.shape_cast %47 : vector<1x1x128xf32> to vector<1x128xf32>
    %49 = arith.truncf %36 : vector<8x128xf32> to vector<8x128xbf16>
    %cst_34 = arith.constant dense<0.000000e+00> : vector<8x128xf32>
    %50 = tpu.matmul %49, %38, %cst_34 {dimension_numbers = #tpu.dot_dimension_numbers<[1], [0], [0], [1], [0, 0, 1, 1], [], []>} : vector<8x128xbf16>, vector<128x128xbf16>, vector<8x128xf32> -> vector<8x128xf32>
    %51 = vector.broadcast %40 : vector<1x128xf32> to vector<8x128xf32>
    %52 = arith.addf %50, %51 : vector<8x128xf32>
    %53 = arith.truncf %36 : vector<8x128xf32> to vector<8x128xbf16>
    %cst_35 = arith.constant dense<0.000000e+00> : vector<8x256xf32>
    %54 = tpu.matmul %53, %42, %cst_35 {dimension_numbers = #tpu.dot_dimension_numbers<[1], [0], [0], [1], [0, 0, 1, 1], [], []>} : vector<8x128xbf16>, vector<128x256xbf16>, vector<8x256xf32> -> vector<8x256xf32>
    %55 = vector.broadcast %44 : vector<1x256xf32> to vector<8x256xf32>
    %56 = arith.addf %54, %55 : vector<8x256xf32>
    %57 = vector.extract_strided_slice %56 {offsets = [0, 0], sizes = [8, 128], strides = [1, 1]} : vector<8x256xf32> to vector<8x128xf32>
    %58 = vector.extract_strided_slice %56 {offsets = [0, 128], sizes = [8, 128], strides = [1, 1]} : vector<8x256xf32> to vector<8x128xf32>
    %cst_36 = arith.constant 0.176776692 : f32
    %59 = vector.broadcast %cst_36 : f32 to vector<8x128xf32>
    %60 = arith.mulf %52, %59 : vector<8x128xf32>
    %61 = tpu.iota {dimensions = array<i32: 1>} : vector<8x8xi32>
    %62 = vector.broadcast %8 : i32 to vector<8x8xi32>
    %63 = arith.cmpi slt, %61, %62 : vector<8x8xi32>
    %64 = tpu.iota {dimensions = array<i32: 0>} : vector<8x8xi32>
    %65 = arith.cmpi sle, %61, %64 : vector<8x8xi32>
    %66 = arith.andi %63, %65 : vector<8x8xi1>
    %67 = vector.extract_strided_slice %60 {offsets = [0, 0], sizes = [8, 32], strides = [1, 1]} : vector<8x128xf32> to vector<8x32xf32>
    %68 = arith.truncf %67 : vector<8x32xf32> to vector<8x32xbf16>
    %69 = vector.extract_strided_slice %57 {offsets = [0, 0], sizes = [8, 32], strides = [1, 1]} : vector<8x128xf32> to vector<8x32xf32>
    %70 = arith.truncf %69 : vector<8x32xf32> to vector<8x32xbf16>
    %71 = vector.extract_strided_slice %58 {offsets = [0, 0], sizes = [8, 32], strides = [1, 1]} : vector<8x128xf32> to vector<8x32xf32>
    %72 = arith.truncf %71 : vector<8x32xf32> to vector<8x32xbf16>
    %cst_37 = arith.constant dense<0.000000e+00> : vector<8x8xf32>
    %73 = tpu.matmul %68, %70, %cst_37 {dimension_numbers = #tpu.dot_dimension_numbers<[1], [1], [0], [0], [0, 0, 1, 0], [], []>} : vector<8x32xbf16>, vector<8x32xbf16>, vector<8x8xf32> -> vector<8x8xf32>
    %cst_38 = arith.constant -1.000000e+30 : f32
    %74 = vector.broadcast %cst_38 : f32 to vector<8x8xf32>
    %75 = arith.select %66, %73, %74 : vector<8x8xi1>, vector<8x8xf32>
    %cst_39 = arith.constant dense<0xFF800000> : vector<8xf32>
    %76 = vector.multi_reduction <maximumf>, %75, %cst_39 [1] : vector<8x8xf32> to vector<8xf32>
    %77 = vector.shape_cast %76 : vector<8xf32> to vector<8x1xf32>
    %78 = vector.broadcast %77 : vector<8x1xf32> to vector<8x8xf32>
    %79 = arith.subf %75, %78 : vector<8x8xf32>
    %80 = math.exp %79 : vector<8x8xf32>
    %cst_40 = arith.constant dense<0.000000e+00> : vector<8xf32>
    %81 = vector.multi_reduction <add>, %80, %cst_40 [1] : vector<8x8xf32> to vector<8xf32>
    %82 = vector.shape_cast %81 : vector<8xf32> to vector<8x1xf32>
    %83 = tpu.reciprocal %82 {approx = true} : vector<8x1xf32> -> vector<8x1xf32>
    %84 = vector.broadcast %83 : vector<8x1xf32> to vector<8x8xf32>
    %85 = arith.mulf %80, %84 : vector<8x8xf32>
    %86 = arith.truncf %85 : vector<8x8xf32> to vector<8x8xbf16>
    %cst_41 = arith.constant dense<0.000000e+00> : vector<8x32xf32>
    %87 = tpu.matmul %86, %72, %cst_41 {dimension_numbers = #tpu.dot_dimension_numbers<[1], [0], [0], [1], [0, 0, 1, 1], [], []>} : vector<8x8xbf16>, vector<8x32xbf16>, vector<8x32xf32> -> vector<8x32xf32>
    %88 = vector.extract_strided_slice %60 {offsets = [0, 32], sizes = [8, 32], strides = [1, 1]} : vector<8x128xf32> to vector<8x32xf32>
    %89 = arith.truncf %88 : vector<8x32xf32> to vector<8x32xbf16>
    %90 = vector.extract_strided_slice %57 {offsets = [0, 32], sizes = [8, 32], strides = [1, 1]} : vector<8x128xf32> to vector<8x32xf32>
    %91 = arith.truncf %90 : vector<8x32xf32> to vector<8x32xbf16>
    %92 = vector.extract_strided_slice %58 {offsets = [0, 32], sizes = [8, 32], strides = [1, 1]} : vector<8x128xf32> to vector<8x32xf32>
    %93 = arith.truncf %92 : vector<8x32xf32> to vector<8x32xbf16>
    %cst_42 = arith.constant dense<0.000000e+00> : vector<8x8xf32>
    %94 = tpu.matmul %89, %91, %cst_42 {dimension_numbers = #tpu.dot_dimension_numbers<[1], [1], [0], [0], [0, 0, 1, 0], [], []>} : vector<8x32xbf16>, vector<8x32xbf16>, vector<8x8xf32> -> vector<8x8xf32>
    %cst_43 = arith.constant -1.000000e+30 : f32
    %95 = vector.broadcast %cst_43 : f32 to vector<8x8xf32>
    %96 = arith.select %66, %94, %95 : vector<8x8xi1>, vector<8x8xf32>
    %cst_44 = arith.constant dense<0xFF800000> : vector<8xf32>
    %97 = vector.multi_reduction <maximumf>, %96, %cst_44 [1] : vector<8x8xf32> to vector<8xf32>
    %98 = vector.shape_cast %97 : vector<8xf32> to vector<8x1xf32>
    %99 = vector.broadcast %98 : vector<8x1xf32> to vector<8x8xf32>
    %100 = arith.subf %96, %99 : vector<8x8xf32>
    %101 = math.exp %100 : vector<8x8xf32>
    %cst_45 = arith.constant dense<0.000000e+00> : vector<8xf32>
    %102 = vector.multi_reduction <add>, %101, %cst_45 [1] : vector<8x8xf32> to vector<8xf32>
    %103 = vector.shape_cast %102 : vector<8xf32> to vector<8x1xf32>
    %104 = tpu.reciprocal %103 {approx = true} : vector<8x1xf32> -> vector<8x1xf32>
    %105 = vector.broadcast %104 : vector<8x1xf32> to vector<8x8xf32>
    %106 = arith.mulf %101, %105 : vector<8x8xf32>
    %107 = arith.truncf %106 : vector<8x8xf32> to vector<8x8xbf16>
    %cst_46 = arith.constant dense<0.000000e+00> : vector<8x32xf32>
    %108 = tpu.matmul %107, %93, %cst_46 {dimension_numbers = #tpu.dot_dimension_numbers<[1], [0], [0], [1], [0, 0, 1, 1], [], []>} : vector<8x8xbf16>, vector<8x32xbf16>, vector<8x32xf32> -> vector<8x32xf32>
    %109 = vector.extract_strided_slice %60 {offsets = [0, 64], sizes = [8, 32], strides = [1, 1]} : vector<8x128xf32> to vector<8x32xf32>
    %110 = arith.truncf %109 : vector<8x32xf32> to vector<8x32xbf16>
    %111 = vector.extract_strided_slice %57 {offsets = [0, 64], sizes = [8, 32], strides = [1, 1]} : vector<8x128xf32> to vector<8x32xf32>
    %112 = arith.truncf %111 : vector<8x32xf32> to vector<8x32xbf16>
    %113 = vector.extract_strided_slice %58 {offsets = [0, 64], sizes = [8, 32], strides = [1, 1]} : vector<8x128xf32> to vector<8x32xf32>
    %114 = arith.truncf %113 : vector<8x32xf32> to vector<8x32xbf16>
    %cst_47 = arith.constant dense<0.000000e+00> : vector<8x8xf32>
    %115 = tpu.matmul %110, %112, %cst_47 {dimension_numbers = #tpu.dot_dimension_numbers<[1], [1], [0], [0], [0, 0, 1, 0], [], []>} : vector<8x32xbf16>, vector<8x32xbf16>, vector<8x8xf32> -> vector<8x8xf32>
    %cst_48 = arith.constant -1.000000e+30 : f32
    %116 = vector.broadcast %cst_48 : f32 to vector<8x8xf32>
    %117 = arith.select %66, %115, %116 : vector<8x8xi1>, vector<8x8xf32>
    %cst_49 = arith.constant dense<0xFF800000> : vector<8xf32>
    %118 = vector.multi_reduction <maximumf>, %117, %cst_49 [1] : vector<8x8xf32> to vector<8xf32>
    %119 = vector.shape_cast %118 : vector<8xf32> to vector<8x1xf32>
    %120 = vector.broadcast %119 : vector<8x1xf32> to vector<8x8xf32>
    %121 = arith.subf %117, %120 : vector<8x8xf32>
    %122 = math.exp %121 : vector<8x8xf32>
    %cst_50 = arith.constant dense<0.000000e+00> : vector<8xf32>
    %123 = vector.multi_reduction <add>, %122, %cst_50 [1] : vector<8x8xf32> to vector<8xf32>
    %124 = vector.shape_cast %123 : vector<8xf32> to vector<8x1xf32>
    %125 = tpu.reciprocal %124 {approx = true} : vector<8x1xf32> -> vector<8x1xf32>
    %126 = vector.broadcast %125 : vector<8x1xf32> to vector<8x8xf32>
    %127 = arith.mulf %122, %126 : vector<8x8xf32>
    %128 = arith.truncf %127 : vector<8x8xf32> to vector<8x8xbf16>
    %cst_51 = arith.constant dense<0.000000e+00> : vector<8x32xf32>
    %129 = tpu.matmul %128, %114, %cst_51 {dimension_numbers = #tpu.dot_dimension_numbers<[1], [0], [0], [1], [0, 0, 1, 1], [], []>} : vector<8x8xbf16>, vector<8x32xbf16>, vector<8x32xf32> -> vector<8x32xf32>
    %130 = vector.extract_strided_slice %60 {offsets = [0, 96], sizes = [8, 32], strides = [1, 1]} : vector<8x128xf32> to vector<8x32xf32>
    %131 = arith.truncf %130 : vector<8x32xf32> to vector<8x32xbf16>
    %132 = vector.extract_strided_slice %57 {offsets = [0, 96], sizes = [8, 32], strides = [1, 1]} : vector<8x128xf32> to vector<8x32xf32>
    %133 = arith.truncf %132 : vector<8x32xf32> to vector<8x32xbf16>
    %134 = vector.extract_strided_slice %58 {offsets = [0, 96], sizes = [8, 32], strides = [1, 1]} : vector<8x128xf32> to vector<8x32xf32>
    %135 = arith.truncf %134 : vector<8x32xf32> to vector<8x32xbf16>
    %cst_52 = arith.constant dense<0.000000e+00> : vector<8x8xf32>
    %136 = tpu.matmul %131, %133, %cst_52 {dimension_numbers = #tpu.dot_dimension_numbers<[1], [1], [0], [0], [0, 0, 1, 0], [], []>} : vector<8x32xbf16>, vector<8x32xbf16>, vector<8x8xf32> -> vector<8x8xf32>
    %cst_53 = arith.constant -1.000000e+30 : f32
    %137 = vector.broadcast %cst_53 : f32 to vector<8x8xf32>
    %138 = arith.select %66, %136, %137 : vector<8x8xi1>, vector<8x8xf32>
    %cst_54 = arith.constant dense<0xFF800000> : vector<8xf32>
    %139 = vector.multi_reduction <maximumf>, %138, %cst_54 [1] : vector<8x8xf32> to vector<8xf32>
    %140 = vector.shape_cast %139 : vector<8xf32> to vector<8x1xf32>
    %141 = vector.broadcast %140 : vector<8x1xf32> to vector<8x8xf32>
    %142 = arith.subf %138, %141 : vector<8x8xf32>
    %143 = math.exp %142 : vector<8x8xf32>
    %cst_55 = arith.constant dense<0.000000e+00> : vector<8xf32>
    %144 = vector.multi_reduction <add>, %143, %cst_55 [1] : vector<8x8xf32> to vector<8xf32>
    %145 = vector.shape_cast %144 : vector<8xf32> to vector<8x1xf32>
    %146 = tpu.reciprocal %145 {approx = true} : vector<8x1xf32> -> vector<8x1xf32>
    %147 = vector.broadcast %146 : vector<8x1xf32> to vector<8x8xf32>
    %148 = arith.mulf %143, %147 : vector<8x8xf32>
    %149 = arith.truncf %148 : vector<8x8xf32> to vector<8x8xbf16>
    %cst_56 = arith.constant dense<0.000000e+00> : vector<8x32xf32>
    %150 = tpu.matmul %149, %135, %cst_56 {dimension_numbers = #tpu.dot_dimension_numbers<[1], [0], [0], [1], [0, 0, 1, 1], [], []>} : vector<8x8xbf16>, vector<8x32xbf16>, vector<8x32xf32> -> vector<8x32xf32>
    %151 = tpu.concatenate %87, %108, %129, %150 in 1 : vector<8x32xf32>, vector<8x32xf32>, vector<8x32xf32>, vector<8x32xf32> -> vector<8x128xf32>
    %152 = arith.truncf %151 : vector<8x128xf32> to vector<8x128xbf16>
    %cst_57 = arith.constant dense<0.000000e+00> : vector<8x128xf32>
    %153 = tpu.matmul %152, %46, %cst_57 {dimension_numbers = #tpu.dot_dimension_numbers<[1], [0], [0], [1], [0, 0, 1, 1], [], []>} : vector<8x128xbf16>, vector<128x128xbf16>, vector<8x128xf32> -> vector<8x128xf32>
    %154 = vector.broadcast %48 : vector<1x128xf32> to vector<8x128xf32>
    %155 = arith.addf %153, %154 : vector<8x128xf32>
    %156 = arith.addf %155, %4 : vector<8x128xf32>
    %c0_58 = arith.constant 0 : index
    %c0_59 = arith.constant 0 : index
    %c0_60 = arith.constant 0 : index
    %157 = vector.load %arg14[%c0_58, %c0_59, %c0_60] : memref<1x1x128xf32, #tpu.memory_space<vmem>>, vector<1x1x128xf32>
    %158 = vector.shape_cast %157 : vector<1x1x128xf32> to vector<1x128xf32>
    %c0_61 = arith.constant 0 : index
    %c0_62 = arith.constant 0 : index
    %c0_63 = arith.constant 0 : index
    %159 = vector.load %arg15[%c0_61, %c0_62, %c0_63] : memref<1x1x128xf32, #tpu.memory_space<vmem>>, vector<1x1x128xf32>
    %160 = vector.shape_cast %159 : vector<1x1x128xf32> to vector<1x128xf32>
    %cst_64 = arith.constant dense<0.000000e+00> : vector<8xf32>
    %161 = vector.multi_reduction <add>, %156, %cst_64 [1] : vector<8x128xf32> to vector<8xf32>
    %162 = vector.shape_cast %161 : vector<8xf32> to vector<8x1xf32>
    %cst_65 = arith.constant 1.280000e+02 : f32
    %163 = vector.broadcast %cst_65 : f32 to vector<8x1xf32>
    %164 = arith.divf %162, %163 : vector<8x1xf32>
    %165 = vector.broadcast %164 : vector<8x1xf32> to vector<8x128xf32>
    %166 = arith.subf %156, %165 : vector<8x128xf32>
    %167 = arith.mulf %166, %166 : vector<8x128xf32>
    %cst_66 = arith.constant dense<0.000000e+00> : vector<8xf32>
    %168 = vector.multi_reduction <add>, %167, %cst_66 [1] : vector<8x128xf32> to vector<8xf32>
    %169 = vector.shape_cast %168 : vector<8xf32> to vector<8x1xf32>
    %cst_67 = arith.constant 1.280000e+02 : f32
    %170 = vector.broadcast %cst_67 : f32 to vector<8x1xf32>
    %171 = arith.divf %169, %170 : vector<8x1xf32>
    %172 = vector.broadcast %164 : vector<8x1xf32> to vector<8x128xf32>
    %173 = arith.subf %156, %172 : vector<8x128xf32>
    %cst_68 = arith.constant 9.99999974E-6 : f32
    %174 = vector.broadcast %cst_68 : f32 to vector<8x1xf32>
    %175 = arith.addf %171, %174 : vector<8x1xf32>
    %176 = math.rsqrt %175 : vector<8x1xf32>
    %177 = vector.broadcast %176 : vector<8x1xf32> to vector<8x128xf32>
    %178 = arith.mulf %173, %177 : vector<8x128xf32>
    %179 = vector.broadcast %158 : vector<1x128xf32> to vector<8x128xf32>
    %180 = arith.mulf %178, %179 : vector<8x128xf32>
    %181 = vector.broadcast %160 : vector<1x128xf32> to vector<8x128xf32>
    %182 = arith.addf %180, %181 : vector<8x128xf32>
    %c0_69 = arith.constant 0 : index
    %c0_70 = arith.constant 0 : index
    %c0_71 = arith.constant 0 : index
    %183 = vector.load %arg16[%c0_69, %c0_70, %c0_71] : memref<1x128x128xbf16, #tpu.memory_space<vmem>>, vector<1x128x128xbf16>
    %184 = vector.shape_cast %183 : vector<1x128x128xbf16> to vector<128x128xbf16>
    %c0_72 = arith.constant 0 : index
    %c0_73 = arith.constant 0 : index
    %c0_74 = arith.constant 0 : index
    %185 = vector.load %arg17[%c0_72, %c0_73, %c0_74] : memref<1x1x128xf32, #tpu.memory_space<vmem>>, vector<1x1x128xf32>
    %186 = vector.shape_cast %185 : vector<1x1x128xf32> to vector<1x128xf32>
    %c0_75 = arith.constant 0 : index
    %c0_76 = arith.constant 0 : index
    %c0_77 = arith.constant 0 : index
    %187 = vector.load %arg18[%c0_75, %c0_76, %c0_77] : memref<1x128x256xbf16, #tpu.memory_space<vmem>>, vector<1x128x256xbf16>
    %188 = vector.shape_cast %187 : vector<1x128x256xbf16> to vector<128x256xbf16>
    %c0_78 = arith.constant 0 : index
    %c0_79 = arith.constant 0 : index
    %c0_80 = arith.constant 0 : index
    %189 = vector.load %arg19[%c0_78, %c0_79, %c0_80] : memref<1x1x256xf32, #tpu.memory_space<vmem>>, vector<1x1x256xf32>
    %190 = vector.shape_cast %189 : vector<1x1x256xf32> to vector<1x256xf32>
    %c0_81 = arith.constant 0 : index
    %c0_82 = arith.constant 0 : index
    %c0_83 = arith.constant 0 : index
    %191 = vector.load %arg20[%c0_81, %c0_82, %c0_83] : memref<1x128x128xbf16, #tpu.memory_space<vmem>>, vector<1x128x128xbf16>
    %192 = vector.shape_cast %191 : vector<1x128x128xbf16> to vector<128x128xbf16>
    %c0_84 = arith.constant 0 : index
    %c0_85 = arith.constant 0 : index
    %c0_86 = arith.constant 0 : index
    %193 = vector.load %arg21[%c0_84, %c0_85, %c0_86] : memref<1x1x128xf32, #tpu.memory_space<vmem>>, vector<1x1x128xf32>
    %194 = vector.shape_cast %193 : vector<1x1x128xf32> to vector<1x128xf32>
    %195 = arith.truncf %182 : vector<8x128xf32> to vector<8x128xbf16>
    %cst_87 = arith.constant dense<0.000000e+00> : vector<8x128xf32>
    %196 = tpu.matmul %195, %184, %cst_87 {dimension_numbers = #tpu.dot_dimension_numbers<[1], [0], [0], [1], [0, 0, 1, 1], [], []>} : vector<8x128xbf16>, vector<128x128xbf16>, vector<8x128xf32> -> vector<8x128xf32>
    %197 = vector.broadcast %186 : vector<1x128xf32> to vector<8x128xf32>
    %198 = arith.addf %196, %197 : vector<8x128xf32>
    %199 = arith.truncf %6 : vector<8x128xf32> to vector<8x128xbf16>
    %cst_88 = arith.constant dense<0.000000e+00> : vector<8x256xf32>
    %200 = tpu.matmul %199, %188, %cst_88 {dimension_numbers = #tpu.dot_dimension_numbers<[1], [0], [0], [1], [0, 0, 1, 1], [], []>} : vector<8x128xbf16>, vector<128x256xbf16>, vector<8x256xf32> -> vector<8x256xf32>
    %201 = vector.broadcast %190 : vector<1x256xf32> to vector<8x256xf32>
    %202 = arith.addf %200, %201 : vector<8x256xf32>
    %203 = vector.extract_strided_slice %202 {offsets = [0, 0], sizes = [8, 128], strides = [1, 1]} : vector<8x256xf32> to vector<8x128xf32>
    %204 = vector.extract_strided_slice %202 {offsets = [0, 128], sizes = [8, 128], strides = [1, 1]} : vector<8x256xf32> to vector<8x128xf32>
    %cst_89 = arith.constant 0.176776692 : f32
    %205 = vector.broadcast %cst_89 : f32 to vector<8x128xf32>
    %206 = arith.mulf %198, %205 : vector<8x128xf32>
    %207 = tpu.iota {dimensions = array<i32: 1>} : vector<8x8xi32>
    %208 = vector.broadcast %10 : i32 to vector<8x8xi32>
    %209 = arith.cmpi slt, %207, %208 : vector<8x8xi32>
    %210 = vector.extract_strided_slice %206 {offsets = [0, 0], sizes = [8, 32], strides = [1, 1]} : vector<8x128xf32> to vector<8x32xf32>
    %211 = arith.truncf %210 : vector<8x32xf32> to vector<8x32xbf16>
    %212 = vector.extract_strided_slice %203 {offsets = [0, 0], sizes = [8, 32], strides = [1, 1]} : vector<8x128xf32> to vector<8x32xf32>
    %213 = arith.truncf %212 : vector<8x32xf32> to vector<8x32xbf16>
    %214 = vector.extract_strided_slice %204 {offsets = [0, 0], sizes = [8, 32], strides = [1, 1]} : vector<8x128xf32> to vector<8x32xf32>
    %215 = arith.truncf %214 : vector<8x32xf32> to vector<8x32xbf16>
    %cst_90 = arith.constant dense<0.000000e+00> : vector<8x8xf32>
    %216 = tpu.matmul %211, %213, %cst_90 {dimension_numbers = #tpu.dot_dimension_numbers<[1], [1], [0], [0], [0, 0, 1, 0], [], []>} : vector<8x32xbf16>, vector<8x32xbf16>, vector<8x8xf32> -> vector<8x8xf32>
    %cst_91 = arith.constant -1.000000e+30 : f32
    %217 = vector.broadcast %cst_91 : f32 to vector<8x8xf32>
    %218 = arith.select %209, %216, %217 : vector<8x8xi1>, vector<8x8xf32>
    %cst_92 = arith.constant dense<0xFF800000> : vector<8xf32>
    %219 = vector.multi_reduction <maximumf>, %218, %cst_92 [1] : vector<8x8xf32> to vector<8xf32>
    %220 = vector.shape_cast %219 : vector<8xf32> to vector<8x1xf32>
    %221 = vector.broadcast %220 : vector<8x1xf32> to vector<8x8xf32>
    %222 = arith.subf %218, %221 : vector<8x8xf32>
    %223 = math.exp %222 : vector<8x8xf32>
    %cst_93 = arith.constant dense<0.000000e+00> : vector<8xf32>
    %224 = vector.multi_reduction <add>, %223, %cst_93 [1] : vector<8x8xf32> to vector<8xf32>
    %225 = vector.shape_cast %224 : vector<8xf32> to vector<8x1xf32>
    %226 = tpu.reciprocal %225 {approx = true} : vector<8x1xf32> -> vector<8x1xf32>
    %227 = vector.broadcast %226 : vector<8x1xf32> to vector<8x8xf32>
    %228 = arith.mulf %223, %227 : vector<8x8xf32>
    %229 = arith.truncf %228 : vector<8x8xf32> to vector<8x8xbf16>
    %cst_94 = arith.constant dense<0.000000e+00> : vector<8x32xf32>
    %230 = tpu.matmul %229, %215, %cst_94 {dimension_numbers = #tpu.dot_dimension_numbers<[1], [0], [0], [1], [0, 0, 1, 1], [], []>} : vector<8x8xbf16>, vector<8x32xbf16>, vector<8x32xf32> -> vector<8x32xf32>
    %231 = vector.extract_strided_slice %206 {offsets = [0, 32], sizes = [8, 32], strides = [1, 1]} : vector<8x128xf32> to vector<8x32xf32>
    %232 = arith.truncf %231 : vector<8x32xf32> to vector<8x32xbf16>
    %233 = vector.extract_strided_slice %203 {offsets = [0, 32], sizes = [8, 32], strides = [1, 1]} : vector<8x128xf32> to vector<8x32xf32>
    %234 = arith.truncf %233 : vector<8x32xf32> to vector<8x32xbf16>
    %235 = vector.extract_strided_slice %204 {offsets = [0, 32], sizes = [8, 32], strides = [1, 1]} : vector<8x128xf32> to vector<8x32xf32>
    %236 = arith.truncf %235 : vector<8x32xf32> to vector<8x32xbf16>
    %cst_95 = arith.constant dense<0.000000e+00> : vector<8x8xf32>
    %237 = tpu.matmul %232, %234, %cst_95 {dimension_numbers = #tpu.dot_dimension_numbers<[1], [1], [0], [0], [0, 0, 1, 0], [], []>} : vector<8x32xbf16>, vector<8x32xbf16>, vector<8x8xf32> -> vector<8x8xf32>
    %cst_96 = arith.constant -1.000000e+30 : f32
    %238 = vector.broadcast %cst_96 : f32 to vector<8x8xf32>
    %239 = arith.select %209, %237, %238 : vector<8x8xi1>, vector<8x8xf32>
    %cst_97 = arith.constant dense<0xFF800000> : vector<8xf32>
    %240 = vector.multi_reduction <maximumf>, %239, %cst_97 [1] : vector<8x8xf32> to vector<8xf32>
    %241 = vector.shape_cast %240 : vector<8xf32> to vector<8x1xf32>
    %242 = vector.broadcast %241 : vector<8x1xf32> to vector<8x8xf32>
    %243 = arith.subf %239, %242 : vector<8x8xf32>
    %244 = math.exp %243 : vector<8x8xf32>
    %cst_98 = arith.constant dense<0.000000e+00> : vector<8xf32>
    %245 = vector.multi_reduction <add>, %244, %cst_98 [1] : vector<8x8xf32> to vector<8xf32>
    %246 = vector.shape_cast %245 : vector<8xf32> to vector<8x1xf32>
    %247 = tpu.reciprocal %246 {approx = true} : vector<8x1xf32> -> vector<8x1xf32>
    %248 = vector.broadcast %247 : vector<8x1xf32> to vector<8x8xf32>
    %249 = arith.mulf %244, %248 : vector<8x8xf32>
    %250 = arith.truncf %249 : vector<8x8xf32> to vector<8x8xbf16>
    %cst_99 = arith.constant dense<0.000000e+00> : vector<8x32xf32>
    %251 = tpu.matmul %250, %236, %cst_99 {dimension_numbers = #tpu.dot_dimension_numbers<[1], [0], [0], [1], [0, 0, 1, 1], [], []>} : vector<8x8xbf16>, vector<8x32xbf16>, vector<8x32xf32> -> vector<8x32xf32>
    %252 = vector.extract_strided_slice %206 {offsets = [0, 64], sizes = [8, 32], strides = [1, 1]} : vector<8x128xf32> to vector<8x32xf32>
    %253 = arith.truncf %252 : vector<8x32xf32> to vector<8x32xbf16>
    %254 = vector.extract_strided_slice %203 {offsets = [0, 64], sizes = [8, 32], strides = [1, 1]} : vector<8x128xf32> to vector<8x32xf32>
    %255 = arith.truncf %254 : vector<8x32xf32> to vector<8x32xbf16>
    %256 = vector.extract_strided_slice %204 {offsets = [0, 64], sizes = [8, 32], strides = [1, 1]} : vector<8x128xf32> to vector<8x32xf32>
    %257 = arith.truncf %256 : vector<8x32xf32> to vector<8x32xbf16>
    %cst_100 = arith.constant dense<0.000000e+00> : vector<8x8xf32>
    %258 = tpu.matmul %253, %255, %cst_100 {dimension_numbers = #tpu.dot_dimension_numbers<[1], [1], [0], [0], [0, 0, 1, 0], [], []>} : vector<8x32xbf16>, vector<8x32xbf16>, vector<8x8xf32> -> vector<8x8xf32>
    %cst_101 = arith.constant -1.000000e+30 : f32
    %259 = vector.broadcast %cst_101 : f32 to vector<8x8xf32>
    %260 = arith.select %209, %258, %259 : vector<8x8xi1>, vector<8x8xf32>
    %cst_102 = arith.constant dense<0xFF800000> : vector<8xf32>
    %261 = vector.multi_reduction <maximumf>, %260, %cst_102 [1] : vector<8x8xf32> to vector<8xf32>
    %262 = vector.shape_cast %261 : vector<8xf32> to vector<8x1xf32>
    %263 = vector.broadcast %262 : vector<8x1xf32> to vector<8x8xf32>
    %264 = arith.subf %260, %263 : vector<8x8xf32>
    %265 = math.exp %264 : vector<8x8xf32>
    %cst_103 = arith.constant dense<0.000000e+00> : vector<8xf32>
    %266 = vector.multi_reduction <add>, %265, %cst_103 [1] : vector<8x8xf32> to vector<8xf32>
    %267 = vector.shape_cast %266 : vector<8xf32> to vector<8x1xf32>
    %268 = tpu.reciprocal %267 {approx = true} : vector<8x1xf32> -> vector<8x1xf32>
    %269 = vector.broadcast %268 : vector<8x1xf32> to vector<8x8xf32>
    %270 = arith.mulf %265, %269 : vector<8x8xf32>
    %271 = arith.truncf %270 : vector<8x8xf32> to vector<8x8xbf16>
    %cst_104 = arith.constant dense<0.000000e+00> : vector<8x32xf32>
    %272 = tpu.matmul %271, %257, %cst_104 {dimension_numbers = #tpu.dot_dimension_numbers<[1], [0], [0], [1], [0, 0, 1, 1], [], []>} : vector<8x8xbf16>, vector<8x32xbf16>, vector<8x32xf32> -> vector<8x32xf32>
    %273 = vector.extract_strided_slice %206 {offsets = [0, 96], sizes = [8, 32], strides = [1, 1]} : vector<8x128xf32> to vector<8x32xf32>
    %274 = arith.truncf %273 : vector<8x32xf32> to vector<8x32xbf16>
    %275 = vector.extract_strided_slice %203 {offsets = [0, 96], sizes = [8, 32], strides = [1, 1]} : vector<8x128xf32> to vector<8x32xf32>
    %276 = arith.truncf %275 : vector<8x32xf32> to vector<8x32xbf16>
    %277 = vector.extract_strided_slice %204 {offsets = [0, 96], sizes = [8, 32], strides = [1, 1]} : vector<8x128xf32> to vector<8x32xf32>
    %278 = arith.truncf %277 : vector<8x32xf32> to vector<8x32xbf16>
    %cst_105 = arith.constant dense<0.000000e+00> : vector<8x8xf32>
    %279 = tpu.matmul %274, %276, %cst_105 {dimension_numbers = #tpu.dot_dimension_numbers<[1], [1], [0], [0], [0, 0, 1, 0], [], []>} : vector<8x32xbf16>, vector<8x32xbf16>, vector<8x8xf32> -> vector<8x8xf32>
    %cst_106 = arith.constant -1.000000e+30 : f32
    %280 = vector.broadcast %cst_106 : f32 to vector<8x8xf32>
    %281 = arith.select %209, %279, %280 : vector<8x8xi1>, vector<8x8xf32>
    %cst_107 = arith.constant dense<0xFF800000> : vector<8xf32>
    %282 = vector.multi_reduction <maximumf>, %281, %cst_107 [1] : vector<8x8xf32> to vector<8xf32>
    %283 = vector.shape_cast %282 : vector<8xf32> to vector<8x1xf32>
    %284 = vector.broadcast %283 : vector<8x1xf32> to vector<8x8xf32>
    %285 = arith.subf %281, %284 : vector<8x8xf32>
    %286 = math.exp %285 : vector<8x8xf32>
    %cst_108 = arith.constant dense<0.000000e+00> : vector<8xf32>
    %287 = vector.multi_reduction <add>, %286, %cst_108 [1] : vector<8x8xf32> to vector<8xf32>
    %288 = vector.shape_cast %287 : vector<8xf32> to vector<8x1xf32>
    %289 = tpu.reciprocal %288 {approx = true} : vector<8x1xf32> -> vector<8x1xf32>
    %290 = vector.broadcast %289 : vector<8x1xf32> to vector<8x8xf32>
    %291 = arith.mulf %286, %290 : vector<8x8xf32>
    %292 = arith.truncf %291 : vector<8x8xf32> to vector<8x8xbf16>
    %cst_109 = arith.constant dense<0.000000e+00> : vector<8x32xf32>
    %293 = tpu.matmul %292, %278, %cst_109 {dimension_numbers = #tpu.dot_dimension_numbers<[1], [0], [0], [1], [0, 0, 1, 1], [], []>} : vector<8x8xbf16>, vector<8x32xbf16>, vector<8x32xf32> -> vector<8x32xf32>
    %294 = tpu.concatenate %230, %251, %272, %293 in 1 : vector<8x32xf32>, vector<8x32xf32>, vector<8x32xf32>, vector<8x32xf32> -> vector<8x128xf32>
    %295 = arith.truncf %294 : vector<8x128xf32> to vector<8x128xbf16>
    %cst_110 = arith.constant dense<0.000000e+00> : vector<8x128xf32>
    %296 = tpu.matmul %295, %192, %cst_110 {dimension_numbers = #tpu.dot_dimension_numbers<[1], [0], [0], [1], [0, 0, 1, 1], [], []>} : vector<8x128xbf16>, vector<128x128xbf16>, vector<8x128xf32> -> vector<8x128xf32>
    %297 = vector.broadcast %194 : vector<1x128xf32> to vector<8x128xf32>
    %298 = arith.addf %296, %297 : vector<8x128xf32>
    %299 = arith.addf %298, %156 : vector<8x128xf32>
    %c0_111 = arith.constant 0 : index
    %c0_112 = arith.constant 0 : index
    %c0_113 = arith.constant 0 : index
    %300 = vector.load %arg22[%c0_111, %c0_112, %c0_113] : memref<1x1x128xf32, #tpu.memory_space<vmem>>, vector<1x1x128xf32>
    %301 = vector.shape_cast %300 : vector<1x1x128xf32> to vector<1x128xf32>
    %c0_114 = arith.constant 0 : index
    %c0_115 = arith.constant 0 : index
    %c0_116 = arith.constant 0 : index
    %302 = vector.load %arg23[%c0_114, %c0_115, %c0_116] : memref<1x1x128xf32, #tpu.memory_space<vmem>>, vector<1x1x128xf32>
    %303 = vector.shape_cast %302 : vector<1x1x128xf32> to vector<1x128xf32>
    %c0_117 = arith.constant 0 : index
    %c0_118 = arith.constant 0 : index
    %c0_119 = arith.constant 0 : index
    %304 = vector.load %arg24[%c0_117, %c0_118, %c0_119] : memref<1x128x256xbf16, #tpu.memory_space<vmem>>, vector<1x128x256xbf16>
    %305 = vector.shape_cast %304 : vector<1x128x256xbf16> to vector<128x256xbf16>
    %c0_120 = arith.constant 0 : index
    %c0_121 = arith.constant 0 : index
    %c0_122 = arith.constant 0 : index
    %306 = vector.load %arg25[%c0_120, %c0_121, %c0_122] : memref<1x1x256xf32, #tpu.memory_space<vmem>>, vector<1x1x256xf32>
    %307 = vector.shape_cast %306 : vector<1x1x256xf32> to vector<1x256xf32>
    %c0_123 = arith.constant 0 : index
    %c0_124 = arith.constant 0 : index
    %c0_125 = arith.constant 0 : index
    %308 = vector.load %arg26[%c0_123, %c0_124, %c0_125] : memref<1x256x128xbf16, #tpu.memory_space<vmem>>, vector<1x256x128xbf16>
    %309 = vector.shape_cast %308 : vector<1x256x128xbf16> to vector<256x128xbf16>
    %c0_126 = arith.constant 0 : index
    %c0_127 = arith.constant 0 : index
    %c0_128 = arith.constant 0 : index
    %310 = vector.load %arg27[%c0_126, %c0_127, %c0_128] : memref<1x1x128xf32, #tpu.memory_space<vmem>>, vector<1x1x128xf32>
    %311 = vector.shape_cast %310 : vector<1x1x128xf32> to vector<1x128xf32>
    %cst_129 = arith.constant dense<0.000000e+00> : vector<8xf32>
    %312 = vector.multi_reduction <add>, %299, %cst_129 [1] : vector<8x128xf32> to vector<8xf32>
    %313 = vector.shape_cast %312 : vector<8xf32> to vector<8x1xf32>
    %cst_130 = arith.constant 1.280000e+02 : f32
    %314 = vector.broadcast %cst_130 : f32 to vector<8x1xf32>
    %315 = arith.divf %313, %314 : vector<8x1xf32>
    %316 = vector.broadcast %315 : vector<8x1xf32> to vector<8x128xf32>
    %317 = arith.subf %299, %316 : vector<8x128xf32>
    %318 = arith.mulf %317, %317 : vector<8x128xf32>
    %cst_131 = arith.constant dense<0.000000e+00> : vector<8xf32>
    %319 = vector.multi_reduction <add>, %318, %cst_131 [1] : vector<8x128xf32> to vector<8xf32>
    %320 = vector.shape_cast %319 : vector<8xf32> to vector<8x1xf32>
    %cst_132 = arith.constant 1.280000e+02 : f32
    %321 = vector.broadcast %cst_132 : f32 to vector<8x1xf32>
    %322 = arith.divf %320, %321 : vector<8x1xf32>
    %323 = vector.broadcast %315 : vector<8x1xf32> to vector<8x128xf32>
    %324 = arith.subf %299, %323 : vector<8x128xf32>
    %cst_133 = arith.constant 9.99999974E-6 : f32
    %325 = vector.broadcast %cst_133 : f32 to vector<8x1xf32>
    %326 = arith.addf %322, %325 : vector<8x1xf32>
    %327 = math.rsqrt %326 : vector<8x1xf32>
    %328 = vector.broadcast %327 : vector<8x1xf32> to vector<8x128xf32>
    %329 = arith.mulf %324, %328 : vector<8x128xf32>
    %330 = vector.broadcast %301 : vector<1x128xf32> to vector<8x128xf32>
    %331 = arith.mulf %329, %330 : vector<8x128xf32>
    %332 = vector.broadcast %303 : vector<1x128xf32> to vector<8x128xf32>
    %333 = arith.addf %331, %332 : vector<8x128xf32>
    %334 = arith.truncf %333 : vector<8x128xf32> to vector<8x128xbf16>
    %cst_134 = arith.constant dense<0.000000e+00> : vector<8x256xf32>
    %335 = tpu.matmul %334, %305, %cst_134 {dimension_numbers = #tpu.dot_dimension_numbers<[1], [0], [0], [1], [0, 0, 1, 1], [], []>} : vector<8x128xbf16>, vector<128x256xbf16>, vector<8x256xf32> -> vector<8x256xf32>
    %336 = vector.broadcast %307 : vector<1x256xf32> to vector<8x256xf32>
    %337 = arith.addf %335, %336 : vector<8x256xf32>
    %cst_135 = arith.constant 0.000000e+00 : f32
    %338 = vector.broadcast %cst_135 : f32 to vector<8x256xf32>
    %339 = arith.maximumf %337, %338 : vector<8x256xf32>
    %340 = arith.truncf %339 : vector<8x256xf32> to vector<8x256xbf16>
    %cst_136 = arith.constant dense<0.000000e+00> : vector<8x128xf32>
    %341 = tpu.matmul %340, %309, %cst_136 {dimension_numbers = #tpu.dot_dimension_numbers<[1], [0], [0], [1], [0, 0, 1, 1], [], []>} : vector<8x256xbf16>, vector<256x128xbf16>, vector<8x128xf32> -> vector<8x128xf32>
    %342 = vector.broadcast %311 : vector<1x128xf32> to vector<8x128xf32>
    %343 = arith.addf %341, %342 : vector<8x128xf32>
    %344 = arith.addf %343, %299 : vector<8x128xf32>
    %c0_137 = arith.constant 0 : index
    %c0_138 = arith.constant 0 : index
    %c0_139 = arith.constant 0 : index
    %345 = vector.load %arg33[%c0_137, %c0_138, %c0_139] : memref<1x8x128xf32, #tpu.memory_space<vmem>>, vector<1x8x128xf32>
    %346 = vector.shape_cast %345 : vector<1x8x128xf32> to vector<8x128xf32>
    %347 = vector.shape_cast %344 : vector<8x128xf32> to vector<1x8x128xf32>
    tpu.vector_store %arg33[%c0_137, %c0_138, %c0_139], %347 {strides = array<i32>} : memref<1x8x128xf32, #tpu.memory_space<vmem>>, vector<1x8x128xf32>,
    %c1_i32 = arith.constant 1 : i32
    %348 = arith.cmpi eq, %arg1, %c1_i32 : i32
    %349 = arith.extui %348 : i1 to i32
    %c0_i32_140 = arith.constant 0 : i32
    %350 = arith.cmpi ne, %349, %c0_i32_140 : i32
    scf.if %350 {
      %c0_141 = arith.constant 0 : index
      %c0_142 = arith.constant 0 : index
      %351 = vector.load %arg28[%c0_141, %c0_142] : memref<1x128xf32, #tpu.memory_space<vmem>>, vector<1x128xf32>
      %c0_143 = arith.constant 0 : index
      %c0_144 = arith.constant 0 : index
      %352 = vector.load %arg29[%c0_143, %c0_144] : memref<1x128xf32, #tpu.memory_space<vmem>>, vector<1x128xf32>
      %cst_145 = arith.constant dense<0.000000e+00> : vector<8xf32>
      %353 = vector.multi_reduction <add>, %344, %cst_145 [1] : vector<8x128xf32> to vector<8xf32>
      %354 = vector.shape_cast %353 : vector<8xf32> to vector<8x1xf32>
      %cst_146 = arith.constant 1.280000e+02 : f32
      %355 = vector.broadcast %cst_146 : f32 to vector<8x1xf32>
      %356 = arith.divf %354, %355 : vector<8x1xf32>
      %357 = vector.broadcast %356 : vector<8x1xf32> to vector<8x128xf32>
      %358 = arith.subf %344, %357 : vector<8x128xf32>
      %359 = arith.mulf %358, %358 : vector<8x128xf32>
      %cst_147 = arith.constant dense<0.000000e+00> : vector<8xf32>
      %360 = vector.multi_reduction <add>, %359, %cst_147 [1] : vector<8x128xf32> to vector<8xf32>
      %361 = vector.shape_cast %360 : vector<8xf32> to vector<8x1xf32>
      %cst_148 = arith.constant 1.280000e+02 : f32
      %362 = vector.broadcast %cst_148 : f32 to vector<8x1xf32>
      %363 = arith.divf %361, %362 : vector<8x1xf32>
      %364 = vector.broadcast %356 : vector<8x1xf32> to vector<8x128xf32>
      %365 = arith.subf %344, %364 : vector<8x128xf32>
      %cst_149 = arith.constant 9.99999974E-6 : f32
      %366 = vector.broadcast %cst_149 : f32 to vector<8x1xf32>
      %367 = arith.addf %363, %366 : vector<8x1xf32>
      %368 = math.rsqrt %367 : vector<8x1xf32>
      %369 = vector.broadcast %368 : vector<8x1xf32> to vector<8x128xf32>
      %370 = arith.mulf %365, %369 : vector<8x128xf32>
      %371 = vector.broadcast %351 : vector<1x128xf32> to vector<8x128xf32>
      %372 = arith.mulf %370, %371 : vector<8x128xf32>
      %373 = vector.broadcast %352 : vector<1x128xf32> to vector<8x128xf32>
      %374 = arith.addf %372, %373 : vector<8x128xf32>
      %375 = arith.truncf %374 : vector<8x128xf32> to vector<8x128xbf16>
      %c0_150 = arith.constant 0 : index
      %c0_151 = arith.constant 0 : index
      %376 = vector.load %arg30[%c0_150, %c0_151] : memref<128x128xbf16, #tpu.memory_space<vmem>>, vector<128x128xbf16>
      %cst_152 = arith.constant dense<0.000000e+00> : vector<8x128xf32>
      %377 = tpu.matmul %375, %376, %cst_152 {dimension_numbers = #tpu.dot_dimension_numbers<[1], [0], [0], [1], [0, 0, 1, 1], [], []>} : vector<8x128xbf16>, vector<128x128xbf16>, vector<8x128xf32> -> vector<8x128xf32>
      %c0_153 = arith.constant 0 : index
      %c0_154 = arith.constant 0 : index
      %378 = vector.load %arg31[%c0_153, %c0_154] : memref<1x128xf32, #tpu.memory_space<vmem>>, vector<1x128xf32>
      %379 = vector.broadcast %378 : vector<1x128xf32> to vector<8x128xf32>
      %380 = arith.addf %377, %379 : vector<8x128xf32>
      %c0_155 = arith.constant 0 : index
      %c0_156 = arith.constant 0 : index
      %c0_157 = arith.constant 0 : index
      %381 = vector.load %arg32[%c0_155, %c0_156, %c0_157] : memref<1x8x128xf32, #tpu.memory_space<vmem>>, vector<1x8x128xf32>
      %382 = vector.shape_cast %381 : vector<1x8x128xf32> to vector<8x128xf32>
      %383 = vector.shape_cast %380 : vector<8x128xf32> to vector<1x8x128xf32>
      tpu.vector_store %arg32[%c0_155, %c0_156, %c0_157], %383 {strides = array<i32>} : memref<1x8x128xf32, #tpu.memory_space<vmem>>, vector<1x8x128xf32>,
    } else {
    }
    return
  }
  func.func @transform_0(%arg0: i32, %arg1: i32, %arg2: memref<2xi32, #tpu.memory_space<smem>>, %arg3: memref<2xi32, #tpu.memory_space<smem>>) -> (i32, i32, i32) {
    %c0_i32 = arith.constant 0 : i32
    %c0_i32_0 = arith.constant 0 : i32
    %c0_i32_1 = arith.constant 0 : i32
    return %arg0, %c0_i32, %c0_i32_0 : i32, i32, i32
  }
  func.func @transform_1(%arg0: i32, %arg1: i32, %arg2: memref<2xi32, #tpu.memory_space<smem>>, %arg3: memref<2xi32, #tpu.memory_space<smem>>) -> (i32, i32, i32) {
    %c0_i32 = arith.constant 0 : i32
    %c0_i32_0 = arith.constant 0 : i32
    %c0_i32_1 = arith.constant 0 : i32
    return %arg0, %c0_i32, %c0_i32_0 : i32, i32, i32
  }
  func.func @transform_2(%arg0: i32, %arg1: i32, %arg2: memref<2xi32, #tpu.memory_space<smem>>, %arg3: memref<2xi32, #tpu.memory_space<smem>>) -> (i32, i32, i32) {
    %c0_i32 = arith.constant 0 : i32
    %c0_i32_0 = arith.constant 0 : i32
    %c0_i32_1 = arith.constant 0 : i32
    return %arg1, %c0_i32, %c0_i32_0 : i32, i32, i32
  }
  func.func @transform_3(%arg0: i32, %arg1: i32, %arg2: memref<2xi32, #tpu.memory_space<smem>>, %arg3: memref<2xi32, #tpu.memory_space<smem>>) -> (i32, i32, i32) {
    %c0_i32 = arith.constant 0 : i32
    %c0_i32_0 = arith.constant 0 : i32
    %c0_i32_1 = arith.constant 0 : i32
    return %arg1, %c0_i32, %c0_i32_0 : i32, i32, i32
  }
  func.func @transform_4(%arg0: i32, %arg1: i32, %arg2: memref<2xi32, #tpu.memory_space<smem>>, %arg3: memref<2xi32, #tpu.memory_space<smem>>) -> (i32, i32, i32) {
    %c0_i32 = arith.constant 0 : i32
    %c0_i32_0 = arith.constant 0 : i32
    %c0_i32_1 = arith.constant 0 : i32
    return %arg1, %c0_i32, %c0_i32_0 : i32, i32, i32
  }
  func.func @transform_5(%arg0: i32, %arg1: i32, %arg2: memref<2xi32, #tpu.memory_space<smem>>, %arg3: memref<2xi32, #tpu.memory_space<smem>>) -> (i32, i32, i32) {
    %c0_i32 = arith.constant 0 : i32
    %c0_i32_0 = arith.constant 0 : i32
    %c0_i32_1 = arith.constant 0 : i32
    return %arg1, %c0_i32, %c0_i32_0 : i32, i32, i32
  }
  func.func @transform_6(%arg0: i32, %arg1: i32, %arg2: memref<2xi32, #tpu.memory_space<smem>>, %arg3: memref<2xi32, #tpu.memory_space<smem>>) -> (i32, i32, i32) {
    %c0_i32 = arith.constant 0 : i32
    %c0_i32_0 = arith.constant 0 : i32
    %c0_i32_1 = arith.constant 0 : i32
    return %arg1, %c0_i32, %c0_i32_0 : i32, i32, i32
  }
  func.func @transform_7(%arg0: i32, %arg1: i32, %arg2: memref<2xi32, #tpu.memory_space<smem>>, %arg3: memref<2xi32, #tpu.memory_space<smem>>) -> (i32, i32, i32) {
    %c0_i32 = arith.constant 0 : i32
    %c0_i32_0 = arith.constant 0 : i32
    %c0_i32_1 = arith.constant 0 : i32
    return %arg1, %c0_i32, %c0_i32_0 : i32, i32, i32
  }
  func.func @transform_8(%arg0: i32, %arg1: i32, %arg2: memref<2xi32, #tpu.memory_space<smem>>, %arg3: memref<2xi32, #tpu.memory_space<smem>>) -> (i32, i32, i32) {
    %c0_i32 = arith.constant 0 : i32
    %c0_i32_0 = arith.constant 0 : i32
    %c0_i32_1 = arith.constant 0 : i32
    return %arg1, %c0_i32, %c0_i32_0 : i32, i32, i32
  }
  func.func @transform_9(%arg0: i32, %arg1: i32, %arg2: memref<2xi32, #tpu.memory_space<smem>>, %arg3: memref<2xi32, #tpu.memory_space<smem>>) -> (i32, i32, i32) {
    %c0_i32 = arith.constant 0 : i32
    %c0_i32_0 = arith.constant 0 : i32
    %c0_i32_1 = arith.constant 0 : i32
    return %arg1, %c0_i32, %c0_i32_0 : i32, i32, i32
  }
  func.func @transform_10(%arg0: i32, %arg1: i32, %arg2: memref<2xi32, #tpu.memory_space<smem>>, %arg3: memref<2xi32, #tpu.memory_space<smem>>) -> (i32, i32, i32) {
    %c0_i32 = arith.constant 0 : i32
    %c0_i32_0 = arith.constant 0 : i32
    %c0_i32_1 = arith.constant 0 : i32
    return %arg1, %c0_i32, %c0_i32_0 : i32, i32, i32
  }
  func.func @transform_11(%arg0: i32, %arg1: i32, %arg2: memref<2xi32, #tpu.memory_space<smem>>, %arg3: memref<2xi32, #tpu.memory_space<smem>>) -> (i32, i32, i32) {
    %c0_i32 = arith.constant 0 : i32
    %c0_i32_0 = arith.constant 0 : i32
    %c0_i32_1 = arith.constant 0 : i32
    return %arg1, %c0_i32, %c0_i32_0 : i32, i32, i32
  }
  func.func @transform_12(%arg0: i32, %arg1: i32, %arg2: memref<2xi32, #tpu.memory_space<smem>>, %arg3: memref<2xi32, #tpu.memory_space<smem>>) -> (i32, i32, i32) {
    %c0_i32 = arith.constant 0 : i32
    %c0_i32_0 = arith.constant 0 : i32
    %c0_i32_1 = arith.constant 0 : i32
    return %arg1, %c0_i32, %c0_i32_0 : i32, i32, i32
  }
  func.func @transform_13(%arg0: i32, %arg1: i32, %arg2: memref<2xi32, #tpu.memory_space<smem>>, %arg3: memref<2xi32, #tpu.memory_space<smem>>) -> (i32, i32, i32) {
    %c0_i32 = arith.constant 0 : i32
    %c0_i32_0 = arith.constant 0 : i32
    %c0_i32_1 = arith.constant 0 : i32
    return %arg1, %c0_i32, %c0_i32_0 : i32, i32, i32
  }
  func.func @transform_14(%arg0: i32, %arg1: i32, %arg2: memref<2xi32, #tpu.memory_space<smem>>, %arg3: memref<2xi32, #tpu.memory_space<smem>>) -> (i32, i32, i32) {
    %c0_i32 = arith.constant 0 : i32
    %c0_i32_0 = arith.constant 0 : i32
    %c0_i32_1 = arith.constant 0 : i32
    return %arg1, %c0_i32, %c0_i32_0 : i32, i32, i32
  }
  func.func @transform_15(%arg0: i32, %arg1: i32, %arg2: memref<2xi32, #tpu.memory_space<smem>>, %arg3: memref<2xi32, #tpu.memory_space<smem>>) -> (i32, i32, i32) {
    %c0_i32 = arith.constant 0 : i32
    %c0_i32_0 = arith.constant 0 : i32
    %c0_i32_1 = arith.constant 0 : i32
    return %arg1, %c0_i32, %c0_i32_0 : i32, i32, i32
  }
  func.func @transform_16(%arg0: i32, %arg1: i32, %arg2: memref<2xi32, #tpu.memory_space<smem>>, %arg3: memref<2xi32, #tpu.memory_space<smem>>) -> (i32, i32, i32) {
    %c0_i32 = arith.constant 0 : i32
    %c0_i32_0 = arith.constant 0 : i32
    %c0_i32_1 = arith.constant 0 : i32
    return %arg1, %c0_i32, %c0_i32_0 : i32, i32, i32
  }
  func.func @transform_17(%arg0: i32, %arg1: i32, %arg2: memref<2xi32, #tpu.memory_space<smem>>, %arg3: memref<2xi32, #tpu.memory_space<smem>>) -> (i32, i32, i32) {
    %c0_i32 = arith.constant 0 : i32
    %c0_i32_0 = arith.constant 0 : i32
    %c0_i32_1 = arith.constant 0 : i32
    return %arg1, %c0_i32, %c0_i32_0 : i32, i32, i32
  }
  func.func @transform_18(%arg0: i32, %arg1: i32, %arg2: memref<2xi32, #tpu.memory_space<smem>>, %arg3: memref<2xi32, #tpu.memory_space<smem>>) -> (i32, i32, i32) {
    %c0_i32 = arith.constant 0 : i32
    %c0_i32_0 = arith.constant 0 : i32
    %c0_i32_1 = arith.constant 0 : i32
    return %arg1, %c0_i32, %c0_i32_0 : i32, i32, i32
  }
  func.func @transform_19(%arg0: i32, %arg1: i32, %arg2: memref<2xi32, #tpu.memory_space<smem>>, %arg3: memref<2xi32, #tpu.memory_space<smem>>) -> (i32, i32, i32) {
    %c0_i32 = arith.constant 0 : i32
    %c0_i32_0 = arith.constant 0 : i32
    %c0_i32_1 = arith.constant 0 : i32
    return %arg1, %c0_i32, %c0_i32_0 : i32, i32, i32
  }
  func.func @transform_20(%arg0: i32, %arg1: i32, %arg2: memref<2xi32, #tpu.memory_space<smem>>, %arg3: memref<2xi32, #tpu.memory_space<smem>>) -> (i32, i32, i32) {
    %c0_i32 = arith.constant 0 : i32
    %c0_i32_0 = arith.constant 0 : i32
    %c0_i32_1 = arith.constant 0 : i32
    return %arg1, %c0_i32, %c0_i32_0 : i32, i32, i32
  }
  func.func @transform_21(%arg0: i32, %arg1: i32, %arg2: memref<2xi32, #tpu.memory_space<smem>>, %arg3: memref<2xi32, #tpu.memory_space<smem>>) -> (i32, i32, i32) {
    %c0_i32 = arith.constant 0 : i32
    %c0_i32_0 = arith.constant 0 : i32
    %c0_i32_1 = arith.constant 0 : i32
    return %arg1, %c0_i32, %c0_i32_0 : i32, i32, i32
  }
  func.func @transform_22(%arg0: i32, %arg1: i32, %arg2: memref<2xi32, #tpu.memory_space<smem>>, %arg3: memref<2xi32, #tpu.memory_space<smem>>) -> (i32, i32, i32) {
    %c0_i32 = arith.constant 0 : i32
    %c0_i32_0 = arith.constant 0 : i32
    %c0_i32_1 = arith.constant 0 : i32
    return %arg1, %c0_i32, %c0_i32_0 : i32, i32, i32
  }
  func.func @transform_23(%arg0: i32, %arg1: i32, %arg2: memref<2xi32, #tpu.memory_space<smem>>, %arg3: memref<2xi32, #tpu.memory_space<smem>>) -> (i32, i32, i32) {
    %c0_i32 = arith.constant 0 : i32
    %c0_i32_0 = arith.constant 0 : i32
    %c0_i32_1 = arith.constant 0 : i32
    return %arg1, %c0_i32, %c0_i32_0 : i32, i32, i32
  }
  func.func @transform_24(%arg0: i32, %arg1: i32, %arg2: memref<2xi32, #tpu.memory_space<smem>>, %arg3: memref<2xi32, #tpu.memory_space<smem>>) -> (i32, i32) {
    %c0_i32 = arith.constant 0 : i32
    %c0_i32_0 = arith.constant 0 : i32
    %c0_i32_1 = arith.constant 0 : i32
    return %c0_i32, %c0_i32_0 : i32, i32
  }
  func.func @transform_25(%arg0: i32, %arg1: i32, %arg2: memref<2xi32, #tpu.memory_space<smem>>, %arg3: memref<2xi32, #tpu.memory_space<smem>>) -> (i32, i32) {
    %c0_i32 = arith.constant 0 : i32
    %c0_i32_0 = arith.constant 0 : i32
    %c0_i32_1 = arith.constant 0 : i32
    return %c0_i32, %c0_i32_0 : i32, i32
  }
  func.func @transform_26(%arg0: i32, %arg1: i32, %arg2: memref<2xi32, #tpu.memory_space<smem>>, %arg3: memref<2xi32, #tpu.memory_space<smem>>) -> (i32, i32) {
    %c0_i32 = arith.constant 0 : i32
    %c0_i32_0 = arith.constant 0 : i32
    %c0_i32_1 = arith.constant 0 : i32
    return %c0_i32, %c0_i32_0 : i32, i32
  }
  func.func @transform_27(%arg0: i32, %arg1: i32, %arg2: memref<2xi32, #tpu.memory_space<smem>>, %arg3: memref<2xi32, #tpu.memory_space<smem>>) -> (i32, i32) {
    %c0_i32 = arith.constant 0 : i32
    %c0_i32_0 = arith.constant 0 : i32
    %c0_i32_1 = arith.constant 0 : i32
    return %c0_i32, %c0_i32_0 : i32, i32
  }
  func.func @transform_28(%arg0: i32, %arg1: i32, %arg2: memref<2xi32, #tpu.memory_space<smem>>, %arg3: memref<2xi32, #tpu.memory_space<smem>>) -> (i32, i32, i32) {
    %c0_i32 = arith.constant 0 : i32
    %c0_i32_0 = arith.constant 0 : i32
    %c0_i32_1 = arith.constant 0 : i32
    return %arg0, %c0_i32, %c0_i32_0 : i32, i32, i32
  }
}

</mosaic_0001>

<llo_original>
// kernel: transformer_forward.2
$region0: #{transformer_forward.2}
  #allocation0 [shape = 'u32[]', space=smem, size = 0x4, offset = 0x4, fixed_abs, tag = 'smem constant byte address 0x4 - core index']
  #allocation1 [shape = 'u32[144,128]{1,0:T(1,128)}', space=vmem, size = 0x12000, scoped, tag = 'internal scratch']
  #allocation2 [shape = 's32[1]{0}', space=sflag, size = 0x4, scoped, tag = 'scoped memory for transformer_forward.2']
  #allocation3 [shape = 'u8[512]{0}', space=smem, size = 0x200, scoped, tag = 'prefetched SMEM operand 0']
  %s0 = inlined_call_operand.vmem [shape: s32[2], index: 0, kind: input, shape index: {}]
  %s1 = inlined_call_operand.vmem [shape: f32[2,8,128], index: 1, kind: input, shape index: {}]
  %s2 = inlined_call_operand.hbm [shape: f32[2,1,128], index: 2, kind: input, shape index: {}]
  %s3 = inlined_call_operand.hbm [shape: f32[2,1,128], index: 3, kind: input, shape index: {}]
  %s4 = inlined_call_operand.hbm [shape: bf16[2,128,128], index: 4, kind: input, shape index: {}]
  %s5 = inlined_call_operand.hbm [shape: f32[2,1,128], index: 5, kind: input, shape index: {}]
  %s6 = inlined_call_operand.vmem [shape: bf16[2,128,256], index: 6, kind: input, shape index: {}]
  %s7 = inlined_call_operand.hbm [shape: f32[2,1,256], index: 7, kind: input, shape index: {}]
  %s8 = inlined_call_operand.hbm [shape: bf16[2,128,128], index: 8, kind: input, shape index: {}]
  %s9 = inlined_call_operand.hbm [shape: f32[2,1,128], index: 9, kind: input, shape index: {}]
  %s10 = inlined_call_operand.hbm [shape: f32[2,1,128], index: 10, kind: input, shape index: {}]
  %s11 = inlined_call_operand.hbm [shape: f32[2,1,128], index: 11, kind: input, shape index: {}]
  %s12 = inlined_call_operand.vmem [shape: bf16[2,128,256], index: 12, kind: input, shape index: {}]
  %s13 = inlined_call_operand.hbm [shape: f32[2,1,256], index: 13, kind: input, shape index: {}]
  %s14 = inlined_call_operand.hbm [shape: bf16[2,256,128], index: 14, kind: input, shape index: {}]
  %s15 = inlined_call_operand.hbm [shape: f32[2,1,128], index: 15, kind: input, shape index: {}]
  %s16 = inlined_call_operand.hbm [shape: f32[1,128], index: 16, kind: input, shape index: {}]
  %s17 = inlined_call_operand.hbm [shape: f32[1,128], index: 17, kind: input, shape index: {}]
  %s18 = inlined_call_operand.vmem [shape: f32[2,8,128], index: 18, kind: output, shape index: {}]
  %s19 = sld [smem:[#allocation0]]
  $region165: #{transformer_forward.2} parent=0
    _
  %s21 = ssub.s32 1, %s19
  %s22 = scalar_select 0, %s21, %s19
  %s23 = sshll.u32 %s0, 4
  %s24 = int_to_ptr.vmem [resolvable:$true] %s23
  %26 = dma.vmem_to_smem %s24, 16, [#allocation3], [#allocation2]
  %27 = dma.done [#allocation2], 16
  %28 = sfence
  $region1: #{transformer_forward.2} parent=0
    #allocation4 [shape = 'u8[1024]{0}', space=vmem, size = 0x400, scoped, tag = 'input window, operand 2']
    #allocation5 [shape = 's32[2]{0}', space=sflag, size = 0x8, scoped, tag = 'scoped memory for transformer_forward.2']
    #allocation6 [shape = 'u8[1024]{0}', space=vmem, size = 0x400, scoped, tag = 'input window, operand 3']
    #allocation7 [shape = 's32[2]{0}', space=sflag, size = 0x8, scoped, tag = 'scoped memory for transformer_forward.2']
    #allocation8 [shape = 'u8[65536]{0}', space=vmem, size = 0x10000, scoped, tag = 'input window, operand 4']
    #allocation9 [shape = 'u8[1024]{0}', space=vmem, size = 0x400, scoped, tag = 'input window, operand 5']
    #allocation10 [shape = 's32[2]{0}', space=sflag, size = 0x8, scoped, tag = 'scoped memory for transformer_forward.2']
    #allocation11 [shape = 'u8[2048]{0}', space=vmem, size = 0x800, scoped, tag = 'input window, operand 7']
    #allocation12 [shape = 'u8[65536]{0}', space=vmem, size = 0x10000, scoped, tag = 'input window, operand 8']
    #allocation13 [shape = 's32[2]{0}', space=sflag, size = 0x8, scoped, tag = 'scoped memory for transformer_forward.2']
    #allocation14 [shape = 'u8[1024]{0}', space=vmem, size = 0x400, scoped, tag = 'input window, operand 9']
    #allocation15 [shape = 'u8[1024]{0}', space=vmem, size = 0x400, scoped, tag = 'input window, operand 10']
    #allocation16 [shape = 's32[2]{0}', space=sflag, size = 0x8, scoped, tag = 'scoped memory for transformer_forward.2']
    #allocation17 [shape = 'u8[1024]{0}', space=vmem, size = 0x400, scoped, tag = 'input window, operand 11']
    #allocation18 [shape = 'u8[2048]{0}', space=vmem, size = 0x800, scoped, tag = 'input window, operand 13']
    #allocation19 [shape = 's32[2]{0}', space=sflag, size = 0x8, scoped, tag = 'scoped memory for transformer_forward.2']
    #allocation20 [shape = 'u8[131072]{0}', space=vmem, size = 0x20000, scoped, tag = 'input window, operand 14']
    #allocation21 [shape = 'u8[1024]{0}', space=vmem, size = 0x400, scoped, tag = 'input window, operand 15']
    #allocation22 [shape = 's32[2]{0}', space=sflag, size = 0x8, scoped, tag = 'scoped memory for transformer_forward.2']
    #allocation23 [shape = 'u8[512]{0}', space=vmem, size = 0x400, scoped, tag = 'input window, operand 16, single buffered']
    #allocation24 [shape = 'u8[512]{0}', space=vmem, size = 0x400, scoped, tag = 'input window, operand 17, single buffered']
    #allocation25 [shape = 's32[1]{0}', space=sflag, size = 0x4, scoped, tag = 'scoped memory for transformer_forward.2']
    %29 = vsyncpa [#allocation5], 0
    %s30 = scalar_lea.sflag [#allocation5], 1
    %31 = vsyncpa %s30, 0
    %32 = vsyncpa [#allocation7], 0
    %s33 = scalar_lea.sflag [#allocation7], 1
    %34 = vsyncpa %s33, 0
    %35 = vsyncpa [#allocation10], 0
    %s36 = scalar_lea.sflag [#allocation10], 1
    %37 = vsyncpa %s36, 0
    %38 = vsyncpa [#allocation13], 0
    %s39 = scalar_lea.sflag [#allocation13], 1
    %40 = vsyncpa %s39, 0
    %41 = vsyncpa [#allocation16], 0
    %s42 = scalar_lea.sflag [#allocation16], 1
    %43 = vsyncpa %s42, 0
    %44 = vsyncpa [#allocation19], 0
    %s45 = scalar_lea.sflag [#allocation19], 1
    %46 = vsyncpa %s45, 0
    %47 = vsyncpa [#allocation22], 0
    %s48 = scalar_lea.sflag [#allocation22], 1
    %49 = vsyncpa %s48, 0
    %50 = vsyncpa [#allocation25], 0
    loop: start=0, step=1, limit=6
    $region2: #{transformer_forward.2} parent=1 // loop_pre_header
      _
    $region3: #{transformer_forward.2} parent=1 // loop_header
      %s52 = sphi 0, %s56
      %p53 = scmp.ge.s32.totalorder %s52, 6
      %s59 = sphi 0, %s71
      %s60 = sphi 0, %s67
      %s61 = sphi 0, %s59
      %s62 = sphi 0, %s60
      %s63 = sphi 0, %s61
      %s64 = sphi 0, %s62
      %s74 = sphi 0, %s76
      %s77 = sphi 0, %s74
      %s78 = sphi 0, %s77
      %s94 = sphi 0, %s78
      %s100 = sphi 0, %s102
      %s103 = sphi 0, %s100
      %s104 = sphi 0, %s103
      %s120 = sphi 0, %s104
      %s126 = sphi 0, %s128
      %s129 = sphi 0, %s126
      %s130 = sphi 0, %s129
      %s146 = sphi 0, %s130
      %s152 = sphi 0, %s154
      %s155 = sphi 0, %s152
      %s156 = sphi 0, %s155
      %s172 = sphi 0, %s156
      %s178 = sphi 0, %s180
      %s181 = sphi 0, %s178
      %s182 = sphi 0, %s181
      %s198 = sphi 0, %s182
      %s204 = sphi 0, %s206
      %s207 = sphi 0, %s204
      %s208 = sphi 0, %s207
      %s224 = sphi 0, %s208
      %s230 = sphi 0, %s232
      %s233 = sphi 0, %s230
      %s234 = sphi 0, %s233
      %s250 = sphi 0, %s234
      %s256 = sphi 0, %s258
      %s259 = sphi 0, %s256
      %s260 = sphi 0, %s259
      %s276 = sphi 0, %s260
      %s282 = sphi 0, %s284
      %s285 = sphi 0, %s282
      %s286 = sphi 0, %s285
      %s302 = sphi 0, %s286
      %s308 = sphi 0, %s310
      %s311 = sphi 0, %s308
      %s312 = sphi 0, %s311
      %s328 = sphi 0, %s312
      %s334 = sphi 0, %s336
      %s337 = sphi 0, %s334
      %s338 = sphi 0, %s337
      %s354 = sphi 0, %s338
      %s360 = sphi 0, %s362
      %s363 = sphi 0, %s360
      %s364 = sphi 0, %s363
      %s380 = sphi 0, %s364
      %s386 = sphi 0, %s388
      %s389 = sphi 0, %s386
      %s390 = sphi 0, %s389
      %s406 = sphi 0, %s390
      %s412 = sphi 0, %s414
      %s415 = sphi 0, %s412
      %s416 = sphi 0, %s415
      %s432 = sphi 0, %s416
      %s438 = sphi 0, %s440
      %s441 = sphi 0, %s438
      %s442 = sphi 0, %s441
      %s458 = sphi 0, %s442
      %s462 = sphi 0, %s462
      %s464 = sphi 0, %s462
      %s465 = sphi 0, %s464
      %s479 = sphi 0, %s465
      %s483 = sphi 0, %s483
      %s485 = sphi 0, %s483
      %s486 = sphi 0, %s485
      %s500 = sphi 0, %s486
      %s506 = sphi 0, %s508
      %s509 = sphi 0, %s506
      %s510 = sphi 0, %s509
      %s526 = sphi 0, %s510
    $region4: #{transformer_forward.2} parent=1 // loop_header_branch
      %55 = sbr.rel (%p53) target = $region8
    $region5: #{transformer_forward.2} parent=1 // loop_body
      %s57 = ssub.s32 %s52, 1
      %s58 = ssub.s32 %s52, 2
      %s65 = sadd.s32 1, %s60
      %p66 = scmp.ge.s32.totalorder %s65, 2
      %s67 = scalar_select %p66, 0, %s65
      %s68 = sadd.s32 1, %s59
      %s69 = scalar_select %p66, %s68, %s59
      %p70 = scmp.ge.s32.totalorder %s69, 2
      %s71 = scalar_select %p70, 0, %s69
      %s72 = ssub.s32 %s59, %s71
      %p73 = scmp.eq.s32.totalorder %s72, 0
      %s75 = sadd.s32 %s74, 1
      %s76 = scalar_select %p73, %s74, %s75
      %p79 = pneg %p73
      %p80 = scmp.eq.s32.totalorder %s52, 3
      %p81 = por %p79, %p80
      %p82 = scmp.ne.s32.totalorder %s74, %s77
      %p83 = scmp.eq.s32.totalorder %s52, 0
      %p84 = por %p82, %p83
      %p85 = scmp.ne.s32.totalorder %s74, %s77
      %p86 = scmp.eq.s32.totalorder %s57, 3
      %p87 = por %p85, %p86
      %p88 = scmp.ne.s32.totalorder %s77, %s78
      %p89 = scmp.eq.s32.totalorder %s57, 0
      %p90 = por %p88, %p89
      %p91 = scmp.ne.s32.totalorder %s77, %s78
      %p92 = scmp.eq.s32.totalorder %s58, 3
      %p93 = por %p91, %p92
      %p95 = scmp.ne.s32.totalorder %s78, %s94
      %p96 = scmp.eq.s32.totalorder %s58, 0
      %p97 = por %p95, %p96
      %s98 = ssub.s32 %s60, %s67
      %p99 = scmp.eq.s32.totalorder %s98, 0
      %s101 = sadd.s32 %s100, 1
      %s102 = scalar_select %p99, %s100, %s101
      %p105 = pneg %p99
      %p106 = scmp.eq.s32.totalorder %s52, 3
      %p107 = por %p105, %p106
      %p108 = scmp.ne.s32.totalorder %s100, %s103
      %p109 = scmp.eq.s32.totalorder %s52, 0
      %p110 = por %p108, %p109
      %p111 = scmp.ne.s32.totalorder %s100, %s103
      %p112 = scmp.eq.s32.totalorder %s57, 3
      %p113 = por %p111, %p112
      %p114 = scmp.ne.s32.totalorder %s103, %s104
      %p115 = scmp.eq.s32.totalorder %s57, 0
      %p116 = por %p114, %p115
      %p117 = scmp.ne.s32.totalorder %s103, %s104
      %p118 = scmp.eq.s32.totalorder %s58, 3
      %p119 = por %p117, %p118
      %p121 = scmp.ne.s32.totalorder %s104, %s120
      %p122 = scmp.eq.s32.totalorder %s58, 0
      %p123 = por %p121, %p122
      %s124 = ssub.s32 %s60, %s67
      %p125 = scmp.eq.s32.totalorder %s124, 0
      %s127 = sadd.s32 %s126, 1
      %s128 = scalar_select %p125, %s126, %s127
      %p131 = pneg %p125
      %p132 = scmp.eq.s32.totalorder %s52, 3
      %p133 = por %p131, %p132
      %p134 = scmp.ne.s32.totalorder %s126, %s129
      %p135 = scmp.eq.s32.totalorder %s52, 0
      %p136 = por %p134, %p135
      %p137 = scmp.ne.s32.totalorder %s126, %s129
      %p138 = scmp.eq.s32.totalorder %s57, 3
      %p139 = por %p137, %p138
      %p140 = scmp.ne.s32.totalorder %s129, %s130
      %p141 = scmp.eq.s32.totalorder %s57, 0
      %p142 = por %p140, %p141
      %p143 = scmp.ne.s32.totalorder %s129, %s130
      %p144 = scmp.eq.s32.totalorder %s58, 3
      %p145 = por %p143, %p144
      %p147 = scmp.ne.s32.totalorder %s130, %s146
      %p148 = scmp.eq.s32.totalorder %s58, 0
      %p149 = por %p147, %p148
      %s150 = ssub.s32 %s60, %s67
      %p151 = scmp.eq.s32.totalorder %s150, 0
      %s153 = sadd.s32 %s152, 1
      %s154 = scalar_select %p151, %s152, %s153
      %p157 = pneg %p151
      %p158 = scmp.eq.s32.totalorder %s52, 3
      %p159 = por %p157, %p158
      %p160 = scmp.ne.s32.totalorder %s152, %s155
      %p161 = scmp.eq.s32.totalorder %s52, 0
      %p162 = por %p160, %p161
      %p163 = scmp.ne.s32.totalorder %s152, %s155
      %p164 = scmp.eq.s32.totalorder %s57, 3
      %p165 = por %p163, %p164
      %p166 = scmp.ne.s32.totalorder %s155, %s156
      %p167 = scmp.eq.s32.totalorder %s57, 0
      %p168 = por %p166, %p167
      %p169 = scmp.ne.s32.totalorder %s155, %s156
      %p170 = scmp.eq.s32.totalorder %s58, 3
      %p171 = por %p169, %p170
      %p173 = scmp.ne.s32.totalorder %s156, %s172
      %p174 = scmp.eq.s32.totalorder %s58, 0
      %p175 = por %p173, %p174
      %s176 = ssub.s32 %s60, %s67
      %p177 = scmp.eq.s32.totalorder %s176, 0
      %s179 = sadd.s32 %s178, 1
      %s180 = scalar_select %p177, %s178, %s179
      %p183 = pneg %p177
      %p184 = scmp.eq.s32.totalorder %s52, 3
      %p185 = por %p183, %p184
      %p186 = scmp.ne.s32.totalorder %s178, %s181
      %p187 = scmp.eq.s32.totalorder %s52, 0
      %p188 = por %p186, %p187
      %p189 = scmp.ne.s32.totalorder %s178, %s181
      %p190 = scmp.eq.s32.totalorder %s57, 3
      %p191 = por %p189, %p190
      %p192 = scmp.ne.s32.totalorder %s181, %s182
      %p193 = scmp.eq.s32.totalorder %s57, 0
      %p194 = por %p192, %p193
      %p195 = scmp.ne.s32.totalorder %s181, %s182
      %p196 = scmp.eq.s32.totalorder %s58, 3
      %p197 = por %p195, %p196
      %p199 = scmp.ne.s32.totalorder %s182, %s198
      %p200 = scmp.eq.s32.totalorder %s58, 0
      %p201 = por %p199, %p200
      %s202 = ssub.s32 %s60, %s67
      %p203 = scmp.eq.s32.totalorder %s202, 0
      %s205 = sadd.s32 %s204, 1
      %s206 = scalar_select %p203, %s204, %s205
      %p209 = pneg %p203
      %p210 = scmp.eq.s32.totalorder %s52, 3
      %p211 = por %p209, %p210
      %p212 = scmp.ne.s32.totalorder %s204, %s207
      %p213 = scmp.eq.s32.totalorder %s52, 0
      %p214 = por %p212, %p213
      %p215 = scmp.ne.s32.totalorder %s204, %s207
      %p216 = scmp.eq.s32.totalorder %s57, 3
      %p217 = por %p215, %p216
      %p218 = scmp.ne.s32.totalorder %s207, %s208
      %p219 = scmp.eq.s32.totalorder %s57, 0
      %p220 = por %p218, %p219
      %p221 = scmp.ne.s32.totalorder %s207, %s208
      %p222 = scmp.eq.s32.totalorder %s58, 3
      %p223 = por %p221, %p222
      %p225 = scmp.ne.s32.totalorder %s208, %s224
      %p226 = scmp.eq.s32.totalorder %s58, 0
      %p227 = por %p225, %p226
      %s228 = ssub.s32 %s60, %s67
      %p229 = scmp.eq.s32.totalorder %s228, 0
      %s231 = sadd.s32 %s230, 1
      %s232 = scalar_select %p229, %s230, %s231
      %p235 = pneg %p229
      %p236 = scmp.eq.s32.totalorder %s52, 3
      %p237 = por %p235, %p236
      %p238 = scmp.ne.s32.totalorder %s230, %s233
      %p239 = scmp.eq.s32.totalorder %s52, 0
      %p240 = por %p238, %p239
      %p241 = scmp.ne.s32.totalorder %s230, %s233
      %p242 = scmp.eq.s32.totalorder %s57, 3
      %p243 = por %p241, %p242
      %p244 = scmp.ne.s32.totalorder %s233, %s234
      %p245 = scmp.eq.s32.totalorder %s57, 0
      %p246 = por %p244, %p245
      %p247 = scmp.ne.s32.totalorder %s233, %s234
      %p248 = scmp.eq.s32.totalorder %s58, 3
      %p249 = por %p247, %p248
      %p251 = scmp.ne.s32.totalorder %s234, %s250
      %p252 = scmp.eq.s32.totalorder %s58, 0
      %p253 = por %p251, %p252
      %s254 = ssub.s32 %s60, %s67
      %p255 = scmp.eq.s32.totalorder %s254, 0
      %s257 = sadd.s32 %s256, 1
      %s258 = scalar_select %p255, %s256, %s257
      %p261 = pneg %p255
      %p262 = scmp.eq.s32.totalorder %s52, 3
      %p263 = por %p261, %p262
      %p264 = scmp.ne.s32.totalorder %s256, %s259
      %p265 = scmp.eq.s32.totalorder %s52, 0
      %p266 = por %p264, %p265
      %p267 = scmp.ne.s32.totalorder %s256, %s259
      %p268 = scmp.eq.s32.totalorder %s57, 3
      %p269 = por %p267, %p268
      %p270 = scmp.ne.s32.totalorder %s259, %s260
      %p271 = scmp.eq.s32.totalorder %s57, 0
      %p272 = por %p270, %p271
      %p273 = scmp.ne.s32.totalorder %s259, %s260
      %p274 = scmp.eq.s32.totalorder %s58, 3
      %p275 = por %p273, %p274
      %p277 = scmp.ne.s32.totalorder %s260, %s276
      %p278 = scmp.eq.s32.totalorder %s58, 0
      %p279 = por %p277, %p278
      %s280 = ssub.s32 %s60, %s67
      %p281 = scmp.eq.s32.totalorder %s280, 0
      %s283 = sadd.s32 %s282, 1
      %s284 = scalar_select %p281, %s282, %s283
      %p287 = pneg %p281
      %p288 = scmp.eq.s32.totalorder %s52, 3
      %p289 = por %p287, %p288
      %p290 = scmp.ne.s32.totalorder %s282, %s285
      %p291 = scmp.eq.s32.totalorder %s52, 0
      %p292 = por %p290, %p291
      %p293 = scmp.ne.s32.totalorder %s282, %s285
      %p294 = scmp.eq.s32.totalorder %s57, 3
      %p295 = por %p293, %p294
      %p296 = scmp.ne.s32.totalorder %s285, %s286
      %p297 = scmp.eq.s32.totalorder %s57, 0
      %p298 = por %p296, %p297
      %p299 = scmp.ne.s32.totalorder %s285, %s286
      %p300 = scmp.eq.s32.totalorder %s58, 3
      %p301 = por %p299, %p300
      %p303 = scmp.ne.s32.totalorder %s286, %s302
      %p304 = scmp.eq.s32.totalorder %s58, 0
      %p305 = por %p303, %p304
      %s306 = ssub.s32 %s60, %s67
      %p307 = scmp.eq.s32.totalorder %s306, 0
      %s309 = sadd.s32 %s308, 1
      %s310 = scalar_select %p307, %s308, %s309
      %p313 = pneg %p307
      %p314 = scmp.eq.s32.totalorder %s52, 3
      %p315 = por %p313, %p314
      %p316 = scmp.ne.s32.totalorder %s308, %s311
      %p317 = scmp.eq.s32.totalorder %s52, 0
      %p318 = por %p316, %p317
      %p319 = scmp.ne.s32.totalorder %s308, %s311
      %p320 = scmp.eq.s32.totalorder %s57, 3
      %p321 = por %p319, %p320
      %p322 = scmp.ne.s32.totalorder %s311, %s312
      %p323 = scmp.eq.s32.totalorder %s57, 0
      %p324 = por %p322, %p323
      %p325 = scmp.ne.s32.totalorder %s311, %s312
      %p326 = scmp.eq.s32.totalorder %s58, 3
      %p327 = por %p325, %p326
      %p329 = scmp.ne.s32.totalorder %s312, %s328
      %p330 = scmp.eq.s32.totalorder %s58, 0
      %p331 = por %p329, %p330
      %s332 = ssub.s32 %s60, %s67
      %p333 = scmp.eq.s32.totalorder %s332, 0
      %s335 = sadd.s32 %s334, 1
      %s336 = scalar_select %p333, %s334, %s335
      %p339 = pneg %p333
      %p340 = scmp.eq.s32.totalorder %s52, 3
      %p341 = por %p339, %p340
      %p342 = scmp.ne.s32.totalorder %s334, %s337
      %p343 = scmp.eq.s32.totalorder %s52, 0
      %p344 = por %p342, %p343
      %p345 = scmp.ne.s32.totalorder %s334, %s337
      %p346 = scmp.eq.s32.totalorder %s57, 3
      %p347 = por %p345, %p346
      %p348 = scmp.ne.s32.totalorder %s337, %s338
      %p349 = scmp.eq.s32.totalorder %s57, 0
      %p350 = por %p348, %p349
      %p351 = scmp.ne.s32.totalorder %s337, %s338
      %p352 = scmp.eq.s32.totalorder %s58, 3
      %p353 = por %p351, %p352
      %p355 = scmp.ne.s32.totalorder %s338, %s354
      %p356 = scmp.eq.s32.totalorder %s58, 0
      %p357 = por %p355, %p356
      %s358 = ssub.s32 %s60, %s67
      %p359 = scmp.eq.s32.totalorder %s358, 0
      %s361 = sadd.s32 %s360, 1
      %s362 = scalar_select %p359, %s360, %s361
      %p365 = pneg %p359
      %p366 = scmp.eq.s32.totalorder %s52, 3
      %p367 = por %p365, %p366
      %p368 = scmp.ne.s32.totalorder %s360, %s363
      %p369 = scmp.eq.s32.totalorder %s52, 0
      %p370 = por %p368, %p369
      %p371 = scmp.ne.s32.totalorder %s360, %s363
      %p372 = scmp.eq.s32.totalorder %s57, 3
      %p373 = por %p371, %p372
      %p374 = scmp.ne.s32.totalorder %s363, %s364
      %p375 = scmp.eq.s32.totalorder %s57, 0
      %p376 = por %p374, %p375
      %p377 = scmp.ne.s32.totalorder %s363, %s364
      %p378 = scmp.eq.s32.totalorder %s58, 3
      %p379 = por %p377, %p378
      %p381 = scmp.ne.s32.totalorder %s364, %s380
      %p382 = scmp.eq.s32.totalorder %s58, 0
      %p383 = por %p381, %p382
      %s384 = ssub.s32 %s60, %s67
      %p385 = scmp.eq.s32.totalorder %s384, 0
      %s387 = sadd.s32 %s386, 1
      %s388 = scalar_select %p385, %s386, %s387
      %p391 = pneg %p385
      %p392 = scmp.eq.s32.totalorder %s52, 3
      %p393 = por %p391, %p392
      %p394 = scmp.ne.s32.totalorder %s386, %s389
      %p395 = scmp.eq.s32.totalorder %s52, 0
      %p396 = por %p394, %p395
      %p397 = scmp.ne.s32.totalorder %s386, %s389
      %p398 = scmp.eq.s32.totalorder %s57, 3
      %p399 = por %p397, %p398
      %p400 = scmp.ne.s32.totalorder %s389, %s390
      %p401 = scmp.eq.s32.totalorder %s57, 0
      %p402 = por %p400, %p401
      %p403 = scmp.ne.s32.totalorder %s389, %s390
      %p404 = scmp.eq.s32.totalorder %s58, 3
      %p405 = por %p403, %p404
      %p407 = scmp.ne.s32.totalorder %s390, %s406
      %p408 = scmp.eq.s32.totalorder %s58, 0
      %p409 = por %p407, %p408
      %s410 = ssub.s32 %s60, %s67
      %p411 = scmp.eq.s32.totalorder %s410, 0
      %s413 = sadd.s32 %s412, 1
      %s414 = scalar_select %p411, %s412, %s413
      %p417 = pneg %p411
      %p418 = scmp.eq.s32.totalorder %s52, 3
      %p419 = por %p417, %p418
      %p420 = scmp.ne.s32.totalorder %s412, %s415
      %p421 = scmp.eq.s32.totalorder %s52, 0
      %p422 = por %p420, %p421
      %p423 = scmp.ne.s32.totalorder %s412, %s415
      %p424 = scmp.eq.s32.totalorder %s57, 3
      %p425 = por %p423, %p424
      %p426 = scmp.ne.s32.totalorder %s415, %s416
      %p427 = scmp.eq.s32.totalorder %s57, 0
      %p428 = por %p426, %p427
      %p429 = scmp.ne.s32.totalorder %s415, %s416
      %p430 = scmp.eq.s32.totalorder %s58, 3
      %p431 = por %p429, %p430
      %p433 = scmp.ne.s32.totalorder %s416, %s432
      %p434 = scmp.eq.s32.totalorder %s58, 0
      %p435 = por %p433, %p434
      %s436 = ssub.s32 %s60, %s67
      %p437 = scmp.eq.s32.totalorder %s436, 0
      %s439 = sadd.s32 %s438, 1
      %s440 = scalar_select %p437, %s438, %s439
      %p443 = pneg %p437
      %p444 = scmp.eq.s32.totalorder %s52, 3
      %p445 = por %p443, %p444
      %p446 = scmp.ne.s32.totalorder %s438, %s441
      %p447 = scmp.eq.s32.totalorder %s52, 0
      %p448 = por %p446, %p447
      %p449 = scmp.ne.s32.totalorder %s438, %s441
      %p450 = scmp.eq.s32.totalorder %s57, 3
      %p451 = por %p449, %p450
      %p452 = scmp.ne.s32.totalorder %s441, %s442
      %p453 = scmp.eq.s32.totalorder %s57, 0
      %p454 = por %p452, %p453
      %p455 = scmp.ne.s32.totalorder %s441, %s442
      %p456 = scmp.eq.s32.totalorder %s58, 3
      %p457 = por %p455, %p456
      %p459 = scmp.ne.s32.totalorder %s442, %s458
      %p460 = scmp.eq.s32.totalorder %s58, 0
      %p461 = por %p459, %p460
      %s463 = sadd.s32 %s462, 1
      %p466 = scmp.eq.s32.totalorder %s52, 3
      %p467 = scmp.ne.s32.totalorder %s462, %s464
      %p468 = scmp.eq.s32.totalorder %s52, 0
      %p469 = por %p467, %p468
      %p470 = scmp.ne.s32.totalorder %s462, %s464
      %p471 = scmp.eq.s32.totalorder %s57, 3
      %p472 = por %p470, %p471
      %p473 = scmp.ne.s32.totalorder %s464, %s465
      %p474 = scmp.eq.s32.totalorder %s57, 0
      %p475 = por %p473, %p474
      %p476 = scmp.ne.s32.totalorder %s464, %s465
      %p477 = scmp.eq.s32.totalorder %s58, 3
      %p478 = por %p476, %p477
      %p480 = scmp.ne.s32.totalorder %s465, %s479
      %p481 = scmp.eq.s32.totalorder %s58, 0
      %p482 = por %p480, %p481
      %s484 = sadd.s32 %s483, 1
      %p487 = scmp.eq.s32.totalorder %s52, 3
      %p488 = scmp.ne.s32.totalorder %s483, %s485
      %p489 = scmp.eq.s32.totalorder %s52, 0
      %p490 = por %p488, %p489
      %p491 = scmp.ne.s32.totalorder %s483, %s485
      %p492 = scmp.eq.s32.totalorder %s57, 3
      %p493 = por %p491, %p492
      %p494 = scmp.ne.s32.totalorder %s485, %s486
      %p495 = scmp.eq.s32.totalorder %s57, 0
      %p496 = por %p494, %p495
      %p497 = scmp.ne.s32.totalorder %s485, %s486
      %p498 = scmp.eq.s32.totalorder %s58, 3
      %p499 = por %p497, %p498
      %p501 = scmp.ne.s32.totalorder %s486, %s500
      %p502 = scmp.eq.s32.totalorder %s58, 0
      %p503 = por %p501, %p502
      %s504 = ssub.s32 %s59, %s71
      %p505 = scmp.eq.s32.totalorder %s504, 0
      %s507 = sadd.s32 %s506, 1
      %s508 = scalar_select %p505, %s506, %s507
      %p511 = pneg %p505
      %p512 = scmp.eq.s32.totalorder %s52, 3
      %p513 = por %p511, %p512
      %p514 = scmp.ne.s32.totalorder %s506, %s509
      %p515 = scmp.eq.s32.totalorder %s52, 0
      %p516 = por %p514, %p515
      %p517 = scmp.ne.s32.totalorder %s506, %s509
      %p518 = scmp.eq.s32.totalorder %s57, 3
      %p519 = por %p517, %p518
      %p520 = scmp.ne.s32.totalorder %s509, %s510
      %p521 = scmp.eq.s32.totalorder %s57, 0
      %p522 = por %p520, %p521
      %p523 = scmp.ne.s32.totalorder %s509, %s510
      %p524 = scmp.eq.s32.totalorder %s58, 3
      %p525 = por %p523, %p524
      %p527 = scmp.ne.s32.totalorder %s510, %s526
      %p528 = scmp.eq.s32.totalorder %s58, 0
      %p529 = por %p527, %p528
      %p530 = scmp.le.s32.totalorder 1, %s52
      %p531 = scmp.lt.s32.totalorder %s52, 5
      %p532 = pnand %p530, %p531
      %p533 = pneg %p532
      // Predicated region
      $region9: #{transformer_forward.2} parent=5 // pred_check
        _
      $region10: #{transformer_forward.2} parent=5 // pred_check_branch
        %535 = sbr.rel (%p532) target = $region12
      $region11: #{transformer_forward.2} parent=5 // pred_region
        %s536 = ssub.s32 %s52, 1
        // Predicated region
        $region13: #{transformer_forward.2} parent=11 // pred_check
          %p537 = pneg %p475
        $region14: #{transformer_forward.2} parent=11 // pred_check_branch
          %539 = sbr.rel (%p537) target = $region16
        $region15: #{transformer_forward.2} parent=11 // pred_region
          %s541 = ssub.s32 16, 16
          %542 = vsyncadd [#allocation22], %s541
          %s544 = sshll.u32 [#allocation23], 4
          %s545 = int_to_ptr.vmem [resolvable:$true] %s544
          %547 = dma.hbm_to_vmem [thread:$0]  %s16, 16, %s545, [#allocation22]
        $region16: #{transformer_forward.2} parent=11 // pred_fallthru
          _
        // Predicated region
        $region17: #{transformer_forward.2} parent=11 // pred_check
          %p548 = pneg %p496
        $region18: #{transformer_forward.2} parent=11 // pred_check_branch
          %550 = sbr.rel (%p548) target = $region20
        $region19: #{transformer_forward.2} parent=11 // pred_region
          %s552 = ssub.s32 16, 16
          %553 = vsyncadd [#allocation25], %s552
          %s555 = sshll.u32 [#allocation24], 4
          %s556 = int_to_ptr.vmem [resolvable:$true] %s555
          %558 = dma.hbm_to_vmem [thread:$0]  %s17, 16, %s556, [#allocation25]
        $region20: #{transformer_forward.2} parent=11 // pred_fallthru
          _
      $region12: #{transformer_forward.2} parent=5 // pred_fallthru
        _
      %p559 = scmp.lt.s32.totalorder %s52, 4
      // Predicated region
      $region21: #{transformer_forward.2} parent=5 // pred_check
        %p560 = pneg %p559
      $region22: #{transformer_forward.2} parent=5 // pred_check_branch
        %562 = sbr.rel (%p560) target = $region24
      $region23: #{transformer_forward.2} parent=5 // pred_region
        // Predicated region
        $region25: #{transformer_forward.2} parent=23 // pred_check
          %p563 = pneg %p84
        $region26: #{transformer_forward.2} parent=23 // pred_check_branch
          %565 = sbr.rel (%p563) target = $region28
        $region27: #{transformer_forward.2} parent=23 // pred_region
          %p566 = scmp.lt.s32.totalorder %s59, 1
          %s567 = scalar_select %p566, %s59, 1
          %s568 = smul.addr %s567, 8
          %s569 = scalar_lea.vmem %s1, %s568
        $region28: #{transformer_forward.2} parent=23 // pred_fallthru
          _
        // Predicated region
        $region29: #{transformer_forward.2} parent=23 // pred_check
          %p570 = pneg %p110
        $region30: #{transformer_forward.2} parent=23 // pred_check_branch
          %572 = sbr.rel (%p570) target = $region32
        $region31: #{transformer_forward.2} parent=23 // pred_region
          %s573 = sand.u32 %s100, 1
          %s574 = scalar_lea.sflag [#allocation5], %s573
          %s575 = sand.u32 %s100, 1
          %s576 = scalar_lea.vmem [#allocation4], %s575
          %s578 = ssub.s32 16, 16
          %579 = vsyncadd %s574, %s578
          %s580 = smul.addr %s60, 16
          %s581 = scalar_lea.hbm %s2, %s580
          %s583 = sshll.u32 %s576, 4
          %s584 = int_to_ptr.vmem [resolvable:$true] %s583
          %586 = dma.hbm_to_vmem [thread:$0]  %s581, 16, %s584, %s574
        $region32: #{transformer_forward.2} parent=23 // pred_fallthru
          _
        // Predicated region
        $region33: #{transformer_forward.2} parent=23 // pred_check
          %p587 = pneg %p136
        $region34: #{transformer_forward.2} parent=23 // pred_check_branch
          %589 = sbr.rel (%p587) target = $region36
        $region35: #{transformer_forward.2} parent=23 // pred_region
          %s590 = sand.u32 %s52, 1
          %s591 = scalar_lea.sflag [#allocation7], %s590
          %s592 = sand.u32 %s126, 1
          %s593 = scalar_lea.vmem [#allocation6], %s592
          %s595 = ssub.s32 16, 16
          %596 = vsyncadd %s591, %s595
          %s597 = smul.addr %s60, 16
          %s598 = scalar_lea.hbm %s3, %s597
          %s600 = sshll.u32 %s593, 4
          %s601 = int_to_ptr.vmem [resolvable:$true] %s600
          %603 = dma.hbm_to_vmem [thread:$0]  %s598, 16, %s601, %s591
        $region36: #{transformer_forward.2} parent=23 // pred_fallthru
          _
        // Predicated region
        $region37: #{transformer_forward.2} parent=23 // pred_check
          %p604 = pneg %p162
        $region38: #{transformer_forward.2} parent=23 // pred_check_branch
          %606 = sbr.rel (%p604) target = $region40
        $region39: #{transformer_forward.2} parent=23 // pred_region
          %s607 = sand.u32 %s52, 1
          %s608 = scalar_lea.sflag [#allocation7], %s607
          %s609 = sand.u32 %s152, 1
          %s610 = smul.addr %s609, 64
          %s611 = scalar_lea.vmem [#allocation8], %s610
          %s613 = ssub.s32 1024, 1024
          %614 = vsyncadd %s608, %s613
          %s615 = smul.addr %s60, 16
          %s616 = smul.addr %s615, 64
          %s617 = scalar_lea.hbm %s4, %s616
          %s618 = sshll.u32 %s611, 4
          %s619 = int_to_ptr.vmem [resolvable:$true] %s618
          %624 = dma.hbm_to_vmem [thread:$0]  %s617, 1024, %s619, %s608, 64, 64, 4
        $region40: #{transformer_forward.2} parent=23 // pred_fallthru
          _
        // Predicated region
        $region41: #{transformer_forward.2} parent=23 // pred_check
          %p625 = pneg %p188
        $region42: #{transformer_forward.2} parent=23 // pred_check_branch
          %627 = sbr.rel (%p625) target = $region44
        $region43: #{transformer_forward.2} parent=23 // pred_region
          %s628 = sand.u32 %s52, 1
          %s629 = scalar_lea.sflag [#allocation10], %s628
          %s630 = sand.u32 %s178, 1
          %s631 = scalar_lea.vmem [#allocation9], %s630
          %s633 = ssub.s32 16, 16
          %634 = vsyncadd %s629, %s633
          %s635 = smul.addr %s60, 16
          %s636 = scalar_lea.hbm %s5, %s635
          %s638 = sshll.u32 %s631, 4
          %s639 = int_to_ptr.vmem [resolvable:$true] %s638
          %641 = dma.hbm_to_vmem [thread:$0]  %s636, 16, %s639, %s629
        $region44: #{transformer_forward.2} parent=23 // pred_fallthru
          _
        // Predicated region
        $region45: #{transformer_forward.2} parent=23 // pred_check
          %p642 = pneg %p214
        $region46: #{transformer_forward.2} parent=23 // pred_check_branch
          %644 = sbr.rel (%p642) target = $region48
        $region47: #{transformer_forward.2} parent=23 // pred_region
          %p645 = scmp.lt.s32.totalorder %s60, 1
          %s646 = scalar_select %p645, %s60, 1
          %s647 = smul.addr %s646, 32
          %s648 = smul.addr %s647, 4
          %s649 = scalar_lea.vmem %s6, %s648
        $region48: #{transformer_forward.2} parent=23 // pred_fallthru
          _
        // Predicated region
        $region49: #{transformer_forward.2} parent=23 // pred_check
          %p650 = pneg %p240
        $region50: #{transformer_forward.2} parent=23 // pred_check_branch
          %652 = sbr.rel (%p650) target = $region52
        $region51: #{transformer_forward.2} parent=23 // pred_region
          %s653 = sand.u32 %s52, 1
          %s654 = scalar_lea.sflag [#allocation10], %s653
          %s655 = sand.u32 %s230, 1
          %s656 = smul.addr %s655, 2
          %s657 = scalar_lea.vmem [#allocation11], %s656
          %s659 = ssub.s32 32, 32
          %660 = vsyncadd %s654, %s659
          %s661 = smul.addr %s60, 2
          %s662 = smul.addr %s661, 16
          %s663 = scalar_lea.hbm %s7, %s662
          %s665 = sshll.u32 %s657, 4
          %s666 = int_to_ptr.vmem [resolvable:$true] %s665
          %668 = dma.hbm_to_vmem [thread:$0]  %s663, 32, %s666, %s654
        $region52: #{transformer_forward.2} parent=23 // pred_fallthru
          _
        // Predicated region
        $region53: #{transformer_forward.2} parent=23 // pred_check
          %p669 = pneg %p266
        $region54: #{transformer_forward.2} parent=23 // pred_check_branch
          %671 = sbr.rel (%p669) target = $region56
        $region55: #{transformer_forward.2} parent=23 // pred_region
          %s672 = sand.u32 %s52, 1
          %s673 = scalar_lea.sflag [#allocation13], %s672
          %s674 = sand.u32 %s256, 1
          %s675 = smul.addr %s674, 64
          %s676 = scalar_lea.vmem [#allocation12], %s675
          %s678 = ssub.s32 1024, 1024
          %679 = vsyncadd %s673, %s678
          %s680 = smul.addr %s60, 16
          %s681 = smul.addr %s680, 64
          %s682 = scalar_lea.hbm %s8, %s681
          %s683 = sshll.u32 %s676, 4
          %s684 = int_to_ptr.vmem [resolvable:$true] %s683
          %689 = dma.hbm_to_vmem [thread:$0]  %s682, 1024, %s684, %s673, 64, 64, 4
        $region56: #{transformer_forward.2} parent=23 // pred_fallthru
          _
        // Predicated region
        $region57: #{transformer_forward.2} parent=23 // pred_check
          %p690 = pneg %p292
        $region58: #{transformer_forward.2} parent=23 // pred_check_branch
          %692 = sbr.rel (%p690) target = $region60
        $region59: #{transformer_forward.2} parent=23 // pred_region
          %s693 = sand.u32 %s52, 1
          %s694 = scalar_lea.sflag [#allocation13], %s693
          %s695 = sand.u32 %s282, 1
          %s696 = scalar_lea.vmem [#allocation14], %s695
          %s698 = ssub.s32 16, 16
          %699 = vsyncadd %s694, %s698
          %s700 = smul.addr %s60, 16
          %s701 = scalar_lea.hbm %s9, %s700
          %s703 = sshll.u32 %s696, 4
          %s704 = int_to_ptr.vmem [resolvable:$true] %s703
          %706 = dma.hbm_to_vmem [thread:$0]  %s701, 16, %s704, %s694
        $region60: #{transformer_forward.2} parent=23 // pred_fallthru
          _
        // Predicated region
        $region61: #{transformer_forward.2} parent=23 // pred_check
          %p707 = pneg %p318
        $region62: #{transformer_forward.2} parent=23 // pred_check_branch
          %709 = sbr.rel (%p707) target = $region64
        $region63: #{transformer_forward.2} parent=23 // pred_region
          %s710 = sand.u32 %s52, 1
          %s711 = scalar_lea.sflag [#allocation16], %s710
          %s712 = sand.u32 %s308, 1
          %s713 = scalar_lea.vmem [#allocation15], %s712
          %s715 = ssub.s32 16, 16
          %716 = vsyncadd %s711, %s715
          %s717 = smul.addr %s60, 16
          %s718 = scalar_lea.hbm %s10, %s717
          %s720 = sshll.u32 %s713, 4
          %s721 = int_to_ptr.vmem [resolvable:$true] %s720
          %723 = dma.hbm_to_vmem [thread:$0]  %s718, 16, %s721, %s711
        $region64: #{transformer_forward.2} parent=23 // pred_fallthru
          _
        // Predicated region
        $region65: #{transformer_forward.2} parent=23 // pred_check
          %p724 = pneg %p344
        $region66: #{transformer_forward.2} parent=23 // pred_check_branch
          %726 = sbr.rel (%p724) target = $region68
        $region67: #{transformer_forward.2} parent=23 // pred_region
          %s727 = sand.u32 %s52, 1
          %s728 = scalar_lea.sflag [#allocation16], %s727
          %s729 = sand.u32 %s334, 1
          %s730 = scalar_lea.vmem [#allocation17], %s729
          %s732 = ssub.s32 16, 16
          %733 = vsyncadd %s728, %s732
          %s734 = smul.addr %s60, 16
          %s735 = scalar_lea.hbm %s11, %s734
          %s737 = sshll.u32 %s730, 4
          %s738 = int_to_ptr.vmem [resolvable:$true] %s737
          %740 = dma.hbm_to_vmem [thread:$0]  %s735, 16, %s738, %s728
        $region68: #{transformer_forward.2} parent=23 // pred_fallthru
          _
        // Predicated region
        $region69: #{transformer_forward.2} parent=23 // pred_check
          %p741 = pneg %p370
        $region70: #{transformer_forward.2} parent=23 // pred_check_branch
          %743 = sbr.rel (%p741) target = $region72
        $region71: #{transformer_forward.2} parent=23 // pred_region
          %p744 = scmp.lt.s32.totalorder %s60, 1
          %s745 = scalar_select %p744, %s60, 1
          %s746 = smul.addr %s745, 32
          %s747 = smul.addr %s746, 4
          %s748 = scalar_lea.vmem %s12, %s747
        $region72: #{transformer_forward.2} parent=23 // pred_fallthru
          _
        // Predicated region
        $region73: #{transformer_forward.2} parent=23 // pred_check
          %p749 = pneg %p396
        $region74: #{transformer_forward.2} parent=23 // pred_check_branch
          %751 = sbr.rel (%p749) target = $region76
        $region75: #{transformer_forward.2} parent=23 // pred_region
          %s752 = sand.u32 %s52, 1
          %s753 = scalar_lea.sflag [#allocation19], %s752
          %s754 = sand.u32 %s386, 1
          %s755 = smul.addr %s754, 2
          %s756 = scalar_lea.vmem [#allocation18], %s755
          %s758 = ssub.s32 32, 32
          %759 = vsyncadd %s753, %s758
          %s760 = smul.addr %s60, 2
          %s761 = smul.addr %s760, 16
          %s762 = scalar_lea.hbm %s13, %s761
          %s764 = sshll.u32 %s756, 4
          %s765 = int_to_ptr.vmem [resolvable:$true] %s764
          %767 = dma.hbm_to_vmem [thread:$0]  %s762, 32, %s765, %s753
        $region76: #{transformer_forward.2} parent=23 // pred_fallthru
          _
        // Predicated region
        $region77: #{transformer_forward.2} parent=23 // pred_check
          %p768 = pneg %p422
        $region78: #{transformer_forward.2} parent=23 // pred_check_branch
          %770 = sbr.rel (%p768) target = $region80
        $region79: #{transformer_forward.2} parent=23 // pred_region
          %s771 = sand.u32 %s52, 1
          %s772 = scalar_lea.sflag [#allocation19], %s771
          %s773 = sand.u32 %s412, 1
          %s774 = smul.addr %s773, 128
          %s775 = scalar_lea.vmem [#allocation20], %s774
          %s777 = ssub.s32 2048, 2048
          %778 = vsyncadd %s772, %s777
          %s779 = smul.addr %s60, 32
          %s780 = smul.addr %s779, 64
          %s781 = scalar_lea.hbm %s14, %s780
          %s782 = sshll.u32 %s775, 4
          %s783 = int_to_ptr.vmem [resolvable:$true] %s782
          %788 = dma.hbm_to_vmem [thread:$0]  %s781, 2048, %s783, %s772, 64, 64, 4
        $region80: #{transformer_forward.2} parent=23 // pred_fallthru
          _
        // Predicated region
        $region81: #{transformer_forward.2} parent=23 // pred_check
          %p789 = pneg %p448
        $region82: #{transformer_forward.2} parent=23 // pred_check_branch
          %791 = sbr.rel (%p789) target = $region84
        $region83: #{transformer_forward.2} parent=23 // pred_region
          %s792 = sand.u32 %s52, 1
          %s793 = scalar_lea.sflag [#allocation22], %s792
          %s794 = sand.u32 %s438, 1
          %s795 = scalar_lea.vmem [#allocation21], %s794
          %s797 = ssub.s32 16, 16
          %798 = vsyncadd %s793, %s797
          %s799 = smul.addr %s60, 16
          %s800 = scalar_lea.hbm %s15, %s799
          %s802 = sshll.u32 %s795, 4
          %s803 = int_to_ptr.vmem [resolvable:$true] %s802
          %805 = dma.hbm_to_vmem [thread:$0]  %s800, 16, %s803, %s793
        $region84: #{transformer_forward.2} parent=23 // pred_fallthru
          _
      $region24: #{transformer_forward.2} parent=5 // pred_fallthru
        _
      %p806 = scmp.le.s32.totalorder 1, %s52
      %p807 = scmp.lt.s32.totalorder %s52, 5
      %p808 = pnand %p806, %p807
      %p809 = pneg %p808
      // Predicated region
      $region85: #{transformer_forward.2} parent=5 // pred_check
        _
      $region86: #{transformer_forward.2} parent=5 // pred_check_branch
        %811 = sbr.rel (%p808) target = $region88
      $region87: #{transformer_forward.2} parent=5 // pred_region
        %s812 = ssub.s32 %s52, 1
        %s813 = sand.u32 %s103, 1
        %s814 = scalar_lea.sflag [#allocation5], %s813
        %s815 = sand.u32 %s103, 1
        %s816 = scalar_lea.vmem [#allocation4], %s815
        // Predicated region
        $region89: #{transformer_forward.2} parent=87 // pred_check
          %p817 = pneg %p116
        $region90: #{transformer_forward.2} parent=87 // pred_check_branch
          %819 = sbr.rel (%p817) target = $region92
        $region91: #{transformer_forward.2} parent=87 // pred_region
          %820 = dma.done %s814, 16
        $region92: #{transformer_forward.2} parent=87 // pred_fallthru
          _
        %s821 = sand.u32 %s57, 1
        %s822 = scalar_lea.sflag [#allocation7], %s821
        %s823 = sand.u32 %s129, 1
        %s824 = scalar_lea.vmem [#allocation6], %s823
        // Predicated region
        $region93: #{transformer_forward.2} parent=87 // pred_check
          %p825 = pneg %p142
        $region94: #{transformer_forward.2} parent=87 // pred_check_branch
          %827 = sbr.rel (%p825) target = $region96
        $region95: #{transformer_forward.2} parent=87 // pred_region
          %828 = dma.done %s822, 16
        $region96: #{transformer_forward.2} parent=87 // pred_fallthru
          _
        %s829 = sand.u32 %s57, 1
        %s830 = scalar_lea.sflag [#allocation7], %s829
        %s831 = sand.u32 %s155, 1
        %s832 = smul.addr %s831, 64
        %s833 = scalar_lea.vmem [#allocation8], %s832
        // Predicated region
        $region97: #{transformer_forward.2} parent=87 // pred_check
          %p834 = pneg %p168
        $region98: #{transformer_forward.2} parent=87 // pred_check_branch
          %836 = sbr.rel (%p834) target = $region100
        $region99: #{transformer_forward.2} parent=87 // pred_region
          %837 = dma.done %s830, 1024
        $region100: #{transformer_forward.2} parent=87 // pred_fallthru
          _
        %s838 = sand.u32 %s57, 1
        %s839 = scalar_lea.sflag [#allocation10], %s838
        %s840 = sand.u32 %s181, 1
        %s841 = scalar_lea.vmem [#allocation9], %s840
        // Predicated region
        $region101: #{transformer_forward.2} parent=87 // pred_check
          %p842 = pneg %p194
        $region102: #{transformer_forward.2} parent=87 // pred_check_branch
          %844 = sbr.rel (%p842) target = $region104
        $region103: #{transformer_forward.2} parent=87 // pred_region
          %845 = dma.done %s839, 16
        $region104: #{transformer_forward.2} parent=87 // pred_fallthru
          _
        %s846 = sand.u32 %s57, 1
        %s847 = scalar_lea.sflag [#allocation10], %s846
        %s848 = sand.u32 %s233, 1
        %s849 = smul.addr %s848, 2
        %s850 = scalar_lea.vmem [#allocation11], %s849
        // Predicated region
        $region105: #{transformer_forward.2} parent=87 // pred_check
          %p851 = pneg %p246
        $region106: #{transformer_forward.2} parent=87 // pred_check_branch
          %853 = sbr.rel (%p851) target = $region108
        $region107: #{transformer_forward.2} parent=87 // pred_region
          %854 = dma.done %s847, 32
        $region108: #{transformer_forward.2} parent=87 // pred_fallthru
          _
        %s855 = sand.u32 %s57, 1
        %s856 = scalar_lea.sflag [#allocation13], %s855
        %s857 = sand.u32 %s259, 1
        %s858 = smul.addr %s857, 64
        %s859 = scalar_lea.vmem [#allocation12], %s858
        // Predicated region
        $region109: #{transformer_forward.2} parent=87 // pred_check
          %p860 = pneg %p272
        $region110: #{transformer_forward.2} parent=87 // pred_check_branch
          %862 = sbr.rel (%p860) target = $region112
        $region111: #{transformer_forward.2} parent=87 // pred_region
          %863 = dma.done %s856, 1024
        $region112: #{transformer_forward.2} parent=87 // pred_fallthru
          _
        %s864 = sand.u32 %s57, 1
        %s865 = scalar_lea.sflag [#allocation13], %s864
        %s866 = sand.u32 %s285, 1
        %s867 = scalar_lea.vmem [#allocation14], %s866
        // Predicated region
        $region113: #{transformer_forward.2} parent=87 // pred_check
          %p868 = pneg %p298
        $region114: #{transformer_forward.2} parent=87 // pred_check_branch
          %870 = sbr.rel (%p868) target = $region116
        $region115: #{transformer_forward.2} parent=87 // pred_region
          %871 = dma.done %s865, 16
        $region116: #{transformer_forward.2} parent=87 // pred_fallthru
          _
        %s872 = sand.u32 %s57, 1
        %s873 = scalar_lea.sflag [#allocation16], %s872
        %s874 = sand.u32 %s311, 1
        %s875 = scalar_lea.vmem [#allocation15], %s874
        // Predicated region
        $region117: #{transformer_forward.2} parent=87 // pred_check
          %p876 = pneg %p324
        $region118: #{transformer_forward.2} parent=87 // pred_check_branch
          %878 = sbr.rel (%p876) target = $region120
        $region119: #{transformer_forward.2} parent=87 // pred_region
          %879 = dma.done %s873, 16
        $region120: #{transformer_forward.2} parent=87 // pred_fallthru
          _
        %s880 = sand.u32 %s57, 1
        %s881 = scalar_lea.sflag [#allocation16], %s880
        %s882 = sand.u32 %s337, 1
        %s883 = scalar_lea.vmem [#allocation17], %s882
        // Predicated region
        $region121: #{transformer_forward.2} parent=87 // pred_check
          %p884 = pneg %p350
        $region122: #{transformer_forward.2} parent=87 // pred_check_branch
          %886 = sbr.rel (%p884) target = $region124
        $region123: #{transformer_forward.2} parent=87 // pred_region
          %887 = dma.done %s881, 16
        $region124: #{transformer_forward.2} parent=87 // pred_fallthru
          _
        %s888 = sand.u32 %s57, 1
        %s889 = scalar_lea.sflag [#allocation19], %s888
        %s890 = sand.u32 %s389, 1
        %s891 = smul.addr %s890, 2
        %s892 = scalar_lea.vmem [#allocation18], %s891
        // Predicated region
        $region125: #{transformer_forward.2} parent=87 // pred_check
          %p893 = pneg %p402
        $region126: #{transformer_forward.2} parent=87 // pred_check_branch
          %895 = sbr.rel (%p893) target = $region128
        $region127: #{transformer_forward.2} parent=87 // pred_region
          %896 = dma.done %s889, 32
        $region128: #{transformer_forward.2} parent=87 // pred_fallthru
          _
        %s897 = sand.u32 %s57, 1
        %s898 = scalar_lea.sflag [#allocation19], %s897
        %s899 = sand.u32 %s415, 1
        %s900 = smul.addr %s899, 128
        %s901 = scalar_lea.vmem [#allocation20], %s900
        // Predicated region
        $region129: #{transformer_forward.2} parent=87 // pred_check
          %p902 = pneg %p428
        $region130: #{transformer_forward.2} parent=87 // pred_check_branch
          %904 = sbr.rel (%p902) target = $region132
        $region131: #{transformer_forward.2} parent=87 // pred_region
          %905 = dma.done %s898, 2048
        $region132: #{transformer_forward.2} parent=87 // pred_fallthru
          _
        %s906 = sand.u32 %s57, 1
        %s907 = scalar_lea.sflag [#allocation22], %s906
        %s908 = sand.u32 %s441, 1
        %s909 = scalar_lea.vmem [#allocation21], %s908
        // Predicated region
        $region133: #{transformer_forward.2} parent=87 // pred_check
          %p910 = pneg %p454
        $region134: #{transformer_forward.2} parent=87 // pred_check_branch
          %912 = sbr.rel (%p910) target = $region136
        $region135: #{transformer_forward.2} parent=87 // pred_region
          %913 = dma.done %s907, 16
        $region136: #{transformer_forward.2} parent=87 // pred_fallthru
          _
        // Predicated region
        $region137: #{transformer_forward.2} parent=87 // pred_check
          %p914 = pneg %p475
        $region138: #{transformer_forward.2} parent=87 // pred_check_branch
          %916 = sbr.rel (%p914) target = $region140
        $region139: #{transformer_forward.2} parent=87 // pred_region
          %917 = dma.done [#allocation22], 16
        $region140: #{transformer_forward.2} parent=87 // pred_fallthru
          _
        // Predicated region
        $region141: #{transformer_forward.2} parent=87 // pred_check
          %p918 = pneg %p496
        $region142: #{transformer_forward.2} parent=87 // pred_check_branch
          %920 = sbr.rel (%p918) target = $region144
        $region143: #{transformer_forward.2} parent=87 // pred_region
          %921 = dma.done [#allocation25], 16
        $region144: #{transformer_forward.2} parent=87 // pred_fallthru
          _
        %p922 = scmp.lt.s32.totalorder %s61, 1
        %s923 = scalar_select %p922, %s61, 1
        %s924 = smul.addr %s923, 8
        %s925 = scalar_lea.vmem %s1, %s924
        %p926 = pneg %p90
        %p927 = pneg %p87
        %s928 = sand.u32 %s103, 1
        %s929 = scalar_lea.sflag [#allocation5], %s928
        %s930 = sand.u32 %s103, 1
        %s931 = scalar_lea.vmem [#allocation4], %s930
        %p932 = pneg %p116
        %p933 = pneg %p113
        %s934 = sand.u32 %s57, 1
        %s935 = scalar_lea.sflag [#allocation7], %s934
        %s936 = sand.u32 %s129, 1
        %s937 = scalar_lea.vmem [#allocation6], %s936
        %p938 = pneg %p142
        %p939 = pneg %p139
        %s940 = sand.u32 %s57, 1
        %s941 = scalar_lea.sflag [#allocation7], %s940
        %s942 = sand.u32 %s155, 1
        %s943 = smul.addr %s942, 64
        %s944 = scalar_lea.vmem [#allocation8], %s943
        %p945 = pneg %p168
        %p946 = pneg %p165
        %s947 = sand.u32 %s57, 1
        %s948 = scalar_lea.sflag [#allocation10], %s947
        %s949 = sand.u32 %s181, 1
        %s950 = scalar_lea.vmem [#allocation9], %s949
        %p951 = pneg %p194
        %p952 = pneg %p191
        %p953 = scmp.lt.s32.totalorder %s62, 1
        %s954 = scalar_select %p953, %s62, 1
        %s955 = smul.addr %s954, 32
        %s956 = smul.addr %s955, 4
        %s957 = scalar_lea.vmem %s6, %s956
        %p958 = pneg %p220
        %p959 = pneg %p217
        %s960 = sand.u32 %s57, 1
        %s961 = scalar_lea.sflag [#allocation10], %s960
        %s962 = sand.u32 %s233, 1
        %s963 = smul.addr %s962, 2
        %s964 = scalar_lea.vmem [#allocation11], %s963
        %p965 = pneg %p246
        %p966 = pneg %p243
        %s967 = sand.u32 %s57, 1
        %s968 = scalar_lea.sflag [#allocation13], %s967
        %s969 = sand.u32 %s259, 1
        %s970 = smul.addr %s969, 64
        %s971 = scalar_lea.vmem [#allocation12], %s970
        %p972 = pneg %p272
        %p973 = pneg %p269
        %s974 = sand.u32 %s57, 1
        %s975 = scalar_lea.sflag [#allocation13], %s974
        %s976 = sand.u32 %s285, 1
        %s977 = scalar_lea.vmem [#allocation14], %s976
        %p978 = pneg %p298
        %p979 = pneg %p295
        %s980 = sand.u32 %s57, 1
        %s981 = scalar_lea.sflag [#allocation16], %s980
        %s982 = sand.u32 %s311, 1
        %s983 = scalar_lea.vmem [#allocation15], %s982
        %p984 = pneg %p324
        %p985 = pneg %p321
        %s986 = sand.u32 %s57, 1
        %s987 = scalar_lea.sflag [#allocation16], %s986
        %s988 = sand.u32 %s337, 1
        %s989 = scalar_lea.vmem [#allocation17], %s988
        %p990 = pneg %p350
        %p991 = pneg %p347
        %p992 = scmp.lt.s32.totalorder %s62, 1
        %s993 = scalar_select %p992, %s62, 1
        %s994 = smul.addr %s993, 32
        %s995 = smul.addr %s994, 4
        %s996 = scalar_lea.vmem %s12, %s995
        %p997 = pneg %p376
        %p998 = pneg %p373
        %s999 = sand.u32 %s57, 1
        %s1000 = scalar_lea.sflag [#allocation19], %s999
        %s1001 = sand.u32 %s389, 1
        %s1002 = smul.addr %s1001, 2
        %s1003 = scalar_lea.vmem [#allocation18], %s1002
        %p1004 = pneg %p402
        %p1005 = pneg %p399
        %s1006 = sand.u32 %s57, 1
        %s1007 = scalar_lea.sflag [#allocation19], %s1006
        %s1008 = sand.u32 %s415, 1
        %s1009 = smul.addr %s1008, 128
        %s1010 = scalar_lea.vmem [#allocation20], %s1009
        %p1011 = pneg %p428
        %p1012 = pneg %p425
        %s1013 = sand.u32 %s57, 1
        %s1014 = scalar_lea.sflag [#allocation22], %s1013
        %s1015 = sand.u32 %s441, 1
        %s1016 = scalar_lea.vmem [#allocation21], %s1015
        %p1017 = pneg %p454
        %p1018 = pneg %p451
        %p1019 = pneg %p475
        %p1020 = pneg %p472
        %p1021 = pneg %p496
        %p1022 = pneg %p493
        %p1023 = pneg %p522
        %p1024 = pneg %p519
        %p1025 = scmp.lt.s32.totalorder %s61, 1
        %s1026 = scalar_select %p1025, %s61, 1
        %s1027 = smul.addr %s1026, 8
        %s1028 = scalar_lea.vmem %s18, %s1027
        %p1029 = scmp.lt.s32.totalorder %s61, 1
        %s1030 = scalar_select %p1029, %s61, 1
        %s1031 = smul.addr %s1030, 8
        %s1032 = scalar_lea.vmem %s1, %s1031
        %p1033 = scmp.lt.s32.totalorder %s62, 1
        %s1034 = scalar_select %p1033, %s62, 1
        %s1035 = smul.addr %s1034, 32
        %s1036 = smul.addr %s1035, 4
        %s1037 = scalar_lea.vmem %s6, %s1036
        %p1038 = scmp.lt.s32.totalorder %s62, 1
        %s1039 = scalar_select %p1038, %s62, 1
        %s1040 = smul.addr %s1039, 32
        %s1041 = smul.addr %s1040, 4
        %s1042 = scalar_lea.vmem %s12, %s1041
        %p1043 = scmp.lt.s32.totalorder %s61, 1
        %s1044 = scalar_select %p1043, %s61, 1
        %s1045 = smul.addr %s1044, 8
        %s1046 = scalar_lea.vmem %s18, %s1045
        %p1048 = scmp.eq.s32.totalorder %s62, 0
        // Predicated region
        $region145: #{transformer_forward.2} parent=87 // pred_check
          %p1049 = pneg %p1048
        $region146: #{transformer_forward.2} parent=87 // pred_check_branch
          %1051 = sbr.rel (%p1049) target = $region148
        $region147: #{transformer_forward.2} parent=87 // pred_region
          %v1052 = vld [vmem:[%s1032] sm:$0xff]
          %1053 = vst [vmem:[%s1046] sm:$0xff] %v1052
        $region148: #{transformer_forward.2} parent=87 // pred_fallthru
          _
        %v1054 = vld [vmem:[%s1046] sm:$0xff]
        %s1055 = sld [smem:[#allocation3 + %s61]]
        %v1056 = vld [vmem:[%s816] sm:$0x1]
        %v1057 = vld [vmem:[%s824] sm:$0x1]
        %1058 = vadd.xlane.f32.xlu0 %v1054
        %v1059 = vpop.xlane.xlu0 %1058
        %v1060 = vrcp.pop 128.0
        %v1061 = vmul.f32 %v1059, %v1060
        %v1062 = vsub.f32 %v1054, %v1061
        %v1063 = vmul.f32 %v1062, %v1062
        %1064 = vadd.xlane.f32.xlu0 %v1063
        %v1065 = vpop.xlane.xlu0 %1064
        %v1066 = vmul.f32 %v1065, %v1060
        %v1067 = vadd.f32 %v1066, 1e-05
        %v1068 = vrsqrt.pop %v1067
        %v1069 = vmul.f32 %v1062, %v1068
        %v1071 = vlaneseq
        %v1072 = vshrl.u32 %v1071, 7
        %v1073 = vsub.s32 0, %v1072
        %v1074 = vrot.slane %v1056, %v1073
        %v1076 = vmul.f32 %v1069, %v1074
        %v1078 = vlaneseq
        %v1079 = vshrl.u32 %v1078, 7
        %v1080 = vsub.s32 0, %v1079
        %v1081 = vrot.slane %v1057, %v1080
        %v1083 = vadd.f32 %v1076, %v1081
        %v1084 = vld [vmem:[%s833] sm:$0xf]
        %v1085 = vld [vmem:[%s833 + $0x4] sm:$0xf]
        %v1086 = vld [vmem:[%s833 + $0x8] sm:$0xf]
        %v1087 = vld [vmem:[%s833 + $0xc] sm:$0xf]
        %v1088 = vld [vmem:[%s833 + $0x10] sm:$0xf]
        %v1089 = vld [vmem:[%s833 + $0x14] sm:$0xf]
        %v1090 = vld [vmem:[%s833 + $0x18] sm:$0xf]
        %v1091 = vld [vmem:[%s833 + $0x1c] sm:$0xf]
        %v1092 = vld [vmem:[%s833 + $0x20] sm:$0xf]
        %v1093 = vld [vmem:[%s833 + $0x24] sm:$0xf]
        %v1094 = vld [vmem:[%s833 + $0x28] sm:$0xf]
        %v1095 = vld [vmem:[%s833 + $0x2c] sm:$0xf]
        %v1096 = vld [vmem:[%s833 + $0x30] sm:$0xf]
        %v1097 = vld [vmem:[%s833 + $0x34] sm:$0xf]
        %v1098 = vld [vmem:[%s833 + $0x38] sm:$0xf]
        %v1099 = vld [vmem:[%s833 + $0x3c] sm:$0xf]
        %v1100 = vld [vmem:[%s841] sm:$0x1]
        %v1101 = vld [vmem:[%s1037] sm:$0xff]
        %v1102 = vld [vmem:[%s1037 + $0x8] sm:$0xff]
        %v1103 = vld [vmem:[%s1037 + $0x10] sm:$0xff]
        %v1104 = vld [vmem:[%s1037 + $0x18] sm:$0xff]
        %v1105 = vld [vmem:[%s1037 + $0x20] sm:$0xff]
        %v1106 = vld [vmem:[%s1037 + $0x28] sm:$0xff]
        %v1107 = vld [vmem:[%s1037 + $0x30] sm:$0xff]
        %v1108 = vld [vmem:[%s1037 + $0x38] sm:$0xff]
        %v1109 = vld [vmem:[%s1037 + $0x40] sm:$0xff]
        %v1110 = vld [vmem:[%s1037 + $0x48] sm:$0xff]
        %v1111 = vld [vmem:[%s1037 + $0x50] sm:$0xff]
        %v1112 = vld [vmem:[%s1037 + $0x58] sm:$0xff]
        %v1113 = vld [vmem:[%s1037 + $0x60] sm:$0xff]
        %v1114 = vld [vmem:[%s1037 + $0x68] sm:$0xff]
        %v1115 = vld [vmem:[%s1037 + $0x70] sm:$0xff]
        %v1116 = vld [vmem:[%s1037 + $0x78] sm:$0xff]
        %v1117 = vld [vmem:[%s850] sm:$0x3]
        %v1118 = vld [vmem:[%s859] sm:$0xf]
        %v1119 = vld [vmem:[%s859 + $0x4] sm:$0xf]
        %v1120 = vld [vmem:[%s859 + $0x8] sm:$0xf]
        %v1121 = vld [vmem:[%s859 + $0xc] sm:$0xf]
        %v1122 = vld [vmem:[%s859 + $0x10] sm:$0xf]
        %v1123 = vld [vmem:[%s859 + $0x14] sm:$0xf]
        %v1124 = vld [vmem:[%s859 + $0x18] sm:$0xf]
        %v1125 = vld [vmem:[%s859 + $0x1c] sm:$0xf]
        %v1126 = vld [vmem:[%s859 + $0x20] sm:$0xf]
        %v1127 = vld [vmem:[%s859 + $0x24] sm:$0xf]
        %v1128 = vld [vmem:[%s859 + $0x28] sm:$0xf]
        %v1129 = vld [vmem:[%s859 + $0x2c] sm:$0xf]
        %v1130 = vld [vmem:[%s859 + $0x30] sm:$0xf]
        %v1131 = vld [vmem:[%s859 + $0x34] sm:$0xf]
        %v1132 = vld [vmem:[%s859 + $0x38] sm:$0xf]
        %v1133 = vld [vmem:[%s859 + $0x3c] sm:$0xf]
        %v1134 = vld [vmem:[%s867] sm:$0x1]
        %v1135 = vpack.c.bf16 %v1083, %v1083
        %v1137 = vlaneseq
        %v1138 = vshrl.u32 %v1137, 7
        %v1139 = vsub.s32 0, %v1138
        %v1140 = vrot.slane %v1100, %v1139
        %v1158 = vunpack.c.l.b16 %v1084
        %v1159 = vunpack.c.l.b16 %v1085
        %v1160 = vunpack.c.l.b16 %v1086
        %v1161 = vunpack.c.l.b16 %v1087
        %v1162 = vunpack.c.l.b16 %v1088
        %v1163 = vunpack.c.l.b16 %v1089
        %v1164 = vunpack.c.l.b16 %v1090
        %v1165 = vunpack.c.l.b16 %v1091
        %v1166 = vunpack.c.l.b16 %v1092
        %v1167 = vunpack.c.l.b16 %v1093
        %v1168 = vunpack.c.l.b16 %v1094
        %v1169 = vunpack.c.l.b16 %v1095
        %v1170 = vunpack.c.l.b16 %v1096
        %v1171 = vunpack.c.l.b16 %v1097
        %v1172 = vunpack.c.l.b16 %v1098
        %v1173 = vunpack.c.l.b16 %v1099
        %v1174 = vpack.c.b16 %v1159, %v1158
        %v1175 = vpack.c.b16 %v1161, %v1160
        %v1176 = vpack.c.b16 %v1163, %v1162
        %v1177 = vpack.c.b16 %v1165, %v1164
        %v1178 = vpack.c.b16 %v1167, %v1166
        %v1179 = vpack.c.b16 %v1169, %v1168
        %v1180 = vpack.c.b16 %v1171, %v1170
        %v1181 = vpack.c.b16 %v1173, %v1172
        %1190 = vmatprep.subr.bf16.mxu0 0
        %1191 = vmatpush1.bf16.msra.mxu0 %v1174
        %1192 = vmatprep.subr.bf16.mxu0 0
        %1193 = vmatpush1.bf16.msra.mxu0 %v1175
        %1194 = vmatprep.subr.bf16.mxu0 0
        %1195 = vmatpush1.bf16.msra.mxu0 %v1176
        %1196 = vmatprep.subr.bf16.mxu0 0
        %1197 = vmatpush1.bf16.msra.mxu0 %v1177
        %1198 = vmatprep.subr.bf16.mxu0 0
        %1199 = vmatpush1.bf16.msra.mxu0 %v1178
        %1200 = vmatprep.subr.bf16.mxu0 0
        %1201 = vmatpush1.bf16.msra.mxu0 %v1179
        %1202 = vmatprep.subr.bf16.mxu0 0
        %1203 = vmatpush1.bf16.msra.mxu0 %v1180
        %1204 = vmatprep.subr.bf16.mxu0 0
        %1205 = vmatpush1.bf16.msra.mxu0 %v1181
        %1206 = vmatprep.subr.bf16.mxu0 0
        %1207 = vmatpush1.bf16.msra.mxu0 0
        %1208 = vmatprep.subr.bf16.mxu0 0
        %1209 = vmatpush1.bf16.msra.mxu0 0
        %1210 = vmatprep.subr.bf16.mxu0 0
        %1211 = vmatpush1.bf16.msra.mxu0 0
        %1212 = vmatprep.subr.bf16.mxu0 0
        %1213 = vmatpush1.bf16.msra.mxu0 0
        %1214 = vmatprep.subr.bf16.mxu0 0
        %1215 = vmatpush1.bf16.msra.mxu0 0
        %1216 = vmatprep.subr.bf16.mxu0 0
        %1217 = vmatpush1.bf16.msra.mxu0 0
        %1218 = vmatprep.subr.bf16.mxu0 0
        %1219 = vmatpush1.bf16.msra.mxu0 0
        %1220 = vmatprep.subr.bf16.mxu0 0
        %1221 = vmatpush1.bf16.msra.mxu0 0
        %1222 = vmatprep.mubr.bf16.mxu0 0
        %1223 = vmatmul.mubr.bf16.gmra.mrb[0].mxu0 %v1135
        %v1224 = vpop.f32.mrb[0].mxu0
        %v1225 = vadd.f32 %v1140, %v1224
        %v1226 = vpop.f32.mrb[0].mxu0
        %v1227 = vpop.f32.mrb[0].mxu0
        %v1228 = vpop.f32.mrb[0].mxu0
        %1229 = vdwg.mxu0
        %v1231 = vlaneseq
        %v1232 = vshrl.u32 %v1231, 7
        %v1233 = vsub.s32 0, %v1232
        %v1234 = vrot.slane %v1117, %v1233
        %v1235 = vlaneseq
        %v1236 = vshrl.u32 %v1235, 7
        %v1237 = vsub.s32 1, %v1236
        %v1238 = vrot.slane %v1117, %v1237
        %v1257 = vunpack.c.l.b16 %v1101
        %v1258 = vunpack.c.h.b16 %v1101
        %v1259 = vunpack.c.l.b16 %v1102
        %v1260 = vunpack.c.h.b16 %v1102
        %v1261 = vunpack.c.l.b16 %v1103
        %v1262 = vunpack.c.h.b16 %v1103
        %v1263 = vunpack.c.l.b16 %v1104
        %v1264 = vunpack.c.h.b16 %v1104
        %v1265 = vunpack.c.l.b16 %v1105
        %v1266 = vunpack.c.h.b16 %v1105
        %v1267 = vunpack.c.l.b16 %v1106
        %v1268 = vunpack.c.h.b16 %v1106
        %v1269 = vunpack.c.l.b16 %v1107
        %v1270 = vunpack.c.h.b16 %v1107
        %v1271 = vunpack.c.l.b16 %v1108
        %v1272 = vunpack.c.h.b16 %v1108
        %v1273 = vunpack.c.l.b16 %v1109
        %v1274 = vunpack.c.h.b16 %v1109
        %v1275 = vunpack.c.l.b16 %v1110
        %v1276 = vunpack.c.h.b16 %v1110
        %v1277 = vunpack.c.l.b16 %v1111
        %v1278 = vunpack.c.h.b16 %v1111
        %v1279 = vunpack.c.l.b16 %v1112
        %v1280 = vunpack.c.h.b16 %v1112
        %v1281 = vunpack.c.l.b16 %v1113
        %v1282 = vunpack.c.h.b16 %v1113
        %v1283 = vunpack.c.l.b16 %v1114
        %v1284 = vunpack.c.h.b16 %v1114
        %v1285 = vunpack.c.l.b16 %v1115
        %v1286 = vunpack.c.h.b16 %v1115
        %v1287 = vunpack.c.l.b16 %v1116
        %v1288 = vunpack.c.h.b16 %v1116
        %v1289 = vpack.c.b16 %v1259, %v1257
        %v1290 = vpack.c.b16 %v1260, %v1258
        %v1291 = vpack.c.b16 %v1263, %v1261
        %v1292 = vpack.c.b16 %v1264, %v1262
        %v1293 = vpack.c.b16 %v1267, %v1265
        %v1294 = vpack.c.b16 %v1268, %v1266
        %v1295 = vpack.c.b16 %v1271, %v1269
        %v1296 = vpack.c.b16 %v1272, %v1270
        %v1297 = vpack.c.b16 %v1275, %v1273
        %v1298 = vpack.c.b16 %v1276, %v1274
        %v1299 = vpack.c.b16 %v1279, %v1277
        %v1300 = vpack.c.b16 %v1280, %v1278
        %v1301 = vpack.c.b16 %v1283, %v1281
        %v1302 = vpack.c.b16 %v1284, %v1282
        %v1303 = vpack.c.b16 %v1287, %v1285
        %v1304 = vpack.c.b16 %v1288, %v1286
        %1321 = vmatprep.subr.bf16.mxu0 %v1290
        %1322 = vmatpush1.bf16.msra.mxu0 %v1289
        %1323 = vmatprep.subr.bf16.mxu0 %v1292
        %1324 = vmatpush1.bf16.msra.mxu0 %v1291
        %1325 = vmatprep.subr.bf16.mxu0 %v1294
        %1326 = vmatpush1.bf16.msra.mxu0 %v1293
        %1327 = vmatprep.subr.bf16.mxu0 %v1296
        %1328 = vmatpush1.bf16.msra.mxu0 %v1295
        %1329 = vmatprep.subr.bf16.mxu0 %v1298
        %1330 = vmatpush1.bf16.msra.mxu0 %v1297
        %1331 = vmatprep.subr.bf16.mxu0 %v1300
        %1332 = vmatpush1.bf16.msra.mxu0 %v1299
        %1333 = vmatprep.subr.bf16.mxu0 %v1302
        %1334 = vmatpush1.bf16.msra.mxu0 %v1301
        %1335 = vmatprep.subr.bf16.mxu0 %v1304
        %1336 = vmatpush1.bf16.msra.mxu0 %v1303
        %1337 = vmatprep.subr.bf16.mxu0 0
        %1338 = vmatpush1.bf16.msra.mxu0 0
        %1339 = vmatprep.subr.bf16.mxu0 0
        %1340 = vmatpush1.bf16.msra.mxu0 0
        %1341 = vmatprep.subr.bf16.mxu0 0
        %1342 = vmatpush1.bf16.msra.mxu0 0
        %1343 = vmatprep.subr.bf16.mxu0 0
        %1344 = vmatpush1.bf16.msra.mxu0 0
        %1345 = vmatprep.subr.bf16.mxu0 0
        %1346 = vmatpush1.bf16.msra.mxu0 0
        %1347 = vmatprep.subr.bf16.mxu0 0
        %1348 = vmatpush1.bf16.msra.mxu0 0
        %1349 = vmatprep.subr.bf16.mxu0 0
        %1350 = vmatpush1.bf16.msra.mxu0 0
        %1351 = vmatprep.subr.bf16.mxu0 0
        %1352 = vmatpush1.bf16.msra.mxu0 0
        %1353 = vmatprep.mubr.bf16.mxu0 0
        %1354 = vmatmul.mubr.bf16.gmra.mrb[0].mxu0 %v1135
        %v1355 = vpop.f32.mrb[0].mxu0
        %v1356 = vadd.f32 %v1234, %v1355
        %v1357 = vpop.f32.mrb[0].mxu0
        %v1358 = vadd.f32 %v1238, %v1357
        %v1359 = vpop.f32.mrb[0].mxu0
        %v1360 = vpop.f32.mrb[0].mxu0
        %1361 = vdwg.mxu0
        %v1362 = vmul.f32 %v1225, 0.17677669
        %v1363 = vlaneseq
        %v1364 = vand.u32 %v1363, 127
        %v1365 = vstv %s1055
        %vm1366 = vcmp.lt.s32.totalorder %v1364, %v1365
        %v1367 = vpack.c.bf16 %v1362, %v1362
        %v1368 = vpack.c.bf16 %v1356, %v1356
        %v1369 = vpack.c.bf16 %v1358, %v1358
        %vm1370 = vcmask 261120
        %v1372 = vsel %vm1370, %v1367, 0
        %v1375 = vsel %vm1370, %v1368, 0
        %1377 = vmatprep.subr.bf16.mxu0 0
        %1378 = vmatpush1.bf16.xpose.msra.mxu0 %v1375
        %1379 = vmatprep.subr.bf16.mxu0 0
        %1380 = vmatpush1.bf16.xpose.msra.mxu0 0
        %1381 = vmatprep.subr.bf16.mxu0 0
        %1382 = vmatpush1.bf16.xpose.msra.mxu0 0
        %1383 = vmatprep.subr.bf16.mxu0 0
        %1384 = vmatpush1.bf16.xpose.msra.mxu0 0
        %1385 = vmatprep.subr.bf16.mxu0 0
        %1386 = vmatpush1.bf16.xpose.msra.mxu0 0
        %1387 = vmatprep.subr.bf16.mxu0 0
        %1388 = vmatpush1.bf16.xpose.msra.mxu0 0
        %1389 = vmatprep.subr.bf16.mxu0 0
        %1390 = vmatpush1.bf16.xpose.msra.mxu0 0
        %1391 = vmatprep.subr.bf16.mxu0 0
        %1392 = vmatpush1.bf16.xpose.msra.mxu0 0
        %1393 = vmatprep.subr.bf16.mxu0 0
        %1394 = vmatpush1.bf16.xpose.msra.mxu0 0
        %1395 = vmatprep.subr.bf16.mxu0 0
        %1396 = vmatpush1.bf16.xpose.msra.mxu0 0
        %1397 = vmatprep.subr.bf16.mxu0 0
        %1398 = vmatpush1.bf16.xpose.msra.mxu0 0
        %1399 = vmatprep.subr.bf16.mxu0 0
        %1400 = vmatpush1.bf16.xpose.msra.mxu0 0
        %1401 = vmatprep.subr.bf16.mxu0 0
        %1402 = vmatpush1.bf16.xpose.msra.mxu0 0
        %1403 = vmatprep.subr.bf16.mxu0 0
        %1404 = vmatpush1.bf16.xpose.msra.mxu0 0
        %1405 = vmatprep.subr.bf16.mxu0 0
        %1406 = vmatpush1.bf16.xpose.msra.mxu0 0
        %1407 = vmatprep.subr.bf16.mxu0 0
        %1408 = vmatpush1.bf16.xpose.msra.mxu0 0
        %1409 = vmatprep.mubr.bf16.mxu0 0
        %1410 = vmatmul.mubr.bf16.gmra.mrb[0].mxu0 %v1372
        %v1411 = vpop.f32.mrb[0].mxu0
        %v1412 = vadd.f32 0.0, %v1411
        %v1413 = vpop.f32.mrb[0].mxu0
        %v1414 = vpop.f32.mrb[0].mxu0
        %v1415 = vpop.f32.mrb[0].mxu0
        %1416 = vdwg.mxu0
        %v1417 = vsel %vm1366, %v1412, -1e+30
        %vm1418 = vcmask 64512
        %v1419 = vsel %vm1418, %v1417, -inf
        %1420 = vmax.xlane.f32.xlu0 %v1419
        %v1421 = vpop.xlane.xlu0 %1420
        %v1422 = vsub.f32 %v1417, %v1421
        %v1423 = vmul.f32 %v1422, 1.442695
        %v1424 = vpow.pop %v1423
        %v1425 = vsel %vm1418, %v1424, 0.0
        %1426 = vadd.xlane.f32.xlu0 %v1425
        %v1427 = vpop.xlane.xlu0 %1426
        %v1428 = vrcp.pop %v1427
        %v1429 = vmul.f32 %v1424, %v1428
        %v1430 = vpack.c.bf16 %v1429, %v1429
        %v1432 = vsel %vm1418, %v1430, 0
        %vm1434 = vcmask 1043456
        %v1436 = vsel %vm1434, %v1369, 0
        %1438 = vmatprep.subr.bf16.mxu0 0
        %1439 = vmatpush1.bf16.msra.mxu0 %v1436
        %1440 = vmatprep.subr.bf16.mxu0 0
        %1441 = vmatpush1.bf16.msra.mxu0 0
        %1442 = vmatprep.subr.bf16.mxu0 0
        %1443 = vmatpush1.bf16.msra.mxu0 0
        %1444 = vmatprep.subr.bf16.mxu0 0
        %1445 = vmatpush1.bf16.msra.mxu0 0
        %1446 = vmatprep.subr.bf16.mxu0 0
        %1447 = vmatpush1.bf16.msra.mxu0 0
        %1448 = vmatprep.subr.bf16.mxu0 0
        %1449 = vmatpush1.bf16.msra.mxu0 0
        %1450 = vmatprep.subr.bf16.mxu0 0
        %1451 = vmatpush1.bf16.msra.mxu0 0
        %1452 = vmatprep.subr.bf16.mxu0 0
        %1453 = vmatpush1.bf16.msra.mxu0 0
        %1454 = vmatprep.subr.bf16.mxu0 0
        %1455 = vmatpush1.bf16.msra.mxu0 0
        %1456 = vmatprep.subr.bf16.mxu0 0
        %1457 = vmatpush1.bf16.msra.mxu0 0
        %1458 = vmatprep.subr.bf16.mxu0 0
        %1459 = vmatpush1.bf16.msra.mxu0 0
        %1460 = vmatprep.subr.bf16.mxu0 0
        %1461 = vmatpush1.bf16.msra.mxu0 0
        %1462 = vmatprep.subr.bf16.mxu0 0
        %1463 = vmatpush1.bf16.msra.mxu0 0
        %1464 = vmatprep.subr.bf16.mxu0 0
        %1465 = vmatpush1.bf16.msra.mxu0 0
        %1466 = vmatprep.subr.bf16.mxu0 0
        %1467 = vmatpush1.bf16.msra.mxu0 0
        %1468 = vmatprep.subr.bf16.mxu0 0
        %1469 = vmatpush1.bf16.msra.mxu0 0
        %1470 = vmatprep.mubr.bf16.mxu0 0
        %1471 = vmatmul.mubr.bf16.gmra.mrb[0].mxu0 %v1432
        %v1472 = vpop.f32.mrb[0].mxu0
        %v1473 = vadd.f32 0.0, %v1472
        %v1474 = vpop.f32.mrb[0].mxu0
        %v1475 = vpop.f32.mrb[0].mxu0
        %v1476 = vpop.f32.mrb[0].mxu0
        %1477 = vdwg.mxu0
        %1479 = vrot.lane.b32.xlu0 %v1367, 96
        %v1480 = vpop.permute.xlu0 %1479
        %1482 = vrot.lane.b32.xlu0 %v1368, 96
        %v1483 = vpop.permute.xlu0 %1482
        %v1485 = vsel %vm1370, %v1480, 0
        %v1488 = vsel %vm1370, %v1483, 0
        %1490 = vmatprep.subr.bf16.mxu0 0
        %1491 = vmatpush1.bf16.xpose.msra.mxu0 %v1488
        %1492 = vmatprep.subr.bf16.mxu0 0
        %1493 = vmatpush1.bf16.xpose.msra.mxu0 0
        %1494 = vmatprep.subr.bf16.mxu0 0
        %1495 = vmatpush1.bf16.xpose.msra.mxu0 0
        %1496 = vmatprep.subr.bf16.mxu0 0
        %1497 = vmatpush1.bf16.xpose.msra.mxu0 0
        %1498 = vmatprep.subr.bf16.mxu0 0
        %1499 = vmatpush1.bf16.xpose.msra.mxu0 0
        %1500 = vmatprep.subr.bf16.mxu0 0
        %1501 = vmatpush1.bf16.xpose.msra.mxu0 0
        %1502 = vmatprep.subr.bf16.mxu0 0
        %1503 = vmatpush1.bf16.xpose.msra.mxu0 0
        %1504 = vmatprep.subr.bf16.mxu0 0
        %1505 = vmatpush1.bf16.xpose.msra.mxu0 0
        %1506 = vmatprep.subr.bf16.mxu0 0
        %1507 = vmatpush1.bf16.xpose.msra.mxu0 0
        %1508 = vmatprep.subr.bf16.mxu0 0
        %1509 = vmatpush1.bf16.xpose.msra.mxu0 0
        %1510 = vmatprep.subr.bf16.mxu0 0
        %1511 = vmatpush1.bf16.xpose.msra.mxu0 0
        %1512 = vmatprep.subr.bf16.mxu0 0
        %1513 = vmatpush1.bf16.xpose.msra.mxu0 0
        %1514 = vmatprep.subr.bf16.mxu0 0
        %1515 = vmatpush1.bf16.xpose.msra.mxu0 0
        %1516 = vmatprep.subr.bf16.mxu0 0
        %1517 = vmatpush1.bf16.xpose.msra.mxu0 0
        %1518 = vmatprep.subr.bf16.mxu0 0
        %1519 = vmatpush1.bf16.xpose.msra.mxu0 0
        %1520 = vmatprep.subr.bf16.mxu0 0
        %1521 = vmatpush1.bf16.xpose.msra.mxu0 0
        %1522 = vmatprep.mubr.bf16.mxu0 0
        %1523 = vmatmul.mubr.bf16.gmra.mrb[0].mxu0 %v1485
        %v1524 = vpop.f32.mrb[0].mxu0
        %v1525 = vadd.f32 0.0, %v1524
        %v1526 = vpop.f32.mrb[0].mxu0
        %v1527 = vpop.f32.mrb[0].mxu0
        %v1528 = vpop.f32.mrb[0].mxu0
        %1529 = vdwg.mxu0
        %v1530 = vsel %vm1366, %v1525, -1e+30
        %v1531 = vsel %vm1418, %v1530, -inf
        %1532 = vmax.xlane.f32.xlu0 %v1531
        %v1533 = vpop.xlane.xlu0 %1532
        %v1534 = vsub.f32 %v1530, %v1533
        %v1535 = vmul.f32 %v1534, 1.442695
        %v1536 = vpow.pop %v1535
        %v1537 = vsel %vm1418, %v1536, 0.0
        %1538 = vadd.xlane.f32.xlu0 %v1537
        %v1539 = vpop.xlane.xlu0 %1538
        %v1540 = vrcp.pop %v1539
        %v1541 = vmul.f32 %v1536, %v1540
        %v1542 = vpack.c.bf16 %v1541, %v1541
        %1544 = vrot.lane.b32.xlu0 %v1369, 96
        %v1545 = vpop.permute.xlu0 %1544
        %v1547 = vsel %vm1418, %v1542, 0
        %v1550 = vsel %vm1434, %v1545, 0
        %1552 = vmatprep.subr.bf16.mxu0 0
        %1553 = vmatpush1.bf16.msra.mxu0 %v1550
        %1554 = vmatprep.subr.bf16.mxu0 0
        %1555 = vmatpush1.bf16.msra.mxu0 0
        %1556 = vmatprep.subr.bf16.mxu0 0
        %1557 = vmatpush1.bf16.msra.mxu0 0
        %1558 = vmatprep.subr.bf16.mxu0 0
        %1559 = vmatpush1.bf16.msra.mxu0 0
        %1560 = vmatprep.subr.bf16.mxu0 0
        %1561 = vmatpush1.bf16.msra.mxu0 0
        %1562 = vmatprep.subr.bf16.mxu0 0
        %1563 = vmatpush1.bf16.msra.mxu0 0
        %1564 = vmatprep.subr.bf16.mxu0 0
        %1565 = vmatpush1.bf16.msra.mxu0 0
        %1566 = vmatprep.subr.bf16.mxu0 0
        %1567 = vmatpush1.bf16.msra.mxu0 0
        %1568 = vmatprep.subr.bf16.mxu0 0
        %1569 = vmatpush1.bf16.msra.mxu0 0
        %1570 = vmatprep.subr.bf16.mxu0 0
        %1571 = vmatpush1.bf16.msra.mxu0 0
        %1572 = vmatprep.subr.bf16.mxu0 0
        %1573 = vmatpush1.bf16.msra.mxu0 0
        %1574 = vmatprep.subr.bf16.mxu0 0
        %1575 = vmatpush1.bf16.msra.mxu0 0
        %1576 = vmatprep.subr.bf16.mxu0 0
        %1577 = vmatpush1.bf16.msra.mxu0 0
        %1578 = vmatprep.subr.bf16.mxu0 0
        %1579 = vmatpush1.bf16.msra.mxu0 0
        %1580 = vmatprep.subr.bf16.mxu0 0
        %1581 = vmatpush1.bf16.msra.mxu0 0
        %1582 = vmatprep.subr.bf16.mxu0 0
        %1583 = vmatpush1.bf16.msra.mxu0 0
        %1584 = vmatprep.mubr.bf16.mxu0 0
        %1585 = vmatmul.mubr.bf16.gmra.mrb[0].mxu0 %v1547
        %v1586 = vpop.f32.mrb[0].mxu0
        %v1587 = vadd.f32 0.0, %v1586
        %v1588 = vpop.f32.mrb[0].mxu0
        %v1589 = vpop.f32.mrb[0].mxu0
        %v1590 = vpop.f32.mrb[0].mxu0
        %1591 = vdwg.mxu0
        %1592 = vrot.lane.b32.xlu0 %v1367, 64
        %v1593 = vpop.permute.xlu0 %1592
        %1594 = vrot.lane.b32.xlu0 %v1368, 64
        %v1595 = vpop.permute.xlu0 %1594
        %v1597 = vsel %vm1370, %v1593, 0
        %v1600 = vsel %vm1370, %v1595, 0
        %1602 = vmatprep.subr.bf16.mxu0 0
        %1603 = vmatpush1.bf16.xpose.msra.mxu0 %v1600
        %1604 = vmatprep.subr.bf16.mxu0 0
        %1605 = vmatpush1.bf16.xpose.msra.mxu0 0
        %1606 = vmatprep.subr.bf16.mxu0 0
        %1607 = vmatpush1.bf16.xpose.msra.mxu0 0
        %1608 = vmatprep.subr.bf16.mxu0 0
        %1609 = vmatpush1.bf16.xpose.msra.mxu0 0
        %1610 = vmatprep.subr.bf16.mxu0 0
        %1611 = vmatpush1.bf16.xpose.msra.mxu0 0
        %1612 = vmatprep.subr.bf16.mxu0 0
        %1613 = vmatpush1.bf16.xpose.msra.mxu0 0
        %1614 = vmatprep.subr.bf16.mxu0 0
        %1615 = vmatpush1.bf16.xpose.msra.mxu0 0
        %1616 = vmatprep.subr.bf16.mxu0 0
        %1617 = vmatpush1.bf16.xpose.msra.mxu0 0
        %1618 = vmatprep.subr.bf16.mxu0 0
        %1619 = vmatpush1.bf16.xpose.msra.mxu0 0
        %1620 = vmatprep.subr.bf16.mxu0 0
        %1621 = vmatpush1.bf16.xpose.msra.mxu0 0
        %1622 = vmatprep.subr.bf16.mxu0 0
        %1623 = vmatpush1.bf16.xpose.msra.mxu0 0
        %1624 = vmatprep.subr.bf16.mxu0 0
        %1625 = vmatpush1.bf16.xpose.msra.mxu0 0
        %1626 = vmatprep.subr.bf16.mxu0 0
        %1627 = vmatpush1.bf16.xpose.msra.mxu0 0
        %1628 = vmatprep.subr.bf16.mxu0 0
        %1629 = vmatpush1.bf16.xpose.msra.mxu0 0
        %1630 = vmatprep.subr.bf16.mxu0 0
        %1631 = vmatpush1.bf16.xpose.msra.mxu0 0
        %1632 = vmatprep.subr.bf16.mxu0 0
        %1633 = vmatpush1.bf16.xpose.msra.mxu0 0
        %1634 = vmatprep.mubr.bf16.mxu0 0
        %1635 = vmatmul.mubr.bf16.gmra.mrb[0].mxu0 %v1597
        %v1636 = vpop.f32.mrb[0].mxu0
        %v1637 = vadd.f32 0.0, %v1636
        %v1638 = vpop.f32.mrb[0].mxu0
        %v1639 = vpop.f32.mrb[0].mxu0
        %v1640 = vpop.f32.mrb[0].mxu0
        %1641 = vdwg.mxu0
        %v1642 = vsel %vm1366, %v1637, -1e+30
        %v1643 = vsel %vm1418, %v1642, -inf
        %1644 = vmax.xlane.f32.xlu0 %v1643
        %v1645 = vpop.xlane.xlu0 %1644
        %v1646 = vsub.f32 %v1642, %v1645
        %v1647 = vmul.f32 %v1646, 1.442695
        %v1648 = vpow.pop %v1647
        %v1649 = vsel %vm1418, %v1648, 0.0
        %1650 = vadd.xlane.f32.xlu0 %v1649
        %v1651 = vpop.xlane.xlu0 %1650
        %v1652 = vrcp.pop %v1651
        %v1653 = vmul.f32 %v1648, %v1652
        %v1654 = vpack.c.bf16 %v1653, %v1653
        %1655 = vrot.lane.b32.xlu0 %v1369, 64
        %v1656 = vpop.permute.xlu0 %1655
        %v1658 = vsel %vm1418, %v1654, 0
        %v1661 = vsel %vm1434, %v1656, 0
        %1663 = vmatprep.subr.bf16.mxu0 0
        %1664 = vmatpush1.bf16.msra.mxu0 %v1661
        %1665 = vmatprep.subr.bf16.mxu0 0
        %1666 = vmatpush1.bf16.msra.mxu0 0
        %1667 = vmatprep.subr.bf16.mxu0 0
        %1668 = vmatpush1.bf16.msra.mxu0 0
        %1669 = vmatprep.subr.bf16.mxu0 0
        %1670 = vmatpush1.bf16.msra.mxu0 0
        %1671 = vmatprep.subr.bf16.mxu0 0
        %1672 = vmatpush1.bf16.msra.mxu0 0
        %1673 = vmatprep.subr.bf16.mxu0 0
        %1674 = vmatpush1.bf16.msra.mxu0 0
        %1675 = vmatprep.subr.bf16.mxu0 0
        %1676 = vmatpush1.bf16.msra.mxu0 0
        %1677 = vmatprep.subr.bf16.mxu0 0
        %1678 = vmatpush1.bf16.msra.mxu0 0
        %1679 = vmatprep.subr.bf16.mxu0 0
        %1680 = vmatpush1.bf16.msra.mxu0 0
        %1681 = vmatprep.subr.bf16.mxu0 0
        %1682 = vmatpush1.bf16.msra.mxu0 0
        %1683 = vmatprep.subr.bf16.mxu0 0
        %1684 = vmatpush1.bf16.msra.mxu0 0
        %1685 = vmatprep.subr.bf16.mxu0 0
        %1686 = vmatpush1.bf16.msra.mxu0 0
        %1687 = vmatprep.subr.bf16.mxu0 0
        %1688 = vmatpush1.bf16.msra.mxu0 0
        %1689 = vmatprep.subr.bf16.mxu0 0
        %1690 = vmatpush1.bf16.msra.mxu0 0
        %1691 = vmatprep.subr.bf16.mxu0 0
        %1692 = vmatpush1.bf16.msra.mxu0 0
        %1693 = vmatprep.subr.bf16.mxu0 0
        %1694 = vmatpush1.bf16.msra.mxu0 0
        %1695 = vmatprep.mubr.bf16.mxu0 0
        %1696 = vmatmul.mubr.bf16.gmra.mrb[0].mxu0 %v1658
        %v1697 = vpop.f32.mrb[0].mxu0
        %v1698 = vadd.f32 0.0, %v1697
        %v1699 = vpop.f32.mrb[0].mxu0
        %v1700 = vpop.f32.mrb[0].mxu0
        %v1701 = vpop.f32.mrb[0].mxu0
        %1702 = vdwg.mxu0
        %1703 = vrot.lane.b32.xlu0 %v1367, 32
        %v1704 = vpop.permute.xlu0 %1703
        %1705 = vrot.lane.b32.xlu0 %v1368, 32
        %v1706 = vpop.permute.xlu0 %1705
        %v1708 = vsel %vm1370, %v1704, 0
        %v1711 = vsel %vm1370, %v1706, 0
        %1713 = vmatprep.subr.bf16.mxu0 0
        %1714 = vmatpush1.bf16.xpose.msra.mxu0 %v1711
        %1715 = vmatprep.subr.bf16.mxu0 0
        %1716 = vmatpush1.bf16.xpose.msra.mxu0 0
        %1717 = vmatprep.subr.bf16.mxu0 0
        %1718 = vmatpush1.bf16.xpose.msra.mxu0 0
        %1719 = vmatprep.subr.bf16.mxu0 0
        %1720 = vmatpush1.bf16.xpose.msra.mxu0 0
        %1721 = vmatprep.subr.bf16.mxu0 0
        %1722 = vmatpush1.bf16.xpose.msra.mxu0 0
        %1723 = vmatprep.subr.bf16.mxu0 0
        %1724 = vmatpush1.bf16.xpose.msra.mxu0 0
        %1725 = vmatprep.subr.bf16.mxu0 0
        %1726 = vmatpush1.bf16.xpose.msra.mxu0 0
        %1727 = vmatprep.subr.bf16.mxu0 0
        %1728 = vmatpush1.bf16.xpose.msra.mxu0 0
        %1729 = vmatprep.subr.bf16.mxu0 0
        %1730 = vmatpush1.bf16.xpose.msra.mxu0 0
        %1731 = vmatprep.subr.bf16.mxu0 0
        %1732 = vmatpush1.bf16.xpose.msra.mxu0 0
        %1733 = vmatprep.subr.bf16.mxu0 0
        %1734 = vmatpush1.bf16.xpose.msra.mxu0 0
        %1735 = vmatprep.subr.bf16.mxu0 0
        %1736 = vmatpush1.bf16.xpose.msra.mxu0 0
        %1737 = vmatprep.subr.bf16.mxu0 0
        %1738 = vmatpush1.bf16.xpose.msra.mxu0 0
        %1739 = vmatprep.subr.bf16.mxu0 0
        %1740 = vmatpush1.bf16.xpose.msra.mxu0 0
        %1741 = vmatprep.subr.bf16.mxu0 0
        %1742 = vmatpush1.bf16.xpose.msra.mxu0 0
        %1743 = vmatprep.subr.bf16.mxu0 0
        %1744 = vmatpush1.bf16.xpose.msra.mxu0 0
        %1745 = vmatprep.mubr.bf16.mxu0 0
        %1746 = vmatmul.mubr.bf16.gmra.mrb[0].mxu0 %v1708
        %v1747 = vpop.f32.mrb[0].mxu0
        %v1748 = vadd.f32 0.0, %v1747
        %v1749 = vpop.f32.mrb[0].mxu0
        %v1750 = vpop.f32.mrb[0].mxu0
        %v1751 = vpop.f32.mrb[0].mxu0
        %1752 = vdwg.mxu0
        %v1753 = vsel %vm1366, %v1748, -1e+30
        %v1754 = vsel %vm1418, %v1753, -inf
        %1755 = vmax.xlane.f32.xlu0 %v1754
        %v1756 = vpop.xlane.xlu0 %1755
        %v1757 = vsub.f32 %v1753, %v1756
        %v1758 = vmul.f32 %v1757, 1.442695
        %v1759 = vpow.pop %v1758
        %v1760 = vsel %vm1418, %v1759, 0.0
        %1761 = vadd.xlane.f32.xlu0 %v1760
        %v1762 = vpop.xlane.xlu0 %1761
        %v1763 = vrcp.pop %v1762
        %v1764 = vmul.f32 %v1759, %v1763
        %v1765 = vpack.c.bf16 %v1764, %v1764
        %1766 = vrot.lane.b32.xlu0 %v1369, 32
        %v1767 = vpop.permute.xlu0 %1766
        %v1769 = vsel %vm1418, %v1765, 0
        %v1772 = vsel %vm1434, %v1767, 0
        %1774 = vmatprep.subr.bf16.mxu0 0
        %1775 = vmatpush1.bf16.msra.mxu0 %v1772
        %1776 = vmatprep.subr.bf16.mxu0 0
        %1777 = vmatpush1.bf16.msra.mxu0 0
        %1778 = vmatprep.subr.bf16.mxu0 0
        %1779 = vmatpush1.bf16.msra.mxu0 0
        %1780 = vmatprep.subr.bf16.mxu0 0
        %1781 = vmatpush1.bf16.msra.mxu0 0
        %1782 = vmatprep.subr.bf16.mxu0 0
        %1783 = vmatpush1.bf16.msra.mxu0 0
        %1784 = vmatprep.subr.bf16.mxu0 0
        %1785 = vmatpush1.bf16.msra.mxu0 0
        %1786 = vmatprep.subr.bf16.mxu0 0
        %1787 = vmatpush1.bf16.msra.mxu0 0
        %1788 = vmatprep.subr.bf16.mxu0 0
        %1789 = vmatpush1.bf16.msra.mxu0 0
        %1790 = vmatprep.subr.bf16.mxu0 0
        %1791 = vmatpush1.bf16.msra.mxu0 0
        %1792 = vmatprep.subr.bf16.mxu0 0
        %1793 = vmatpush1.bf16.msra.mxu0 0
        %1794 = vmatprep.subr.bf16.mxu0 0
        %1795 = vmatpush1.bf16.msra.mxu0 0
        %1796 = vmatprep.subr.bf16.mxu0 0
        %1797 = vmatpush1.bf16.msra.mxu0 0
        %1798 = vmatprep.subr.bf16.mxu0 0
        %1799 = vmatpush1.bf16.msra.mxu0 0
        %1800 = vmatprep.subr.bf16.mxu0 0
        %1801 = vmatpush1.bf16.msra.mxu0 0
        %1802 = vmatprep.subr.bf16.mxu0 0
        %1803 = vmatpush1.bf16.msra.mxu0 0
        %1804 = vmatprep.subr.bf16.mxu0 0
        %1805 = vmatpush1.bf16.msra.mxu0 0
        %1806 = vmatprep.mubr.bf16.mxu0 0
        %1807 = vmatmul.mubr.bf16.gmra.mrb[0].mxu0 %v1769
        %v1808 = vpop.f32.mrb[0].mxu0
        %v1809 = vadd.f32 0.0, %v1808
        %v1810 = vpop.f32.mrb[0].mxu0
        %v1811 = vpop.f32.mrb[0].mxu0
        %v1812 = vpop.f32.mrb[0].mxu0
        %1813 = vdwg.mxu0
        %1815 = vrot.lane.b32.xlu0 %v1587, 32
        %v1816 = vpop.permute.xlu0 %1815
        %1819 = vrot.lane.b32.xlu0 %v1698, 64
        %v1820 = vpop.permute.xlu0 %1819
        %1823 = vrot.lane.b32.xlu0 %v1809, 96
        %v1824 = vpop.permute.xlu0 %1823
        %v1826 = vsel %vm1370, %v1473, %v1816
        %vm1827 = vcmask 523264
        %v1828 = vsel %vm1827, %v1826, %v1820
        %vm1829 = vcmask 785408
        %v1830 = vsel %vm1829, %v1828, %v1824
        %v1831 = vpack.c.bf16 %v1830, %v1830
        %v1833 = vlaneseq
        %v1834 = vshrl.u32 %v1833, 7
        %v1835 = vsub.s32 0, %v1834
        %v1836 = vrot.slane %v1134, %v1835
        %v1854 = vunpack.c.l.b16 %v1118
        %v1855 = vunpack.c.l.b16 %v1119
        %v1856 = vunpack.c.l.b16 %v1120
        %v1857 = vunpack.c.l.b16 %v1121
        %v1858 = vunpack.c.l.b16 %v1122
        %v1859 = vunpack.c.l.b16 %v1123
        %v1860 = vunpack.c.l.b16 %v1124
        %v1861 = vunpack.c.l.b16 %v1125
        %v1862 = vunpack.c.l.b16 %v1126
        %v1863 = vunpack.c.l.b16 %v1127
        %v1864 = vunpack.c.l.b16 %v1128
        %v1865 = vunpack.c.l.b16 %v1129
        %v1866 = vunpack.c.l.b16 %v1130
        %v1867 = vunpack.c.l.b16 %v1131
        %v1868 = vunpack.c.l.b16 %v1132
        %v1869 = vunpack.c.l.b16 %v1133
        %v1870 = vpack.c.b16 %v1855, %v1854
        %v1871 = vpack.c.b16 %v1857, %v1856
        %v1872 = vpack.c.b16 %v1859, %v1858
        %v1873 = vpack.c.b16 %v1861, %v1860
        %v1874 = vpack.c.b16 %v1863, %v1862
        %v1875 = vpack.c.b16 %v1865, %v1864
        %v1876 = vpack.c.b16 %v1867, %v1866
        %v1877 = vpack.c.b16 %v1869, %v1868
        %1886 = vmatprep.subr.bf16.mxu0 0
        %1887 = vmatpush1.bf16.msra.mxu0 %v1870
        %1888 = vmatprep.subr.bf16.mxu0 0
        %1889 = vmatpush1.bf16.msra.mxu0 %v1871
        %1890 = vmatprep.subr.bf16.mxu0 0
        %1891 = vmatpush1.bf16.msra.mxu0 %v1872
        %1892 = vmatprep.subr.bf16.mxu0 0
        %1893 = vmatpush1.bf16.msra.mxu0 %v1873
        %1894 = vmatprep.subr.bf16.mxu0 0
        %1895 = vmatpush1.bf16.msra.mxu0 %v1874
        %1896 = vmatprep.subr.bf16.mxu0 0
        %1897 = vmatpush1.bf16.msra.mxu0 %v1875
        %1898 = vmatprep.subr.bf16.mxu0 0
        %1899 = vmatpush1.bf16.msra.mxu0 %v1876
        %1900 = vmatprep.subr.bf16.mxu0 0
        %1901 = vmatpush1.bf16.msra.mxu0 %v1877
        %1902 = vmatprep.subr.bf16.mxu0 0
        %1903 = vmatpush1.bf16.msra.mxu0 0
        %1904 = vmatprep.subr.bf16.mxu0 0
        %1905 = vmatpush1.bf16.msra.mxu0 0
        %1906 = vmatprep.subr.bf16.mxu0 0
        %1907 = vmatpush1.bf16.msra.mxu0 0
        %1908 = vmatprep.subr.bf16.mxu0 0
        %1909 = vmatpush1.bf16.msra.mxu0 0
        %1910 = vmatprep.subr.bf16.mxu0 0
        %1911 = vmatpush1.bf16.msra.mxu0 0
        %1912 = vmatprep.subr.bf16.mxu0 0
        %1913 = vmatpush1.bf16.msra.mxu0 0
        %1914 = vmatprep.subr.bf16.mxu0 0
        %1915 = vmatpush1.bf16.msra.mxu0 0
        %1916 = vmatprep.subr.bf16.mxu0 0
        %1917 = vmatpush1.bf16.msra.mxu0 0
        %1918 = vmatprep.mubr.bf16.mxu0 0
        %1919 = vmatmul.mubr.bf16.gmra.mrb[0].mxu0 %v1831
        %v1920 = vpop.f32.mrb[0].mxu0
        %v1921 = vadd.f32 %v1836, %v1920
        %v1922 = vpop.f32.mrb[0].mxu0
        %v1923 = vpop.f32.mrb[0].mxu0
        %v1924 = vpop.f32.mrb[0].mxu0
        %1925 = vdwg.mxu0
        %v1926 = vadd.f32 %v1921, %v1054
        %v1927 = vld [vmem:[%s875] sm:$0x1]
        %v1928 = vld [vmem:[%s883] sm:$0x1]
        %v1929 = vld [vmem:[%s1042] sm:$0xff]
        %v1930 = vld [vmem:[%s1042 + $0x8] sm:$0xff]
        %v1931 = vld [vmem:[%s1042 + $0x10] sm:$0xff]
        %v1932 = vld [vmem:[%s1042 + $0x18] sm:$0xff]
        %v1933 = vld [vmem:[%s1042 + $0x20] sm:$0xff]
        %v1934 = vld [vmem:[%s1042 + $0x28] sm:$0xff]
        %v1935 = vld [vmem:[%s1042 + $0x30] sm:$0xff]
        %v1936 = vld [vmem:[%s1042 + $0x38] sm:$0xff]
        %v1937 = vld [vmem:[%s1042 + $0x40] sm:$0xff]
        %v1938 = vld [vmem:[%s1042 + $0x48] sm:$0xff]
        %v1939 = vld [vmem:[%s1042 + $0x50] sm:$0xff]
        %v1940 = vld [vmem:[%s1042 + $0x58] sm:$0xff]
        %v1941 = vld [vmem:[%s1042 + $0x60] sm:$0xff]
        %v1942 = vld [vmem:[%s1042 + $0x68] sm:$0xff]
        %v1943 = vld [vmem:[%s1042 + $0x70] sm:$0xff]
        %v1944 = vld [vmem:[%s1042 + $0x78] sm:$0xff]
        %v1945 = vld [vmem:[%s892] sm:$0x3]
        %v1946 = vld [vmem:[%s901] sm:$0xf]
        %v1947 = vld [vmem:[%s901 + $0x4] sm:$0xf]
        %v1948 = vld [vmem:[%s901 + $0x8] sm:$0xf]
        %v1949 = vld [vmem:[%s901 + $0xc] sm:$0xf]
        %v1950 = vld [vmem:[%s901 + $0x10] sm:$0xf]
        %v1951 = vld [vmem:[%s901 + $0x14] sm:$0xf]
        %v1952 = vld [vmem:[%s901 + $0x18] sm:$0xf]
        %v1953 = vld [vmem:[%s901 + $0x1c] sm:$0xf]
        %v1954 = vld [vmem:[%s901 + $0x20] sm:$0xf]
        %v1955 = vld [vmem:[%s901 + $0x24] sm:$0xf]
        %v1956 = vld [vmem:[%s901 + $0x28] sm:$0xf]
        %v1957 = vld [vmem:[%s901 + $0x2c] sm:$0xf]
        %v1958 = vld [vmem:[%s901 + $0x30] sm:$0xf]
        %v1959 = vld [vmem:[%s901 + $0x34] sm:$0xf]
        %v1960 = vld [vmem:[%s901 + $0x38] sm:$0xf]
        %v1961 = vld [vmem:[%s901 + $0x3c] sm:$0xf]
        %v1962 = vld [vmem:[%s901 + $0x40] sm:$0xf]
        %v1963 = vld [vmem:[%s901 + $0x44] sm:$0xf]
        %v1964 = vld [vmem:[%s901 + $0x48] sm:$0xf]
        %v1965 = vld [vmem:[%s901 + $0x4c] sm:$0xf]
        %v1966 = vld [vmem:[%s901 + $0x50] sm:$0xf]
        %v1967 = vld [vmem:[%s901 + $0x54] sm:$0xf]
        %v1968 = vld [vmem:[%s901 + $0x58] sm:$0xf]
        %v1969 = vld [vmem:[%s901 + $0x5c] sm:$0xf]
        %v1970 = vld [vmem:[%s901 + $0x60] sm:$0xf]
        %v1971 = vld [vmem:[%s901 + $0x64] sm:$0xf]
        %v1972 = vld [vmem:[%s901 + $0x68] sm:$0xf]
        %v1973 = vld [vmem:[%s901 + $0x6c] sm:$0xf]
        %v1974 = vld [vmem:[%s901 + $0x70] sm:$0xf]
        %v1975 = vld [vmem:[%s901 + $0x74] sm:$0xf]
        %v1976 = vld [vmem:[%s901 + $0x78] sm:$0xf]
        %v1977 = vld [vmem:[%s901 + $0x7c] sm:$0xf]
        %v1978 = vld [vmem:[%s909] sm:$0x1]
        %1979 = vadd.xlane.f32.xlu0 %v1926
        %v1980 = vpop.xlane.xlu0 %1979
        %v1981 = vmul.f32 %v1980, %v1060
        %v1982 = vsub.f32 %v1926, %v1981
        %v1983 = vmul.f32 %v1982, %v1982
        %1984 = vadd.xlane.f32.xlu0 %v1983
        %v1985 = vpop.xlane.xlu0 %1984
        %v1986 = vmul.f32 %v1985, %v1060
        %v1987 = vadd.f32 %v1986, 1e-05
        %v1988 = vrsqrt.pop %v1987
        %v1989 = vmul.f32 %v1982, %v1988
        %v1991 = vlaneseq
        %v1992 = vshrl.u32 %v1991, 7
        %v1993 = vsub.s32 0, %v1992
        %v1994 = vrot.slane %v1927, %v1993
        %v1996 = vmul.f32 %v1989, %v1994
        %v1998 = vlaneseq
        %v1999 = vshrl.u32 %v1998, 7
        %v2000 = vsub.s32 0, %v1999
        %v2001 = vrot.slane %v1928, %v2000
        %v2003 = vadd.f32 %v1996, %v2001
        %v2004 = vpack.c.bf16 %v2003, %v2003
        %v2006 = vlaneseq
        %v2007 = vshrl.u32 %v2006, 7
        %v2008 = vsub.s32 0, %v2007
        %v2009 = vrot.slane %v1945, %v2008
        %v2010 = vlaneseq
        %v2011 = vshrl.u32 %v2010, 7
        %v2012 = vsub.s32 1, %v2011
        %v2013 = vrot.slane %v1945, %v2012
        %v2032 = vunpack.c.l.b16 %v1929
        %v2033 = vunpack.c.h.b16 %v1929
        %v2034 = vunpack.c.l.b16 %v1930
        %v2035 = vunpack.c.h.b16 %v1930
        %v2036 = vunpack.c.l.b16 %v1931
        %v2037 = vunpack.c.h.b16 %v1931
        %v2038 = vunpack.c.l.b16 %v1932
        %v2039 = vunpack.c.h.b16 %v1932
        %v2040 = vunpack.c.l.b16 %v1933
        %v2041 = vunpack.c.h.b16 %v1933
        %v2042 = vunpack.c.l.b16 %v1934
        %v2043 = vunpack.c.h.b16 %v1934
        %v2044 = vunpack.c.l.b16 %v1935
        %v2045 = vunpack.c.h.b16 %v1935
        %v2046 = vunpack.c.l.b16 %v1936
        %v2047 = vunpack.c.h.b16 %v1936
        %v2048 = vunpack.c.l.b16 %v1937
        %v2049 = vunpack.c.h.b16 %v1937
        %v2050 = vunpack.c.l.b16 %v1938
        %v2051 = vunpack.c.h.b16 %v1938
        %v2052 = vunpack.c.l.b16 %v1939
        %v2053 = vunpack.c.h.b16 %v1939
        %v2054 = vunpack.c.l.b16 %v1940
        %v2055 = vunpack.c.h.b16 %v1940
        %v2056 = vunpack.c.l.b16 %v1941
        %v2057 = vunpack.c.h.b16 %v1941
        %v2058 = vunpack.c.l.b16 %v1942
        %v2059 = vunpack.c.h.b16 %v1942
        %v2060 = vunpack.c.l.b16 %v1943
        %v2061 = vunpack.c.h.b16 %v1943
        %v2062 = vunpack.c.l.b16 %v1944
        %v2063 = vunpack.c.h.b16 %v1944
        %v2064 = vpack.c.b16 %v2034, %v2032
        %v2065 = vpack.c.b16 %v2035, %v2033
        %v2066 = vpack.c.b16 %v2038, %v2036
        %v2067 = vpack.c.b16 %v2039, %v2037
        %v2068 = vpack.c.b16 %v2042, %v2040
        %v2069 = vpack.c.b16 %v2043, %v2041
        %v2070 = vpack.c.b16 %v2046, %v2044
        %v2071 = vpack.c.b16 %v2047, %v2045
        %v2072 = vpack.c.b16 %v2050, %v2048
        %v2073 = vpack.c.b16 %v2051, %v2049
        %v2074 = vpack.c.b16 %v2054, %v2052
        %v2075 = vpack.c.b16 %v2055, %v2053
        %v2076 = vpack.c.b16 %v2058, %v2056
        %v2077 = vpack.c.b16 %v2059, %v2057
        %v2078 = vpack.c.b16 %v2062, %v2060
        %v2079 = vpack.c.b16 %v2063, %v2061
        %2096 = vmatprep.subr.bf16.mxu0 %v2065
        %2097 = vmatpush1.bf16.msra.mxu0 %v2064
        %2098 = vmatprep.subr.bf16.mxu0 %v2067
        %2099 = vmatpush1.bf16.msra.mxu0 %v2066
        %2100 = vmatprep.subr.bf16.mxu0 %v2069
        %2101 = vmatpush1.bf16.msra.mxu0 %v2068
        %2102 = vmatprep.subr.bf16.mxu0 %v2071
        %2103 = vmatpush1.bf16.msra.mxu0 %v2070
        %2104 = vmatprep.subr.bf16.mxu0 %v2073
        %2105 = vmatpush1.bf16.msra.mxu0 %v2072
        %2106 = vmatprep.subr.bf16.mxu0 %v2075
        %2107 = vmatpush1.bf16.msra.mxu0 %v2074
        %2108 = vmatprep.subr.bf16.mxu0 %v2077
        %2109 = vmatpush1.bf16.msra.mxu0 %v2076
        %2110 = vmatprep.subr.bf16.mxu0 %v2079
        %2111 = vmatpush1.bf16.msra.mxu0 %v2078
        %2112 = vmatprep.subr.bf16.mxu0 0
        %2113 = vmatpush1.bf16.msra.mxu0 0
        %2114 = vmatprep.subr.bf16.mxu0 0
        %2115 = vmatpush1.bf16.msra.mxu0 0
        %2116 = vmatprep.subr.bf16.mxu0 0
        %2117 = vmatpush1.bf16.msra.mxu0 0
        %2118 = vmatprep.subr.bf16.mxu0 0
        %2119 = vmatpush1.bf16.msra.mxu0 0
        %2120 = vmatprep.subr.bf16.mxu0 0
        %2121 = vmatpush1.bf16.msra.mxu0 0
        %2122 = vmatprep.subr.bf16.mxu0 0
        %2123 = vmatpush1.bf16.msra.mxu0 0
        %2124 = vmatprep.subr.bf16.mxu0 0
        %2125 = vmatpush1.bf16.msra.mxu0 0
        %2126 = vmatprep.subr.bf16.mxu0 0
        %2127 = vmatpush1.bf16.msra.mxu0 0
        %2128 = vmatprep.mubr.bf16.mxu0 0
        %2129 = vmatmul.mubr.bf16.gmra.mrb[0].mxu0 %v2004
        %v2130 = vpop.f32.mrb[0].mxu0
        %v2131 = vadd.f32 %v2009, %v2130
        %v2132 = vpop.f32.mrb[0].mxu0
        %v2133 = vadd.f32 %v2013, %v2132
        %v2134 = vpop.f32.mrb[0].mxu0
        %v2135 = vpop.f32.mrb[0].mxu0
        %2136 = vdwg.mxu0
        %v2137 = vmax.f32 %v2131, 0.0
        %v2138 = vmax.f32 %v2133, 0.0
        %v2139 = vpack.c.bf16 %v2137, %v2137
        %v2140 = vpack.c.bf16 %v2138, %v2138
        %v2142 = vlaneseq
        %v2143 = vshrl.u32 %v2142, 7
        %v2144 = vsub.s32 0, %v2143
        %v2145 = vrot.slane %v1978, %v2144
        %v2179 = vunpack.c.l.b16 %v1946
        %v2180 = vunpack.c.l.b16 %v1947
        %v2181 = vunpack.c.l.b16 %v1948
        %v2182 = vunpack.c.l.b16 %v1949
        %v2183 = vunpack.c.l.b16 %v1950
        %v2184 = vunpack.c.l.b16 %v1951
        %v2185 = vunpack.c.l.b16 %v1952
        %v2186 = vunpack.c.l.b16 %v1953
        %v2187 = vunpack.c.l.b16 %v1954
        %v2188 = vunpack.c.l.b16 %v1955
        %v2189 = vunpack.c.l.b16 %v1956
        %v2190 = vunpack.c.l.b16 %v1957
        %v2191 = vunpack.c.l.b16 %v1958
        %v2192 = vunpack.c.l.b16 %v1959
        %v2193 = vunpack.c.l.b16 %v1960
        %v2194 = vunpack.c.l.b16 %v1961
        %v2195 = vunpack.c.l.b16 %v1962
        %v2196 = vunpack.c.l.b16 %v1963
        %v2197 = vunpack.c.l.b16 %v1964
        %v2198 = vunpack.c.l.b16 %v1965
        %v2199 = vunpack.c.l.b16 %v1966
        %v2200 = vunpack.c.l.b16 %v1967
        %v2201 = vunpack.c.l.b16 %v1968
        %v2202 = vunpack.c.l.b16 %v1969
        %v2203 = vunpack.c.l.b16 %v1970
        %v2204 = vunpack.c.l.b16 %v1971
        %v2205 = vunpack.c.l.b16 %v1972
        %v2206 = vunpack.c.l.b16 %v1973
        %v2207 = vunpack.c.l.b16 %v1974
        %v2208 = vunpack.c.l.b16 %v1975
        %v2209 = vunpack.c.l.b16 %v1976
        %v2210 = vunpack.c.l.b16 %v1977
        %v2211 = vpack.c.b16 %v2180, %v2179
        %v2212 = vpack.c.b16 %v2182, %v2181
        %v2213 = vpack.c.b16 %v2184, %v2183
        %v2214 = vpack.c.b16 %v2186, %v2185
        %v2215 = vpack.c.b16 %v2188, %v2187
        %v2216 = vpack.c.b16 %v2190, %v2189
        %v2217 = vpack.c.b16 %v2192, %v2191
        %v2218 = vpack.c.b16 %v2194, %v2193
        %v2219 = vpack.c.b16 %v2196, %v2195
        %v2220 = vpack.c.b16 %v2198, %v2197
        %v2221 = vpack.c.b16 %v2200, %v2199
        %v2222 = vpack.c.b16 %v2202, %v2201
        %v2223 = vpack.c.b16 %v2204, %v2203
        %v2224 = vpack.c.b16 %v2206, %v2205
        %v2225 = vpack.c.b16 %v2208, %v2207
        %v2226 = vpack.c.b16 %v2210, %v2209
        %2243 = vmatprep.subr.bf16.mxu0 0
        %2244 = vmatpush1.bf16.msra.mxu0 %v2211
        %2245 = vmatprep.subr.bf16.mxu0 0
        %2246 = vmatpush1.bf16.msra.mxu0 %v2212
        %2247 = vmatprep.subr.bf16.mxu0 0
        %2248 = vmatpush1.bf16.msra.mxu0 %v2213
        %2249 = vmatprep.subr.bf16.mxu0 0
        %2250 = vmatpush1.bf16.msra.mxu0 %v2214
        %2251 = vmatprep.subr.bf16.mxu0 0
        %2252 = vmatpush1.bf16.msra.mxu0 %v2215
        %2253 = vmatprep.subr.bf16.mxu0 0
        %2254 = vmatpush1.bf16.msra.mxu0 %v2216
        %2255 = vmatprep.subr.bf16.mxu0 0
        %2256 = vmatpush1.bf16.msra.mxu0 %v2217
        %2257 = vmatprep.subr.bf16.mxu0 0
        %2258 = vmatpush1.bf16.msra.mxu0 %v2218
        %2259 = vmatprep.subr.bf16.mxu0 0
        %2260 = vmatpush1.bf16.msra.mxu0 %v2219
        %2261 = vmatprep.subr.bf16.mxu0 0
        %2262 = vmatpush1.bf16.msra.mxu0 %v2220
        %2263 = vmatprep.subr.bf16.mxu0 0
        %2264 = vmatpush1.bf16.msra.mxu0 %v2221
        %2265 = vmatprep.subr.bf16.mxu0 0
        %2266 = vmatpush1.bf16.msra.mxu0 %v2222
        %2267 = vmatprep.subr.bf16.mxu0 0
        %2268 = vmatpush1.bf16.msra.mxu0 %v2223
        %2269 = vmatprep.subr.bf16.mxu0 0
        %2270 = vmatpush1.bf16.msra.mxu0 %v2224
        %2271 = vmatprep.subr.bf16.mxu0 0
        %2272 = vmatpush1.bf16.msra.mxu0 %v2225
        %2273 = vmatprep.subr.bf16.mxu0 0
        %2274 = vmatpush1.bf16.msra.mxu0 %v2226
        %2275 = vmatprep.mubr.bf16.mxu0 %v2140
        %2276 = vmatmul.mubr.bf16.gmra.mrb[0].mxu0 %v2139
        %v2277 = vpop.f32.mrb[0].mxu0
        %v2278 = vadd.f32 %v2145, %v2277
        %v2279 = vpop.f32.mrb[0].mxu0
        %v2280 = vpop.f32.mrb[0].mxu0
        %v2281 = vpop.f32.mrb[0].mxu0
        %2282 = vdwg.mxu0
        %v2283 = vadd.f32 %v2278, %v1926
        %2284 = vst [vmem:[%s1046] sm:$0xff] %v2283
        %p2285 = scmp.eq.s32.totalorder %s62, 1
        // Predicated region
        $region149: #{transformer_forward.2} parent=87 // pred_check
          %p2286 = pneg %p2285
        $region150: #{transformer_forward.2} parent=87 // pred_check_branch
          %2288 = sbr.rel (%p2286) target = $region152
        $region151: #{transformer_forward.2} parent=87 // pred_region
          %v2289 = vld [vmem:[#allocation23] sm:$0x1]
          %v2290 = vld [vmem:[#allocation24] sm:$0x1]
          %2291 = vadd.xlane.f32.xlu0 %v2283
          %v2292 = vpop.xlane.xlu0 %2291
          %v2293 = vmul.f32 %v2292, %v1060
          %v2294 = vsub.f32 %v2283, %v2293
          %v2295 = vmul.f32 %v2294, %v2294
          %2296 = vadd.xlane.f32.xlu0 %v2295
          %v2297 = vpop.xlane.xlu0 %2296
          %v2298 = vmul.f32 %v2297, %v1060
          %v2299 = vadd.f32 %v2298, 1e-05
          %v2300 = vrsqrt.pop %v2299
          %v2301 = vmul.f32 %v2294, %v2300
          %v2303 = vlaneseq
          %v2304 = vshrl.u32 %v2303, 7
          %v2305 = vsub.s32 0, %v2304
          %v2306 = vrot.slane %v2289, %v2305
          %v2308 = vmul.f32 %v2301, %v2306
          %v2310 = vlaneseq
          %v2311 = vshrl.u32 %v2310, 7
          %v2312 = vsub.s32 0, %v2311
          %v2313 = vrot.slane %v2290, %v2312
          %v2315 = vadd.f32 %v2308, %v2313
          %2316 = vst [vmem:[%s1046] sm:$0xff] %v2315
        $region152: #{transformer_forward.2} parent=87 // pred_fallthru
          _
        %p2317 = scmp.lt.s32.totalorder %s61, 1
        %s2318 = scalar_select %p2317, %s61, 1
        %s2319 = smul.addr %s2318, 8
        %s2320 = scalar_lea.vmem %s18, %s2319
        // Predicated region
        $region153: #{transformer_forward.2} parent=87 // pred_check
          %p2321 = pneg %p519
        $region154: #{transformer_forward.2} parent=87 // pred_check_branch
          %2323 = sbr.rel (%p2321) target = $region156
        $region155: #{transformer_forward.2} parent=87 // pred_region
          _
        $region156: #{transformer_forward.2} parent=87 // pred_fallthru
          _
      $region88: #{transformer_forward.2} parent=5 // pred_fallthru
        _
      %p2324 = scmp.le.s32.totalorder 2, %s52
      // Predicated region
      $region157: #{transformer_forward.2} parent=5 // pred_check
        %p2325 = pneg %p2324
      $region158: #{transformer_forward.2} parent=5 // pred_check_branch
        %2327 = sbr.rel (%p2325) target = $region160
      $region159: #{transformer_forward.2} parent=5 // pred_region
        %s2328 = ssub.s32 %s52, 2
        // Predicated region
        $region161: #{transformer_forward.2} parent=159 // pred_check
          %p2329 = pneg %p525
        $region162: #{transformer_forward.2} parent=159 // pred_check_branch
          %2331 = sbr.rel (%p2329) target = $region164
        $region163: #{transformer_forward.2} parent=159 // pred_region
          %p2332 = scmp.lt.s32.totalorder %s63, 1
          %s2333 = scalar_select %p2332, %s63, 1
          %s2334 = smul.addr %s2333, 8
          %s2335 = scalar_lea.vmem %s18, %s2334
        $region164: #{transformer_forward.2} parent=159 // pred_fallthru
          _
      $region160: #{transformer_forward.2} parent=5 // pred_fallthru
        _
    $region6: #{transformer_forward.2} parent=1 // loop_footer
      %s56 = sadd.s32 1, %s52
    $region7: #{transformer_forward.2} parent=1 // loop_footer_branch
      %51 = sbr.rel target = $region3
    $region8: #{transformer_forward.2} parent=1 // loop_exit
      _
    %2336 = vsyncpa [#allocation5], 1
    %s2337 = scalar_lea.sflag [#allocation5], 1
    %2338 = vsyncpa %s2337, 1
    %2339 = vsyncpa [#allocation7], 1
    %s2340 = scalar_lea.sflag [#allocation7], 1
    %2341 = vsyncpa %s2340, 1
    %2342 = vsyncpa [#allocation10], 1
    %s2343 = scalar_lea.sflag [#allocation10], 1
    %2344 = vsyncpa %s2343, 1
    %2345 = vsyncpa [#allocation13], 1
    %s2346 = scalar_lea.sflag [#allocation13], 1
    %2347 = vsyncpa %s2346, 1
    %2348 = vsyncpa [#allocation16], 1
    %s2349 = scalar_lea.sflag [#allocation16], 1
    %2350 = vsyncpa %s2349, 1
    %2351 = vsyncpa [#allocation19], 1
    %s2352 = scalar_lea.sflag [#allocation19], 1
    %2353 = vsyncpa %s2352, 1
    %2354 = vsyncpa [#allocation22], 1
    %s2355 = scalar_lea.sflag [#allocation22], 1
    %2356 = vsyncpa %s2355, 1
    %2357 = vsyncpa [#allocation25], 1

// kernel: transformer_forward.3
$region0: #{transformer_forward.3}
  #allocation0 [shape = 'u32[]', space=smem, size = 0x4, offset = 0x4, fixed_abs, tag = 'smem constant byte address 0x4 - core index']
  #allocation1 [shape = 'u32[144,128]{1,0:T(1,128)}', space=vmem, size = 0x12000, scoped, tag = 'internal scratch']
  #allocation2 [shape = 'f32[1,8,128]{2,1,0:T(8,128)}', space=vmem, size = 0x1000, scoped, tag = 'scratch operand']
  #allocation3 [shape = 's32[1]{0}', space=sflag, size = 0x4, scoped, tag = 'scoped memory for transformer_forward.3']
  #allocation4 [shape = 'u8[512]{0}', space=smem, size = 0x200, scoped, tag = 'prefetched SMEM operand 0']
  #allocation5 [shape = 'u8[512]{0}', space=smem, size = 0x200, scoped, tag = 'prefetched SMEM operand 1']
  %s0 = inlined_call_operand.smem [shape: u32[31], index: -1, kind: input, shape index: {}]
  %s1 = sld [smem:[%s0]]
  %s2 = scalar_lea.smem %s0, 1
  %s3 = sld [smem:[%s2]]
  %s4 = scalar_lea.smem %s0, 2
  %s5 = sld [smem:[%s4]]
  %s6 = scalar_lea.smem %s0, 3
  %s7 = sld [smem:[%s6]]
  %s8 = scalar_lea.smem %s0, 4
  %s9 = sld [smem:[%s8]]
  %s10 = scalar_lea.smem %s0, 5
  %s11 = sld [smem:[%s10]]
  %s12 = scalar_lea.smem %s0, 6
  %s13 = sld [smem:[%s12]]
  %s14 = scalar_lea.smem %s0, 7
  %s15 = sld [smem:[%s14]]
  %s16 = scalar_lea.smem %s0, 8
  %s17 = sld [smem:[%s16]]
  %s18 = scalar_lea.smem %s0, 9
  %s19 = sld [smem:[%s18]]
  %s20 = scalar_lea.smem %s0, 10
  %s21 = sld [smem:[%s20]]
  %s22 = scalar_lea.smem %s0, 11
  %s23 = sld [smem:[%s22]]
  %s24 = scalar_lea.smem %s0, 12
  %s25 = sld [smem:[%s24]]
  %s26 = scalar_lea.smem %s0, 13
  %s27 = sld [smem:[%s26]]
  %s28 = scalar_lea.smem %s0, 14
  %s29 = sld [smem:[%s28]]
  %s30 = scalar_lea.smem %s0, 15
  %s31 = sld [smem:[%s30]]
  %s32 = scalar_lea.smem %s0, 16
  %s33 = sld [smem:[%s32]]
  %s34 = scalar_lea.smem %s0, 17
  %s35 = sld [smem:[%s34]]
  %s36 = scalar_lea.smem %s0, 18
  %s37 = sld [smem:[%s36]]
  %s38 = scalar_lea.smem %s0, 19
  %s39 = sld [smem:[%s38]]
  %s40 = scalar_lea.smem %s0, 20
  %s41 = sld [smem:[%s40]]
  %s42 = scalar_lea.smem %s0, 21
  %s43 = sld [smem:[%s42]]
  %s44 = scalar_lea.smem %s0, 22
  %s45 = sld [smem:[%s44]]
  %s46 = scalar_lea.smem %s0, 23
  %s47 = sld [smem:[%s46]]
  %s48 = scalar_lea.smem %s0, 24
  %s49 = sld [smem:[%s48]]
  %s50 = scalar_lea.smem %s0, 25
  %s51 = sld [smem:[%s50]]
  %s52 = scalar_lea.smem %s0, 26
  %s53 = sld [smem:[%s52]]
  %s54 = scalar_lea.smem %s0, 27
  %s55 = sld [smem:[%s54]]
  %s56 = scalar_lea.smem %s0, 28
  %s57 = sld [smem:[%s56]]
  %s58 = scalar_lea.smem %s0, 29
  %s59 = sld [smem:[%s58]]
  %s60 = scalar_lea.smem %s0, 30
  %s61 = sld [smem:[%s60]]
  %s62 = sld [smem:[#allocation0]]
  $region169: #{transformer_forward.3} parent=0
    _
  %s64 = ssub.s32 1, %s62
  %s65 = scalar_select 0, %s64, %s62
  %s66 = sshll.u32 %s1, 4
  %s67 = int_to_ptr.vmem [resolvable:$true] %s66
  %69 = dma.vmem_to_smem %s67, 16, [#allocation4], [#allocation3]
  %s70 = sshll.u32 %s3, 4
  %s71 = int_to_ptr.vmem [resolvable:$true] %s70
  %73 = dma.vmem_to_smem %s71, 16, [#allocation5], [#allocation3]
  %74 = dma.done [#allocation3], 32
  %75 = sfence
  $region1: #{transformer_forward.3} parent=0
    #allocation6 [shape = 'u8[65536]{0}', space=vmem, size = 0x10000, scoped, tag = 'input window, operand 6']
    #allocation7 [shape = 's32[2]{0}', space=sflag, size = 0x8, scoped, tag = 'scoped memory for transformer_forward.3']
    #allocation8 [shape = 's32[2]{0}', space=sflag, size = 0x8, scoped, tag = 'scoped memory for transformer_forward.3']
    #allocation9 [shape = 'u8[65536]{0}', space=vmem, size = 0x10000, scoped, tag = 'input window, operand 10']
    #allocation10 [shape = 's32[2]{0}', space=sflag, size = 0x8, scoped, tag = 'scoped memory for transformer_forward.3']
    #allocation11 [shape = 'u8[65536]{0}', space=vmem, size = 0x10000, scoped, tag = 'input window, operand 14']
    #allocation12 [shape = 'u8[65536]{0}', space=vmem, size = 0x10000, scoped, tag = 'input window, operand 18']
    #allocation13 [shape = 's32[2]{0}', space=sflag, size = 0x8, scoped, tag = 'scoped memory for transformer_forward.3']
    #allocation14 [shape = 'u8[8192]{0}', space=vmem, size = 0x2000, scoped, tag = 'output window, operand 0']
    %76 = vsyncpa [#allocation7], 0
    %s77 = scalar_lea.sflag [#allocation7], 1
    %78 = vsyncpa %s77, 0
    %79 = vsyncpa [#allocation10], 0
    %s80 = scalar_lea.sflag [#allocation10], 1
    %81 = vsyncpa %s80, 0
    %82 = vsyncpa [#allocation13], 0
    %s83 = scalar_lea.sflag [#allocation13], 1
    %84 = vsyncpa %s83, 0
    %85 = vsyncpa [#allocation8], 0
    %s86 = scalar_lea.sflag [#allocation8], 1
    %87 = vsyncpa %s86, 0
    loop: start=0, step=1, limit=6
    $region2: #{transformer_forward.3} parent=1 // loop_pre_header
      _
    $region3: #{transformer_forward.3} parent=1 // loop_header
      %s89 = sphi 0, %s93
      %p90 = scmp.ge.s32.totalorder %s89, 6
      %s96 = sphi 0, %s108
      %s97 = sphi 0, %s104
      %s98 = sphi 0, %s96
      %s99 = sphi 0, %s97
      %s100 = sphi 0, %s98
      %s101 = sphi 0, %s99
      %s111 = sphi 0, %s113
      %s114 = sphi 0, %s111
      %s115 = sphi 0, %s114
      %s131 = sphi 0, %s115
      %s137 = sphi 0, %s139
      %s140 = sphi 0, %s137
      %s141 = sphi 0, %s140
      %s157 = sphi 0, %s141
      %s163 = sphi 0, %s165
      %s166 = sphi 0, %s163
      %s167 = sphi 0, %s166
      %s183 = sphi 0, %s167
      %s189 = sphi 0, %s191
      %s192 = sphi 0, %s189
      %s193 = sphi 0, %s192
      %s209 = sphi 0, %s193
      %s215 = sphi 0, %s217
      %s218 = sphi 0, %s215
      %s219 = sphi 0, %s218
      %s235 = sphi 0, %s219
      %s241 = sphi 0, %s243
      %s244 = sphi 0, %s241
      %s245 = sphi 0, %s244
      %s261 = sphi 0, %s245
      %s267 = sphi 0, %s269
      %s270 = sphi 0, %s267
      %s271 = sphi 0, %s270
      %s287 = sphi 0, %s271
      %s293 = sphi 0, %s295
      %s296 = sphi 0, %s293
      %s297 = sphi 0, %s296
      %s313 = sphi 0, %s297
      %s319 = sphi 0, %s321
      %s322 = sphi 0, %s319
      %s323 = sphi 0, %s322
      %s339 = sphi 0, %s323
      %s345 = sphi 0, %s347
      %s348 = sphi 0, %s345
      %s349 = sphi 0, %s348
      %s365 = sphi 0, %s349
      %s371 = sphi 0, %s373
      %s374 = sphi 0, %s371
      %s375 = sphi 0, %s374
      %s391 = sphi 0, %s375
      %s397 = sphi 0, %s399
      %s400 = sphi 0, %s397
      %s401 = sphi 0, %s400
      %s417 = sphi 0, %s401
      %s423 = sphi 0, %s425
      %s426 = sphi 0, %s423
      %s427 = sphi 0, %s426
      %s443 = sphi 0, %s427
      %s449 = sphi 0, %s451
      %s452 = sphi 0, %s449
      %s453 = sphi 0, %s452
      %s469 = sphi 0, %s453
      %s475 = sphi 0, %s477
      %s478 = sphi 0, %s475
      %s479 = sphi 0, %s478
      %s495 = sphi 0, %s479
      %s501 = sphi 0, %s503
      %s504 = sphi 0, %s501
      %s505 = sphi 0, %s504
      %s521 = sphi 0, %s505
      %s527 = sphi 0, %s529
      %s530 = sphi 0, %s527
      %s531 = sphi 0, %s530
      %s547 = sphi 0, %s531
      %s553 = sphi 0, %s555
      %s556 = sphi 0, %s553
      %s557 = sphi 0, %s556
      %s573 = sphi 0, %s557
      %s579 = sphi 0, %s581
      %s582 = sphi 0, %s579
      %s583 = sphi 0, %s582
      %s599 = sphi 0, %s583
      %s605 = sphi 0, %s607
      %s608 = sphi 0, %s605
      %s609 = sphi 0, %s608
      %s625 = sphi 0, %s609
      %s631 = sphi 0, %s633
      %s634 = sphi 0, %s631
      %s635 = sphi 0, %s634
      %s651 = sphi 0, %s635
      %s657 = sphi 0, %s659
      %s660 = sphi 0, %s657
      %s661 = sphi 0, %s660
      %s677 = sphi 0, %s661
      %s683 = sphi 0, %s685
      %s686 = sphi 0, %s683
      %s687 = sphi 0, %s686
      %s703 = sphi 0, %s687
      %s709 = sphi 0, %s711
      %s712 = sphi 0, %s709
      %s713 = sphi 0, %s712
      %s729 = sphi 0, %s713
      %s733 = sphi 0, %s733
      %s735 = sphi 0, %s733
      %s736 = sphi 0, %s735
      %s750 = sphi 0, %s736
      %s754 = sphi 0, %s754
      %s756 = sphi 0, %s754
      %s757 = sphi 0, %s756
      %s771 = sphi 0, %s757
      %s775 = sphi 0, %s775
      %s777 = sphi 0, %s775
      %s778 = sphi 0, %s777
      %s792 = sphi 0, %s778
      %s796 = sphi 0, %s796
      %s798 = sphi 0, %s796
      %s799 = sphi 0, %s798
      %s813 = sphi 0, %s799
      %s819 = sphi 0, %s821
      %s822 = sphi 0, %s819
      %s823 = sphi 0, %s822
      %s839 = sphi 0, %s823
    $region4: #{transformer_forward.3} parent=1 // loop_header_branch
      %92 = sbr.rel (%p90) target = $region8
    $region5: #{transformer_forward.3} parent=1 // loop_body
      %s94 = ssub.s32 %s89, 1
      %s95 = ssub.s32 %s89, 2
      %s102 = sadd.s32 1, %s97
      %p103 = scmp.ge.s32.totalorder %s102, 2
      %s104 = scalar_select %p103, 0, %s102
      %s105 = sadd.s32 1, %s96
      %s106 = scalar_select %p103, %s105, %s96
      %p107 = scmp.ge.s32.totalorder %s106, 2
      %s108 = scalar_select %p107, 0, %s106
      %s109 = ssub.s32 %s96, %s108
      %p110 = scmp.eq.s32.totalorder %s109, 0
      %s112 = sadd.s32 %s111, 1
      %s113 = scalar_select %p110, %s111, %s112
      %p116 = pneg %p110
      %p117 = scmp.eq.s32.totalorder %s89, 3
      %p118 = por %p116, %p117
      %p119 = scmp.ne.s32.totalorder %s111, %s114
      %p120 = scmp.eq.s32.totalorder %s89, 0
      %p121 = por %p119, %p120
      %p122 = scmp.ne.s32.totalorder %s111, %s114
      %p123 = scmp.eq.s32.totalorder %s94, 3
      %p124 = por %p122, %p123
      %p125 = scmp.ne.s32.totalorder %s114, %s115
      %p126 = scmp.eq.s32.totalorder %s94, 0
      %p127 = por %p125, %p126
      %p128 = scmp.ne.s32.totalorder %s114, %s115
      %p129 = scmp.eq.s32.totalorder %s95, 3
      %p130 = por %p128, %p129
      %p132 = scmp.ne.s32.totalorder %s115, %s131
      %p133 = scmp.eq.s32.totalorder %s95, 0
      %p134 = por %p132, %p133
      %s135 = ssub.s32 %s96, %s108
      %p136 = scmp.eq.s32.totalorder %s135, 0
      %s138 = sadd.s32 %s137, 1
      %s139 = scalar_select %p136, %s137, %s138
      %p142 = pneg %p136
      %p143 = scmp.eq.s32.totalorder %s89, 3
      %p144 = por %p142, %p143
      %p145 = scmp.ne.s32.totalorder %s137, %s140
      %p146 = scmp.eq.s32.totalorder %s89, 0
      %p147 = por %p145, %p146
      %p148 = scmp.ne.s32.totalorder %s137, %s140
      %p149 = scmp.eq.s32.totalorder %s94, 3
      %p150 = por %p148, %p149
      %p151 = scmp.ne.s32.totalorder %s140, %s141
      %p152 = scmp.eq.s32.totalorder %s94, 0
      %p153 = por %p151, %p152
      %p154 = scmp.ne.s32.totalorder %s140, %s141
      %p155 = scmp.eq.s32.totalorder %s95, 3
      %p156 = por %p154, %p155
      %p158 = scmp.ne.s32.totalorder %s141, %s157
      %p159 = scmp.eq.s32.totalorder %s95, 0
      %p160 = por %p158, %p159
      %s161 = ssub.s32 %s97, %s104
      %p162 = scmp.eq.s32.totalorder %s161, 0
      %s164 = sadd.s32 %s163, 1
      %s165 = scalar_select %p162, %s163, %s164
      %p168 = pneg %p162
      %p169 = scmp.eq.s32.totalorder %s89, 3
      %p170 = por %p168, %p169
      %p171 = scmp.ne.s32.totalorder %s163, %s166
      %p172 = scmp.eq.s32.totalorder %s89, 0
      %p173 = por %p171, %p172
      %p174 = scmp.ne.s32.totalorder %s163, %s166
      %p175 = scmp.eq.s32.totalorder %s94, 3
      %p176 = por %p174, %p175
      %p177 = scmp.ne.s32.totalorder %s166, %s167
      %p178 = scmp.eq.s32.totalorder %s94, 0
      %p179 = por %p177, %p178
      %p180 = scmp.ne.s32.totalorder %s166, %s167
      %p181 = scmp.eq.s32.totalorder %s95, 3
      %p182 = por %p180, %p181
      %p184 = scmp.ne.s32.totalorder %s167, %s183
      %p185 = scmp.eq.s32.totalorder %s95, 0
      %p186 = por %p184, %p185
      %s187 = ssub.s32 %s97, %s104
      %p188 = scmp.eq.s32.totalorder %s187, 0
      %s190 = sadd.s32 %s189, 1
      %s191 = scalar_select %p188, %s189, %s190
      %p194 = pneg %p188
      %p195 = scmp.eq.s32.totalorder %s89, 3
      %p196 = por %p194, %p195
      %p197 = scmp.ne.s32.totalorder %s189, %s192
      %p198 = scmp.eq.s32.totalorder %s89, 0
      %p199 = por %p197, %p198
      %p200 = scmp.ne.s32.totalorder %s189, %s192
      %p201 = scmp.eq.s32.totalorder %s94, 3
      %p202 = por %p200, %p201
      %p203 = scmp.ne.s32.totalorder %s192, %s193
      %p204 = scmp.eq.s32.totalorder %s94, 0
      %p205 = por %p203, %p204
      %p206 = scmp.ne.s32.totalorder %s192, %s193
      %p207 = scmp.eq.s32.totalorder %s95, 3
      %p208 = por %p206, %p207
      %p210 = scmp.ne.s32.totalorder %s193, %s209
      %p211 = scmp.eq.s32.totalorder %s95, 0
      %p212 = por %p210, %p211
      %s213 = ssub.s32 %s97, %s104
      %p214 = scmp.eq.s32.totalorder %s213, 0
      %s216 = sadd.s32 %s215, 1
      %s217 = scalar_select %p214, %s215, %s216
      %p220 = pneg %p214
      %p221 = scmp.eq.s32.totalorder %s89, 3
      %p222 = por %p220, %p221
      %p223 = scmp.ne.s32.totalorder %s215, %s218
      %p224 = scmp.eq.s32.totalorder %s89, 0
      %p225 = por %p223, %p224
      %p226 = scmp.ne.s32.totalorder %s215, %s218
      %p227 = scmp.eq.s32.totalorder %s94, 3
      %p228 = por %p226, %p227
      %p229 = scmp.ne.s32.totalorder %s218, %s219
      %p230 = scmp.eq.s32.totalorder %s94, 0
      %p231 = por %p229, %p230
      %p232 = scmp.ne.s32.totalorder %s218, %s219
      %p233 = scmp.eq.s32.totalorder %s95, 3
      %p234 = por %p232, %p233
      %p236 = scmp.ne.s32.totalorder %s219, %s235
      %p237 = scmp.eq.s32.totalorder %s95, 0
      %p238 = por %p236, %p237
      %s239 = ssub.s32 %s97, %s104
      %p240 = scmp.eq.s32.totalorder %s239, 0
      %s242 = sadd.s32 %s241, 1
      %s243 = scalar_select %p240, %s241, %s242
      %p246 = pneg %p240
      %p247 = scmp.eq.s32.totalorder %s89, 3
      %p248 = por %p246, %p247
      %p249 = scmp.ne.s32.totalorder %s241, %s244
      %p250 = scmp.eq.s32.totalorder %s89, 0
      %p251 = por %p249, %p250
      %p252 = scmp.ne.s32.totalorder %s241, %s244
      %p253 = scmp.eq.s32.totalorder %s94, 3
      %p254 = por %p252, %p253
      %p255 = scmp.ne.s32.totalorder %s244, %s245
      %p256 = scmp.eq.s32.totalorder %s94, 0
      %p257 = por %p255, %p256
      %p258 = scmp.ne.s32.totalorder %s244, %s245
      %p259 = scmp.eq.s32.totalorder %s95, 3
      %p260 = por %p258, %p259
      %p262 = scmp.ne.s32.totalorder %s245, %s261
      %p263 = scmp.eq.s32.totalorder %s95, 0
      %p264 = por %p262, %p263
      %s265 = ssub.s32 %s97, %s104
      %p266 = scmp.eq.s32.totalorder %s265, 0
      %s268 = sadd.s32 %s267, 1
      %s269 = scalar_select %p266, %s267, %s268
      %p272 = pneg %p266
      %p273 = scmp.eq.s32.totalorder %s89, 3
      %p274 = por %p272, %p273
      %p275 = scmp.ne.s32.totalorder %s267, %s270
      %p276 = scmp.eq.s32.totalorder %s89, 0
      %p277 = por %p275, %p276
      %p278 = scmp.ne.s32.totalorder %s267, %s270
      %p279 = scmp.eq.s32.totalorder %s94, 3
      %p280 = por %p278, %p279
      %p281 = scmp.ne.s32.totalorder %s270, %s271
      %p282 = scmp.eq.s32.totalorder %s94, 0
      %p283 = por %p281, %p282
      %p284 = scmp.ne.s32.totalorder %s270, %s271
      %p285 = scmp.eq.s32.totalorder %s95, 3
      %p286 = por %p284, %p285
      %p288 = scmp.ne.s32.totalorder %s271, %s287
      %p289 = scmp.eq.s32.totalorder %s95, 0
      %p290 = por %p288, %p289
      %s291 = ssub.s32 %s97, %s104
      %p292 = scmp.eq.s32.totalorder %s291, 0
      %s294 = sadd.s32 %s293, 1
      %s295 = scalar_select %p292, %s293, %s294
      %p298 = pneg %p292
      %p299 = scmp.eq.s32.totalorder %s89, 3
      %p300 = por %p298, %p299
      %p301 = scmp.ne.s32.totalorder %s293, %s296
      %p302 = scmp.eq.s32.totalorder %s89, 0
      %p303 = por %p301, %p302
      %p304 = scmp.ne.s32.totalorder %s293, %s296
      %p305 = scmp.eq.s32.totalorder %s94, 3
      %p306 = por %p304, %p305
      %p307 = scmp.ne.s32.totalorder %s296, %s297
      %p308 = scmp.eq.s32.totalorder %s94, 0
      %p309 = por %p307, %p308
      %p310 = scmp.ne.s32.totalorder %s296, %s297
      %p311 = scmp.eq.s32.totalorder %s95, 3
      %p312 = por %p310, %p311
      %p314 = scmp.ne.s32.totalorder %s297, %s313
      %p315 = scmp.eq.s32.totalorder %s95, 0
      %p316 = por %p314, %p315
      %s317 = ssub.s32 %s97, %s104
      %p318 = scmp.eq.s32.totalorder %s317, 0
      %s320 = sadd.s32 %s319, 1
      %s321 = scalar_select %p318, %s319, %s320
      %p324 = pneg %p318
      %p325 = scmp.eq.s32.totalorder %s89, 3
      %p326 = por %p324, %p325
      %p327 = scmp.ne.s32.totalorder %s319, %s322
      %p328 = scmp.eq.s32.totalorder %s89, 0
      %p329 = por %p327, %p328
      %p330 = scmp.ne.s32.totalorder %s319, %s322
      %p331 = scmp.eq.s32.totalorder %s94, 3
      %p332 = por %p330, %p331
      %p333 = scmp.ne.s32.totalorder %s322, %s323
      %p334 = scmp.eq.s32.totalorder %s94, 0
      %p335 = por %p333, %p334
      %p336 = scmp.ne.s32.totalorder %s322, %s323
      %p337 = scmp.eq.s32.totalorder %s95, 3
      %p338 = por %p336, %p337
      %p340 = scmp.ne.s32.totalorder %s323, %s339
      %p341 = scmp.eq.s32.totalorder %s95, 0
      %p342 = por %p340, %p341
      %s343 = ssub.s32 %s97, %s104
      %p344 = scmp.eq.s32.totalorder %s343, 0
      %s346 = sadd.s32 %s345, 1
      %s347 = scalar_select %p344, %s345, %s346
      %p350 = pneg %p344
      %p351 = scmp.eq.s32.totalorder %s89, 3
      %p352 = por %p350, %p351
      %p353 = scmp.ne.s32.totalorder %s345, %s348
      %p354 = scmp.eq.s32.totalorder %s89, 0
      %p355 = por %p353, %p354
      %p356 = scmp.ne.s32.totalorder %s345, %s348
      %p357 = scmp.eq.s32.totalorder %s94, 3
      %p358 = por %p356, %p357
      %p359 = scmp.ne.s32.totalorder %s348, %s349
      %p360 = scmp.eq.s32.totalorder %s94, 0
      %p361 = por %p359, %p360
      %p362 = scmp.ne.s32.totalorder %s348, %s349
      %p363 = scmp.eq.s32.totalorder %s95, 3
      %p364 = por %p362, %p363
      %p366 = scmp.ne.s32.totalorder %s349, %s365
      %p367 = scmp.eq.s32.totalorder %s95, 0
      %p368 = por %p366, %p367
      %s369 = ssub.s32 %s97, %s104
      %p370 = scmp.eq.s32.totalorder %s369, 0
      %s372 = sadd.s32 %s371, 1
      %s373 = scalar_select %p370, %s371, %s372
      %p376 = pneg %p370
      %p377 = scmp.eq.s32.totalorder %s89, 3
      %p378 = por %p376, %p377
      %p379 = scmp.ne.s32.totalorder %s371, %s374
      %p380 = scmp.eq.s32.totalorder %s89, 0
      %p381 = por %p379, %p380
      %p382 = scmp.ne.s32.totalorder %s371, %s374
      %p383 = scmp.eq.s32.totalorder %s94, 3
      %p384 = por %p382, %p383
      %p385 = scmp.ne.s32.totalorder %s374, %s375
      %p386 = scmp.eq.s32.totalorder %s94, 0
      %p387 = por %p385, %p386
      %p388 = scmp.ne.s32.totalorder %s374, %s375
      %p389 = scmp.eq.s32.totalorder %s95, 3
      %p390 = por %p388, %p389
      %p392 = scmp.ne.s32.totalorder %s375, %s391
      %p393 = scmp.eq.s32.totalorder %s95, 0
      %p394 = por %p392, %p393
      %s395 = ssub.s32 %s97, %s104
      %p396 = scmp.eq.s32.totalorder %s395, 0
      %s398 = sadd.s32 %s397, 1
      %s399 = scalar_select %p396, %s397, %s398
      %p402 = pneg %p396
      %p403 = scmp.eq.s32.totalorder %s89, 3
      %p404 = por %p402, %p403
      %p405 = scmp.ne.s32.totalorder %s397, %s400
      %p406 = scmp.eq.s32.totalorder %s89, 0
      %p407 = por %p405, %p406
      %p408 = scmp.ne.s32.totalorder %s397, %s400
      %p409 = scmp.eq.s32.totalorder %s94, 3
      %p410 = por %p408, %p409
      %p411 = scmp.ne.s32.totalorder %s400, %s401
      %p412 = scmp.eq.s32.totalorder %s94, 0
      %p413 = por %p411, %p412
      %p414 = scmp.ne.s32.totalorder %s400, %s401
      %p415 = scmp.eq.s32.totalorder %s95, 3
      %p416 = por %p414, %p415
      %p418 = scmp.ne.s32.totalorder %s401, %s417
      %p419 = scmp.eq.s32.totalorder %s95, 0
      %p420 = por %p418, %p419
      %s421 = ssub.s32 %s97, %s104
      %p422 = scmp.eq.s32.totalorder %s421, 0
      %s424 = sadd.s32 %s423, 1
      %s425 = scalar_select %p422, %s423, %s424
      %p428 = pneg %p422
      %p429 = scmp.eq.s32.totalorder %s89, 3
      %p430 = por %p428, %p429
      %p431 = scmp.ne.s32.totalorder %s423, %s426
      %p432 = scmp.eq.s32.totalorder %s89, 0
      %p433 = por %p431, %p432
      %p434 = scmp.ne.s32.totalorder %s423, %s426
      %p435 = scmp.eq.s32.totalorder %s94, 3
      %p436 = por %p434, %p435
      %p437 = scmp.ne.s32.totalorder %s426, %s427
      %p438 = scmp.eq.s32.totalorder %s94, 0
      %p439 = por %p437, %p438
      %p440 = scmp.ne.s32.totalorder %s426, %s427
      %p441 = scmp.eq.s32.totalorder %s95, 3
      %p442 = por %p440, %p441
      %p444 = scmp.ne.s32.totalorder %s427, %s443
      %p445 = scmp.eq.s32.totalorder %s95, 0
      %p446 = por %p444, %p445
      %s447 = ssub.s32 %s97, %s104
      %p448 = scmp.eq.s32.totalorder %s447, 0
      %s450 = sadd.s32 %s449, 1
      %s451 = scalar_select %p448, %s449, %s450
      %p454 = pneg %p448
      %p455 = scmp.eq.s32.totalorder %s89, 3
      %p456 = por %p454, %p455
      %p457 = scmp.ne.s32.totalorder %s449, %s452
      %p458 = scmp.eq.s32.totalorder %s89, 0
      %p459 = por %p457, %p458
      %p460 = scmp.ne.s32.totalorder %s449, %s452
      %p461 = scmp.eq.s32.totalorder %s94, 3
      %p462 = por %p460, %p461
      %p463 = scmp.ne.s32.totalorder %s452, %s453
      %p464 = scmp.eq.s32.totalorder %s94, 0
      %p465 = por %p463, %p464
      %p466 = scmp.ne.s32.totalorder %s452, %s453
      %p467 = scmp.eq.s32.totalorder %s95, 3
      %p468 = por %p466, %p467
      %p470 = scmp.ne.s32.totalorder %s453, %s469
      %p471 = scmp.eq.s32.totalorder %s95, 0
      %p472 = por %p470, %p471
      %s473 = ssub.s32 %s97, %s104
      %p474 = scmp.eq.s32.totalorder %s473, 0
      %s476 = sadd.s32 %s475, 1
      %s477 = scalar_select %p474, %s475, %s476
      %p480 = pneg %p474
      %p481 = scmp.eq.s32.totalorder %s89, 3
      %p482 = por %p480, %p481
      %p483 = scmp.ne.s32.totalorder %s475, %s478
      %p484 = scmp.eq.s32.totalorder %s89, 0
      %p485 = por %p483, %p484
      %p486 = scmp.ne.s32.totalorder %s475, %s478
      %p487 = scmp.eq.s32.totalorder %s94, 3
      %p488 = por %p486, %p487
      %p489 = scmp.ne.s32.totalorder %s478, %s479
      %p490 = scmp.eq.s32.totalorder %s94, 0
      %p491 = por %p489, %p490
      %p492 = scmp.ne.s32.totalorder %s478, %s479
      %p493 = scmp.eq.s32.totalorder %s95, 3
      %p494 = por %p492, %p493
      %p496 = scmp.ne.s32.totalorder %s479, %s495
      %p497 = scmp.eq.s32.totalorder %s95, 0
      %p498 = por %p496, %p497
      %s499 = ssub.s32 %s97, %s104
      %p500 = scmp.eq.s32.totalorder %s499, 0
      %s502 = sadd.s32 %s501, 1
      %s503 = scalar_select %p500, %s501, %s502
      %p506 = pneg %p500
      %p507 = scmp.eq.s32.totalorder %s89, 3
      %p508 = por %p506, %p507
      %p509 = scmp.ne.s32.totalorder %s501, %s504
      %p510 = scmp.eq.s32.totalorder %s89, 0
      %p511 = por %p509, %p510
      %p512 = scmp.ne.s32.totalorder %s501, %s504
      %p513 = scmp.eq.s32.totalorder %s94, 3
      %p514 = por %p512, %p513
      %p515 = scmp.ne.s32.totalorder %s504, %s505
      %p516 = scmp.eq.s32.totalorder %s94, 0
      %p517 = por %p515, %p516
      %p518 = scmp.ne.s32.totalorder %s504, %s505
      %p519 = scmp.eq.s32.totalorder %s95, 3
      %p520 = por %p518, %p519
      %p522 = scmp.ne.s32.totalorder %s505, %s521
      %p523 = scmp.eq.s32.totalorder %s95, 0
      %p524 = por %p522, %p523
      %s525 = ssub.s32 %s97, %s104
      %p526 = scmp.eq.s32.totalorder %s525, 0
      %s528 = sadd.s32 %s527, 1
      %s529 = scalar_select %p526, %s527, %s528
      %p532 = pneg %p526
      %p533 = scmp.eq.s32.totalorder %s89, 3
      %p534 = por %p532, %p533
      %p535 = scmp.ne.s32.totalorder %s527, %s530
      %p536 = scmp.eq.s32.totalorder %s89, 0
      %p537 = por %p535, %p536
      %p538 = scmp.ne.s32.totalorder %s527, %s530
      %p539 = scmp.eq.s32.totalorder %s94, 3
      %p540 = por %p538, %p539
      %p541 = scmp.ne.s32.totalorder %s530, %s531
      %p542 = scmp.eq.s32.totalorder %s94, 0
      %p543 = por %p541, %p542
      %p544 = scmp.ne.s32.totalorder %s530, %s531
      %p545 = scmp.eq.s32.totalorder %s95, 3
      %p546 = por %p544, %p545
      %p548 = scmp.ne.s32.totalorder %s531, %s547
      %p549 = scmp.eq.s32.totalorder %s95, 0
      %p550 = por %p548, %p549
      %s551 = ssub.s32 %s97, %s104
      %p552 = scmp.eq.s32.totalorder %s551, 0
      %s554 = sadd.s32 %s553, 1
      %s555 = scalar_select %p552, %s553, %s554
      %p558 = pneg %p552
      %p559 = scmp.eq.s32.totalorder %s89, 3
      %p560 = por %p558, %p559
      %p561 = scmp.ne.s32.totalorder %s553, %s556
      %p562 = scmp.eq.s32.totalorder %s89, 0
      %p563 = por %p561, %p562
      %p564 = scmp.ne.s32.totalorder %s553, %s556
      %p565 = scmp.eq.s32.totalorder %s94, 3
      %p566 = por %p564, %p565
      %p567 = scmp.ne.s32.totalorder %s556, %s557
      %p568 = scmp.eq.s32.totalorder %s94, 0
      %p569 = por %p567, %p568
      %p570 = scmp.ne.s32.totalorder %s556, %s557
      %p571 = scmp.eq.s32.totalorder %s95, 3
      %p572 = por %p570, %p571
      %p574 = scmp.ne.s32.totalorder %s557, %s573
      %p575 = scmp.eq.s32.totalorder %s95, 0
      %p576 = por %p574, %p575
      %s577 = ssub.s32 %s97, %s104
      %p578 = scmp.eq.s32.totalorder %s577, 0
      %s580 = sadd.s32 %s579, 1
      %s581 = scalar_select %p578, %s579, %s580
      %p584 = pneg %p578
      %p585 = scmp.eq.s32.totalorder %s89, 3
      %p586 = por %p584, %p585
      %p587 = scmp.ne.s32.totalorder %s579, %s582
      %p588 = scmp.eq.s32.totalorder %s89, 0
      %p589 = por %p587, %p588
      %p590 = scmp.ne.s32.totalorder %s579, %s582
      %p591 = scmp.eq.s32.totalorder %s94, 3
      %p592 = por %p590, %p591
      %p593 = scmp.ne.s32.totalorder %s582, %s583
      %p594 = scmp.eq.s32.totalorder %s94, 0
      %p595 = por %p593, %p594
      %p596 = scmp.ne.s32.totalorder %s582, %s583
      %p597 = scmp.eq.s32.totalorder %s95, 3
      %p598 = por %p596, %p597
      %p600 = scmp.ne.s32.totalorder %s583, %s599
      %p601 = scmp.eq.s32.totalorder %s95, 0
      %p602 = por %p600, %p601
      %s603 = ssub.s32 %s97, %s104
      %p604 = scmp.eq.s32.totalorder %s603, 0
      %s606 = sadd.s32 %s605, 1
      %s607 = scalar_select %p604, %s605, %s606
      %p610 = pneg %p604
      %p611 = scmp.eq.s32.totalorder %s89, 3
      %p612 = por %p610, %p611
      %p613 = scmp.ne.s32.totalorder %s605, %s608
      %p614 = scmp.eq.s32.totalorder %s89, 0
      %p615 = por %p613, %p614
      %p616 = scmp.ne.s32.totalorder %s605, %s608
      %p617 = scmp.eq.s32.totalorder %s94, 3
      %p618 = por %p616, %p617
      %p619 = scmp.ne.s32.totalorder %s608, %s609
      %p620 = scmp.eq.s32.totalorder %s94, 0
      %p621 = por %p619, %p620
      %p622 = scmp.ne.s32.totalorder %s608, %s609
      %p623 = scmp.eq.s32.totalorder %s95, 3
      %p624 = por %p622, %p623
      %p626 = scmp.ne.s32.totalorder %s609, %s625
      %p627 = scmp.eq.s32.totalorder %s95, 0
      %p628 = por %p626, %p627
      %s629 = ssub.s32 %s97, %s104
      %p630 = scmp.eq.s32.totalorder %s629, 0
      %s632 = sadd.s32 %s631, 1
      %s633 = scalar_select %p630, %s631, %s632
      %p636 = pneg %p630
      %p637 = scmp.eq.s32.totalorder %s89, 3
      %p638 = por %p636, %p637
      %p639 = scmp.ne.s32.totalorder %s631, %s634
      %p640 = scmp.eq.s32.totalorder %s89, 0
      %p641 = por %p639, %p640
      %p642 = scmp.ne.s32.totalorder %s631, %s634
      %p643 = scmp.eq.s32.totalorder %s94, 3
      %p644 = por %p642, %p643
      %p645 = scmp.ne.s32.totalorder %s634, %s635
      %p646 = scmp.eq.s32.totalorder %s94, 0
      %p647 = por %p645, %p646
      %p648 = scmp.ne.s32.totalorder %s634, %s635
      %p649 = scmp.eq.s32.totalorder %s95, 3
      %p650 = por %p648, %p649
      %p652 = scmp.ne.s32.totalorder %s635, %s651
      %p653 = scmp.eq.s32.totalorder %s95, 0
      %p654 = por %p652, %p653
      %s655 = ssub.s32 %s97, %s104
      %p656 = scmp.eq.s32.totalorder %s655, 0
      %s658 = sadd.s32 %s657, 1
      %s659 = scalar_select %p656, %s657, %s658
      %p662 = pneg %p656
      %p663 = scmp.eq.s32.totalorder %s89, 3
      %p664 = por %p662, %p663
      %p665 = scmp.ne.s32.totalorder %s657, %s660
      %p666 = scmp.eq.s32.totalorder %s89, 0
      %p667 = por %p665, %p666
      %p668 = scmp.ne.s32.totalorder %s657, %s660
      %p669 = scmp.eq.s32.totalorder %s94, 3
      %p670 = por %p668, %p669
      %p671 = scmp.ne.s32.totalorder %s660, %s661
      %p672 = scmp.eq.s32.totalorder %s94, 0
      %p673 = por %p671, %p672
      %p674 = scmp.ne.s32.totalorder %s660, %s661
      %p675 = scmp.eq.s32.totalorder %s95, 3
      %p676 = por %p674, %p675
      %p678 = scmp.ne.s32.totalorder %s661, %s677
      %p679 = scmp.eq.s32.totalorder %s95, 0
      %p680 = por %p678, %p679
      %s681 = ssub.s32 %s97, %s104
      %p682 = scmp.eq.s32.totalorder %s681, 0
      %s684 = sadd.s32 %s683, 1
      %s685 = scalar_select %p682, %s683, %s684
      %p688 = pneg %p682
      %p689 = scmp.eq.s32.totalorder %s89, 3
      %p690 = por %p688, %p689
      %p691 = scmp.ne.s32.totalorder %s683, %s686
      %p692 = scmp.eq.s32.totalorder %s89, 0
      %p693 = por %p691, %p692
      %p694 = scmp.ne.s32.totalorder %s683, %s686
      %p695 = scmp.eq.s32.totalorder %s94, 3
      %p696 = por %p694, %p695
      %p697 = scmp.ne.s32.totalorder %s686, %s687
      %p698 = scmp.eq.s32.totalorder %s94, 0
      %p699 = por %p697, %p698
      %p700 = scmp.ne.s32.totalorder %s686, %s687
      %p701 = scmp.eq.s32.totalorder %s95, 3
      %p702 = por %p700, %p701
      %p704 = scmp.ne.s32.totalorder %s687, %s703
      %p705 = scmp.eq.s32.totalorder %s95, 0
      %p706 = por %p704, %p705
      %s707 = ssub.s32 %s97, %s104
      %p708 = scmp.eq.s32.totalorder %s707, 0
      %s710 = sadd.s32 %s709, 1
      %s711 = scalar_select %p708, %s709, %s710
      %p714 = pneg %p708
      %p715 = scmp.eq.s32.totalorder %s89, 3
      %p716 = por %p714, %p715
      %p717 = scmp.ne.s32.totalorder %s709, %s712
      %p718 = scmp.eq.s32.totalorder %s89, 0
      %p719 = por %p717, %p718
      %p720 = scmp.ne.s32.totalorder %s709, %s712
      %p721 = scmp.eq.s32.totalorder %s94, 3
      %p722 = por %p720, %p721
      %p723 = scmp.ne.s32.totalorder %s712, %s713
      %p724 = scmp.eq.s32.totalorder %s94, 0
      %p725 = por %p723, %p724
      %p726 = scmp.ne.s32.totalorder %s712, %s713
      %p727 = scmp.eq.s32.totalorder %s95, 3
      %p728 = por %p726, %p727
      %p730 = scmp.ne.s32.totalorder %s713, %s729
      %p731 = scmp.eq.s32.totalorder %s95, 0
      %p732 = por %p730, %p731
      %s734 = sadd.s32 %s733, 1
      %p737 = scmp.eq.s32.totalorder %s89, 3
      %p738 = scmp.ne.s32.totalorder %s733, %s735
      %p739 = scmp.eq.s32.totalorder %s89, 0
      %p740 = por %p738, %p739
      %p741 = scmp.ne.s32.totalorder %s733, %s735
      %p742 = scmp.eq.s32.totalorder %s94, 3
      %p743 = por %p741, %p742
      %p744 = scmp.ne.s32.totalorder %s735, %s736
      %p745 = scmp.eq.s32.totalorder %s94, 0
      %p746 = por %p744, %p745
      %p747 = scmp.ne.s32.totalorder %s735, %s736
      %p748 = scmp.eq.s32.totalorder %s95, 3
      %p749 = por %p747, %p748
      %p751 = scmp.ne.s32.totalorder %s736, %s750
      %p752 = scmp.eq.s32.totalorder %s95, 0
      %p753 = por %p751, %p752
      %s755 = sadd.s32 %s754, 1
      %p758 = scmp.eq.s32.totalorder %s89, 3
      %p759 = scmp.ne.s32.totalorder %s754, %s756
      %p760 = scmp.eq.s32.totalorder %s89, 0
      %p761 = por %p759, %p760
      %p762 = scmp.ne.s32.totalorder %s754, %s756
      %p763 = scmp.eq.s32.totalorder %s94, 3
      %p764 = por %p762, %p763
      %p765 = scmp.ne.s32.totalorder %s756, %s757
      %p766 = scmp.eq.s32.totalorder %s94, 0
      %p767 = por %p765, %p766
      %p768 = scmp.ne.s32.totalorder %s756, %s757
      %p769 = scmp.eq.s32.totalorder %s95, 3
      %p770 = por %p768, %p769
      %p772 = scmp.ne.s32.totalorder %s757, %s771
      %p773 = scmp.eq.s32.totalorder %s95, 0
      %p774 = por %p772, %p773
      %s776 = sadd.s32 %s775, 1
      %p779 = scmp.eq.s32.totalorder %s89, 3
      %p780 = scmp.ne.s32.totalorder %s775, %s777
      %p781 = scmp.eq.s32.totalorder %s89, 0
      %p782 = por %p780, %p781
      %p783 = scmp.ne.s32.totalorder %s775, %s777
      %p784 = scmp.eq.s32.totalorder %s94, 3
      %p785 = por %p783, %p784
      %p786 = scmp.ne.s32.totalorder %s777, %s778
      %p787 = scmp.eq.s32.totalorder %s94, 0
      %p788 = por %p786, %p787
      %p789 = scmp.ne.s32.totalorder %s777, %s778
      %p790 = scmp.eq.s32.totalorder %s95, 3
      %p791 = por %p789, %p790
      %p793 = scmp.ne.s32.totalorder %s778, %s792
      %p794 = scmp.eq.s32.totalorder %s95, 0
      %p795 = por %p793, %p794
      %s797 = sadd.s32 %s796, 1
      %p800 = scmp.eq.s32.totalorder %s89, 3
      %p801 = scmp.ne.s32.totalorder %s796, %s798
      %p802 = scmp.eq.s32.totalorder %s89, 0
      %p803 = por %p801, %p802
      %p804 = scmp.ne.s32.totalorder %s796, %s798
      %p805 = scmp.eq.s32.totalorder %s94, 3
      %p806 = por %p804, %p805
      %p807 = scmp.ne.s32.totalorder %s798, %s799
      %p808 = scmp.eq.s32.totalorder %s94, 0
      %p809 = por %p807, %p808
      %p810 = scmp.ne.s32.totalorder %s798, %s799
      %p811 = scmp.eq.s32.totalorder %s95, 3
      %p812 = por %p810, %p811
      %p814 = scmp.ne.s32.totalorder %s799, %s813
      %p815 = scmp.eq.s32.totalorder %s95, 0
      %p816 = por %p814, %p815
      %s817 = ssub.s32 %s96, %s108
      %p818 = scmp.eq.s32.totalorder %s817, 0
      %s820 = sadd.s32 %s819, 1
      %s821 = scalar_select %p818, %s819, %s820
      %p824 = pneg %p818
      %p825 = scmp.eq.s32.totalorder %s89, 3
      %p826 = por %p824, %p825
      %p827 = scmp.ne.s32.totalorder %s819, %s822
      %p828 = scmp.eq.s32.totalorder %s89, 0
      %p829 = por %p827, %p828
      %p830 = scmp.ne.s32.totalorder %s819, %s822
      %p831 = scmp.eq.s32.totalorder %s94, 3
      %p832 = por %p830, %p831
      %p833 = scmp.ne.s32.totalorder %s822, %s823
      %p834 = scmp.eq.s32.totalorder %s94, 0
      %p835 = por %p833, %p834
      %p836 = scmp.ne.s32.totalorder %s822, %s823
      %p837 = scmp.eq.s32.totalorder %s95, 3
      %p838 = por %p836, %p837
      %p840 = scmp.ne.s32.totalorder %s823, %s839
      %p841 = scmp.eq.s32.totalorder %s95, 0
      %p842 = por %p840, %p841
      %p843 = scmp.le.s32.totalorder 1, %s89
      %p844 = scmp.lt.s32.totalorder %s89, 5
      %p845 = pnand %p843, %p844
      %p846 = pneg %p845
      // Predicated region
      $region9: #{transformer_forward.3} parent=5 // pred_check
        _
      $region10: #{transformer_forward.3} parent=5 // pred_check_branch
        %848 = sbr.rel (%p845) target = $region12
      $region11: #{transformer_forward.3} parent=5 // pred_region
        %s849 = ssub.s32 %s89, 1
        // Predicated region
        $region13: #{transformer_forward.3} parent=11 // pred_check
          %p850 = pneg %p746
        $region14: #{transformer_forward.3} parent=11 // pred_check_branch
          %852 = sbr.rel (%p850) target = $region16
        $region15: #{transformer_forward.3} parent=11 // pred_region
          _
        $region16: #{transformer_forward.3} parent=11 // pred_fallthru
          _
        // Predicated region
        $region17: #{transformer_forward.3} parent=11 // pred_check
          %p853 = pneg %p767
        $region18: #{transformer_forward.3} parent=11 // pred_check_branch
          %855 = sbr.rel (%p853) target = $region20
        $region19: #{transformer_forward.3} parent=11 // pred_region
          _
        $region20: #{transformer_forward.3} parent=11 // pred_fallthru
          _
        // Predicated region
        $region21: #{transformer_forward.3} parent=11 // pred_check
          %p856 = pneg %p788
        $region22: #{transformer_forward.3} parent=11 // pred_check_branch
          %858 = sbr.rel (%p856) target = $region24
        $region23: #{transformer_forward.3} parent=11 // pred_region
          _
        $region24: #{transformer_forward.3} parent=11 // pred_fallthru
          _
        // Predicated region
        $region25: #{transformer_forward.3} parent=11 // pred_check
          %p859 = pneg %p809
        $region26: #{transformer_forward.3} parent=11 // pred_check_branch
          %861 = sbr.rel (%p859) target = $region28
        $region27: #{transformer_forward.3} parent=11 // pred_region
          _
        $region28: #{transformer_forward.3} parent=11 // pred_fallthru
          _
      $region12: #{transformer_forward.3} parent=5 // pred_fallthru
        _
      %p862 = scmp.lt.s32.totalorder %s89, 4
      // Predicated region
      $region29: #{transformer_forward.3} parent=5 // pred_check
        %p863 = pneg %p862
      $region30: #{transformer_forward.3} parent=5 // pred_check_branch
        %865 = sbr.rel (%p863) target = $region32
      $region31: #{transformer_forward.3} parent=5 // pred_region
        // Predicated region
        $region33: #{transformer_forward.3} parent=31 // pred_check
          %p866 = pneg %p121
        $region34: #{transformer_forward.3} parent=31 // pred_check_branch
          %868 = sbr.rel (%p866) target = $region36
        $region35: #{transformer_forward.3} parent=31 // pred_region
          %p869 = scmp.lt.s32.totalorder %s96, 1
          %s870 = scalar_select %p869, %s96, 1
          %s871 = smul.addr %s870, 8
          %s872 = scalar_lea.vmem %s5, %s871
        $region36: #{transformer_forward.3} parent=31 // pred_fallthru
          _
        // Predicated region
        $region37: #{transformer_forward.3} parent=31 // pred_check
          %p873 = pneg %p147
        $region38: #{transformer_forward.3} parent=31 // pred_check_branch
          %875 = sbr.rel (%p873) target = $region40
        $region39: #{transformer_forward.3} parent=31 // pred_region
          %p876 = scmp.lt.s32.totalorder %s96, 1
          %s877 = scalar_select %p876, %s96, 1
          %s878 = smul.addr %s877, 8
          %s879 = scalar_lea.vmem %s7, %s878
        $region40: #{transformer_forward.3} parent=31 // pred_fallthru
          _
        // Predicated region
        $region41: #{transformer_forward.3} parent=31 // pred_check
          %p880 = pneg %p173
        $region42: #{transformer_forward.3} parent=31 // pred_check_branch
          %882 = sbr.rel (%p880) target = $region44
        $region43: #{transformer_forward.3} parent=31 // pred_region
          %p883 = scmp.lt.s32.totalorder %s97, 1
          %s884 = scalar_select %p883, %s97, 1
          %s885 = scalar_lea.vmem %s9, %s884
        $region44: #{transformer_forward.3} parent=31 // pred_fallthru
          _
        // Predicated region
        $region45: #{transformer_forward.3} parent=31 // pred_check
          %p886 = pneg %p199
        $region46: #{transformer_forward.3} parent=31 // pred_check_branch
          %888 = sbr.rel (%p886) target = $region48
        $region47: #{transformer_forward.3} parent=31 // pred_region
          %p889 = scmp.lt.s32.totalorder %s97, 1
          %s890 = scalar_select %p889, %s97, 1
          %s891 = scalar_lea.vmem %s11, %s890
        $region48: #{transformer_forward.3} parent=31 // pred_fallthru
          _
        // Predicated region
        $region49: #{transformer_forward.3} parent=31 // pred_check
          %p892 = pneg %p225
        $region50: #{transformer_forward.3} parent=31 // pred_check_branch
          %894 = sbr.rel (%p892) target = $region52
        $region51: #{transformer_forward.3} parent=31 // pred_region
          %s895 = sand.u32 %s215, 1
          %s896 = scalar_lea.sflag [#allocation7], %s895
          %s897 = sand.u32 %s215, 1
          %s898 = smul.addr %s897, 64
          %s899 = scalar_lea.vmem [#allocation6], %s898
          %s901 = ssub.s32 1024, 1024
          %902 = vsyncadd %s896, %s901
          %s903 = smul.addr %s97, 16
          %s904 = smul.addr %s903, 64
          %s905 = scalar_lea.hbm %s13, %s904
          %s906 = sshll.u32 %s899, 4
          %s907 = int_to_ptr.vmem [resolvable:$true] %s906
          %912 = dma.hbm_to_vmem [thread:$0]  %s905, 1024, %s907, %s896, 64, 64, 4
        $region52: #{transformer_forward.3} parent=31 // pred_fallthru
          _
        // Predicated region
        $region53: #{transformer_forward.3} parent=31 // pred_check
          %p913 = pneg %p251
        $region54: #{transformer_forward.3} parent=31 // pred_check_branch
          %915 = sbr.rel (%p913) target = $region56
        $region55: #{transformer_forward.3} parent=31 // pred_region
          %p916 = scmp.lt.s32.totalorder %s97, 1
          %s917 = scalar_select %p916, %s97, 1
          %s918 = scalar_lea.vmem %s15, %s917
        $region56: #{transformer_forward.3} parent=31 // pred_fallthru
          _
        // Predicated region
        $region57: #{transformer_forward.3} parent=31 // pred_check
          %p919 = pneg %p277
        $region58: #{transformer_forward.3} parent=31 // pred_check_branch
          %921 = sbr.rel (%p919) target = $region60
        $region59: #{transformer_forward.3} parent=31 // pred_region
          %p922 = scmp.lt.s32.totalorder %s97, 1
          %s923 = scalar_select %p922, %s97, 1
          %s924 = smul.addr %s923, 32
          %s925 = smul.addr %s924, 4
          %s926 = scalar_lea.vmem %s17, %s925
        $region60: #{transformer_forward.3} parent=31 // pred_fallthru
          _
        // Predicated region
        $region61: #{transformer_forward.3} parent=31 // pred_check
          %p927 = pneg %p303
        $region62: #{transformer_forward.3} parent=31 // pred_check_branch
          %929 = sbr.rel (%p927) target = $region64
        $region63: #{transformer_forward.3} parent=31 // pred_region
          %p930 = scmp.lt.s32.totalorder %s97, 1
          %s931 = scalar_select %p930, %s97, 1
          %s932 = smul.addr %s931, 2
          %s933 = scalar_lea.vmem %s19, %s932
        $region64: #{transformer_forward.3} parent=31 // pred_fallthru
          _
        // Predicated region
        $region65: #{transformer_forward.3} parent=31 // pred_check
          %p934 = pneg %p329
        $region66: #{transformer_forward.3} parent=31 // pred_check_branch
          %936 = sbr.rel (%p934) target = $region68
        $region67: #{transformer_forward.3} parent=31 // pred_region
          %s937 = sand.u32 %s89, 1
          %s938 = scalar_lea.sflag [#allocation10], %s937
          %s939 = sand.u32 %s319, 1
          %s940 = smul.addr %s939, 64
          %s941 = scalar_lea.vmem [#allocation9], %s940
          %s943 = ssub.s32 1024, 1024
          %944 = vsyncadd %s938, %s943
          %s945 = smul.addr %s97, 16
          %s946 = smul.addr %s945, 64
          %s947 = scalar_lea.hbm %s21, %s946
          %s948 = sshll.u32 %s941, 4
          %s949 = int_to_ptr.vmem [resolvable:$true] %s948
          %954 = dma.hbm_to_vmem [thread:$0]  %s947, 1024, %s949, %s938, 64, 64, 4
        $region68: #{transformer_forward.3} parent=31 // pred_fallthru
          _
        // Predicated region
        $region69: #{transformer_forward.3} parent=31 // pred_check
          %p955 = pneg %p355
        $region70: #{transformer_forward.3} parent=31 // pred_check_branch
          %957 = sbr.rel (%p955) target = $region72
        $region71: #{transformer_forward.3} parent=31 // pred_region
          %p958 = scmp.lt.s32.totalorder %s97, 1
          %s959 = scalar_select %p958, %s97, 1
          %s960 = scalar_lea.vmem %s23, %s959
        $region72: #{transformer_forward.3} parent=31 // pred_fallthru
          _
        // Predicated region
        $region73: #{transformer_forward.3} parent=31 // pred_check
          %p961 = pneg %p381
        $region74: #{transformer_forward.3} parent=31 // pred_check_branch
          %963 = sbr.rel (%p961) target = $region76
        $region75: #{transformer_forward.3} parent=31 // pred_region
          %p964 = scmp.lt.s32.totalorder %s97, 1
          %s965 = scalar_select %p964, %s97, 1
          %s966 = scalar_lea.vmem %s25, %s965
        $region76: #{transformer_forward.3} parent=31 // pred_fallthru
          _
        // Predicated region
        $region77: #{transformer_forward.3} parent=31 // pred_check
          %p967 = pneg %p407
        $region78: #{transformer_forward.3} parent=31 // pred_check_branch
          %969 = sbr.rel (%p967) target = $region80
        $region79: #{transformer_forward.3} parent=31 // pred_region
          %p970 = scmp.lt.s32.totalorder %s97, 1
          %s971 = scalar_select %p970, %s97, 1
          %s972 = scalar_lea.vmem %s27, %s971
        $region80: #{transformer_forward.3} parent=31 // pred_fallthru
          _
        // Predicated region
        $region81: #{transformer_forward.3} parent=31 // pred_check
          %p973 = pneg %p433
        $region82: #{transformer_forward.3} parent=31 // pred_check_branch
          %975 = sbr.rel (%p973) target = $region84
        $region83: #{transformer_forward.3} parent=31 // pred_region
          %s976 = sand.u32 %s89, 1
          %s977 = scalar_lea.sflag [#allocation10], %s976
          %s978 = sand.u32 %s423, 1
          %s979 = smul.addr %s978, 64
          %s980 = scalar_lea.vmem [#allocation11], %s979
          %s982 = ssub.s32 1024, 1024
          %983 = vsyncadd %s977, %s982
          %s984 = smul.addr %s97, 16
          %s985 = smul.addr %s984, 64
          %s986 = scalar_lea.hbm %s29, %s985
          %s987 = sshll.u32 %s980, 4
          %s988 = int_to_ptr.vmem [resolvable:$true] %s987
          %993 = dma.hbm_to_vmem [thread:$0]  %s986, 1024, %s988, %s977, 64, 64, 4
        $region84: #{transformer_forward.3} parent=31 // pred_fallthru
          _
        // Predicated region
        $region85: #{transformer_forward.3} parent=31 // pred_check
          %p994 = pneg %p459
        $region86: #{transformer_forward.3} parent=31 // pred_check_branch
          %996 = sbr.rel (%p994) target = $region88
        $region87: #{transformer_forward.3} parent=31 // pred_region
          %p997 = scmp.lt.s32.totalorder %s97, 1
          %s998 = scalar_select %p997, %s97, 1
          %s999 = scalar_lea.vmem %s31, %s998
        $region88: #{transformer_forward.3} parent=31 // pred_fallthru
          _
        // Predicated region
        $region89: #{transformer_forward.3} parent=31 // pred_check
          %p1000 = pneg %p485
        $region90: #{transformer_forward.3} parent=31 // pred_check_branch
          %1002 = sbr.rel (%p1000) target = $region92
        $region91: #{transformer_forward.3} parent=31 // pred_region
          %p1003 = scmp.lt.s32.totalorder %s97, 1
          %s1004 = scalar_select %p1003, %s97, 1
          %s1005 = smul.addr %s1004, 32
          %s1006 = smul.addr %s1005, 4
          %s1007 = scalar_lea.vmem %s33, %s1006
        $region92: #{transformer_forward.3} parent=31 // pred_fallthru
          _
        // Predicated region
        $region93: #{transformer_forward.3} parent=31 // pred_check
          %p1008 = pneg %p511
        $region94: #{transformer_forward.3} parent=31 // pred_check_branch
          %1010 = sbr.rel (%p1008) target = $region96
        $region95: #{transformer_forward.3} parent=31 // pred_region
          %p1011 = scmp.lt.s32.totalorder %s97, 1
          %s1012 = scalar_select %p1011, %s97, 1
          %s1013 = smul.addr %s1012, 2
          %s1014 = scalar_lea.vmem %s35, %s1013
        $region96: #{transformer_forward.3} parent=31 // pred_fallthru
          _
        // Predicated region
        $region97: #{transformer_forward.3} parent=31 // pred_check
          %p1015 = pneg %p537
        $region98: #{transformer_forward.3} parent=31 // pred_check_branch
          %1017 = sbr.rel (%p1015) target = $region100
        $region99: #{transformer_forward.3} parent=31 // pred_region
          %s1018 = sand.u32 %s527, 1
          %s1019 = scalar_lea.sflag [#allocation13], %s1018
          %s1020 = sand.u32 %s527, 1
          %s1021 = smul.addr %s1020, 64
          %s1022 = scalar_lea.vmem [#allocation12], %s1021
          %s1024 = ssub.s32 1024, 1024
          %1025 = vsyncadd %s1019, %s1024
          %s1026 = smul.addr %s97, 16
          %s1027 = smul.addr %s1026, 64
          %s1028 = scalar_lea.hbm %s37, %s1027
          %s1029 = sshll.u32 %s1022, 4
          %s1030 = int_to_ptr.vmem [resolvable:$true] %s1029
          %1035 = dma.hbm_to_vmem [thread:$0]  %s1028, 1024, %s1030, %s1019, 64, 64, 4
        $region100: #{transformer_forward.3} parent=31 // pred_fallthru
          _
        // Predicated region
        $region101: #{transformer_forward.3} parent=31 // pred_check
          %p1036 = pneg %p563
        $region102: #{transformer_forward.3} parent=31 // pred_check_branch
          %1038 = sbr.rel (%p1036) target = $region104
        $region103: #{transformer_forward.3} parent=31 // pred_region
          %p1039 = scmp.lt.s32.totalorder %s97, 1
          %s1040 = scalar_select %p1039, %s97, 1
          %s1041 = scalar_lea.vmem %s39, %s1040
        $region104: #{transformer_forward.3} parent=31 // pred_fallthru
          _
        // Predicated region
        $region105: #{transformer_forward.3} parent=31 // pred_check
          %p1042 = pneg %p589
        $region106: #{transformer_forward.3} parent=31 // pred_check_branch
          %1044 = sbr.rel (%p1042) target = $region108
        $region107: #{transformer_forward.3} parent=31 // pred_region
          %p1045 = scmp.lt.s32.totalorder %s97, 1
          %s1046 = scalar_select %p1045, %s97, 1
          %s1047 = scalar_lea.vmem %s41, %s1046
        $region108: #{transformer_forward.3} parent=31 // pred_fallthru
          _
        // Predicated region
        $region109: #{transformer_forward.3} parent=31 // pred_check
          %p1048 = pneg %p615
        $region110: #{transformer_forward.3} parent=31 // pred_check_branch
          %1050 = sbr.rel (%p1048) target = $region112
        $region111: #{transformer_forward.3} parent=31 // pred_region
          %p1051 = scmp.lt.s32.totalorder %s97, 1
          %s1052 = scalar_select %p1051, %s97, 1
          %s1053 = scalar_lea.vmem %s43, %s1052
        $region112: #{transformer_forward.3} parent=31 // pred_fallthru
          _
        // Predicated region
        $region113: #{transformer_forward.3} parent=31 // pred_check
          %p1054 = pneg %p641
        $region114: #{transformer_forward.3} parent=31 // pred_check_branch
          %1056 = sbr.rel (%p1054) target = $region116
        $region115: #{transformer_forward.3} parent=31 // pred_region
          %p1057 = scmp.lt.s32.totalorder %s97, 1
          %s1058 = scalar_select %p1057, %s97, 1
          %s1059 = smul.addr %s1058, 32
          %s1060 = smul.addr %s1059, 4
          %s1061 = scalar_lea.vmem %s45, %s1060
        $region116: #{transformer_forward.3} parent=31 // pred_fallthru
          _
        // Predicated region
        $region117: #{transformer_forward.3} parent=31 // pred_check
          %p1062 = pneg %p667
        $region118: #{transformer_forward.3} parent=31 // pred_check_branch
          %1064 = sbr.rel (%p1062) target = $region120
        $region119: #{transformer_forward.3} parent=31 // pred_region
          %p1065 = scmp.lt.s32.totalorder %s97, 1
          %s1066 = scalar_select %p1065, %s97, 1
          %s1067 = smul.addr %s1066, 2
          %s1068 = scalar_lea.vmem %s47, %s1067
        $region120: #{transformer_forward.3} parent=31 // pred_fallthru
          _
        // Predicated region
        $region121: #{transformer_forward.3} parent=31 // pred_check
          %p1069 = pneg %p693
        $region122: #{transformer_forward.3} parent=31 // pred_check_branch
          %1071 = sbr.rel (%p1069) target = $region124
        $region123: #{transformer_forward.3} parent=31 // pred_region
          %p1072 = scmp.lt.s32.totalorder %s97, 1
          %s1073 = scalar_select %p1072, %s97, 1
          %s1074 = smul.addr %s1073, 32
          %s1075 = smul.addr %s1074, 4
          %s1076 = scalar_lea.vmem %s49, %s1075
        $region124: #{transformer_forward.3} parent=31 // pred_fallthru
          _
        // Predicated region
        $region125: #{transformer_forward.3} parent=31 // pred_check
          %p1077 = pneg %p719
        $region126: #{transformer_forward.3} parent=31 // pred_check_branch
          %1079 = sbr.rel (%p1077) target = $region128
        $region127: #{transformer_forward.3} parent=31 // pred_region
          %p1080 = scmp.lt.s32.totalorder %s97, 1
          %s1081 = scalar_select %p1080, %s97, 1
          %s1082 = scalar_lea.vmem %s51, %s1081
        $region128: #{transformer_forward.3} parent=31 // pred_fallthru
          _
      $region32: #{transformer_forward.3} parent=5 // pred_fallthru
        _
      %p1083 = scmp.le.s32.totalorder 1, %s89
      %p1084 = scmp.lt.s32.totalorder %s89, 5
      %p1085 = pnand %p1083, %p1084
      %p1086 = pneg %p1085
      // Predicated region
      $region129: #{transformer_forward.3} parent=5 // pred_check
        _
      $region130: #{transformer_forward.3} parent=5 // pred_check_branch
        %1088 = sbr.rel (%p1085) target = $region132
      $region131: #{transformer_forward.3} parent=5 // pred_region
        %s1089 = ssub.s32 %s89, 1
        %s1090 = sand.u32 %s218, 1
        %s1091 = scalar_lea.sflag [#allocation7], %s1090
        %s1092 = sand.u32 %s218, 1
        %s1093 = smul.addr %s1092, 64
        %s1094 = scalar_lea.vmem [#allocation6], %s1093
        // Predicated region
        $region133: #{transformer_forward.3} parent=131 // pred_check
          %p1095 = pneg %p231
        $region134: #{transformer_forward.3} parent=131 // pred_check_branch
          %1097 = sbr.rel (%p1095) target = $region136
        $region135: #{transformer_forward.3} parent=131 // pred_region
          %1098 = dma.done %s1091, 1024
        $region136: #{transformer_forward.3} parent=131 // pred_fallthru
          _
        %s1099 = sand.u32 %s94, 1
        %s1100 = scalar_lea.sflag [#allocation10], %s1099
        %s1101 = sand.u32 %s322, 1
        %s1102 = smul.addr %s1101, 64
        %s1103 = scalar_lea.vmem [#allocation9], %s1102
        // Predicated region
        $region137: #{transformer_forward.3} parent=131 // pred_check
          %p1104 = pneg %p335
        $region138: #{transformer_forward.3} parent=131 // pred_check_branch
          %1106 = sbr.rel (%p1104) target = $region140
        $region139: #{transformer_forward.3} parent=131 // pred_region
          %1107 = dma.done %s1100, 1024
        $region140: #{transformer_forward.3} parent=131 // pred_fallthru
          _
        %s1108 = sand.u32 %s94, 1
        %s1109 = scalar_lea.sflag [#allocation10], %s1108
        %s1110 = sand.u32 %s426, 1
        %s1111 = smul.addr %s1110, 64
        %s1112 = scalar_lea.vmem [#allocation11], %s1111
        // Predicated region
        $region141: #{transformer_forward.3} parent=131 // pred_check
          %p1113 = pneg %p439
        $region142: #{transformer_forward.3} parent=131 // pred_check_branch
          %1115 = sbr.rel (%p1113) target = $region144
        $region143: #{transformer_forward.3} parent=131 // pred_region
          %1116 = dma.done %s1109, 1024
        $region144: #{transformer_forward.3} parent=131 // pred_fallthru
          _
        %s1117 = sand.u32 %s530, 1
        %s1118 = scalar_lea.sflag [#allocation13], %s1117
        %s1119 = sand.u32 %s530, 1
        %s1120 = smul.addr %s1119, 64
        %s1121 = scalar_lea.vmem [#allocation12], %s1120
        // Predicated region
        $region145: #{transformer_forward.3} parent=131 // pred_check
          %p1122 = pneg %p543
        $region146: #{transformer_forward.3} parent=131 // pred_check_branch
          %1124 = sbr.rel (%p1122) target = $region148
        $region147: #{transformer_forward.3} parent=131 // pred_region
          %1125 = dma.done %s1118, 1024
        $region148: #{transformer_forward.3} parent=131 // pred_fallthru
          _
        %p1126 = scmp.lt.s32.totalorder %s98, 1
        %s1127 = scalar_select %p1126, %s98, 1
        %s1128 = smul.addr %s1127, 8
        %s1129 = scalar_lea.vmem %s5, %s1128
        %p1130 = pneg %p127
        %p1131 = pneg %p124
        %p1132 = scmp.lt.s32.totalorder %s98, 1
        %s1133 = scalar_select %p1132, %s98, 1
        %s1134 = smul.addr %s1133, 8
        %s1135 = scalar_lea.vmem %s7, %s1134
        %p1136 = pneg %p153
        %p1137 = pneg %p150
        %p1138 = scmp.lt.s32.totalorder %s99, 1
        %s1139 = scalar_select %p1138, %s99, 1
        %s1140 = scalar_lea.vmem %s9, %s1139
        %p1141 = pneg %p179
        %p1142 = pneg %p176
        %p1143 = scmp.lt.s32.totalorder %s99, 1
        %s1144 = scalar_select %p1143, %s99, 1
        %s1145 = scalar_lea.vmem %s11, %s1144
        %p1146 = pneg %p205
        %p1147 = pneg %p202
        %s1148 = sand.u32 %s218, 1
        %s1149 = scalar_lea.sflag [#allocation7], %s1148
        %s1150 = sand.u32 %s218, 1
        %s1151 = smul.addr %s1150, 64
        %s1152 = scalar_lea.vmem [#allocation6], %s1151
        %p1153 = pneg %p231
        %p1154 = pneg %p228
        %p1155 = scmp.lt.s32.totalorder %s99, 1
        %s1156 = scalar_select %p1155, %s99, 1
        %s1157 = scalar_lea.vmem %s15, %s1156
        %p1158 = pneg %p257
        %p1159 = pneg %p254
        %p1160 = scmp.lt.s32.totalorder %s99, 1
        %s1161 = scalar_select %p1160, %s99, 1
        %s1162 = smul.addr %s1161, 32
        %s1163 = smul.addr %s1162, 4
        %s1164 = scalar_lea.vmem %s17, %s1163
        %p1165 = pneg %p283
        %p1166 = pneg %p280
        %p1167 = scmp.lt.s32.totalorder %s99, 1
        %s1168 = scalar_select %p1167, %s99, 1
        %s1169 = smul.addr %s1168, 2
        %s1170 = scalar_lea.vmem %s19, %s1169
        %p1171 = pneg %p309
        %p1172 = pneg %p306
        %s1173 = sand.u32 %s94, 1
        %s1174 = scalar_lea.sflag [#allocation10], %s1173
        %s1175 = sand.u32 %s322, 1
        %s1176 = smul.addr %s1175, 64
        %s1177 = scalar_lea.vmem [#allocation9], %s1176
        %p1178 = pneg %p335
        %p1179 = pneg %p332
        %p1180 = scmp.lt.s32.totalorder %s99, 1
        %s1181 = scalar_select %p1180, %s99, 1
        %s1182 = scalar_lea.vmem %s23, %s1181
        %p1183 = pneg %p361
        %p1184 = pneg %p358
        %p1185 = scmp.lt.s32.totalorder %s99, 1
        %s1186 = scalar_select %p1185, %s99, 1
        %s1187 = scalar_lea.vmem %s25, %s1186
        %p1188 = pneg %p387
        %p1189 = pneg %p384
        %p1190 = scmp.lt.s32.totalorder %s99, 1
        %s1191 = scalar_select %p1190, %s99, 1
        %s1192 = scalar_lea.vmem %s27, %s1191
        %p1193 = pneg %p413
        %p1194 = pneg %p410
        %s1195 = sand.u32 %s94, 1
        %s1196 = scalar_lea.sflag [#allocation10], %s1195
        %s1197 = sand.u32 %s426, 1
        %s1198 = smul.addr %s1197, 64
        %s1199 = scalar_lea.vmem [#allocation11], %s1198
        %p1200 = pneg %p439
        %p1201 = pneg %p436
        %p1202 = scmp.lt.s32.totalorder %s99, 1
        %s1203 = scalar_select %p1202, %s99, 1
        %s1204 = scalar_lea.vmem %s31, %s1203
        %p1205 = pneg %p465
        %p1206 = pneg %p462
        %p1207 = scmp.lt.s32.totalorder %s99, 1
        %s1208 = scalar_select %p1207, %s99, 1
        %s1209 = smul.addr %s1208, 32
        %s1210 = smul.addr %s1209, 4
        %s1211 = scalar_lea.vmem %s33, %s1210
        %p1212 = pneg %p491
        %p1213 = pneg %p488
        %p1214 = scmp.lt.s32.totalorder %s99, 1
        %s1215 = scalar_select %p1214, %s99, 1
        %s1216 = smul.addr %s1215, 2
        %s1217 = scalar_lea.vmem %s35, %s1216
        %p1218 = pneg %p517
        %p1219 = pneg %p514
        %s1220 = sand.u32 %s530, 1
        %s1221 = scalar_lea.sflag [#allocation13], %s1220
        %s1222 = sand.u32 %s530, 1
        %s1223 = smul.addr %s1222, 64
        %s1224 = scalar_lea.vmem [#allocation12], %s1223
        %p1225 = pneg %p543
        %p1226 = pneg %p540
        %p1227 = scmp.lt.s32.totalorder %s99, 1
        %s1228 = scalar_select %p1227, %s99, 1
        %s1229 = scalar_lea.vmem %s39, %s1228
        %p1230 = pneg %p569
        %p1231 = pneg %p566
        %p1232 = scmp.lt.s32.totalorder %s99, 1
        %s1233 = scalar_select %p1232, %s99, 1
        %s1234 = scalar_lea.vmem %s41, %s1233
        %p1235 = pneg %p595
        %p1236 = pneg %p592
        %p1237 = scmp.lt.s32.totalorder %s99, 1
        %s1238 = scalar_select %p1237, %s99, 1
        %s1239 = scalar_lea.vmem %s43, %s1238
        %p1240 = pneg %p621
        %p1241 = pneg %p618
        %p1242 = scmp.lt.s32.totalorder %s99, 1
        %s1243 = scalar_select %p1242, %s99, 1
        %s1244 = smul.addr %s1243, 32
        %s1245 = smul.addr %s1244, 4
        %s1246 = scalar_lea.vmem %s45, %s1245
        %p1247 = pneg %p647
        %p1248 = pneg %p644
        %p1249 = scmp.lt.s32.totalorder %s99, 1
        %s1250 = scalar_select %p1249, %s99, 1
        %s1251 = smul.addr %s1250, 2
        %s1252 = scalar_lea.vmem %s47, %s1251
        %p1253 = pneg %p673
        %p1254 = pneg %p670
        %p1255 = scmp.lt.s32.totalorder %s99, 1
        %s1256 = scalar_select %p1255, %s99, 1
        %s1257 = smul.addr %s1256, 32
        %s1258 = smul.addr %s1257, 4
        %s1259 = scalar_lea.vmem %s49, %s1258
        %p1260 = pneg %p699
        %p1261 = pneg %p696
        %p1262 = scmp.lt.s32.totalorder %s99, 1
        %s1263 = scalar_select %p1262, %s99, 1
        %s1264 = scalar_lea.vmem %s51, %s1263
        %p1265 = pneg %p725
        %p1266 = pneg %p722
        %p1267 = pneg %p746
        %p1268 = pneg %p743
        %p1269 = pneg %p767
        %p1270 = pneg %p764
        %p1271 = pneg %p788
        %p1272 = pneg %p785
        %p1273 = pneg %p809
        %p1274 = pneg %p806
        %p1275 = pneg %p835
        %p1276 = pneg %p832
        %s1277 = sand.u32 %s822, 1
        %s1278 = scalar_lea.sflag [#allocation8], %s1277
        %s1279 = sand.u32 %s822, 1
        %s1280 = smul.addr %s1279, 8
        %s1281 = scalar_lea.vmem [#allocation14], %s1280
        %p1282 = scmp.lt.s32.totalorder %s98, 1
        %s1283 = scalar_select %p1282, %s98, 1
        %s1284 = smul.addr %s1283, 8
        %s1285 = scalar_lea.vmem %s5, %s1284
        %p1286 = scmp.lt.s32.totalorder %s98, 1
        %s1287 = scalar_select %p1286, %s98, 1
        %s1288 = smul.addr %s1287, 8
        %s1289 = scalar_lea.vmem %s7, %s1288
        %p1290 = scmp.lt.s32.totalorder %s99, 1
        %s1291 = scalar_select %p1290, %s99, 1
        %s1292 = scalar_lea.vmem %s9, %s1291
        %p1293 = scmp.lt.s32.totalorder %s99, 1
        %s1294 = scalar_select %p1293, %s99, 1
        %s1295 = scalar_lea.vmem %s11, %s1294
        %p1296 = scmp.lt.s32.totalorder %s99, 1
        %s1297 = scalar_select %p1296, %s99, 1
        %s1298 = scalar_lea.vmem %s15, %s1297
        %p1299 = scmp.lt.s32.totalorder %s99, 1
        %s1300 = scalar_select %p1299, %s99, 1
        %s1301 = smul.addr %s1300, 32
        %s1302 = smul.addr %s1301, 4
        %s1303 = scalar_lea.vmem %s17, %s1302
        %p1304 = scmp.lt.s32.totalorder %s99, 1
        %s1305 = scalar_select %p1304, %s99, 1
        %s1306 = smul.addr %s1305, 2
        %s1307 = scalar_lea.vmem %s19, %s1306
        %p1308 = scmp.lt.s32.totalorder %s99, 1
        %s1309 = scalar_select %p1308, %s99, 1
        %s1310 = scalar_lea.vmem %s23, %s1309
        %p1311 = scmp.lt.s32.totalorder %s99, 1
        %s1312 = scalar_select %p1311, %s99, 1
        %s1313 = scalar_lea.vmem %s25, %s1312
        %p1314 = scmp.lt.s32.totalorder %s99, 1
        %s1315 = scalar_select %p1314, %s99, 1
        %s1316 = scalar_lea.vmem %s27, %s1315
        %p1317 = scmp.lt.s32.totalorder %s99, 1
        %s1318 = scalar_select %p1317, %s99, 1
        %s1319 = scalar_lea.vmem %s31, %s1318
        %p1320 = scmp.lt.s32.totalorder %s99, 1
        %s1321 = scalar_select %p1320, %s99, 1
        %s1322 = smul.addr %s1321, 32
        %s1323 = smul.addr %s1322, 4
        %s1324 = scalar_lea.vmem %s33, %s1323
        %p1325 = scmp.lt.s32.totalorder %s99, 1
        %s1326 = scalar_select %p1325, %s99, 1
        %s1327 = smul.addr %s1326, 2
        %s1328 = scalar_lea.vmem %s35, %s1327
        %p1329 = scmp.lt.s32.totalorder %s99, 1
        %s1330 = scalar_select %p1329, %s99, 1
        %s1331 = scalar_lea.vmem %s39, %s1330
        %p1332 = scmp.lt.s32.totalorder %s99, 1
        %s1333 = scalar_select %p1332, %s99, 1
        %s1334 = scalar_lea.vmem %s41, %s1333
        %p1335 = scmp.lt.s32.totalorder %s99, 1
        %s1336 = scalar_select %p1335, %s99, 1
        %s1337 = scalar_lea.vmem %s43, %s1336
        %p1338 = scmp.lt.s32.totalorder %s99, 1
        %s1339 = scalar_select %p1338, %s99, 1
        %s1340 = smul.addr %s1339, 32
        %s1341 = smul.addr %s1340, 4
        %s1342 = scalar_lea.vmem %s45, %s1341
        %p1343 = scmp.lt.s32.totalorder %s99, 1
        %s1344 = scalar_select %p1343, %s99, 1
        %s1345 = smul.addr %s1344, 2
        %s1346 = scalar_lea.vmem %s47, %s1345
        %p1347 = scmp.lt.s32.totalorder %s99, 1
        %s1348 = scalar_select %p1347, %s99, 1
        %s1349 = smul.addr %s1348, 32
        %s1350 = smul.addr %s1349, 4
        %s1351 = scalar_lea.vmem %s49, %s1350
        %p1352 = scmp.lt.s32.totalorder %s99, 1
        %s1353 = scalar_select %p1352, %s99, 1
        %s1354 = scalar_lea.vmem %s51, %s1353
        %p1356 = scmp.eq.s32.totalorder %s99, 0
        // Predicated region
        $region149: #{transformer_forward.3} parent=131 // pred_check
          %p1357 = pneg %p1356
        $region150: #{transformer_forward.3} parent=131 // pred_check_branch
          %1359 = sbr.rel (%p1357) target = $region152
        $region151: #{transformer_forward.3} parent=131 // pred_region
          %v1360 = vld [vmem:[%s1285] sm:$0xff]
          %1361 = vst [vmem:[#allocation2] sm:$0xff] %v1360
        $region152: #{transformer_forward.3} parent=131 // pred_fallthru
          _
        %v1362 = vld [vmem:[#allocation2] sm:$0xff]
        %v1363 = vld [vmem:[%s1289] sm:$0xff]
        %s1364 = sld [smem:[#allocation4 + %s98]]
        %s1365 = sld [smem:[#allocation5 + %s98]]
        %v1366 = vld [vmem:[%s1292] sm:$0x1]
        %v1367 = vld [vmem:[%s1295] sm:$0x1]
        %1368 = vadd.xlane.f32.xlu0 %v1362
        %v1369 = vpop.xlane.xlu0 %1368
        %v1370 = vrcp.pop 128.0
        %v1371 = vmul.f32 %v1369, %v1370
        %v1372 = vsub.f32 %v1362, %v1371
        %v1373 = vmul.f32 %v1372, %v1372
        %1374 = vadd.xlane.f32.xlu0 %v1373
        %v1375 = vpop.xlane.xlu0 %1374
        %v1376 = vmul.f32 %v1375, %v1370
        %v1377 = vadd.f32 %v1376, 1e-05
        %v1378 = vrsqrt.pop %v1377
        %v1379 = vmul.f32 %v1372, %v1378
        %v1381 = vlaneseq
        %v1382 = vshrl.u32 %v1381, 7
        %v1383 = vsub.s32 0, %v1382
        %v1384 = vrot.slane %v1366, %v1383
        %v1386 = vmul.f32 %v1379, %v1384
        %v1388 = vlaneseq
        %v1389 = vshrl.u32 %v1388, 7
        %v1390 = vsub.s32 0, %v1389
        %v1391 = vrot.slane %v1367, %v1390
        %v1393 = vadd.f32 %v1386, %v1391
        %v1394 = vld [vmem:[%s1094] sm:$0xf]
        %v1395 = vld [vmem:[%s1094 + $0x4] sm:$0xf]
        %v1396 = vld [vmem:[%s1094 + $0x8] sm:$0xf]
        %v1397 = vld [vmem:[%s1094 + $0xc] sm:$0xf]
        %v1398 = vld [vmem:[%s1094 + $0x10] sm:$0xf]
        %v1399 = vld [vmem:[%s1094 + $0x14] sm:$0xf]
        %v1400 = vld [vmem:[%s1094 + $0x18] sm:$0xf]
        %v1401 = vld [vmem:[%s1094 + $0x1c] sm:$0xf]
        %v1402 = vld [vmem:[%s1094 + $0x20] sm:$0xf]
        %v1403 = vld [vmem:[%s1094 + $0x24] sm:$0xf]
        %v1404 = vld [vmem:[%s1094 + $0x28] sm:$0xf]
        %v1405 = vld [vmem:[%s1094 + $0x2c] sm:$0xf]
        %v1406 = vld [vmem:[%s1094 + $0x30] sm:$0xf]
        %v1407 = vld [vmem:[%s1094 + $0x34] sm:$0xf]
        %v1408 = vld [vmem:[%s1094 + $0x38] sm:$0xf]
        %v1409 = vld [vmem:[%s1094 + $0x3c] sm:$0xf]
        %v1410 = vld [vmem:[%s1298] sm:$0x1]
        %v1411 = vld [vmem:[%s1303] sm:$0xff]
        %v1412 = vld [vmem:[%s1303 + $0x8] sm:$0xff]
        %v1413 = vld [vmem:[%s1303 + $0x10] sm:$0xff]
        %v1414 = vld [vmem:[%s1303 + $0x18] sm:$0xff]
        %v1415 = vld [vmem:[%s1303 + $0x20] sm:$0xff]
        %v1416 = vld [vmem:[%s1303 + $0x28] sm:$0xff]
        %v1417 = vld [vmem:[%s1303 + $0x30] sm:$0xff]
        %v1418 = vld [vmem:[%s1303 + $0x38] sm:$0xff]
        %v1419 = vld [vmem:[%s1303 + $0x40] sm:$0xff]
        %v1420 = vld [vmem:[%s1303 + $0x48] sm:$0xff]
        %v1421 = vld [vmem:[%s1303 + $0x50] sm:$0xff]
        %v1422 = vld [vmem:[%s1303 + $0x58] sm:$0xff]
        %v1423 = vld [vmem:[%s1303 + $0x60] sm:$0xff]
        %v1424 = vld [vmem:[%s1303 + $0x68] sm:$0xff]
        %v1425 = vld [vmem:[%s1303 + $0x70] sm:$0xff]
        %v1426 = vld [vmem:[%s1303 + $0x78] sm:$0xff]
        %v1427 = vld [vmem:[%s1307] sm:$0x3]
        %v1428 = vld [vmem:[%s1103] sm:$0xf]
        %v1429 = vld [vmem:[%s1103 + $0x4] sm:$0xf]
        %v1430 = vld [vmem:[%s1103 + $0x8] sm:$0xf]
        %v1431 = vld [vmem:[%s1103 + $0xc] sm:$0xf]
        %v1432 = vld [vmem:[%s1103 + $0x10] sm:$0xf]
        %v1433 = vld [vmem:[%s1103 + $0x14] sm:$0xf]
        %v1434 = vld [vmem:[%s1103 + $0x18] sm:$0xf]
        %v1435 = vld [vmem:[%s1103 + $0x1c] sm:$0xf]
        %v1436 = vld [vmem:[%s1103 + $0x20] sm:$0xf]
        %v1437 = vld [vmem:[%s1103 + $0x24] sm:$0xf]
        %v1438 = vld [vmem:[%s1103 + $0x28] sm:$0xf]
        %v1439 = vld [vmem:[%s1103 + $0x2c] sm:$0xf]
        %v1440 = vld [vmem:[%s1103 + $0x30] sm:$0xf]
        %v1441 = vld [vmem:[%s1103 + $0x34] sm:$0xf]
        %v1442 = vld [vmem:[%s1103 + $0x38] sm:$0xf]
        %v1443 = vld [vmem:[%s1103 + $0x3c] sm:$0xf]
        %v1444 = vld [vmem:[%s1310] sm:$0x1]
        %v1445 = vpack.c.bf16 %v1393, %v1393
        %v1447 = vlaneseq
        %v1448 = vshrl.u32 %v1447, 7
        %v1449 = vsub.s32 0, %v1448
        %v1450 = vrot.slane %v1410, %v1449
        %v1468 = vunpack.c.l.b16 %v1394
        %v1469 = vunpack.c.l.b16 %v1395
        %v1470 = vunpack.c.l.b16 %v1396
        %v1471 = vunpack.c.l.b16 %v1397
        %v1472 = vunpack.c.l.b16 %v1398
        %v1473 = vunpack.c.l.b16 %v1399
        %v1474 = vunpack.c.l.b16 %v1400
        %v1475 = vunpack.c.l.b16 %v1401
        %v1476 = vunpack.c.l.b16 %v1402
        %v1477 = vunpack.c.l.b16 %v1403
        %v1478 = vunpack.c.l.b16 %v1404
        %v1479 = vunpack.c.l.b16 %v1405
        %v1480 = vunpack.c.l.b16 %v1406
        %v1481 = vunpack.c.l.b16 %v1407
        %v1482 = vunpack.c.l.b16 %v1408
        %v1483 = vunpack.c.l.b16 %v1409
        %v1484 = vpack.c.b16 %v1469, %v1468
        %v1485 = vpack.c.b16 %v1471, %v1470
        %v1486 = vpack.c.b16 %v1473, %v1472
        %v1487 = vpack.c.b16 %v1475, %v1474
        %v1488 = vpack.c.b16 %v1477, %v1476
        %v1489 = vpack.c.b16 %v1479, %v1478
        %v1490 = vpack.c.b16 %v1481, %v1480
        %v1491 = vpack.c.b16 %v1483, %v1482
        %1500 = vmatprep.subr.bf16.mxu0 0
        %1501 = vmatpush1.bf16.msra.mxu0 %v1484
        %1502 = vmatprep.subr.bf16.mxu0 0
        %1503 = vmatpush1.bf16.msra.mxu0 %v1485
        %1504 = vmatprep.subr.bf16.mxu0 0
        %1505 = vmatpush1.bf16.msra.mxu0 %v1486
        %1506 = vmatprep.subr.bf16.mxu0 0
        %1507 = vmatpush1.bf16.msra.mxu0 %v1487
        %1508 = vmatprep.subr.bf16.mxu0 0
        %1509 = vmatpush1.bf16.msra.mxu0 %v1488
        %1510 = vmatprep.subr.bf16.mxu0 0
        %1511 = vmatpush1.bf16.msra.mxu0 %v1489
        %1512 = vmatprep.subr.bf16.mxu0 0
        %1513 = vmatpush1.bf16.msra.mxu0 %v1490
        %1514 = vmatprep.subr.bf16.mxu0 0
        %1515 = vmatpush1.bf16.msra.mxu0 %v1491
        %1516 = vmatprep.subr.bf16.mxu0 0
        %1517 = vmatpush1.bf16.msra.mxu0 0
        %1518 = vmatprep.subr.bf16.mxu0 0
        %1519 = vmatpush1.bf16.msra.mxu0 0
        %1520 = vmatprep.subr.bf16.mxu0 0
        %1521 = vmatpush1.bf16.msra.mxu0 0
        %1522 = vmatprep.subr.bf16.mxu0 0
        %1523 = vmatpush1.bf16.msra.mxu0 0
        %1524 = vmatprep.subr.bf16.mxu0 0
        %1525 = vmatpush1.bf16.msra.mxu0 0
        %1526 = vmatprep.subr.bf16.mxu0 0
        %1527 = vmatpush1.bf16.msra.mxu0 0
        %1528 = vmatprep.subr.bf16.mxu0 0
        %1529 = vmatpush1.bf16.msra.mxu0 0
        %1530 = vmatprep.subr.bf16.mxu0 0
        %1531 = vmatpush1.bf16.msra.mxu0 0
        %1532 = vmatprep.mubr.bf16.mxu0 0
        %1533 = vmatmul.mubr.bf16.gmra.mrb[0].mxu0 %v1445
        %v1534 = vpop.f32.mrb[0].mxu0
        %v1535 = vadd.f32 %v1450, %v1534
        %v1536 = vpop.f32.mrb[0].mxu0
        %v1537 = vpop.f32.mrb[0].mxu0
        %v1538 = vpop.f32.mrb[0].mxu0
        %1539 = vdwg.mxu0
        %v1541 = vlaneseq
        %v1542 = vshrl.u32 %v1541, 7
        %v1543 = vsub.s32 0, %v1542
        %v1544 = vrot.slane %v1427, %v1543
        %v1545 = vlaneseq
        %v1546 = vshrl.u32 %v1545, 7
        %v1547 = vsub.s32 1, %v1546
        %v1548 = vrot.slane %v1427, %v1547
        %v1567 = vunpack.c.l.b16 %v1411
        %v1568 = vunpack.c.h.b16 %v1411
        %v1569 = vunpack.c.l.b16 %v1412
        %v1570 = vunpack.c.h.b16 %v1412
        %v1571 = vunpack.c.l.b16 %v1413
        %v1572 = vunpack.c.h.b16 %v1413
        %v1573 = vunpack.c.l.b16 %v1414
        %v1574 = vunpack.c.h.b16 %v1414
        %v1575 = vunpack.c.l.b16 %v1415
        %v1576 = vunpack.c.h.b16 %v1415
        %v1577 = vunpack.c.l.b16 %v1416
        %v1578 = vunpack.c.h.b16 %v1416
        %v1579 = vunpack.c.l.b16 %v1417
        %v1580 = vunpack.c.h.b16 %v1417
        %v1581 = vunpack.c.l.b16 %v1418
        %v1582 = vunpack.c.h.b16 %v1418
        %v1583 = vunpack.c.l.b16 %v1419
        %v1584 = vunpack.c.h.b16 %v1419
        %v1585 = vunpack.c.l.b16 %v1420
        %v1586 = vunpack.c.h.b16 %v1420
        %v1587 = vunpack.c.l.b16 %v1421
        %v1588 = vunpack.c.h.b16 %v1421
        %v1589 = vunpack.c.l.b16 %v1422
        %v1590 = vunpack.c.h.b16 %v1422
        %v1591 = vunpack.c.l.b16 %v1423
        %v1592 = vunpack.c.h.b16 %v1423
        %v1593 = vunpack.c.l.b16 %v1424
        %v1594 = vunpack.c.h.b16 %v1424
        %v1595 = vunpack.c.l.b16 %v1425
        %v1596 = vunpack.c.h.b16 %v1425
        %v1597 = vunpack.c.l.b16 %v1426
        %v1598 = vunpack.c.h.b16 %v1426
        %v1599 = vpack.c.b16 %v1569, %v1567
        %v1600 = vpack.c.b16 %v1570, %v1568
        %v1601 = vpack.c.b16 %v1573, %v1571
        %v1602 = vpack.c.b16 %v1574, %v1572
        %v1603 = vpack.c.b16 %v1577, %v1575
        %v1604 = vpack.c.b16 %v1578, %v1576
        %v1605 = vpack.c.b16 %v1581, %v1579
        %v1606 = vpack.c.b16 %v1582, %v1580
        %v1607 = vpack.c.b16 %v1585, %v1583
        %v1608 = vpack.c.b16 %v1586, %v1584
        %v1609 = vpack.c.b16 %v1589, %v1587
        %v1610 = vpack.c.b16 %v1590, %v1588
        %v1611 = vpack.c.b16 %v1593, %v1591
        %v1612 = vpack.c.b16 %v1594, %v1592
        %v1613 = vpack.c.b16 %v1597, %v1595
        %v1614 = vpack.c.b16 %v1598, %v1596
        %1631 = vmatprep.subr.bf16.mxu0 %v1600
        %1632 = vmatpush1.bf16.msra.mxu0 %v1599
        %1633 = vmatprep.subr.bf16.mxu0 %v1602
        %1634 = vmatpush1.bf16.msra.mxu0 %v1601
        %1635 = vmatprep.subr.bf16.mxu0 %v1604
        %1636 = vmatpush1.bf16.msra.mxu0 %v1603
        %1637 = vmatprep.subr.bf16.mxu0 %v1606
        %1638 = vmatpush1.bf16.msra.mxu0 %v1605
        %1639 = vmatprep.subr.bf16.mxu0 %v1608
        %1640 = vmatpush1.bf16.msra.mxu0 %v1607
        %1641 = vmatprep.subr.bf16.mxu0 %v1610
        %1642 = vmatpush1.bf16.msra.mxu0 %v1609
        %1643 = vmatprep.subr.bf16.mxu0 %v1612
        %1644 = vmatpush1.bf16.msra.mxu0 %v1611
        %1645 = vmatprep.subr.bf16.mxu0 %v1614
        %1646 = vmatpush1.bf16.msra.mxu0 %v1613
        %1647 = vmatprep.subr.bf16.mxu0 0
        %1648 = vmatpush1.bf16.msra.mxu0 0
        %1649 = vmatprep.subr.bf16.mxu0 0
        %1650 = vmatpush1.bf16.msra.mxu0 0
        %1651 = vmatprep.subr.bf16.mxu0 0
        %1652 = vmatpush1.bf16.msra.mxu0 0
        %1653 = vmatprep.subr.bf16.mxu0 0
        %1654 = vmatpush1.bf16.msra.mxu0 0
        %1655 = vmatprep.subr.bf16.mxu0 0
        %1656 = vmatpush1.bf16.msra.mxu0 0
        %1657 = vmatprep.subr.bf16.mxu0 0
        %1658 = vmatpush1.bf16.msra.mxu0 0
        %1659 = vmatprep.subr.bf16.mxu0 0
        %1660 = vmatpush1.bf16.msra.mxu0 0
        %1661 = vmatprep.subr.bf16.mxu0 0
        %1662 = vmatpush1.bf16.msra.mxu0 0
        %1663 = vmatprep.mubr.bf16.mxu0 0
        %1664 = vmatmul.mubr.bf16.gmra.mrb[0].mxu0 %v1445
        %v1665 = vpop.f32.mrb[0].mxu0
        %v1666 = vadd.f32 %v1544, %v1665
        %v1667 = vpop.f32.mrb[0].mxu0
        %v1668 = vadd.f32 %v1548, %v1667
        %v1669 = vpop.f32.mrb[0].mxu0
        %v1670 = vpop.f32.mrb[0].mxu0
        %1671 = vdwg.mxu0
        %v1672 = vmul.f32 %v1535, 0.17677669
        %v1673 = vlaneseq
        %v1674 = vand.u32 %v1673, 127
        %v1675 = vstv %s1364
        %vm1676 = vcmp.lt.s32.totalorder %v1674, %v1675
        %v1677 = vlaneseq
        %v1678 = vshrl.u32 %v1677, 7
        %vm1679 = vcmp.le.s32.totalorder %v1674, %v1678
        %vm1680 = vmand %vm1676, %vm1679
        %v1681 = vpack.c.bf16 %v1672, %v1672
        %v1682 = vpack.c.bf16 %v1666, %v1666
        %v1683 = vpack.c.bf16 %v1668, %v1668
        %vm1684 = vcmask 261120
        %v1686 = vsel %vm1684, %v1681, 0
        %v1689 = vsel %vm1684, %v1682, 0
        %1691 = vmatprep.subr.bf16.mxu0 0
        %1692 = vmatpush1.bf16.xpose.msra.mxu0 %v1689
        %1693 = vmatprep.subr.bf16.mxu0 0
        %1694 = vmatpush1.bf16.xpose.msra.mxu0 0
        %1695 = vmatprep.subr.bf16.mxu0 0
        %1696 = vmatpush1.bf16.xpose.msra.mxu0 0
        %1697 = vmatprep.subr.bf16.mxu0 0
        %1698 = vmatpush1.bf16.xpose.msra.mxu0 0
        %1699 = vmatprep.subr.bf16.mxu0 0
        %1700 = vmatpush1.bf16.xpose.msra.mxu0 0
        %1701 = vmatprep.subr.bf16.mxu0 0
        %1702 = vmatpush1.bf16.xpose.msra.mxu0 0
        %1703 = vmatprep.subr.bf16.mxu0 0
        %1704 = vmatpush1.bf16.xpose.msra.mxu0 0
        %1705 = vmatprep.subr.bf16.mxu0 0
        %1706 = vmatpush1.bf16.xpose.msra.mxu0 0
        %1707 = vmatprep.subr.bf16.mxu0 0
        %1708 = vmatpush1.bf16.xpose.msra.mxu0 0
        %1709 = vmatprep.subr.bf16.mxu0 0
        %1710 = vmatpush1.bf16.xpose.msra.mxu0 0
        %1711 = vmatprep.subr.bf16.mxu0 0
        %1712 = vmatpush1.bf16.xpose.msra.mxu0 0
        %1713 = vmatprep.subr.bf16.mxu0 0
        %1714 = vmatpush1.bf16.xpose.msra.mxu0 0
        %1715 = vmatprep.subr.bf16.mxu0 0
        %1716 = vmatpush1.bf16.xpose.msra.mxu0 0
        %1717 = vmatprep.subr.bf16.mxu0 0
        %1718 = vmatpush1.bf16.xpose.msra.mxu0 0
        %1719 = vmatprep.subr.bf16.mxu0 0
        %1720 = vmatpush1.bf16.xpose.msra.mxu0 0
        %1721 = vmatprep.subr.bf16.mxu0 0
        %1722 = vmatpush1.bf16.xpose.msra.mxu0 0
        %1723 = vmatprep.mubr.bf16.mxu0 0
        %1724 = vmatmul.mubr.bf16.gmra.mrb[0].mxu0 %v1686
        %v1725 = vpop.f32.mrb[0].mxu0
        %v1726 = vadd.f32 0.0, %v1725
        %v1727 = vpop.f32.mrb[0].mxu0
        %v1728 = vpop.f32.mrb[0].mxu0
        %v1729 = vpop.f32.mrb[0].mxu0
        %1730 = vdwg.mxu0
        %v1731 = vsel %vm1680, %v1726, -1e+30
        %vm1732 = vcmask 64512
        %v1733 = vsel %vm1732, %v1731, -inf
        %1734 = vmax.xlane.f32.xlu0 %v1733
        %v1735 = vpop.xlane.xlu0 %1734
        %v1736 = vsub.f32 %v1731, %v1735
        %v1737 = vmul.f32 %v1736, 1.442695
        %v1738 = vpow.pop %v1737
        %v1739 = vsel %vm1732, %v1738, 0.0
        %1740 = vadd.xlane.f32.xlu0 %v1739
        %v1741 = vpop.xlane.xlu0 %1740
        %v1742 = vrcp.pop %v1741
        %v1743 = vmul.f32 %v1738, %v1742
        %v1744 = vpack.c.bf16 %v1743, %v1743
        %v1746 = vsel %vm1732, %v1744, 0
        %vm1748 = vcmask 1043456
        %v1750 = vsel %vm1748, %v1683, 0
        %1752 = vmatprep.subr.bf16.mxu0 0
        %1753 = vmatpush1.bf16.msra.mxu0 %v1750
        %1754 = vmatprep.subr.bf16.mxu0 0
        %1755 = vmatpush1.bf16.msra.mxu0 0
        %1756 = vmatprep.subr.bf16.mxu0 0
        %1757 = vmatpush1.bf16.msra.mxu0 0
        %1758 = vmatprep.subr.bf16.mxu0 0
        %1759 = vmatpush1.bf16.msra.mxu0 0
        %1760 = vmatprep.subr.bf16.mxu0 0
        %1761 = vmatpush1.bf16.msra.mxu0 0
        %1762 = vmatprep.subr.bf16.mxu0 0
        %1763 = vmatpush1.bf16.msra.mxu0 0
        %1764 = vmatprep.subr.bf16.mxu0 0
        %1765 = vmatpush1.bf16.msra.mxu0 0
        %1766 = vmatprep.subr.bf16.mxu0 0
        %1767 = vmatpush1.bf16.msra.mxu0 0
        %1768 = vmatprep.subr.bf16.mxu0 0
        %1769 = vmatpush1.bf16.msra.mxu0 0
        %1770 = vmatprep.subr.bf16.mxu0 0
        %1771 = vmatpush1.bf16.msra.mxu0 0
        %1772 = vmatprep.subr.bf16.mxu0 0
        %1773 = vmatpush1.bf16.msra.mxu0 0
        %1774 = vmatprep.subr.bf16.mxu0 0
        %1775 = vmatpush1.bf16.msra.mxu0 0
        %1776 = vmatprep.subr.bf16.mxu0 0
        %1777 = vmatpush1.bf16.msra.mxu0 0
        %1778 = vmatprep.subr.bf16.mxu0 0
        %1779 = vmatpush1.bf16.msra.mxu0 0
        %1780 = vmatprep.subr.bf16.mxu0 0
        %1781 = vmatpush1.bf16.msra.mxu0 0
        %1782 = vmatprep.subr.bf16.mxu0 0
        %1783 = vmatpush1.bf16.msra.mxu0 0
        %1784 = vmatprep.mubr.bf16.mxu0 0
        %1785 = vmatmul.mubr.bf16.gmra.mrb[0].mxu0 %v1746
        %v1786 = vpop.f32.mrb[0].mxu0
        %v1787 = vadd.f32 0.0, %v1786
        %v1788 = vpop.f32.mrb[0].mxu0
        %v1789 = vpop.f32.mrb[0].mxu0
        %v1790 = vpop.f32.mrb[0].mxu0
        %1791 = vdwg.mxu0
        %1793 = vrot.lane.b32.xlu0 %v1681, 96
        %v1794 = vpop.permute.xlu0 %1793
        %1796 = vrot.lane.b32.xlu0 %v1682, 96
        %v1797 = vpop.permute.xlu0 %1796
        %v1799 = vsel %vm1684, %v1794, 0
        %v1802 = vsel %vm1684, %v1797, 0
        %1804 = vmatprep.subr.bf16.mxu0 0
        %1805 = vmatpush1.bf16.xpose.msra.mxu0 %v1802
        %1806 = vmatprep.subr.bf16.mxu0 0
        %1807 = vmatpush1.bf16.xpose.msra.mxu0 0
        %1808 = vmatprep.subr.bf16.mxu0 0
        %1809 = vmatpush1.bf16.xpose.msra.mxu0 0
        %1810 = vmatprep.subr.bf16.mxu0 0
        %1811 = vmatpush1.bf16.xpose.msra.mxu0 0
        %1812 = vmatprep.subr.bf16.mxu0 0
        %1813 = vmatpush1.bf16.xpose.msra.mxu0 0
        %1814 = vmatprep.subr.bf16.mxu0 0
        %1815 = vmatpush1.bf16.xpose.msra.mxu0 0
        %1816 = vmatprep.subr.bf16.mxu0 0
        %1817 = vmatpush1.bf16.xpose.msra.mxu0 0
        %1818 = vmatprep.subr.bf16.mxu0 0
        %1819 = vmatpush1.bf16.xpose.msra.mxu0 0
        %1820 = vmatprep.subr.bf16.mxu0 0
        %1821 = vmatpush1.bf16.xpose.msra.mxu0 0
        %1822 = vmatprep.subr.bf16.mxu0 0
        %1823 = vmatpush1.bf16.xpose.msra.mxu0 0
        %1824 = vmatprep.subr.bf16.mxu0 0
        %1825 = vmatpush1.bf16.xpose.msra.mxu0 0
        %1826 = vmatprep.subr.bf16.mxu0 0
        %1827 = vmatpush1.bf16.xpose.msra.mxu0 0
        %1828 = vmatprep.subr.bf16.mxu0 0
        %1829 = vmatpush1.bf16.xpose.msra.mxu0 0
        %1830 = vmatprep.subr.bf16.mxu0 0
        %1831 = vmatpush1.bf16.xpose.msra.mxu0 0
        %1832 = vmatprep.subr.bf16.mxu0 0
        %1833 = vmatpush1.bf16.xpose.msra.mxu0 0
        %1834 = vmatprep.subr.bf16.mxu0 0
        %1835 = vmatpush1.bf16.xpose.msra.mxu0 0
        %1836 = vmatprep.mubr.bf16.mxu0 0
        %1837 = vmatmul.mubr.bf16.gmra.mrb[0].mxu0 %v1799
        %v1838 = vpop.f32.mrb[0].mxu0
        %v1839 = vadd.f32 0.0, %v1838
        %v1840 = vpop.f32.mrb[0].mxu0
        %v1841 = vpop.f32.mrb[0].mxu0
        %v1842 = vpop.f32.mrb[0].mxu0
        %1843 = vdwg.mxu0
        %v1844 = vsel %vm1680, %v1839, -1e+30
        %v1845 = vsel %vm1732, %v1844, -inf
        %1846 = vmax.xlane.f32.xlu0 %v1845
        %v1847 = vpop.xlane.xlu0 %1846
        %v1848 = vsub.f32 %v1844, %v1847
        %v1849 = vmul.f32 %v1848, 1.442695
        %v1850 = vpow.pop %v1849
        %v1851 = vsel %vm1732, %v1850, 0.0
        %1852 = vadd.xlane.f32.xlu0 %v1851
        %v1853 = vpop.xlane.xlu0 %1852
        %v1854 = vrcp.pop %v1853
        %v1855 = vmul.f32 %v1850, %v1854
        %v1856 = vpack.c.bf16 %v1855, %v1855
        %1858 = vrot.lane.b32.xlu0 %v1683, 96
        %v1859 = vpop.permute.xlu0 %1858
        %v1861 = vsel %vm1732, %v1856, 0
        %v1864 = vsel %vm1748, %v1859, 0
        %1866 = vmatprep.subr.bf16.mxu0 0
        %1867 = vmatpush1.bf16.msra.mxu0 %v1864
        %1868 = vmatprep.subr.bf16.mxu0 0
        %1869 = vmatpush1.bf16.msra.mxu0 0
        %1870 = vmatprep.subr.bf16.mxu0 0
        %1871 = vmatpush1.bf16.msra.mxu0 0
        %1872 = vmatprep.subr.bf16.mxu0 0
        %1873 = vmatpush1.bf16.msra.mxu0 0
        %1874 = vmatprep.subr.bf16.mxu0 0
        %1875 = vmatpush1.bf16.msra.mxu0 0
        %1876 = vmatprep.subr.bf16.mxu0 0
        %1877 = vmatpush1.bf16.msra.mxu0 0
        %1878 = vmatprep.subr.bf16.mxu0 0
        %1879 = vmatpush1.bf16.msra.mxu0 0
        %1880 = vmatprep.subr.bf16.mxu0 0
        %1881 = vmatpush1.bf16.msra.mxu0 0
        %1882 = vmatprep.subr.bf16.mxu0 0
        %1883 = vmatpush1.bf16.msra.mxu0 0
        %1884 = vmatprep.subr.bf16.mxu0 0
        %1885 = vmatpush1.bf16.msra.mxu0 0
        %1886 = vmatprep.subr.bf16.mxu0 0
        %1887 = vmatpush1.bf16.msra.mxu0 0
        %1888 = vmatprep.subr.bf16.mxu0 0
        %1889 = vmatpush1.bf16.msra.mxu0 0
        %1890 = vmatprep.subr.bf16.mxu0 0
        %1891 = vmatpush1.bf16.msra.mxu0 0
        %1892 = vmatprep.subr.bf16.mxu0 0
        %1893 = vmatpush1.bf16.msra.mxu0 0
        %1894 = vmatprep.subr.bf16.mxu0 0
        %1895 = vmatpush1.bf16.msra.mxu0 0
        %1896 = vmatprep.subr.bf16.mxu0 0
        %1897 = vmatpush1.bf16.msra.mxu0 0
        %1898 = vmatprep.mubr.bf16.mxu0 0
        %1899 = vmatmul.mubr.bf16.gmra.mrb[0].mxu0 %v1861
        %v1900 = vpop.f32.mrb[0].mxu0
        %v1901 = vadd.f32 0.0, %v1900
        %v1902 = vpop.f32.mrb[0].mxu0
        %v1903 = vpop.f32.mrb[0].mxu0
        %v1904 = vpop.f32.mrb[0].mxu0
        %1905 = vdwg.mxu0
        %1906 = vrot.lane.b32.xlu0 %v1681, 64
        %v1907 = vpop.permute.xlu0 %1906
        %1908 = vrot.lane.b32.xlu0 %v1682, 64
        %v1909 = vpop.permute.xlu0 %1908
        %v1911 = vsel %vm1684, %v1907, 0
        %v1914 = vsel %vm1684, %v1909, 0
        %1916 = vmatprep.subr.bf16.mxu0 0
        %1917 = vmatpush1.bf16.xpose.msra.mxu0 %v1914
        %1918 = vmatprep.subr.bf16.mxu0 0
        %1919 = vmatpush1.bf16.xpose.msra.mxu0 0
        %1920 = vmatprep.subr.bf16.mxu0 0
        %1921 = vmatpush1.bf16.xpose.msra.mxu0 0
        %1922 = vmatprep.subr.bf16.mxu0 0
        %1923 = vmatpush1.bf16.xpose.msra.mxu0 0
        %1924 = vmatprep.subr.bf16.mxu0 0
        %1925 = vmatpush1.bf16.xpose.msra.mxu0 0
        %1926 = vmatprep.subr.bf16.mxu0 0
        %1927 = vmatpush1.bf16.xpose.msra.mxu0 0
        %1928 = vmatprep.subr.bf16.mxu0 0
        %1929 = vmatpush1.bf16.xpose.msra.mxu0 0
        %1930 = vmatprep.subr.bf16.mxu0 0
        %1931 = vmatpush1.bf16.xpose.msra.mxu0 0
        %1932 = vmatprep.subr.bf16.mxu0 0
        %1933 = vmatpush1.bf16.xpose.msra.mxu0 0
        %1934 = vmatprep.subr.bf16.mxu0 0
        %1935 = vmatpush1.bf16.xpose.msra.mxu0 0
        %1936 = vmatprep.subr.bf16.mxu0 0
        %1937 = vmatpush1.bf16.xpose.msra.mxu0 0
        %1938 = vmatprep.subr.bf16.mxu0 0
        %1939 = vmatpush1.bf16.xpose.msra.mxu0 0
        %1940 = vmatprep.subr.bf16.mxu0 0
        %1941 = vmatpush1.bf16.xpose.msra.mxu0 0
        %1942 = vmatprep.subr.bf16.mxu0 0
        %1943 = vmatpush1.bf16.xpose.msra.mxu0 0
        %1944 = vmatprep.subr.bf16.mxu0 0
        %1945 = vmatpush1.bf16.xpose.msra.mxu0 0
        %1946 = vmatprep.subr.bf16.mxu0 0
        %1947 = vmatpush1.bf16.xpose.msra.mxu0 0
        %1948 = vmatprep.mubr.bf16.mxu0 0
        %1949 = vmatmul.mubr.bf16.gmra.mrb[0].mxu0 %v1911
        %v1950 = vpop.f32.mrb[0].mxu0
        %v1951 = vadd.f32 0.0, %v1950
        %v1952 = vpop.f32.mrb[0].mxu0
        %v1953 = vpop.f32.mrb[0].mxu0
        %v1954 = vpop.f32.mrb[0].mxu0
        %1955 = vdwg.mxu0
        %v1956 = vsel %vm1680, %v1951, -1e+30
        %v1957 = vsel %vm1732, %v1956, -inf
        %1958 = vmax.xlane.f32.xlu0 %v1957
        %v1959 = vpop.xlane.xlu0 %1958
        %v1960 = vsub.f32 %v1956, %v1959
        %v1961 = vmul.f32 %v1960, 1.442695
        %v1962 = vpow.pop %v1961
        %v1963 = vsel %vm1732, %v1962, 0.0
        %1964 = vadd.xlane.f32.xlu0 %v1963
        %v1965 = vpop.xlane.xlu0 %1964
        %v1966 = vrcp.pop %v1965
        %v1967 = vmul.f32 %v1962, %v1966
        %v1968 = vpack.c.bf16 %v1967, %v1967
        %1969 = vrot.lane.b32.xlu0 %v1683, 64
        %v1970 = vpop.permute.xlu0 %1969
        %v1972 = vsel %vm1732, %v1968, 0
        %v1975 = vsel %vm1748, %v1970, 0
        %1977 = vmatprep.subr.bf16.mxu0 0
        %1978 = vmatpush1.bf16.msra.mxu0 %v1975
        %1979 = vmatprep.subr.bf16.mxu0 0
        %1980 = vmatpush1.bf16.msra.mxu0 0
        %1981 = vmatprep.subr.bf16.mxu0 0
        %1982 = vmatpush1.bf16.msra.mxu0 0
        %1983 = vmatprep.subr.bf16.mxu0 0
        %1984 = vmatpush1.bf16.msra.mxu0 0
        %1985 = vmatprep.subr.bf16.mxu0 0
        %1986 = vmatpush1.bf16.msra.mxu0 0
        %1987 = vmatprep.subr.bf16.mxu0 0
        %1988 = vmatpush1.bf16.msra.mxu0 0
        %1989 = vmatprep.subr.bf16.mxu0 0
        %1990 = vmatpush1.bf16.msra.mxu0 0
        %1991 = vmatprep.subr.bf16.mxu0 0
        %1992 = vmatpush1.bf16.msra.mxu0 0
        %1993 = vmatprep.subr.bf16.mxu0 0
        %1994 = vmatpush1.bf16.msra.mxu0 0
        %1995 = vmatprep.subr.bf16.mxu0 0
        %1996 = vmatpush1.bf16.msra.mxu0 0
        %1997 = vmatprep.subr.bf16.mxu0 0
        %1998 = vmatpush1.bf16.msra.mxu0 0
        %1999 = vmatprep.subr.bf16.mxu0 0
        %2000 = vmatpush1.bf16.msra.mxu0 0
        %2001 = vmatprep.subr.bf16.mxu0 0
        %2002 = vmatpush1.bf16.msra.mxu0 0
        %2003 = vmatprep.subr.bf16.mxu0 0
        %2004 = vmatpush1.bf16.msra.mxu0 0
        %2005 = vmatprep.subr.bf16.mxu0 0
        %2006 = vmatpush1.bf16.msra.mxu0 0
        %2007 = vmatprep.subr.bf16.mxu0 0
        %2008 = vmatpush1.bf16.msra.mxu0 0
        %2009 = vmatprep.mubr.bf16.mxu0 0
        %2010 = vmatmul.mubr.bf16.gmra.mrb[0].mxu0 %v1972
        %v2011 = vpop.f32.mrb[0].mxu0
        %v2012 = vadd.f32 0.0, %v2011
        %v2013 = vpop.f32.mrb[0].mxu0
        %v2014 = vpop.f32.mrb[0].mxu0
        %v2015 = vpop.f32.mrb[0].mxu0
        %2016 = vdwg.mxu0
        %2017 = vrot.lane.b32.xlu0 %v1681, 32
        %v2018 = vpop.permute.xlu0 %2017
        %2019 = vrot.lane.b32.xlu0 %v1682, 32
        %v2020 = vpop.permute.xlu0 %2019
        %v2022 = vsel %vm1684, %v2018, 0
        %v2025 = vsel %vm1684, %v2020, 0
        %2027 = vmatprep.subr.bf16.mxu0 0
        %2028 = vmatpush1.bf16.xpose.msra.mxu0 %v2025
        %2029 = vmatprep.subr.bf16.mxu0 0
        %2030 = vmatpush1.bf16.xpose.msra.mxu0 0
        %2031 = vmatprep.subr.bf16.mxu0 0
        %2032 = vmatpush1.bf16.xpose.msra.mxu0 0
        %2033 = vmatprep.subr.bf16.mxu0 0
        %2034 = vmatpush1.bf16.xpose.msra.mxu0 0
        %2035 = vmatprep.subr.bf16.mxu0 0
        %2036 = vmatpush1.bf16.xpose.msra.mxu0 0
        %2037 = vmatprep.subr.bf16.mxu0 0
        %2038 = vmatpush1.bf16.xpose.msra.mxu0 0
        %2039 = vmatprep.subr.bf16.mxu0 0
        %2040 = vmatpush1.bf16.xpose.msra.mxu0 0
        %2041 = vmatprep.subr.bf16.mxu0 0
        %2042 = vmatpush1.bf16.xpose.msra.mxu0 0
        %2043 = vmatprep.subr.bf16.mxu0 0
        %2044 = vmatpush1.bf16.xpose.msra.mxu0 0
        %2045 = vmatprep.subr.bf16.mxu0 0
        %2046 = vmatpush1.bf16.xpose.msra.mxu0 0
        %2047 = vmatprep.subr.bf16.mxu0 0
        %2048 = vmatpush1.bf16.xpose.msra.mxu0 0
        %2049 = vmatprep.subr.bf16.mxu0 0
        %2050 = vmatpush1.bf16.xpose.msra.mxu0 0
        %2051 = vmatprep.subr.bf16.mxu0 0
        %2052 = vmatpush1.bf16.xpose.msra.mxu0 0
        %2053 = vmatprep.subr.bf16.mxu0 0
        %2054 = vmatpush1.bf16.xpose.msra.mxu0 0
        %2055 = vmatprep.subr.bf16.mxu0 0
        %2056 = vmatpush1.bf16.xpose.msra.mxu0 0
        %2057 = vmatprep.subr.bf16.mxu0 0
        %2058 = vmatpush1.bf16.xpose.msra.mxu0 0
        %2059 = vmatprep.mubr.bf16.mxu0 0
        %2060 = vmatmul.mubr.bf16.gmra.mrb[0].mxu0 %v2022
        %v2061 = vpop.f32.mrb[0].mxu0
        %v2062 = vadd.f32 0.0, %v2061
        %v2063 = vpop.f32.mrb[0].mxu0
        %v2064 = vpop.f32.mrb[0].mxu0
        %v2065 = vpop.f32.mrb[0].mxu0
        %2066 = vdwg.mxu0
        %v2067 = vsel %vm1680, %v2062, -1e+30
        %v2068 = vsel %vm1732, %v2067, -inf
        %2069 = vmax.xlane.f32.xlu0 %v2068
        %v2070 = vpop.xlane.xlu0 %2069
        %v2071 = vsub.f32 %v2067, %v2070
        %v2072 = vmul.f32 %v2071, 1.442695
        %v2073 = vpow.pop %v2072
        %v2074 = vsel %vm1732, %v2073, 0.0
        %2075 = vadd.xlane.f32.xlu0 %v2074
        %v2076 = vpop.xlane.xlu0 %2075
        %v2077 = vrcp.pop %v2076
        %v2078 = vmul.f32 %v2073, %v2077
        %v2079 = vpack.c.bf16 %v2078, %v2078
        %2080 = vrot.lane.b32.xlu0 %v1683, 32
        %v2081 = vpop.permute.xlu0 %2080
        %v2083 = vsel %vm1732, %v2079, 0
        %v2086 = vsel %vm1748, %v2081, 0
        %2088 = vmatprep.subr.bf16.mxu0 0
        %2089 = vmatpush1.bf16.msra.mxu0 %v2086
        %2090 = vmatprep.subr.bf16.mxu0 0
        %2091 = vmatpush1.bf16.msra.mxu0 0
        %2092 = vmatprep.subr.bf16.mxu0 0
        %2093 = vmatpush1.bf16.msra.mxu0 0
        %2094 = vmatprep.subr.bf16.mxu0 0
        %2095 = vmatpush1.bf16.msra.mxu0 0
        %2096 = vmatprep.subr.bf16.mxu0 0
        %2097 = vmatpush1.bf16.msra.mxu0 0
        %2098 = vmatprep.subr.bf16.mxu0 0
        %2099 = vmatpush1.bf16.msra.mxu0 0
        %2100 = vmatprep.subr.bf16.mxu0 0
        %2101 = vmatpush1.bf16.msra.mxu0 0
        %2102 = vmatprep.subr.bf16.mxu0 0
        %2103 = vmatpush1.bf16.msra.mxu0 0
        %2104 = vmatprep.subr.bf16.mxu0 0
        %2105 = vmatpush1.bf16.msra.mxu0 0
        %2106 = vmatprep.subr.bf16.mxu0 0
        %2107 = vmatpush1.bf16.msra.mxu0 0
        %2108 = vmatprep.subr.bf16.mxu0 0
        %2109 = vmatpush1.bf16.msra.mxu0 0
        %2110 = vmatprep.subr.bf16.mxu0 0
        %2111 = vmatpush1.bf16.msra.mxu0 0
        %2112 = vmatprep.subr.bf16.mxu0 0
        %2113 = vmatpush1.bf16.msra.mxu0 0
        %2114 = vmatprep.subr.bf16.mxu0 0
        %2115 = vmatpush1.bf16.msra.mxu0 0
        %2116 = vmatprep.subr.bf16.mxu0 0
        %2117 = vmatpush1.bf16.msra.mxu0 0
        %2118 = vmatprep.subr.bf16.mxu0 0
        %2119 = vmatpush1.bf16.msra.mxu0 0
        %2120 = vmatprep.mubr.bf16.mxu0 0
        %2121 = vmatmul.mubr.bf16.gmra.mrb[0].mxu0 %v2083
        %v2122 = vpop.f32.mrb[0].mxu0
        %v2123 = vadd.f32 0.0, %v2122
        %v2124 = vpop.f32.mrb[0].mxu0
        %v2125 = vpop.f32.mrb[0].mxu0
        %v2126 = vpop.f32.mrb[0].mxu0
        %2127 = vdwg.mxu0
        %2129 = vrot.lane.b32.xlu0 %v1901, 32
        %v2130 = vpop.permute.xlu0 %2129
        %2133 = vrot.lane.b32.xlu0 %v2012, 64
        %v2134 = vpop.permute.xlu0 %2133
        %2137 = vrot.lane.b32.xlu0 %v2123, 96
        %v2138 = vpop.permute.xlu0 %2137
        %v2140 = vsel %vm1684, %v1787, %v2130
        %vm2141 = vcmask 523264
        %v2142 = vsel %vm2141, %v2140, %v2134
        %vm2143 = vcmask 785408
        %v2144 = vsel %vm2143, %v2142, %v2138
        %v2145 = vpack.c.bf16 %v2144, %v2144
        %v2147 = vlaneseq
        %v2148 = vshrl.u32 %v2147, 7
        %v2149 = vsub.s32 0, %v2148
        %v2150 = vrot.slane %v1444, %v2149
        %v2168 = vunpack.c.l.b16 %v1428
        %v2169 = vunpack.c.l.b16 %v1429
        %v2170 = vunpack.c.l.b16 %v1430
        %v2171 = vunpack.c.l.b16 %v1431
        %v2172 = vunpack.c.l.b16 %v1432
        %v2173 = vunpack.c.l.b16 %v1433
        %v2174 = vunpack.c.l.b16 %v1434
        %v2175 = vunpack.c.l.b16 %v1435
        %v2176 = vunpack.c.l.b16 %v1436
        %v2177 = vunpack.c.l.b16 %v1437
        %v2178 = vunpack.c.l.b16 %v1438
        %v2179 = vunpack.c.l.b16 %v1439
        %v2180 = vunpack.c.l.b16 %v1440
        %v2181 = vunpack.c.l.b16 %v1441
        %v2182 = vunpack.c.l.b16 %v1442
        %v2183 = vunpack.c.l.b16 %v1443
        %v2184 = vpack.c.b16 %v2169, %v2168
        %v2185 = vpack.c.b16 %v2171, %v2170
        %v2186 = vpack.c.b16 %v2173, %v2172
        %v2187 = vpack.c.b16 %v2175, %v2174
        %v2188 = vpack.c.b16 %v2177, %v2176
        %v2189 = vpack.c.b16 %v2179, %v2178
        %v2190 = vpack.c.b16 %v2181, %v2180
        %v2191 = vpack.c.b16 %v2183, %v2182
        %2200 = vmatprep.subr.bf16.mxu0 0
        %2201 = vmatpush1.bf16.msra.mxu0 %v2184
        %2202 = vmatprep.subr.bf16.mxu0 0
        %2203 = vmatpush1.bf16.msra.mxu0 %v2185
        %2204 = vmatprep.subr.bf16.mxu0 0
        %2205 = vmatpush1.bf16.msra.mxu0 %v2186
        %2206 = vmatprep.subr.bf16.mxu0 0
        %2207 = vmatpush1.bf16.msra.mxu0 %v2187
        %2208 = vmatprep.subr.bf16.mxu0 0
        %2209 = vmatpush1.bf16.msra.mxu0 %v2188
        %2210 = vmatprep.subr.bf16.mxu0 0
        %2211 = vmatpush1.bf16.msra.mxu0 %v2189
        %2212 = vmatprep.subr.bf16.mxu0 0
        %2213 = vmatpush1.bf16.msra.mxu0 %v2190
        %2214 = vmatprep.subr.bf16.mxu0 0
        %2215 = vmatpush1.bf16.msra.mxu0 %v2191
        %2216 = vmatprep.subr.bf16.mxu0 0
        %2217 = vmatpush1.bf16.msra.mxu0 0
        %2218 = vmatprep.subr.bf16.mxu0 0
        %2219 = vmatpush1.bf16.msra.mxu0 0
        %2220 = vmatprep.subr.bf16.mxu0 0
        %2221 = vmatpush1.bf16.msra.mxu0 0
        %2222 = vmatprep.subr.bf16.mxu0 0
        %2223 = vmatpush1.bf16.msra.mxu0 0
        %2224 = vmatprep.subr.bf16.mxu0 0
        %2225 = vmatpush1.bf16.msra.mxu0 0
        %2226 = vmatprep.subr.bf16.mxu0 0
        %2227 = vmatpush1.bf16.msra.mxu0 0
        %2228 = vmatprep.subr.bf16.mxu0 0
        %2229 = vmatpush1.bf16.msra.mxu0 0
        %2230 = vmatprep.subr.bf16.mxu0 0
        %2231 = vmatpush1.bf16.msra.mxu0 0
        %2232 = vmatprep.mubr.bf16.mxu0 0
        %2233 = vmatmul.mubr.bf16.gmra.mrb[0].mxu0 %v2145
        %v2234 = vpop.f32.mrb[0].mxu0
        %v2235 = vadd.f32 %v2150, %v2234
        %v2236 = vpop.f32.mrb[0].mxu0
        %v2237 = vpop.f32.mrb[0].mxu0
        %v2238 = vpop.f32.mrb[0].mxu0
        %2239 = vdwg.mxu0
        %v2240 = vadd.f32 %v2235, %v1362
        %v2241 = vld [vmem:[%s1313] sm:$0x1]
        %v2242 = vld [vmem:[%s1316] sm:$0x1]
        %2243 = vadd.xlane.f32.xlu0 %v2240
        %v2244 = vpop.xlane.xlu0 %2243
        %v2245 = vmul.f32 %v2244, %v1370
        %v2246 = vsub.f32 %v2240, %v2245
        %v2247 = vmul.f32 %v2246, %v2246
        %2248 = vadd.xlane.f32.xlu0 %v2247
        %v2249 = vpop.xlane.xlu0 %2248
        %v2250 = vmul.f32 %v2249, %v1370
        %v2251 = vadd.f32 %v2250, 1e-05
        %v2252 = vrsqrt.pop %v2251
        %v2253 = vmul.f32 %v2246, %v2252
        %v2255 = vlaneseq
        %v2256 = vshrl.u32 %v2255, 7
        %v2257 = vsub.s32 0, %v2256
        %v2258 = vrot.slane %v2241, %v2257
        %v2260 = vmul.f32 %v2253, %v2258
        %v2262 = vlaneseq
        %v2263 = vshrl.u32 %v2262, 7
        %v2264 = vsub.s32 0, %v2263
        %v2265 = vrot.slane %v2242, %v2264
        %v2267 = vadd.f32 %v2260, %v2265
        %v2268 = vld [vmem:[%s1112] sm:$0xf]
        %v2269 = vld [vmem:[%s1112 + $0x4] sm:$0xf]
        %v2270 = vld [vmem:[%s1112 + $0x8] sm:$0xf]
        %v2271 = vld [vmem:[%s1112 + $0xc] sm:$0xf]
        %v2272 = vld [vmem:[%s1112 + $0x10] sm:$0xf]
        %v2273 = vld [vmem:[%s1112 + $0x14] sm:$0xf]
        %v2274 = vld [vmem:[%s1112 + $0x18] sm:$0xf]
        %v2275 = vld [vmem:[%s1112 + $0x1c] sm:$0xf]
        %v2276 = vld [vmem:[%s1112 + $0x20] sm:$0xf]
        %v2277 = vld [vmem:[%s1112 + $0x24] sm:$0xf]
        %v2278 = vld [vmem:[%s1112 + $0x28] sm:$0xf]
        %v2279 = vld [vmem:[%s1112 + $0x2c] sm:$0xf]
        %v2280 = vld [vmem:[%s1112 + $0x30] sm:$0xf]
        %v2281 = vld [vmem:[%s1112 + $0x34] sm:$0xf]
        %v2282 = vld [vmem:[%s1112 + $0x38] sm:$0xf]
        %v2283 = vld [vmem:[%s1112 + $0x3c] sm:$0xf]
        %v2284 = vld [vmem:[%s1319] sm:$0x1]
        %v2285 = vld [vmem:[%s1324] sm:$0xff]
        %v2286 = vld [vmem:[%s1324 + $0x8] sm:$0xff]
        %v2287 = vld [vmem:[%s1324 + $0x10] sm:$0xff]
        %v2288 = vld [vmem:[%s1324 + $0x18] sm:$0xff]
        %v2289 = vld [vmem:[%s1324 + $0x20] sm:$0xff]
        %v2290 = vld [vmem:[%s1324 + $0x28] sm:$0xff]
        %v2291 = vld [vmem:[%s1324 + $0x30] sm:$0xff]
        %v2292 = vld [vmem:[%s1324 + $0x38] sm:$0xff]
        %v2293 = vld [vmem:[%s1324 + $0x40] sm:$0xff]
        %v2294 = vld [vmem:[%s1324 + $0x48] sm:$0xff]
        %v2295 = vld [vmem:[%s1324 + $0x50] sm:$0xff]
        %v2296 = vld [vmem:[%s1324 + $0x58] sm:$0xff]
        %v2297 = vld [vmem:[%s1324 + $0x60] sm:$0xff]
        %v2298 = vld [vmem:[%s1324 + $0x68] sm:$0xff]
        %v2299 = vld [vmem:[%s1324 + $0x70] sm:$0xff]
        %v2300 = vld [vmem:[%s1324 + $0x78] sm:$0xff]
        %v2301 = vld [vmem:[%s1328] sm:$0x3]
        %v2302 = vld [vmem:[%s1121] sm:$0xf]
        %v2303 = vld [vmem:[%s1121 + $0x4] sm:$0xf]
        %v2304 = vld [vmem:[%s1121 + $0x8] sm:$0xf]
        %v2305 = vld [vmem:[%s1121 + $0xc] sm:$0xf]
        %v2306 = vld [vmem:[%s1121 + $0x10] sm:$0xf]
        %v2307 = vld [vmem:[%s1121 + $0x14] sm:$0xf]
        %v2308 = vld [vmem:[%s1121 + $0x18] sm:$0xf]
        %v2309 = vld [vmem:[%s1121 + $0x1c] sm:$0xf]
        %v2310 = vld [vmem:[%s1121 + $0x20] sm:$0xf]
        %v2311 = vld [vmem:[%s1121 + $0x24] sm:$0xf]
        %v2312 = vld [vmem:[%s1121 + $0x28] sm:$0xf]
        %v2313 = vld [vmem:[%s1121 + $0x2c] sm:$0xf]
        %v2314 = vld [vmem:[%s1121 + $0x30] sm:$0xf]
        %v2315 = vld [vmem:[%s1121 + $0x34] sm:$0xf]
        %v2316 = vld [vmem:[%s1121 + $0x38] sm:$0xf]
        %v2317 = vld [vmem:[%s1121 + $0x3c] sm:$0xf]
        %v2318 = vld [vmem:[%s1331] sm:$0x1]
        %v2319 = vpack.c.bf16 %v2267, %v2267
        %v2321 = vlaneseq
        %v2322 = vshrl.u32 %v2321, 7
        %v2323 = vsub.s32 0, %v2322
        %v2324 = vrot.slane %v2284, %v2323
        %v2342 = vunpack.c.l.b16 %v2268
        %v2343 = vunpack.c.l.b16 %v2269
        %v2344 = vunpack.c.l.b16 %v2270
        %v2345 = vunpack.c.l.b16 %v2271
        %v2346 = vunpack.c.l.b16 %v2272
        %v2347 = vunpack.c.l.b16 %v2273
        %v2348 = vunpack.c.l.b16 %v2274
        %v2349 = vunpack.c.l.b16 %v2275
        %v2350 = vunpack.c.l.b16 %v2276
        %v2351 = vunpack.c.l.b16 %v2277
        %v2352 = vunpack.c.l.b16 %v2278
        %v2353 = vunpack.c.l.b16 %v2279
        %v2354 = vunpack.c.l.b16 %v2280
        %v2355 = vunpack.c.l.b16 %v2281
        %v2356 = vunpack.c.l.b16 %v2282
        %v2357 = vunpack.c.l.b16 %v2283
        %v2358 = vpack.c.b16 %v2343, %v2342
        %v2359 = vpack.c.b16 %v2345, %v2344
        %v2360 = vpack.c.b16 %v2347, %v2346
        %v2361 = vpack.c.b16 %v2349, %v2348
        %v2362 = vpack.c.b16 %v2351, %v2350
        %v2363 = vpack.c.b16 %v2353, %v2352
        %v2364 = vpack.c.b16 %v2355, %v2354
        %v2365 = vpack.c.b16 %v2357, %v2356
        %2374 = vmatprep.subr.bf16.mxu0 0
        %2375 = vmatpush1.bf16.msra.mxu0 %v2358
        %2376 = vmatprep.subr.bf16.mxu0 0
        %2377 = vmatpush1.bf16.msra.mxu0 %v2359
        %2378 = vmatprep.subr.bf16.mxu0 0
        %2379 = vmatpush1.bf16.msra.mxu0 %v2360
        %2380 = vmatprep.subr.bf16.mxu0 0
        %2381 = vmatpush1.bf16.msra.mxu0 %v2361
        %2382 = vmatprep.subr.bf16.mxu0 0
        %2383 = vmatpush1.bf16.msra.mxu0 %v2362
        %2384 = vmatprep.subr.bf16.mxu0 0
        %2385 = vmatpush1.bf16.msra.mxu0 %v2363
        %2386 = vmatprep.subr.bf16.mxu0 0
        %2387 = vmatpush1.bf16.msra.mxu0 %v2364
        %2388 = vmatprep.subr.bf16.mxu0 0
        %2389 = vmatpush1.bf16.msra.mxu0 %v2365
        %2390 = vmatprep.subr.bf16.mxu0 0
        %2391 = vmatpush1.bf16.msra.mxu0 0
        %2392 = vmatprep.subr.bf16.mxu0 0
        %2393 = vmatpush1.bf16.msra.mxu0 0
        %2394 = vmatprep.subr.bf16.mxu0 0
        %2395 = vmatpush1.bf16.msra.mxu0 0
        %2396 = vmatprep.subr.bf16.mxu0 0
        %2397 = vmatpush1.bf16.msra.mxu0 0
        %2398 = vmatprep.subr.bf16.mxu0 0
        %2399 = vmatpush1.bf16.msra.mxu0 0
        %2400 = vmatprep.subr.bf16.mxu0 0
        %2401 = vmatpush1.bf16.msra.mxu0 0
        %2402 = vmatprep.subr.bf16.mxu0 0
        %2403 = vmatpush1.bf16.msra.mxu0 0
        %2404 = vmatprep.subr.bf16.mxu0 0
        %2405 = vmatpush1.bf16.msra.mxu0 0
        %2406 = vmatprep.mubr.bf16.mxu0 0
        %2407 = vmatmul.mubr.bf16.gmra.mrb[0].mxu0 %v2319
        %v2408 = vpop.f32.mrb[0].mxu0
        %v2409 = vadd.f32 %v2324, %v2408
        %v2410 = vpop.f32.mrb[0].mxu0
        %v2411 = vpop.f32.mrb[0].mxu0
        %v2412 = vpop.f32.mrb[0].mxu0
        %2413 = vdwg.mxu0
        %v2414 = vpack.c.bf16 %v1363, %v1363
        %v2416 = vlaneseq
        %v2417 = vshrl.u32 %v2416, 7
        %v2418 = vsub.s32 0, %v2417
        %v2419 = vrot.slane %v2301, %v2418
        %v2420 = vlaneseq
        %v2421 = vshrl.u32 %v2420, 7
        %v2422 = vsub.s32 1, %v2421
        %v2423 = vrot.slane %v2301, %v2422
        %v2442 = vunpack.c.l.b16 %v2285
        %v2443 = vunpack.c.h.b16 %v2285
        %v2444 = vunpack.c.l.b16 %v2286
        %v2445 = vunpack.c.h.b16 %v2286
        %v2446 = vunpack.c.l.b16 %v2287
        %v2447 = vunpack.c.h.b16 %v2287
        %v2448 = vunpack.c.l.b16 %v2288
        %v2449 = vunpack.c.h.b16 %v2288
        %v2450 = vunpack.c.l.b16 %v2289
        %v2451 = vunpack.c.h.b16 %v2289
        %v2452 = vunpack.c.l.b16 %v2290
        %v2453 = vunpack.c.h.b16 %v2290
        %v2454 = vunpack.c.l.b16 %v2291
        %v2455 = vunpack.c.h.b16 %v2291
        %v2456 = vunpack.c.l.b16 %v2292
        %v2457 = vunpack.c.h.b16 %v2292
        %v2458 = vunpack.c.l.b16 %v2293
        %v2459 = vunpack.c.h.b16 %v2293
        %v2460 = vunpack.c.l.b16 %v2294
        %v2461 = vunpack.c.h.b16 %v2294
        %v2462 = vunpack.c.l.b16 %v2295
        %v2463 = vunpack.c.h.b16 %v2295
        %v2464 = vunpack.c.l.b16 %v2296
        %v2465 = vunpack.c.h.b16 %v2296
        %v2466 = vunpack.c.l.b16 %v2297
        %v2467 = vunpack.c.h.b16 %v2297
        %v2468 = vunpack.c.l.b16 %v2298
        %v2469 = vunpack.c.h.b16 %v2298
        %v2470 = vunpack.c.l.b16 %v2299
        %v2471 = vunpack.c.h.b16 %v2299
        %v2472 = vunpack.c.l.b16 %v2300
        %v2473 = vunpack.c.h.b16 %v2300
        %v2474 = vpack.c.b16 %v2444, %v2442
        %v2475 = vpack.c.b16 %v2445, %v2443
        %v2476 = vpack.c.b16 %v2448, %v2446
        %v2477 = vpack.c.b16 %v2449, %v2447
        %v2478 = vpack.c.b16 %v2452, %v2450
        %v2479 = vpack.c.b16 %v2453, %v2451
        %v2480 = vpack.c.b16 %v2456, %v2454
        %v2481 = vpack.c.b16 %v2457, %v2455
        %v2482 = vpack.c.b16 %v2460, %v2458
        %v2483 = vpack.c.b16 %v2461, %v2459
        %v2484 = vpack.c.b16 %v2464, %v2462
        %v2485 = vpack.c.b16 %v2465, %v2463
        %v2486 = vpack.c.b16 %v2468, %v2466
        %v2487 = vpack.c.b16 %v2469, %v2467
        %v2488 = vpack.c.b16 %v2472, %v2470
        %v2489 = vpack.c.b16 %v2473, %v2471
        %2506 = vmatprep.subr.bf16.mxu0 %v2475
        %2507 = vmatpush1.bf16.msra.mxu0 %v2474
        %2508 = vmatprep.subr.bf16.mxu0 %v2477
        %2509 = vmatpush1.bf16.msra.mxu0 %v2476
        %2510 = vmatprep.subr.bf16.mxu0 %v2479
        %2511 = vmatpush1.bf16.msra.mxu0 %v2478
        %2512 = vmatprep.subr.bf16.mxu0 %v2481
        %2513 = vmatpush1.bf16.msra.mxu0 %v2480
        %2514 = vmatprep.subr.bf16.mxu0 %v2483
        %2515 = vmatpush1.bf16.msra.mxu0 %v2482
        %2516 = vmatprep.subr.bf16.mxu0 %v2485
        %2517 = vmatpush1.bf16.msra.mxu0 %v2484
        %2518 = vmatprep.subr.bf16.mxu0 %v2487
        %2519 = vmatpush1.bf16.msra.mxu0 %v2486
        %2520 = vmatprep.subr.bf16.mxu0 %v2489
        %2521 = vmatpush1.bf16.msra.mxu0 %v2488
        %2522 = vmatprep.subr.bf16.mxu0 0
        %2523 = vmatpush1.bf16.msra.mxu0 0
        %2524 = vmatprep.subr.bf16.mxu0 0
        %2525 = vmatpush1.bf16.msra.mxu0 0
        %2526 = vmatprep.subr.bf16.mxu0 0
        %2527 = vmatpush1.bf16.msra.mxu0 0
        %2528 = vmatprep.subr.bf16.mxu0 0
        %2529 = vmatpush1.bf16.msra.mxu0 0
        %2530 = vmatprep.subr.bf16.mxu0 0
        %2531 = vmatpush1.bf16.msra.mxu0 0
        %2532 = vmatprep.subr.bf16.mxu0 0
        %2533 = vmatpush1.bf16.msra.mxu0 0
        %2534 = vmatprep.subr.bf16.mxu0 0
        %2535 = vmatpush1.bf16.msra.mxu0 0
        %2536 = vmatprep.subr.bf16.mxu0 0
        %2537 = vmatpush1.bf16.msra.mxu0 0
        %2538 = vmatprep.mubr.bf16.mxu0 0
        %2539 = vmatmul.mubr.bf16.gmra.mrb[0].mxu0 %v2414
        %v2540 = vpop.f32.mrb[0].mxu0
        %v2541 = vadd.f32 %v2419, %v2540
        %v2542 = vpop.f32.mrb[0].mxu0
        %v2543 = vadd.f32 %v2423, %v2542
        %v2544 = vpop.f32.mrb[0].mxu0
        %v2545 = vpop.f32.mrb[0].mxu0
        %2546 = vdwg.mxu0
        %v2547 = vmul.f32 %v2409, 0.17677669
        %v2548 = vstv %s1365
        %vm2549 = vcmp.lt.s32.totalorder %v1674, %v2548
        %v2550 = vpack.c.bf16 %v2547, %v2547
        %v2551 = vpack.c.bf16 %v2541, %v2541
        %v2552 = vpack.c.bf16 %v2543, %v2543
        %v2554 = vsel %vm1684, %v2550, 0
        %v2557 = vsel %vm1684, %v2551, 0
        %2559 = vmatprep.subr.bf16.mxu0 0
        %2560 = vmatpush1.bf16.xpose.msra.mxu0 %v2557
        %2561 = vmatprep.subr.bf16.mxu0 0
        %2562 = vmatpush1.bf16.xpose.msra.mxu0 0
        %2563 = vmatprep.subr.bf16.mxu0 0
        %2564 = vmatpush1.bf16.xpose.msra.mxu0 0
        %2565 = vmatprep.subr.bf16.mxu0 0
        %2566 = vmatpush1.bf16.xpose.msra.mxu0 0
        %2567 = vmatprep.subr.bf16.mxu0 0
        %2568 = vmatpush1.bf16.xpose.msra.mxu0 0
        %2569 = vmatprep.subr.bf16.mxu0 0
        %2570 = vmatpush1.bf16.xpose.msra.mxu0 0
        %2571 = vmatprep.subr.bf16.mxu0 0
        %2572 = vmatpush1.bf16.xpose.msra.mxu0 0
        %2573 = vmatprep.subr.bf16.mxu0 0
        %2574 = vmatpush1.bf16.xpose.msra.mxu0 0
        %2575 = vmatprep.subr.bf16.mxu0 0
        %2576 = vmatpush1.bf16.xpose.msra.mxu0 0
        %2577 = vmatprep.subr.bf16.mxu0 0
        %2578 = vmatpush1.bf16.xpose.msra.mxu0 0
        %2579 = vmatprep.subr.bf16.mxu0 0
        %2580 = vmatpush1.bf16.xpose.msra.mxu0 0
        %2581 = vmatprep.subr.bf16.mxu0 0
        %2582 = vmatpush1.bf16.xpose.msra.mxu0 0
        %2583 = vmatprep.subr.bf16.mxu0 0
        %2584 = vmatpush1.bf16.xpose.msra.mxu0 0
        %2585 = vmatprep.subr.bf16.mxu0 0
        %2586 = vmatpush1.bf16.xpose.msra.mxu0 0
        %2587 = vmatprep.subr.bf16.mxu0 0
        %2588 = vmatpush1.bf16.xpose.msra.mxu0 0
        %2589 = vmatprep.subr.bf16.mxu0 0
        %2590 = vmatpush1.bf16.xpose.msra.mxu0 0
        %2591 = vmatprep.mubr.bf16.mxu0 0
        %2592 = vmatmul.mubr.bf16.gmra.mrb[0].mxu0 %v2554
        %v2593 = vpop.f32.mrb[0].mxu0
        %v2594 = vadd.f32 0.0, %v2593
        %v2595 = vpop.f32.mrb[0].mxu0
        %v2596 = vpop.f32.mrb[0].mxu0
        %v2597 = vpop.f32.mrb[0].mxu0
        %2598 = vdwg.mxu0
        %v2599 = vsel %vm2549, %v2594, -1e+30
        %v2600 = vsel %vm1732, %v2599, -inf
        %2601 = vmax.xlane.f32.xlu0 %v2600
        %v2602 = vpop.xlane.xlu0 %2601
        %v2603 = vsub.f32 %v2599, %v2602
        %v2604 = vmul.f32 %v2603, 1.442695
        %v2605 = vpow.pop %v2604
        %v2606 = vsel %vm1732, %v2605, 0.0
        %2607 = vadd.xlane.f32.xlu0 %v2606
        %v2608 = vpop.xlane.xlu0 %2607
        %v2609 = vrcp.pop %v2608
        %v2610 = vmul.f32 %v2605, %v2609
        %v2611 = vpack.c.bf16 %v2610, %v2610
        %v2613 = vsel %vm1732, %v2611, 0
        %v2616 = vsel %vm1748, %v2552, 0
        %2618 = vmatprep.subr.bf16.mxu0 0
        %2619 = vmatpush1.bf16.msra.mxu0 %v2616
        %2620 = vmatprep.subr.bf16.mxu0 0
        %2621 = vmatpush1.bf16.msra.mxu0 0
        %2622 = vmatprep.subr.bf16.mxu0 0
        %2623 = vmatpush1.bf16.msra.mxu0 0
        %2624 = vmatprep.subr.bf16.mxu0 0
        %2625 = vmatpush1.bf16.msra.mxu0 0
        %2626 = vmatprep.subr.bf16.mxu0 0
        %2627 = vmatpush1.bf16.msra.mxu0 0
        %2628 = vmatprep.subr.bf16.mxu0 0
        %2629 = vmatpush1.bf16.msra.mxu0 0
        %2630 = vmatprep.subr.bf16.mxu0 0
        %2631 = vmatpush1.bf16.msra.mxu0 0
        %2632 = vmatprep.subr.bf16.mxu0 0
        %2633 = vmatpush1.bf16.msra.mxu0 0
        %2634 = vmatprep.subr.bf16.mxu0 0
        %2635 = vmatpush1.bf16.msra.mxu0 0
        %2636 = vmatprep.subr.bf16.mxu0 0
        %2637 = vmatpush1.bf16.msra.mxu0 0
        %2638 = vmatprep.subr.bf16.mxu0 0
        %2639 = vmatpush1.bf16.msra.mxu0 0
        %2640 = vmatprep.subr.bf16.mxu0 0
        %2641 = vmatpush1.bf16.msra.mxu0 0
        %2642 = vmatprep.subr.bf16.mxu0 0
        %2643 = vmatpush1.bf16.msra.mxu0 0
        %2644 = vmatprep.subr.bf16.mxu0 0
        %2645 = vmatpush1.bf16.msra.mxu0 0
        %2646 = vmatprep.subr.bf16.mxu0 0
        %2647 = vmatpush1.bf16.msra.mxu0 0
        %2648 = vmatprep.subr.bf16.mxu0 0
        %2649 = vmatpush1.bf16.msra.mxu0 0
        %2650 = vmatprep.mubr.bf16.mxu0 0
        %2651 = vmatmul.mubr.bf16.gmra.mrb[0].mxu0 %v2613
        %v2652 = vpop.f32.mrb[0].mxu0
        %v2653 = vadd.f32 0.0, %v2652
        %v2654 = vpop.f32.mrb[0].mxu0
        %v2655 = vpop.f32.mrb[0].mxu0
        %v2656 = vpop.f32.mrb[0].mxu0
        %2657 = vdwg.mxu0
        %2659 = vrot.lane.b32.xlu0 %v2550, 96
        %v2660 = vpop.permute.xlu0 %2659
        %2662 = vrot.lane.b32.xlu0 %v2551, 96
        %v2663 = vpop.permute.xlu0 %2662
        %v2665 = vsel %vm1684, %v2660, 0
        %v2668 = vsel %vm1684, %v2663, 0
        %2670 = vmatprep.subr.bf16.mxu0 0
        %2671 = vmatpush1.bf16.xpose.msra.mxu0 %v2668
        %2672 = vmatprep.subr.bf16.mxu0 0
        %2673 = vmatpush1.bf16.xpose.msra.mxu0 0
        %2674 = vmatprep.subr.bf16.mxu0 0
        %2675 = vmatpush1.bf16.xpose.msra.mxu0 0
        %2676 = vmatprep.subr.bf16.mxu0 0
        %2677 = vmatpush1.bf16.xpose.msra.mxu0 0
        %2678 = vmatprep.subr.bf16.mxu0 0
        %2679 = vmatpush1.bf16.xpose.msra.mxu0 0
        %2680 = vmatprep.subr.bf16.mxu0 0
        %2681 = vmatpush1.bf16.xpose.msra.mxu0 0
        %2682 = vmatprep.subr.bf16.mxu0 0
        %2683 = vmatpush1.bf16.xpose.msra.mxu0 0
        %2684 = vmatprep.subr.bf16.mxu0 0
        %2685 = vmatpush1.bf16.xpose.msra.mxu0 0
        %2686 = vmatprep.subr.bf16.mxu0 0
        %2687 = vmatpush1.bf16.xpose.msra.mxu0 0
        %2688 = vmatprep.subr.bf16.mxu0 0
        %2689 = vmatpush1.bf16.xpose.msra.mxu0 0
        %2690 = vmatprep.subr.bf16.mxu0 0
        %2691 = vmatpush1.bf16.xpose.msra.mxu0 0
        %2692 = vmatprep.subr.bf16.mxu0 0
        %2693 = vmatpush1.bf16.xpose.msra.mxu0 0
        %2694 = vmatprep.subr.bf16.mxu0 0
        %2695 = vmatpush1.bf16.xpose.msra.mxu0 0
        %2696 = vmatprep.subr.bf16.mxu0 0
        %2697 = vmatpush1.bf16.xpose.msra.mxu0 0
        %2698 = vmatprep.subr.bf16.mxu0 0
        %2699 = vmatpush1.bf16.xpose.msra.mxu0 0
        %2700 = vmatprep.subr.bf16.mxu0 0
        %2701 = vmatpush1.bf16.xpose.msra.mxu0 0
        %2702 = vmatprep.mubr.bf16.mxu0 0
        %2703 = vmatmul.mubr.bf16.gmra.mrb[0].mxu0 %v2665
        %v2704 = vpop.f32.mrb[0].mxu0
        %v2705 = vadd.f32 0.0, %v2704
        %v2706 = vpop.f32.mrb[0].mxu0
        %v2707 = vpop.f32.mrb[0].mxu0
        %v2708 = vpop.f32.mrb[0].mxu0
        %2709 = vdwg.mxu0
        %v2710 = vsel %vm2549, %v2705, -1e+30
        %v2711 = vsel %vm1732, %v2710, -inf
        %2712 = vmax.xlane.f32.xlu0 %v2711
        %v2713 = vpop.xlane.xlu0 %2712
        %v2714 = vsub.f32 %v2710, %v2713
        %v2715 = vmul.f32 %v2714, 1.442695
        %v2716 = vpow.pop %v2715
        %v2717 = vsel %vm1732, %v2716, 0.0
        %2718 = vadd.xlane.f32.xlu0 %v2717
        %v2719 = vpop.xlane.xlu0 %2718
        %v2720 = vrcp.pop %v2719
        %v2721 = vmul.f32 %v2716, %v2720
        %v2722 = vpack.c.bf16 %v2721, %v2721
        %2724 = vrot.lane.b32.xlu0 %v2552, 96
        %v2725 = vpop.permute.xlu0 %2724
        %v2727 = vsel %vm1732, %v2722, 0
        %v2730 = vsel %vm1748, %v2725, 0
        %2732 = vmatprep.subr.bf16.mxu0 0
        %2733 = vmatpush1.bf16.msra.mxu0 %v2730
        %2734 = vmatprep.subr.bf16.mxu0 0
        %2735 = vmatpush1.bf16.msra.mxu0 0
        %2736 = vmatprep.subr.bf16.mxu0 0
        %2737 = vmatpush1.bf16.msra.mxu0 0
        %2738 = vmatprep.subr.bf16.mxu0 0
        %2739 = vmatpush1.bf16.msra.mxu0 0
        %2740 = vmatprep.subr.bf16.mxu0 0
        %2741 = vmatpush1.bf16.msra.mxu0 0
        %2742 = vmatprep.subr.bf16.mxu0 0
        %2743 = vmatpush1.bf16.msra.mxu0 0
        %2744 = vmatprep.subr.bf16.mxu0 0
        %2745 = vmatpush1.bf16.msra.mxu0 0
        %2746 = vmatprep.subr.bf16.mxu0 0
        %2747 = vmatpush1.bf16.msra.mxu0 0
        %2748 = vmatprep.subr.bf16.mxu0 0
        %2749 = vmatpush1.bf16.msra.mxu0 0
        %2750 = vmatprep.subr.bf16.mxu0 0
        %2751 = vmatpush1.bf16.msra.mxu0 0
        %2752 = vmatprep.subr.bf16.mxu0 0
        %2753 = vmatpush1.bf16.msra.mxu0 0
        %2754 = vmatprep.subr.bf16.mxu0 0
        %2755 = vmatpush1.bf16.msra.mxu0 0
        %2756 = vmatprep.subr.bf16.mxu0 0
        %2757 = vmatpush1.bf16.msra.mxu0 0
        %2758 = vmatprep.subr.bf16.mxu0 0
        %2759 = vmatpush1.bf16.msra.mxu0 0
        %2760 = vmatprep.subr.bf16.mxu0 0
        %2761 = vmatpush1.bf16.msra.mxu0 0
        %2762 = vmatprep.subr.bf16.mxu0 0
        %2763 = vmatpush1.bf16.msra.mxu0 0
        %2764 = vmatprep.mubr.bf16.mxu0 0
        %2765 = vmatmul.mubr.bf16.gmra.mrb[0].mxu0 %v2727
        %v2766 = vpop.f32.mrb[0].mxu0
        %v2767 = vadd.f32 0.0, %v2766
        %v2768 = vpop.f32.mrb[0].mxu0
        %v2769 = vpop.f32.mrb[0].mxu0
        %v2770 = vpop.f32.mrb[0].mxu0
        %2771 = vdwg.mxu0
        %2772 = vrot.lane.b32.xlu0 %v2550, 64
        %v2773 = vpop.permute.xlu0 %2772
        %2774 = vrot.lane.b32.xlu0 %v2551, 64
        %v2775 = vpop.permute.xlu0 %2774
        %v2777 = vsel %vm1684, %v2773, 0
        %v2780 = vsel %vm1684, %v2775, 0
        %2782 = vmatprep.subr.bf16.mxu0 0
        %2783 = vmatpush1.bf16.xpose.msra.mxu0 %v2780
        %2784 = vmatprep.subr.bf16.mxu0 0
        %2785 = vmatpush1.bf16.xpose.msra.mxu0 0
        %2786 = vmatprep.subr.bf16.mxu0 0
        %2787 = vmatpush1.bf16.xpose.msra.mxu0 0
        %2788 = vmatprep.subr.bf16.mxu0 0
        %2789 = vmatpush1.bf16.xpose.msra.mxu0 0
        %2790 = vmatprep.subr.bf16.mxu0 0
        %2791 = vmatpush1.bf16.xpose.msra.mxu0 0
        %2792 = vmatprep.subr.bf16.mxu0 0
        %2793 = vmatpush1.bf16.xpose.msra.mxu0 0
        %2794 = vmatprep.subr.bf16.mxu0 0
        %2795 = vmatpush1.bf16.xpose.msra.mxu0 0
        %2796 = vmatprep.subr.bf16.mxu0 0
        %2797 = vmatpush1.bf16.xpose.msra.mxu0 0
        %2798 = vmatprep.subr.bf16.mxu0 0
        %2799 = vmatpush1.bf16.xpose.msra.mxu0 0
        %2800 = vmatprep.subr.bf16.mxu0 0
        %2801 = vmatpush1.bf16.xpose.msra.mxu0 0
        %2802 = vmatprep.subr.bf16.mxu0 0
        %2803 = vmatpush1.bf16.xpose.msra.mxu0 0
        %2804 = vmatprep.subr.bf16.mxu0 0
        %2805 = vmatpush1.bf16.xpose.msra.mxu0 0
        %2806 = vmatprep.subr.bf16.mxu0 0
        %2807 = vmatpush1.bf16.xpose.msra.mxu0 0
        %2808 = vmatprep.subr.bf16.mxu0 0
        %2809 = vmatpush1.bf16.xpose.msra.mxu0 0
        %2810 = vmatprep.subr.bf16.mxu0 0
        %2811 = vmatpush1.bf16.xpose.msra.mxu0 0
        %2812 = vmatprep.subr.bf16.mxu0 0
        %2813 = vmatpush1.bf16.xpose.msra.mxu0 0
        %2814 = vmatprep.mubr.bf16.mxu0 0
        %2815 = vmatmul.mubr.bf16.gmra.mrb[0].mxu0 %v2777
        %v2816 = vpop.f32.mrb[0].mxu0
        %v2817 = vadd.f32 0.0, %v2816
        %v2818 = vpop.f32.mrb[0].mxu0
        %v2819 = vpop.f32.mrb[0].mxu0
        %v2820 = vpop.f32.mrb[0].mxu0
        %2821 = vdwg.mxu0
        %v2822 = vsel %vm2549, %v2817, -1e+30
        %v2823 = vsel %vm1732, %v2822, -inf
        %2824 = vmax.xlane.f32.xlu0 %v2823
        %v2825 = vpop.xlane.xlu0 %2824
        %v2826 = vsub.f32 %v2822, %v2825
        %v2827 = vmul.f32 %v2826, 1.442695
        %v2828 = vpow.pop %v2827
        %v2829 = vsel %vm1732, %v2828, 0.0
        %2830 = vadd.xlane.f32.xlu0 %v2829
        %v2831 = vpop.xlane.xlu0 %2830
        %v2832 = vrcp.pop %v2831
        %v2833 = vmul.f32 %v2828, %v2832
        %v2834 = vpack.c.bf16 %v2833, %v2833
        %2835 = vrot.lane.b32.xlu0 %v2552, 64
        %v2836 = vpop.permute.xlu0 %2835
        %v2838 = vsel %vm1732, %v2834, 0
        %v2841 = vsel %vm1748, %v2836, 0
        %2843 = vmatprep.subr.bf16.mxu0 0
        %2844 = vmatpush1.bf16.msra.mxu0 %v2841
        %2845 = vmatprep.subr.bf16.mxu0 0
        %2846 = vmatpush1.bf16.msra.mxu0 0
        %2847 = vmatprep.subr.bf16.mxu0 0
        %2848 = vmatpush1.bf16.msra.mxu0 0
        %2849 = vmatprep.subr.bf16.mxu0 0
        %2850 = vmatpush1.bf16.msra.mxu0 0
        %2851 = vmatprep.subr.bf16.mxu0 0
        %2852 = vmatpush1.bf16.msra.mxu0 0
        %2853 = vmatprep.subr.bf16.mxu0 0
        %2854 = vmatpush1.bf16.msra.mxu0 0
        %2855 = vmatprep.subr.bf16.mxu0 0
        %2856 = vmatpush1.bf16.msra.mxu0 0
        %2857 = vmatprep.subr.bf16.mxu0 0
        %2858 = vmatpush1.bf16.msra.mxu0 0
        %2859 = vmatprep.subr.bf16.mxu0 0
        %2860 = vmatpush1.bf16.msra.mxu0 0
        %2861 = vmatprep.subr.bf16.mxu0 0
        %2862 = vmatpush1.bf16.msra.mxu0 0
        %2863 = vmatprep.subr.bf16.mxu0 0
        %2864 = vmatpush1.bf16.msra.mxu0 0
        %2865 = vmatprep.subr.bf16.mxu0 0
        %2866 = vmatpush1.bf16.msra.mxu0 0
        %2867 = vmatprep.subr.bf16.mxu0 0
        %2868 = vmatpush1.bf16.msra.mxu0 0
        %2869 = vmatprep.subr.bf16.mxu0 0
        %2870 = vmatpush1.bf16.msra.mxu0 0
        %2871 = vmatprep.subr.bf16.mxu0 0
        %2872 = vmatpush1.bf16.msra.mxu0 0
        %2873 = vmatprep.subr.bf16.mxu0 0
        %2874 = vmatpush1.bf16.msra.mxu0 0
        %2875 = vmatprep.mubr.bf16.mxu0 0
        %2876 = vmatmul.mubr.bf16.gmra.mrb[0].mxu0 %v2838
        %v2877 = vpop.f32.mrb[0].mxu0
        %v2878 = vadd.f32 0.0, %v2877
        %v2879 = vpop.f32.mrb[0].mxu0
        %v2880 = vpop.f32.mrb[0].mxu0
        %v2881 = vpop.f32.mrb[0].mxu0
        %2882 = vdwg.mxu0
        %2883 = vrot.lane.b32.xlu0 %v2550, 32
        %v2884 = vpop.permute.xlu0 %2883
        %2885 = vrot.lane.b32.xlu0 %v2551, 32
        %v2886 = vpop.permute.xlu0 %2885
        %v2888 = vsel %vm1684, %v2884, 0
        %v2891 = vsel %vm1684, %v2886, 0
        %2893 = vmatprep.subr.bf16.mxu0 0
        %2894 = vmatpush1.bf16.xpose.msra.mxu0 %v2891
        %2895 = vmatprep.subr.bf16.mxu0 0
        %2896 = vmatpush1.bf16.xpose.msra.mxu0 0
        %2897 = vmatprep.subr.bf16.mxu0 0
        %2898 = vmatpush1.bf16.xpose.msra.mxu0 0
        %2899 = vmatprep.subr.bf16.mxu0 0
        %2900 = vmatpush1.bf16.xpose.msra.mxu0 0
        %2901 = vmatprep.subr.bf16.mxu0 0
        %2902 = vmatpush1.bf16.xpose.msra.mxu0 0
        %2903 = vmatprep.subr.bf16.mxu0 0
        %2904 = vmatpush1.bf16.xpose.msra.mxu0 0
        %2905 = vmatprep.subr.bf16.mxu0 0
        %2906 = vmatpush1.bf16.xpose.msra.mxu0 0
        %2907 = vmatprep.subr.bf16.mxu0 0
        %2908 = vmatpush1.bf16.xpose.msra.mxu0 0
        %2909 = vmatprep.subr.bf16.mxu0 0
        %2910 = vmatpush1.bf16.xpose.msra.mxu0 0
        %2911 = vmatprep.subr.bf16.mxu0 0
        %2912 = vmatpush1.bf16.xpose.msra.mxu0 0
        %2913 = vmatprep.subr.bf16.mxu0 0
        %2914 = vmatpush1.bf16.xpose.msra.mxu0 0
        %2915 = vmatprep.subr.bf16.mxu0 0
        %2916 = vmatpush1.bf16.xpose.msra.mxu0 0
        %2917 = vmatprep.subr.bf16.mxu0 0
        %2918 = vmatpush1.bf16.xpose.msra.mxu0 0
        %2919 = vmatprep.subr.bf16.mxu0 0
        %2920 = vmatpush1.bf16.xpose.msra.mxu0 0
        %2921 = vmatprep.subr.bf16.mxu0 0
        %2922 = vmatpush1.bf16.xpose.msra.mxu0 0
        %2923 = vmatprep.subr.bf16.mxu0 0
        %2924 = vmatpush1.bf16.xpose.msra.mxu0 0
        %2925 = vmatprep.mubr.bf16.mxu0 0
        %2926 = vmatmul.mubr.bf16.gmra.mrb[0].mxu0 %v2888
        %v2927 = vpop.f32.mrb[0].mxu0
        %v2928 = vadd.f32 0.0, %v2927
        %v2929 = vpop.f32.mrb[0].mxu0
        %v2930 = vpop.f32.mrb[0].mxu0
        %v2931 = vpop.f32.mrb[0].mxu0
        %2932 = vdwg.mxu0
        %v2933 = vsel %vm2549, %v2928, -1e+30
        %v2934 = vsel %vm1732, %v2933, -inf
        %2935 = vmax.xlane.f32.xlu0 %v2934
        %v2936 = vpop.xlane.xlu0 %2935
        %v2937 = vsub.f32 %v2933, %v2936
        %v2938 = vmul.f32 %v2937, 1.442695
        %v2939 = vpow.pop %v2938
        %v2940 = vsel %vm1732, %v2939, 0.0
        %2941 = vadd.xlane.f32.xlu0 %v2940
        %v2942 = vpop.xlane.xlu0 %2941
        %v2943 = vrcp.pop %v2942
        %v2944 = vmul.f32 %v2939, %v2943
        %v2945 = vpack.c.bf16 %v2944, %v2944
        %2946 = vrot.lane.b32.xlu0 %v2552, 32
        %v2947 = vpop.permute.xlu0 %2946
        %v2949 = vsel %vm1732, %v2945, 0
        %v2952 = vsel %vm1748, %v2947, 0
        %2954 = vmatprep.subr.bf16.mxu0 0
        %2955 = vmatpush1.bf16.msra.mxu0 %v2952
        %2956 = vmatprep.subr.bf16.mxu0 0
        %2957 = vmatpush1.bf16.msra.mxu0 0
        %2958 = vmatprep.subr.bf16.mxu0 0
        %2959 = vmatpush1.bf16.msra.mxu0 0
        %2960 = vmatprep.subr.bf16.mxu0 0
        %2961 = vmatpush1.bf16.msra.mxu0 0
        %2962 = vmatprep.subr.bf16.mxu0 0
        %2963 = vmatpush1.bf16.msra.mxu0 0
        %2964 = vmatprep.subr.bf16.mxu0 0
        %2965 = vmatpush1.bf16.msra.mxu0 0
        %2966 = vmatprep.subr.bf16.mxu0 0
        %2967 = vmatpush1.bf16.msra.mxu0 0
        %2968 = vmatprep.subr.bf16.mxu0 0
        %2969 = vmatpush1.bf16.msra.mxu0 0
        %2970 = vmatprep.subr.bf16.mxu0 0
        %2971 = vmatpush1.bf16.msra.mxu0 0
        %2972 = vmatprep.subr.bf16.mxu0 0
        %2973 = vmatpush1.bf16.msra.mxu0 0
        %2974 = vmatprep.subr.bf16.mxu0 0
        %2975 = vmatpush1.bf16.msra.mxu0 0
        %2976 = vmatprep.subr.bf16.mxu0 0
        %2977 = vmatpush1.bf16.msra.mxu0 0
        %2978 = vmatprep.subr.bf16.mxu0 0
        %2979 = vmatpush1.bf16.msra.mxu0 0
        %2980 = vmatprep.subr.bf16.mxu0 0
        %2981 = vmatpush1.bf16.msra.mxu0 0
        %2982 = vmatprep.subr.bf16.mxu0 0
        %2983 = vmatpush1.bf16.msra.mxu0 0
        %2984 = vmatprep.subr.bf16.mxu0 0
        %2985 = vmatpush1.bf16.msra.mxu0 0
        %2986 = vmatprep.mubr.bf16.mxu0 0
        %2987 = vmatmul.mubr.bf16.gmra.mrb[0].mxu0 %v2949
        %v2988 = vpop.f32.mrb[0].mxu0
        %v2989 = vadd.f32 0.0, %v2988
        %v2990 = vpop.f32.mrb[0].mxu0
        %v2991 = vpop.f32.mrb[0].mxu0
        %v2992 = vpop.f32.mrb[0].mxu0
        %2993 = vdwg.mxu0
        %2995 = vrot.lane.b32.xlu0 %v2767, 32
        %v2996 = vpop.permute.xlu0 %2995
        %2999 = vrot.lane.b32.xlu0 %v2878, 64
        %v3000 = vpop.permute.xlu0 %2999
        %3003 = vrot.lane.b32.xlu0 %v2989, 96
        %v3004 = vpop.permute.xlu0 %3003
        %v3006 = vsel %vm1684, %v2653, %v2996
        %v3007 = vsel %vm2141, %v3006, %v3000
        %v3008 = vsel %vm2143, %v3007, %v3004
        %v3009 = vpack.c.bf16 %v3008, %v3008
        %v3011 = vlaneseq
        %v3012 = vshrl.u32 %v3011, 7
        %v3013 = vsub.s32 0, %v3012
        %v3014 = vrot.slane %v2318, %v3013
        %v3032 = vunpack.c.l.b16 %v2302
        %v3033 = vunpack.c.l.b16 %v2303
        %v3034 = vunpack.c.l.b16 %v2304
        %v3035 = vunpack.c.l.b16 %v2305
        %v3036 = vunpack.c.l.b16 %v2306
        %v3037 = vunpack.c.l.b16 %v2307
        %v3038 = vunpack.c.l.b16 %v2308
        %v3039 = vunpack.c.l.b16 %v2309
        %v3040 = vunpack.c.l.b16 %v2310
        %v3041 = vunpack.c.l.b16 %v2311
        %v3042 = vunpack.c.l.b16 %v2312
        %v3043 = vunpack.c.l.b16 %v2313
        %v3044 = vunpack.c.l.b16 %v2314
        %v3045 = vunpack.c.l.b16 %v2315
        %v3046 = vunpack.c.l.b16 %v2316
        %v3047 = vunpack.c.l.b16 %v2317
        %v3048 = vpack.c.b16 %v3033, %v3032
        %v3049 = vpack.c.b16 %v3035, %v3034
        %v3050 = vpack.c.b16 %v3037, %v3036
        %v3051 = vpack.c.b16 %v3039, %v3038
        %v3052 = vpack.c.b16 %v3041, %v3040
        %v3053 = vpack.c.b16 %v3043, %v3042
        %v3054 = vpack.c.b16 %v3045, %v3044
        %v3055 = vpack.c.b16 %v3047, %v3046
        %3064 = vmatprep.subr.bf16.mxu0 0
        %3065 = vmatpush1.bf16.msra.mxu0 %v3048
        %3066 = vmatprep.subr.bf16.mxu0 0
        %3067 = vmatpush1.bf16.msra.mxu0 %v3049
        %3068 = vmatprep.subr.bf16.mxu0 0
        %3069 = vmatpush1.bf16.msra.mxu0 %v3050
        %3070 = vmatprep.subr.bf16.mxu0 0
        %3071 = vmatpush1.bf16.msra.mxu0 %v3051
        %3072 = vmatprep.subr.bf16.mxu0 0
        %3073 = vmatpush1.bf16.msra.mxu0 %v3052
        %3074 = vmatprep.subr.bf16.mxu0 0
        %3075 = vmatpush1.bf16.msra.mxu0 %v3053
        %3076 = vmatprep.subr.bf16.mxu0 0
        %3077 = vmatpush1.bf16.msra.mxu0 %v3054
        %3078 = vmatprep.subr.bf16.mxu0 0
        %3079 = vmatpush1.bf16.msra.mxu0 %v3055
        %3080 = vmatprep.subr.bf16.mxu0 0
        %3081 = vmatpush1.bf16.msra.mxu0 0
        %3082 = vmatprep.subr.bf16.mxu0 0
        %3083 = vmatpush1.bf16.msra.mxu0 0
        %3084 = vmatprep.subr.bf16.mxu0 0
        %3085 = vmatpush1.bf16.msra.mxu0 0
        %3086 = vmatprep.subr.bf16.mxu0 0
        %3087 = vmatpush1.bf16.msra.mxu0 0
        %3088 = vmatprep.subr.bf16.mxu0 0
        %3089 = vmatpush1.bf16.msra.mxu0 0
        %3090 = vmatprep.subr.bf16.mxu0 0
        %3091 = vmatpush1.bf16.msra.mxu0 0
        %3092 = vmatprep.subr.bf16.mxu0 0
        %3093 = vmatpush1.bf16.msra.mxu0 0
        %3094 = vmatprep.subr.bf16.mxu0 0
        %3095 = vmatpush1.bf16.msra.mxu0 0
        %3096 = vmatprep.mubr.bf16.mxu0 0
        %3097 = vmatmul.mubr.bf16.gmra.mrb[0].mxu0 %v3009
        %v3098 = vpop.f32.mrb[0].mxu0
        %v3099 = vadd.f32 %v3014, %v3098
        %v3100 = vpop.f32.mrb[0].mxu0
        %v3101 = vpop.f32.mrb[0].mxu0
        %v3102 = vpop.f32.mrb[0].mxu0
        %3103 = vdwg.mxu0
        %v3104 = vadd.f32 %v3099, %v2240
        %v3105 = vld [vmem:[%s1334] sm:$0x1]
        %v3106 = vld [vmem:[%s1337] sm:$0x1]
        %v3107 = vld [vmem:[%s1342] sm:$0xff]
        %v3108 = vld [vmem:[%s1342 + $0x8] sm:$0xff]
        %v3109 = vld [vmem:[%s1342 + $0x10] sm:$0xff]
        %v3110 = vld [vmem:[%s1342 + $0x18] sm:$0xff]
        %v3111 = vld [vmem:[%s1342 + $0x20] sm:$0xff]
        %v3112 = vld [vmem:[%s1342 + $0x28] sm:$0xff]
        %v3113 = vld [vmem:[%s1342 + $0x30] sm:$0xff]
        %v3114 = vld [vmem:[%s1342 + $0x38] sm:$0xff]
        %v3115 = vld [vmem:[%s1342 + $0x40] sm:$0xff]
        %v3116 = vld [vmem:[%s1342 + $0x48] sm:$0xff]
        %v3117 = vld [vmem:[%s1342 + $0x50] sm:$0xff]
        %v3118 = vld [vmem:[%s1342 + $0x58] sm:$0xff]
        %v3119 = vld [vmem:[%s1342 + $0x60] sm:$0xff]
        %v3120 = vld [vmem:[%s1342 + $0x68] sm:$0xff]
        %v3121 = vld [vmem:[%s1342 + $0x70] sm:$0xff]
        %v3122 = vld [vmem:[%s1342 + $0x78] sm:$0xff]
        %v3123 = vld [vmem:[%s1346] sm:$0x3]
        %v3124 = vld [vmem:[%s1351] sm:$0xf]
        %v3125 = vld [vmem:[%s1351 + $0x4] sm:$0xf]
        %v3126 = vld [vmem:[%s1351 + $0x8] sm:$0xf]
        %v3127 = vld [vmem:[%s1351 + $0xc] sm:$0xf]
        %v3128 = vld [vmem:[%s1351 + $0x10] sm:$0xf]
        %v3129 = vld [vmem:[%s1351 + $0x14] sm:$0xf]
        %v3130 = vld [vmem:[%s1351 + $0x18] sm:$0xf]
        %v3131 = vld [vmem:[%s1351 + $0x1c] sm:$0xf]
        %v3132 = vld [vmem:[%s1351 + $0x20] sm:$0xf]
        %v3133 = vld [vmem:[%s1351 + $0x24] sm:$0xf]
        %v3134 = vld [vmem:[%s1351 + $0x28] sm:$0xf]
        %v3135 = vld [vmem:[%s1351 + $0x2c] sm:$0xf]
        %v3136 = vld [vmem:[%s1351 + $0x30] sm:$0xf]
        %v3137 = vld [vmem:[%s1351 + $0x34] sm:$0xf]
        %v3138 = vld [vmem:[%s1351 + $0x38] sm:$0xf]
        %v3139 = vld [vmem:[%s1351 + $0x3c] sm:$0xf]
        %v3140 = vld [vmem:[%s1351 + $0x40] sm:$0xf]
        %v3141 = vld [vmem:[%s1351 + $0x44] sm:$0xf]
        %v3142 = vld [vmem:[%s1351 + $0x48] sm:$0xf]
        %v3143 = vld [vmem:[%s1351 + $0x4c] sm:$0xf]
        %v3144 = vld [vmem:[%s1351 + $0x50] sm:$0xf]
        %v3145 = vld [vmem:[%s1351 + $0x54] sm:$0xf]
        %v3146 = vld [vmem:[%s1351 + $0x58] sm:$0xf]
        %v3147 = vld [vmem:[%s1351 + $0x5c] sm:$0xf]
        %v3148 = vld [vmem:[%s1351 + $0x60] sm:$0xf]
        %v3149 = vld [vmem:[%s1351 + $0x64] sm:$0xf]
        %v3150 = vld [vmem:[%s1351 + $0x68] sm:$0xf]
        %v3151 = vld [vmem:[%s1351 + $0x6c] sm:$0xf]
        %v3152 = vld [vmem:[%s1351 + $0x70] sm:$0xf]
        %v3153 = vld [vmem:[%s1351 + $0x74] sm:$0xf]
        %v3154 = vld [vmem:[%s1351 + $0x78] sm:$0xf]
        %v3155 = vld [vmem:[%s1351 + $0x7c] sm:$0xf]
        %v3156 = vld [vmem:[%s1354] sm:$0x1]
        %3157 = vadd.xlane.f32.xlu0 %v3104
        %v3158 = vpop.xlane.xlu0 %3157
        %v3159 = vmul.f32 %v3158, %v1370
        %v3160 = vsub.f32 %v3104, %v3159
        %v3161 = vmul.f32 %v3160, %v3160
        %3162 = vadd.xlane.f32.xlu0 %v3161
        %v3163 = vpop.xlane.xlu0 %3162
        %v3164 = vmul.f32 %v3163, %v1370
        %v3165 = vadd.f32 %v3164, 1e-05
        %v3166 = vrsqrt.pop %v3165
        %v3167 = vmul.f32 %v3160, %v3166
        %v3169 = vlaneseq
        %v3170 = vshrl.u32 %v3169, 7
        %v3171 = vsub.s32 0, %v3170
        %v3172 = vrot.slane %v3105, %v3171
        %v3174 = vmul.f32 %v3167, %v3172
        %v3176 = vlaneseq
        %v3177 = vshrl.u32 %v3176, 7
        %v3178 = vsub.s32 0, %v3177
        %v3179 = vrot.slane %v3106, %v3178
        %v3181 = vadd.f32 %v3174, %v3179
        %v3182 = vpack.c.bf16 %v3181, %v3181
        %v3184 = vlaneseq
        %v3185 = vshrl.u32 %v3184, 7
        %v3186 = vsub.s32 0, %v3185
        %v3187 = vrot.slane %v3123, %v3186
        %v3188 = vlaneseq
        %v3189 = vshrl.u32 %v3188, 7
        %v3190 = vsub.s32 1, %v3189
        %v3191 = vrot.slane %v3123, %v3190
        %v3210 = vunpack.c.l.b16 %v3107
        %v3211 = vunpack.c.h.b16 %v3107
        %v3212 = vunpack.c.l.b16 %v3108
        %v3213 = vunpack.c.h.b16 %v3108
        %v3214 = vunpack.c.l.b16 %v3109
        %v3215 = vunpack.c.h.b16 %v3109
        %v3216 = vunpack.c.l.b16 %v3110
        %v3217 = vunpack.c.h.b16 %v3110
        %v3218 = vunpack.c.l.b16 %v3111
        %v3219 = vunpack.c.h.b16 %v3111
        %v3220 = vunpack.c.l.b16 %v3112
        %v3221 = vunpack.c.h.b16 %v3112
        %v3222 = vunpack.c.l.b16 %v3113
        %v3223 = vunpack.c.h.b16 %v3113
        %v3224 = vunpack.c.l.b16 %v3114
        %v3225 = vunpack.c.h.b16 %v3114
        %v3226 = vunpack.c.l.b16 %v3115
        %v3227 = vunpack.c.h.b16 %v3115
        %v3228 = vunpack.c.l.b16 %v3116
        %v3229 = vunpack.c.h.b16 %v3116
        %v3230 = vunpack.c.l.b16 %v3117
        %v3231 = vunpack.c.h.b16 %v3117
        %v3232 = vunpack.c.l.b16 %v3118
        %v3233 = vunpack.c.h.b16 %v3118
        %v3234 = vunpack.c.l.b16 %v3119
        %v3235 = vunpack.c.h.b16 %v3119
        %v3236 = vunpack.c.l.b16 %v3120
        %v3237 = vunpack.c.h.b16 %v3120
        %v3238 = vunpack.c.l.b16 %v3121
        %v3239 = vunpack.c.h.b16 %v3121
        %v3240 = vunpack.c.l.b16 %v3122
        %v3241 = vunpack.c.h.b16 %v3122
        %v3242 = vpack.c.b16 %v3212, %v3210
        %v3243 = vpack.c.b16 %v3213, %v3211
        %v3244 = vpack.c.b16 %v3216, %v3214
        %v3245 = vpack.c.b16 %v3217, %v3215
        %v3246 = vpack.c.b16 %v3220, %v3218
        %v3247 = vpack.c.b16 %v3221, %v3219
        %v3248 = vpack.c.b16 %v3224, %v3222
        %v3249 = vpack.c.b16 %v3225, %v3223
        %v3250 = vpack.c.b16 %v3228, %v3226
        %v3251 = vpack.c.b16 %v3229, %v3227
        %v3252 = vpack.c.b16 %v3232, %v3230
        %v3253 = vpack.c.b16 %v3233, %v3231
        %v3254 = vpack.c.b16 %v3236, %v3234
        %v3255 = vpack.c.b16 %v3237, %v3235
        %v3256 = vpack.c.b16 %v3240, %v3238
        %v3257 = vpack.c.b16 %v3241, %v3239
        %3274 = vmatprep.subr.bf16.mxu0 %v3243
        %3275 = vmatpush1.bf16.msra.mxu0 %v3242
        %3276 = vmatprep.subr.bf16.mxu0 %v3245
        %3277 = vmatpush1.bf16.msra.mxu0 %v3244
        %3278 = vmatprep.subr.bf16.mxu0 %v3247
        %3279 = vmatpush1.bf16.msra.mxu0 %v3246
        %3280 = vmatprep.subr.bf16.mxu0 %v3249
        %3281 = vmatpush1.bf16.msra.mxu0 %v3248
        %3282 = vmatprep.subr.bf16.mxu0 %v3251
        %3283 = vmatpush1.bf16.msra.mxu0 %v3250
        %3284 = vmatprep.subr.bf16.mxu0 %v3253
        %3285 = vmatpush1.bf16.msra.mxu0 %v3252
        %3286 = vmatprep.subr.bf16.mxu0 %v3255
        %3287 = vmatpush1.bf16.msra.mxu0 %v3254
        %3288 = vmatprep.subr.bf16.mxu0 %v3257
        %3289 = vmatpush1.bf16.msra.mxu0 %v3256
        %3290 = vmatprep.subr.bf16.mxu0 0
        %3291 = vmatpush1.bf16.msra.mxu0 0
        %3292 = vmatprep.subr.bf16.mxu0 0
        %3293 = vmatpush1.bf16.msra.mxu0 0
        %3294 = vmatprep.subr.bf16.mxu0 0
        %3295 = vmatpush1.bf16.msra.mxu0 0
        %3296 = vmatprep.subr.bf16.mxu0 0
        %3297 = vmatpush1.bf16.msra.mxu0 0
        %3298 = vmatprep.subr.bf16.mxu0 0
        %3299 = vmatpush1.bf16.msra.mxu0 0
        %3300 = vmatprep.subr.bf16.mxu0 0
        %3301 = vmatpush1.bf16.msra.mxu0 0
        %3302 = vmatprep.subr.bf16.mxu0 0
        %3303 = vmatpush1.bf16.msra.mxu0 0
        %3304 = vmatprep.subr.bf16.mxu0 0
        %3305 = vmatpush1.bf16.msra.mxu0 0
        %3306 = vmatprep.mubr.bf16.mxu0 0
        %3307 = vmatmul.mubr.bf16.gmra.mrb[0].mxu0 %v3182
        %v3308 = vpop.f32.mrb[0].mxu0
        %v3309 = vadd.f32 %v3187, %v3308
        %v3310 = vpop.f32.mrb[0].mxu0
        %v3311 = vadd.f32 %v3191, %v3310
        %v3312 = vpop.f32.mrb[0].mxu0
        %v3313 = vpop.f32.mrb[0].mxu0
        %3314 = vdwg.mxu0
        %v3315 = vmax.f32 %v3309, 0.0
        %v3316 = vmax.f32 %v3311, 0.0
        %v3317 = vpack.c.bf16 %v3315, %v3315
        %v3318 = vpack.c.bf16 %v3316, %v3316
        %v3320 = vlaneseq
        %v3321 = vshrl.u32 %v3320, 7
        %v3322 = vsub.s32 0, %v3321
        %v3323 = vrot.slane %v3156, %v3322
        %v3357 = vunpack.c.l.b16 %v3124
        %v3358 = vunpack.c.l.b16 %v3125
        %v3359 = vunpack.c.l.b16 %v3126
        %v3360 = vunpack.c.l.b16 %v3127
        %v3361 = vunpack.c.l.b16 %v3128
        %v3362 = vunpack.c.l.b16 %v3129
        %v3363 = vunpack.c.l.b16 %v3130
        %v3364 = vunpack.c.l.b16 %v3131
        %v3365 = vunpack.c.l.b16 %v3132
        %v3366 = vunpack.c.l.b16 %v3133
        %v3367 = vunpack.c.l.b16 %v3134
        %v3368 = vunpack.c.l.b16 %v3135
        %v3369 = vunpack.c.l.b16 %v3136
        %v3370 = vunpack.c.l.b16 %v3137
        %v3371 = vunpack.c.l.b16 %v3138
        %v3372 = vunpack.c.l.b16 %v3139
        %v3373 = vunpack.c.l.b16 %v3140
        %v3374 = vunpack.c.l.b16 %v3141
        %v3375 = vunpack.c.l.b16 %v3142
        %v3376 = vunpack.c.l.b16 %v3143
        %v3377 = vunpack.c.l.b16 %v3144
        %v3378 = vunpack.c.l.b16 %v3145
        %v3379 = vunpack.c.l.b16 %v3146
        %v3380 = vunpack.c.l.b16 %v3147
        %v3381 = vunpack.c.l.b16 %v3148
        %v3382 = vunpack.c.l.b16 %v3149
        %v3383 = vunpack.c.l.b16 %v3150
        %v3384 = vunpack.c.l.b16 %v3151
        %v3385 = vunpack.c.l.b16 %v3152
        %v3386 = vunpack.c.l.b16 %v3153
        %v3387 = vunpack.c.l.b16 %v3154
        %v3388 = vunpack.c.l.b16 %v3155
        %v3389 = vpack.c.b16 %v3358, %v3357
        %v3390 = vpack.c.b16 %v3360, %v3359
        %v3391 = vpack.c.b16 %v3362, %v3361
        %v3392 = vpack.c.b16 %v3364, %v3363
        %v3393 = vpack.c.b16 %v3366, %v3365
        %v3394 = vpack.c.b16 %v3368, %v3367
        %v3395 = vpack.c.b16 %v3370, %v3369
        %v3396 = vpack.c.b16 %v3372, %v3371
        %v3397 = vpack.c.b16 %v3374, %v3373
        %v3398 = vpack.c.b16 %v3376, %v3375
        %v3399 = vpack.c.b16 %v3378, %v3377
        %v3400 = vpack.c.b16 %v3380, %v3379
        %v3401 = vpack.c.b16 %v3382, %v3381
        %v3402 = vpack.c.b16 %v3384, %v3383
        %v3403 = vpack.c.b16 %v3386, %v3385
        %v3404 = vpack.c.b16 %v3388, %v3387
        %3421 = vmatprep.subr.bf16.mxu0 0
        %3422 = vmatpush1.bf16.msra.mxu0 %v3389
        %3423 = vmatprep.subr.bf16.mxu0 0
        %3424 = vmatpush1.bf16.msra.mxu0 %v3390
        %3425 = vmatprep.subr.bf16.mxu0 0
        %3426 = vmatpush1.bf16.msra.mxu0 %v3391
        %3427 = vmatprep.subr.bf16.mxu0 0
        %3428 = vmatpush1.bf16.msra.mxu0 %v3392
        %3429 = vmatprep.subr.bf16.mxu0 0
        %3430 = vmatpush1.bf16.msra.mxu0 %v3393
        %3431 = vmatprep.subr.bf16.mxu0 0
        %3432 = vmatpush1.bf16.msra.mxu0 %v3394
        %3433 = vmatprep.subr.bf16.mxu0 0
        %3434 = vmatpush1.bf16.msra.mxu0 %v3395
        %3435 = vmatprep.subr.bf16.mxu0 0
        %3436 = vmatpush1.bf16.msra.mxu0 %v3396
        %3437 = vmatprep.subr.bf16.mxu0 0
        %3438 = vmatpush1.bf16.msra.mxu0 %v3397
        %3439 = vmatprep.subr.bf16.mxu0 0
        %3440 = vmatpush1.bf16.msra.mxu0 %v3398
        %3441 = vmatprep.subr.bf16.mxu0 0
        %3442 = vmatpush1.bf16.msra.mxu0 %v3399
        %3443 = vmatprep.subr.bf16.mxu0 0
        %3444 = vmatpush1.bf16.msra.mxu0 %v3400
        %3445 = vmatprep.subr.bf16.mxu0 0
        %3446 = vmatpush1.bf16.msra.mxu0 %v3401
        %3447 = vmatprep.subr.bf16.mxu0 0
        %3448 = vmatpush1.bf16.msra.mxu0 %v3402
        %3449 = vmatprep.subr.bf16.mxu0 0
        %3450 = vmatpush1.bf16.msra.mxu0 %v3403
        %3451 = vmatprep.subr.bf16.mxu0 0
        %3452 = vmatpush1.bf16.msra.mxu0 %v3404
        %3453 = vmatprep.mubr.bf16.mxu0 %v3318
        %3454 = vmatmul.mubr.bf16.gmra.mrb[0].mxu0 %v3317
        %v3455 = vpop.f32.mrb[0].mxu0
        %v3456 = vadd.f32 %v3323, %v3455
        %v3457 = vpop.f32.mrb[0].mxu0
        %v3458 = vpop.f32.mrb[0].mxu0
        %v3459 = vpop.f32.mrb[0].mxu0
        %3460 = vdwg.mxu0
        %v3461 = vadd.f32 %v3456, %v3104
        %3462 = vst [vmem:[#allocation2] sm:$0xff] %v3461
        %p3463 = scmp.eq.s32.totalorder %s99, 1
        // Predicated region
        $region153: #{transformer_forward.3} parent=131 // pred_check
          %p3464 = pneg %p3463
        $region154: #{transformer_forward.3} parent=131 // pred_check_branch
          %3466 = sbr.rel (%p3464) target = $region156
        $region155: #{transformer_forward.3} parent=131 // pred_region
          %v3467 = vld [vmem:[%s53] sm:$0x1]
          %v3468 = vld [vmem:[%s55] sm:$0x1]
          %3469 = vadd.xlane.f32.xlu0 %v3461
          %v3470 = vpop.xlane.xlu0 %3469
          %v3471 = vmul.f32 %v3470, %v1370
          %v3472 = vsub.f32 %v3461, %v3471
          %v3473 = vmul.f32 %v3472, %v3472
          %3474 = vadd.xlane.f32.xlu0 %v3473
          %v3475 = vpop.xlane.xlu0 %3474
          %v3476 = vmul.f32 %v3475, %v1370
          %v3477 = vadd.f32 %v3476, 1e-05
          %v3478 = vrsqrt.pop %v3477
          %v3479 = vmul.f32 %v3472, %v3478
          %v3481 = vlaneseq
          %v3482 = vshrl.u32 %v3481, 7
          %v3483 = vsub.s32 0, %v3482
          %v3484 = vrot.slane %v3467, %v3483
          %v3486 = vmul.f32 %v3479, %v3484
          %v3488 = vlaneseq
          %v3489 = vshrl.u32 %v3488, 7
          %v3490 = vsub.s32 0, %v3489
          %v3491 = vrot.slane %v3468, %v3490
          %v3493 = vadd.f32 %v3486, %v3491
          %v3494 = vpack.c.bf16 %v3493, %v3493
          %v3495 = vld [vmem:[%s57] sm:$0xf]
          %v3496 = vld [vmem:[%s57 + $0x4] sm:$0xf]
          %v3497 = vld [vmem:[%s57 + $0x8] sm:$0xf]
          %v3498 = vld [vmem:[%s57 + $0xc] sm:$0xf]
          %v3499 = vld [vmem:[%s57 + $0x10] sm:$0xf]
          %v3500 = vld [vmem:[%s57 + $0x14] sm:$0xf]
          %v3501 = vld [vmem:[%s57 + $0x18] sm:$0xf]
          %v3502 = vld [vmem:[%s57 + $0x1c] sm:$0xf]
          %v3503 = vld [vmem:[%s57 + $0x20] sm:$0xf]
          %v3504 = vld [vmem:[%s57 + $0x24] sm:$0xf]
          %v3505 = vld [vmem:[%s57 + $0x28] sm:$0xf]
          %v3506 = vld [vmem:[%s57 + $0x2c] sm:$0xf]
          %v3507 = vld [vmem:[%s57 + $0x30] sm:$0xf]
          %v3508 = vld [vmem:[%s57 + $0x34] sm:$0xf]
          %v3509 = vld [vmem:[%s57 + $0x38] sm:$0xf]
          %v3510 = vld [vmem:[%s57 + $0x3c] sm:$0xf]
          %v3511 = vld [vmem:[%s59] sm:$0x1]
          %v3513 = vlaneseq
          %v3514 = vshrl.u32 %v3513, 7
          %v3515 = vsub.s32 0, %v3514
          %v3516 = vrot.slane %v3511, %v3515
          %v3534 = vunpack.c.l.b16 %v3495
          %v3535 = vunpack.c.l.b16 %v3496
          %v3536 = vunpack.c.l.b16 %v3497
          %v3537 = vunpack.c.l.b16 %v3498
          %v3538 = vunpack.c.l.b16 %v3499
          %v3539 = vunpack.c.l.b16 %v3500
          %v3540 = vunpack.c.l.b16 %v3501
          %v3541 = vunpack.c.l.b16 %v3502
          %v3542 = vunpack.c.l.b16 %v3503
          %v3543 = vunpack.c.l.b16 %v3504
          %v3544 = vunpack.c.l.b16 %v3505
          %v3545 = vunpack.c.l.b16 %v3506
          %v3546 = vunpack.c.l.b16 %v3507
          %v3547 = vunpack.c.l.b16 %v3508
          %v3548 = vunpack.c.l.b16 %v3509
          %v3549 = vunpack.c.l.b16 %v3510
          %v3550 = vpack.c.b16 %v3535, %v3534
          %v3551 = vpack.c.b16 %v3537, %v3536
          %v3552 = vpack.c.b16 %v3539, %v3538
          %v3553 = vpack.c.b16 %v3541, %v3540
          %v3554 = vpack.c.b16 %v3543, %v3542
          %v3555 = vpack.c.b16 %v3545, %v3544
          %v3556 = vpack.c.b16 %v3547, %v3546
          %v3557 = vpack.c.b16 %v3549, %v3548
          %3566 = vmatprep.subr.bf16.mxu0 0
          %3567 = vmatpush1.bf16.msra.mxu0 %v3550
          %3568 = vmatprep.subr.bf16.mxu0 0
          %3569 = vmatpush1.bf16.msra.mxu0 %v3551
          %3570 = vmatprep.subr.bf16.mxu0 0
          %3571 = vmatpush1.bf16.msra.mxu0 %v3552
          %3572 = vmatprep.subr.bf16.mxu0 0
          %3573 = vmatpush1.bf16.msra.mxu0 %v3553
          %3574 = vmatprep.subr.bf16.mxu0 0
          %3575 = vmatpush1.bf16.msra.mxu0 %v3554
          %3576 = vmatprep.subr.bf16.mxu0 0
          %3577 = vmatpush1.bf16.msra.mxu0 %v3555
          %3578 = vmatprep.subr.bf16.mxu0 0
          %3579 = vmatpush1.bf16.msra.mxu0 %v3556
          %3580 = vmatprep.subr.bf16.mxu0 0
          %3581 = vmatpush1.bf16.msra.mxu0 %v3557
          %3582 = vmatprep.subr.bf16.mxu0 0
          %3583 = vmatpush1.bf16.msra.mxu0 0
          %3584 = vmatprep.subr.bf16.mxu0 0
          %3585 = vmatpush1.bf16.msra.mxu0 0
          %3586 = vmatprep.subr.bf16.mxu0 0
          %3587 = vmatpush1.bf16.msra.mxu0 0
          %3588 = vmatprep.subr.bf16.mxu0 0
          %3589 = vmatpush1.bf16.msra.mxu0 0
          %3590 = vmatprep.subr.bf16.mxu0 0
          %3591 = vmatpush1.bf16.msra.mxu0 0
          %3592 = vmatprep.subr.bf16.mxu0 0
          %3593 = vmatpush1.bf16.msra.mxu0 0
          %3594 = vmatprep.subr.bf16.mxu0 0
          %3595 = vmatpush1.bf16.msra.mxu0 0
          %3596 = vmatprep.subr.bf16.mxu0 0
          %3597 = vmatpush1.bf16.msra.mxu0 0
          %3598 = vmatprep.mubr.bf16.mxu0 0
          %3599 = vmatmul.mubr.bf16.gmra.mrb[0].mxu0 %v3494
          %v3600 = vpop.f32.mrb[0].mxu0
          %v3601 = vadd.f32 %v3516, %v3600
          %v3602 = vpop.f32.mrb[0].mxu0
          %v3603 = vpop.f32.mrb[0].mxu0
          %v3604 = vpop.f32.mrb[0].mxu0
          %3605 = vdwg.mxu0
          %3606 = vst [vmem:[%s1281] sm:$0xff] %v3601
        $region156: #{transformer_forward.3} parent=131 // pred_fallthru
          _
        %s3607 = sand.u32 %s822, 1
        %s3608 = scalar_lea.sflag [#allocation8], %s3607
        %s3609 = sand.u32 %s822, 1
        %s3610 = smul.addr %s3609, 8
        %s3611 = scalar_lea.vmem [#allocation14], %s3610
        // Predicated region
        $region157: #{transformer_forward.3} parent=131 // pred_check
          %p3612 = pneg %p832
        $region158: #{transformer_forward.3} parent=131 // pred_check_branch
          %3614 = sbr.rel (%p3612) target = $region160
        $region159: #{transformer_forward.3} parent=131 // pred_region
          %s3616 = ssub.s32 128, 128
          %3617 = vsyncadd %s3608, %s3616
          %s3618 = smul.addr %s98, 128
          %s3619 = scalar_lea.hbm %s61, %s3618
          %s3621 = sshll.u32 %s3611, 4
          %s3622 = int_to_ptr.vmem [resolvable:$true] %s3621
          %3624 = dma.vmem_to_hbm [thread:$0]  %s3622, 128, %s3619, %s3608
        $region160: #{transformer_forward.3} parent=131 // pred_fallthru
          _
      $region132: #{transformer_forward.3} parent=5 // pred_fallthru
        _
      %p3625 = scmp.le.s32.totalorder 2, %s89
      // Predicated region
      $region161: #{transformer_forward.3} parent=5 // pred_check
        %p3626 = pneg %p3625
      $region162: #{transformer_forward.3} parent=5 // pred_check_branch
        %3628 = sbr.rel (%p3626) target = $region164
      $region163: #{transformer_forward.3} parent=5 // pred_region
        %s3629 = ssub.s32 %s89, 2
        // Predicated region
        $region165: #{transformer_forward.3} parent=163 // pred_check
          %p3630 = pneg %p838
        $region166: #{transformer_forward.3} parent=163 // pred_check_branch
          %3632 = sbr.rel (%p3630) target = $region168
        $region167: #{transformer_forward.3} parent=163 // pred_region
          %s3633 = sand.u32 %s823, 1
          %s3634 = scalar_lea.sflag [#allocation8], %s3633
          %s3635 = sand.u32 %s823, 1
          %s3636 = smul.addr %s3635, 8
          %s3637 = scalar_lea.vmem [#allocation14], %s3636
          %3638 = dma.done %s3634, 128
        $region168: #{transformer_forward.3} parent=163 // pred_fallthru
          _
      $region164: #{transformer_forward.3} parent=5 // pred_fallthru
        _
    $region6: #{transformer_forward.3} parent=1 // loop_footer
      %s93 = sadd.s32 1, %s89
    $region7: #{transformer_forward.3} parent=1 // loop_footer_branch
      %88 = sbr.rel target = $region3
    $region8: #{transformer_forward.3} parent=1 // loop_exit
      _
    %3639 = vsyncpa [#allocation7], 1
    %s3640 = scalar_lea.sflag [#allocation7], 1
    %3641 = vsyncpa %s3640, 1
    %3642 = vsyncpa [#allocation10], 1
    %s3643 = scalar_lea.sflag [#allocation10], 1
    %3644 = vsyncpa %s3643, 1
    %3645 = vsyncpa [#allocation13], 1
    %s3646 = scalar_lea.sflag [#allocation13], 1
    %3647 = vsyncpa %s3646, 1
    %3648 = vsyncpa [#allocation8], 1
    %s3649 = scalar_lea.sflag [#allocation8], 1
    %3650 = vsyncpa %s3649, 1

</llo_original>
